<compile_context>
chip_gen: v7x
topology: tpu7x:2x2x1
jax: 0.10.0
libtpu: 0.0.40
codegen_flags: <defaults>
</compile_context>

<pallas_src>
import functools

import jax
import jax.numpy as jnp
import numpy as np
from jax import lax
from jax.experimental import pallas as pl
from jax.experimental.pallas import tpu as pltpu

_EPS = 1e-5
_LANES = 128
_TAPS = tuple((ky, kx) for ky in range(3) for kx in range(3))


def _round_up(v, m):
    return (v + m - 1) // m * m


def _tree_sum(terms):
    """Balanced-tree sum (shorter dependent-add chain than a serial fold)."""
    while len(terms) > 1:
        nxt = [terms[i] + terms[i + 1] for i in range(0, len(terms) - 1, 2)]
        if len(terms) % 2:
            nxt.append(terms[-1])
        terms = nxt
    return terms[0]


def _batchnorm(y, gamma, beta, inv_m):
    """Training-mode BatchNorm2d over axis 0 of an (M, C) f32 slab.

    Single pass, but with a per-channel pivot (row 0) subtracted before the
    squared sum so the variance does not cancel catastrophically when
    mean^2 >> var (all-positive post-ReLU activations).  Biased batch variance,
    eps=1e-5 == PyTorch training-mode forward.
    Padded lanes stay exactly 0 because gamma/beta are ZERO-padded in the
    wrapper (var=0 -> scale=0, shift=0).
    """
    pivot = y[0:1, :]
    d = y - pivot
    s = jnp.sum(d, axis=0, keepdims=True)
    ss = jnp.sum(d * d, axis=0, keepdims=True)
    mu_d = s * inv_m
    var = jnp.maximum(ss * inv_m - mu_d * mu_d, 0.0)
    mu = pivot + mu_d
    scale = gamma * lax.rsqrt(var + _EPS)
    shift = beta - mu * scale
    return y * scale + shift


def _cnn_block_kernel(*refs, N, H, W, apply_residual, needs_match):
    if needs_match:
        (x_ref, w1_ref, wdw_ref, w3_ref,
         g1_ref, b1_ref, g2_ref, b2_ref, g3_ref, b3_ref,
         g4_ref, b4_ref, o_ref, pad_ref) = refs
    else:
        (x_ref, w1_ref, wdw_ref, w3_ref,
         g1_ref, b1_ref, g2_ref, b2_ref, g3_ref, b3_ref,
         o_ref, pad_ref) = refs
        g4_ref = b4_ref = None

    M, Cp = o_ref.shape          # lane-dense (M, Cp) output slab, Cp % 128 == 0
    inv_m = 1.0 / float(M)
    f32 = jnp.float32

    x_bf = x_ref[...]            # (M, Cip) bf16, lane-dense

    # --- conv1 (1x1) [+ fused 1x1 channel-match]: ONE bf16 MXU dot, f32 acc --
    yc = jnp.dot(x_bf, w1_ref[...], preferred_element_type=f32)
    y = jnp.maximum(_batchnorm(yc[:, :Cp], g1_ref[...], b1_ref[...], inv_m), 0.0)

    # --- zero ONLY the 1-pixel halo ring of the staging scratch (once) ------
    zero_h = jnp.zeros((N, 1, W + 2, Cp), f32)
    zero_w = jnp.zeros((N, H, 1, Cp), f32)
    pad_ref[:, 0:1, 0:W + 2, :] = zero_h
    pad_ref[:, H + 1:H + 2, 0:W + 2, :] = zero_h
    pad_ref[:, 1:H + 1, 0:1, :] = zero_w
    pad_ref[:, 1:H + 1, W + 1:W + 2, :] = zero_w

    # --- conv2: 3x3 depthwise ('same'); f32 on the VPU (v5e has no bf16 VPU) -
    pad_ref[:, 1:H + 1, 1:W + 1, :] = y.reshape(N, H, W, Cp)
    wdw = wdw_ref[...]                                           # (9, Cp) f32
    terms = [pad_ref[:, ky:ky + H, kx:kx + W, :] * wdw[t]
             for t, (ky, kx) in enumerate(_TAPS)]
    acc4 = _tree_sum(terms)
    y = jnp.maximum(
        _batchnorm(acc4.reshape(M, Cp), g2_ref[...], b2_ref[...], inv_m), 0.0)

    # --- conv3: dense 3x3 ('same') as 9 per-tap K=Cp bf16 dots, f32 acc ------
    pad_ref[:, 1:H + 1, 1:W + 1, :] = y.reshape(N, H, W, Cp)     # ring stays 0
    acc = None
    for t, (ky, kx) in enumerate(_TAPS):
        lhs = pad_ref[:, ky:ky + H, kx:kx + W, :].reshape(M, Cp)
        d = jnp.dot(lhs.astype(jnp.bfloat16), w3_ref[t],
                    preferred_element_type=f32)
        acc = d if acc is None else acc + d
    y = _batchnorm(acc, g3_ref[...], b3_ref[...], inv_m)

    # --- residual path + final ReLU ------------------------------------------
    if apply_residual:
        if needs_match:
            r = _batchnorm(yc[:, Cp:], g4_ref[...], b4_ref[...], inv_m)
        else:
            # identity residual (bf16-rounded x; rounding << test tolerance)
            r = x_bf.astype(f32)
        y = y + r
    # Lane-dense (Cp multiple of 128, M multiple of 8) unmasked output store.
    o_ref[...] = jnp.maximum(y, 0.0).astype(o_ref.dtype)


@functools.partial(jax.jit, static_argnames=("apply_residual",))
def cnn_block_forward(x_nhwc, params, *, apply_residual=True):
    N, H, W, Cin = x_nhwc.shape
    Cout = params["w1"].shape[1]
    needs_match = apply_residual and (Cin != Cout)

    # Lane-dense channel padding (multiples of the 128-lane vreg width).
    Cip = _round_up(Cin, _LANES)
    Cp = _round_up(Cout, _LANES)
    if apply_residual and not needs_match:     # identity residual: equal widths
        Cip = Cp = max(Cip, Cp)

    M = N * H * W
    f32, bf16 = jnp.float32, jnp.bfloat16
    pc_in, pc_out = Cip - Cin, Cp - Cout

    # Pre-flattened, lane-dense (M, Cip) bf16 input slab (feeds the MXU).
    x2 = jnp.pad(x_nhwc.astype(f32),
                 ((0, 0), (0, 0), (0, 0), (0, pc_in))).reshape(M, Cip).astype(bf16)

    # conv1 weight with the 1x1 channel-match weight fused along the output dim
    # -> both pointwise convs share one LHS traversal / one MXU pass.
    w1p = jnp.pad(params["w1"].astype(f32), ((0, pc_in), (0, pc_out)))
    if needs_match:
        wmp = jnp.pad(params["wm"].astype(f32), ((0, pc_in), (0, pc_out)))
        w1c = jnp.concatenate([w1p, wmp], axis=1).astype(bf16)   # (Cip, 2*Cp)
    else:
        w1c = w1p.astype(bf16)
    wdwp = jnp.pad(params["wdw"].astype(f32), ((0, 0), (0, pc_out)))   # f32, VPU
    w3p = jnp.pad(params["w3"].astype(f32),
                  ((0, 0), (0, pc_out), (0, pc_out))).astype(bf16)     # (9,Cp,Cp)

    # NOTE: padded-lane correctness relies on gamma/beta being ZERO-padded
    # (BN then maps padded lanes to exactly 0); never ones-pad gamma here.
    def padv(v):
        return jnp.pad(v.astype(f32), ((0, 0), (0, pc_out)))

    inputs = [x2, w1c, wdwp, w3p,
              padv(params["g1"]), padv(params["b1"]),
              padv(params["g2"]), padv(params["b2"]),
              padv(params["g3"]), padv(params["b3"])]
    if needs_match:
        inputs += [padv(params["g4"]), padv(params["b4"])]

    Wp2 = _round_up(W + 2, 8)          # sublane-aligned halo scratch width

    flops = (2 * M * Cip * (2 * Cp if needs_match else Cp)   # conv1 (+match)
             + 2 * M * 9 * Cp                                # depthwise 3x3
             + 2 * M * 9 * Cp * Cp                           # conv3
             + 14 * M * Cp)                                  # BN/ReLU approx
    bytes_accessed = (sum(int(np.prod(a.shape)) * a.dtype.itemsize for a in inputs)
                      + M * Cp * x_nhwc.dtype.itemsize)
    cost = pl.CostEstimate(flops=int(flops),
                           transcendentals=int((4 if needs_match else 3) * Cp),
                           bytes_accessed=int(bytes_accessed))

    # Scoped-VMEM limit sized from the actual footprint (inputs + output +
    # halo scratch + headroom for f32 intermediates), clipped to stay within
    # every generation's physical VMEM (v7x: 64 MiB/TC).
    static_vmem = bytes_accessed + N * (H + 2) * Wp2 * Cp * 4
    vmem_limit = int(min(max(4 * static_vmem + (16 << 20), 24 << 20), 64 << 20))

    kernel = functools.partial(_cnn_block_kernel, N=N, H=H, W=W,
                               apply_residual=apply_residual,
                               needs_match=needs_match)
    vmem_spec = pl.BlockSpec(memory_space=pltpu.MemorySpace.VMEM)
    out_flat = pl.pallas_call(
        kernel,
        out_shape=jax.ShapeDtypeStruct((M, Cp), x_nhwc.dtype),
        in_specs=[vmem_spec] * len(inputs),
        out_specs=vmem_spec,
        scratch_shapes=[pltpu.VMEM((N, H + 2, Wp2, Cp), jnp.float32)],  # halo
        compiler_params=pltpu.CompilerParams(vmem_limit_bytes=vmem_limit),
        cost_estimate=cost,
    )(*inputs)
    # TODO(synk): when chaining CNNBlocks, return the padded (M, Cp) slab
    # directly (skip this slice) to avoid an extra HBM round trip per block.
    return out_flat.reshape(N, H, W, Cp)[..., :Cout]


def init_params(key, in_channels, out_channels):
    ks = jax.random.split(key, 8)
    p = {
        "w1":  0.2 * jax.random.normal(ks[0], (in_channels, out_channels), jnp.float32),
        "wdw": 0.2 * jax.random.normal(ks[1], (9, out_channels), jnp.float32),
        "w3":  0.2 * jax.random.normal(ks[2], (9, out_channels, out_channels), jnp.float32),
        "wm":  0.2 * jax.random.normal(ks[3], (in_channels, out_channels), jnp.float32),
    }
    for i, k in zip(range(1, 5), ks[4:8]):
        kg, kb = jax.random.split(k)
        p[f"g{i}"] = 1.0 + 0.1 * jax.random.normal(kg, (1, out_channels), jnp.float32)
        p[f"b{i}"] = 0.1 * jax.random.normal(kb, (1, out_channels), jnp.float32)
    return p


def cnn_block_reference(x_nhwc, params, *, apply_residual=True):
    # Pure-JAX f32 reference (lax convs), same NHWC layout and BN semantics.
    Cin = x_nhwc.shape[-1]
    Cout = params["w1"].shape[1]
    dn = ("NHWC", "HWIO", "NHWC")

    def bn(y, g, b):
        mu = jnp.mean(y, axis=(0, 1, 2), keepdims=True)
        var = jnp.mean((y - mu) ** 2, axis=(0, 1, 2), keepdims=True)
        return (y - mu) / jnp.sqrt(var + _EPS) * g.reshape(1, 1, 1, -1) + b.reshape(1, 1, 1, -1)

    x = x_nhwc.astype(jnp.float32)
    y = lax.conv_general_dilated(x, params["w1"].reshape(1, 1, Cin, Cout),
                                 (1, 1), "VALID", dimension_numbers=dn)
    y = jax.nn.relu(bn(y, params["g1"], params["b1"]))
    y = lax.conv_general_dilated(y, params["wdw"].reshape(3, 3, 1, Cout),
                                 (1, 1), "SAME", dimension_numbers=dn,
                                 feature_group_count=Cout)
    y = jax.nn.relu(bn(y, params["g2"], params["b2"]))
    y = lax.conv_general_dilated(y, params["w3"].reshape(3, 3, Cout, Cout),
                                 (1, 1), "SAME", dimension_numbers=dn)
    y = bn(y, params["g3"], params["b3"])
    if apply_residual:
        if Cin != Cout:
            r = lax.conv_general_dilated(x, params["wm"].reshape(1, 1, Cin, Cout),
                                         (1, 1), "VALID", dimension_numbers=dn)
            r = bn(r, params["g4"], params["b4"])
        else:
            r = x
        y = y + r
    return jax.nn.relu(y)


if __name__ == "__main__":
    key = jax.random.PRNGKey(0)
    k_x, k_p = jax.random.split(key)

    N, Cin, H, W = 2, 4, 16, 16   # PyTorch-style NCHW input shape
    Cout = 8

    x_nchw = jax.random.normal(k_x, (N, Cin, H, W), jnp.float32)
    x_nhwc = jnp.transpose(x_nchw, (0, 2, 3, 1))   # NCHW -> NHWC for the kernel
    params = init_params(k_p, Cin, Cout)

    out = jax.block_until_ready(cnn_block_forward(x_nhwc, params, apply_residual=True))
    ref = jax.block_until_ready(cnn_block_reference(x_nhwc, params, apply_residual=True))
    # Tolerance reflects bf16 MXU operands vs. the pure-f32 lax reference
    # (observed deviation is typically well under this bound).
    np.testing.assert_allclose(np.asarray(out), np.asarray(ref), atol=5e-2, rtol=5e-2)

    print("KERNEL_OK")
</pallas_src>

<mosaic_0001>
module attributes {stable_mosaic.version = 11 : i64} {
  func.func @_cnn_block_kernel(%arg0: memref<512x128xbf16, #tpu.memory_space<vmem>>, %arg1: memref<128x256xbf16, #tpu.memory_space<vmem>>, %arg2: memref<9x128xf32, #tpu.memory_space<vmem>>, %arg3: memref<9x128x128xbf16, #tpu.memory_space<vmem>>, %arg4: memref<1x128xf32, #tpu.memory_space<vmem>>, %arg5: memref<1x128xf32, #tpu.memory_space<vmem>>, %arg6: memref<1x128xf32, #tpu.memory_space<vmem>>, %arg7: memref<1x128xf32, #tpu.memory_space<vmem>>, %arg8: memref<1x128xf32, #tpu.memory_space<vmem>>, %arg9: memref<1x128xf32, #tpu.memory_space<vmem>>, %arg10: memref<1x128xf32, #tpu.memory_space<vmem>>, %arg11: memref<1x128xf32, #tpu.memory_space<vmem>>, %arg12: memref<512x128xf32, #tpu.memory_space<vmem>>, %arg13: memref<2x18x24x128xf32, #tpu.memory_space<vmem>>) attributes {dimension_semantics = [], scalar_prefetch = 0 : i64, scratch_operands = 1 : i64, tpu.core_type = #tpu.core_type<tc>} {
    %c0 = arith.constant 0 : index
    %c0_0 = arith.constant 0 : index
    %0 = vector.load %arg0[%c0, %c0_0] : memref<512x128xbf16, #tpu.memory_space<vmem>>, vector<512x128xbf16>
    %c0_1 = arith.constant 0 : index
    %c0_2 = arith.constant 0 : index
    %1 = vector.load %arg1[%c0_1, %c0_2] : memref<128x256xbf16, #tpu.memory_space<vmem>>, vector<128x256xbf16>
    %cst = arith.constant dense<0.000000e+00> : vector<512x256xf32>
    %2 = tpu.matmul %0, %1, %cst {dimension_numbers = #tpu.dot_dimension_numbers<[1], [0], [0], [1], [0, 0, 1, 1], [], []>} : vector<512x128xbf16>, vector<128x256xbf16>, vector<512x256xf32> -> vector<512x256xf32>
    %3 = vector.extract_strided_slice %2 {offsets = [0, 0], sizes = [512, 128], strides = [1, 1]} : vector<512x256xf32> to vector<512x128xf32>
    %c0_3 = arith.constant 0 : index
    %c0_4 = arith.constant 0 : index
    %4 = vector.load %arg4[%c0_3, %c0_4] : memref<1x128xf32, #tpu.memory_space<vmem>>, vector<1x128xf32>
    %c0_5 = arith.constant 0 : index
    %c0_6 = arith.constant 0 : index
    %5 = vector.load %arg5[%c0_5, %c0_6] : memref<1x128xf32, #tpu.memory_space<vmem>>, vector<1x128xf32>
    %6 = vector.extract_strided_slice %3 {offsets = [0, 0], sizes = [1, 128], strides = [1, 1]} : vector<512x128xf32> to vector<1x128xf32>
    %7 = vector.broadcast %6 : vector<1x128xf32> to vector<512x128xf32>
    %8 = arith.subf %3, %7 : vector<512x128xf32>
    %cst_7 = arith.constant dense<0.000000e+00> : vector<128xf32>
    %9 = vector.multi_reduction <add>, %8, %cst_7 [0] : vector<512x128xf32> to vector<128xf32>
    %10 = vector.shape_cast %9 : vector<128xf32> to vector<1x128xf32>
    %11 = arith.mulf %8, %8 : vector<512x128xf32>
    %cst_8 = arith.constant dense<0.000000e+00> : vector<128xf32>
    %12 = vector.multi_reduction <add>, %11, %cst_8 [0] : vector<512x128xf32> to vector<128xf32>
    %13 = vector.shape_cast %12 : vector<128xf32> to vector<1x128xf32>
    %cst_9 = arith.constant 0.001953125 : f32
    %14 = vector.broadcast %cst_9 : f32 to vector<1x128xf32>
    %15 = arith.mulf %10, %14 : vector<1x128xf32>
    %cst_10 = arith.constant 0.001953125 : f32
    %16 = vector.broadcast %cst_10 : f32 to vector<1x128xf32>
    %17 = arith.mulf %13, %16 : vector<1x128xf32>
    %18 = arith.mulf %15, %15 : vector<1x128xf32>
    %19 = arith.subf %17, %18 : vector<1x128xf32>
    %cst_11 = arith.constant 0.000000e+00 : f32
    %20 = vector.broadcast %cst_11 : f32 to vector<1x128xf32>
    %21 = arith.maximumf %19, %20 : vector<1x128xf32>
    %22 = arith.addf %6, %15 : vector<1x128xf32>
    %cst_12 = arith.constant 9.99999974E-6 : f32
    %23 = vector.broadcast %cst_12 : f32 to vector<1x128xf32>
    %24 = arith.addf %21, %23 : vector<1x128xf32>
    %25 = math.rsqrt %24 : vector<1x128xf32>
    %26 = arith.mulf %4, %25 : vector<1x128xf32>
    %27 = arith.mulf %22, %26 : vector<1x128xf32>
    %28 = arith.subf %5, %27 : vector<1x128xf32>
    %29 = vector.broadcast %26 : vector<1x128xf32> to vector<512x128xf32>
    %30 = arith.mulf %3, %29 : vector<512x128xf32>
    %31 = vector.broadcast %28 : vector<1x128xf32> to vector<512x128xf32>
    %32 = arith.addf %30, %31 : vector<512x128xf32>
    %cst_13 = arith.constant 0.000000e+00 : f32
    %33 = vector.broadcast %cst_13 : f32 to vector<512x128xf32>
    %34 = arith.maximumf %32, %33 : vector<512x128xf32>
    %cst_14 = arith.constant 0.000000e+00 : f32
    %35 = vector.broadcast %cst_14 : f32 to vector<2x1x18x128xf32>
    %cst_15 = arith.constant 0.000000e+00 : f32
    %36 = vector.broadcast %cst_15 : f32 to vector<2x16x1x128xf32>
    %c0_16 = arith.constant 0 : index
    %c0_17 = arith.constant 0 : index
    %c0_18 = arith.constant 0 : index
    %c0_19 = arith.constant 0 : index
    %37 = vector.load %arg13[%c0_16, %c0_17, %c0_18, %c0_19] : memref<2x18x24x128xf32, #tpu.memory_space<vmem>>, vector<2x1x18x128xf32>
    tpu.vector_store %arg13[%c0_16, %c0_17, %c0_18, %c0_19], %35 {strides = array<i32>} : memref<2x18x24x128xf32, #tpu.memory_space<vmem>>, vector<2x1x18x128xf32>,
    %c0_20 = arith.constant 0 : index
    %c17 = arith.constant 17 : index
    %c0_21 = arith.constant 0 : index
    %c0_22 = arith.constant 0 : index
    %38 = vector.load %arg13[%c0_20, %c17, %c0_21, %c0_22] : memref<2x18x24x128xf32, #tpu.memory_space<vmem>>, vector<2x1x18x128xf32>
    tpu.vector_store %arg13[%c0_20, %c17, %c0_21, %c0_22], %35 {strides = array<i32>} : memref<2x18x24x128xf32, #tpu.memory_space<vmem>>, vector<2x1x18x128xf32>,
    %c0_23 = arith.constant 0 : index
    %c1 = arith.constant 1 : index
    %c0_24 = arith.constant 0 : index
    %c0_25 = arith.constant 0 : index
    %39 = vector.load %arg13[%c0_23, %c1, %c0_24, %c0_25] : memref<2x18x24x128xf32, #tpu.memory_space<vmem>>, vector<2x16x1x128xf32>
    tpu.vector_store %arg13[%c0_23, %c1, %c0_24, %c0_25], %36 {strides = array<i32>} : memref<2x18x24x128xf32, #tpu.memory_space<vmem>>, vector<2x16x1x128xf32>,
    %c0_26 = arith.constant 0 : index
    %c1_27 = arith.constant 1 : index
    %c17_28 = arith.constant 17 : index
    %c0_29 = arith.constant 0 : index
    %40 = vector.load %arg13[%c0_26, %c1_27, %c17_28, %c0_29] : memref<2x18x24x128xf32, #tpu.memory_space<vmem>>, vector<2x16x1x128xf32>
    tpu.vector_store %arg13[%c0_26, %c1_27, %c17_28, %c0_29], %36 {strides = array<i32>} : memref<2x18x24x128xf32, #tpu.memory_space<vmem>>, vector<2x16x1x128xf32>,
    %41 = vector.shape_cast %34 : vector<512x128xf32> to vector<2x16x16x128xf32>
    %c0_30 = arith.constant 0 : index
    %c1_31 = arith.constant 1 : index
    %c1_32 = arith.constant 1 : index
    %c0_33 = arith.constant 0 : index
    %42 = vector.load %arg13[%c0_30, %c1_31, %c1_32, %c0_33] : memref<2x18x24x128xf32, #tpu.memory_space<vmem>>, vector<2x16x16x128xf32>
    tpu.vector_store %arg13[%c0_30, %c1_31, %c1_32, %c0_33], %41 {strides = array<i32>} : memref<2x18x24x128xf32, #tpu.memory_space<vmem>>, vector<2x16x16x128xf32>,
    %c0_34 = arith.constant 0 : index
    %c0_35 = arith.constant 0 : index
    %43 = vector.load %arg2[%c0_34, %c0_35] : memref<9x128xf32, #tpu.memory_space<vmem>>, vector<9x128xf32>
    %c0_36 = arith.constant 0 : index
    %c0_37 = arith.constant 0 : index
    %c0_38 = arith.constant 0 : index
    %c0_39 = arith.constant 0 : index
    %44 = vector.load %arg13[%c0_36, %c0_37, %c0_38, %c0_39] : memref<2x18x24x128xf32, #tpu.memory_space<vmem>>, vector<2x16x16x128xf32>
    %45 = vector.extract_strided_slice %43 {offsets = [0, 0], sizes = [1, 128], strides = [1, 1]} : vector<9x128xf32> to vector<1x128xf32>
    %46 = vector.shape_cast %45 : vector<1x128xf32> to vector<128xf32>
    %47 = vector.shape_cast %46 : vector<128xf32> to vector<1x1x1x128xf32>
    %48 = vector.broadcast %47 : vector<1x1x1x128xf32> to vector<2x16x16x128xf32>
    %49 = arith.mulf %44, %48 : vector<2x16x16x128xf32>
    %c0_40 = arith.constant 0 : index
    %c0_41 = arith.constant 0 : index
    %c1_42 = arith.constant 1 : index
    %c0_43 = arith.constant 0 : index
    %50 = vector.load %arg13[%c0_40, %c0_41, %c1_42, %c0_43] : memref<2x18x24x128xf32, #tpu.memory_space<vmem>>, vector<2x16x16x128xf32>
    %51 = vector.extract_strided_slice %43 {offsets = [1, 0], sizes = [1, 128], strides = [1, 1]} : vector<9x128xf32> to vector<1x128xf32>
    %52 = vector.shape_cast %51 : vector<1x128xf32> to vector<128xf32>
    %53 = vector.shape_cast %52 : vector<128xf32> to vector<1x1x1x128xf32>
    %54 = vector.broadcast %53 : vector<1x1x1x128xf32> to vector<2x16x16x128xf32>
    %55 = arith.mulf %50, %54 : vector<2x16x16x128xf32>
    %c0_44 = arith.constant 0 : index
    %c0_45 = arith.constant 0 : index
    %c2 = arith.constant 2 : index
    %c0_46 = arith.constant 0 : index
    %56 = vector.load %arg13[%c0_44, %c0_45, %c2, %c0_46] : memref<2x18x24x128xf32, #tpu.memory_space<vmem>>, vector<2x16x16x128xf32>
    %57 = vector.extract_strided_slice %43 {offsets = [2, 0], sizes = [1, 128], strides = [1, 1]} : vector<9x128xf32> to vector<1x128xf32>
    %58 = vector.shape_cast %57 : vector<1x128xf32> to vector<128xf32>
    %59 = vector.shape_cast %58 : vector<128xf32> to vector<1x1x1x128xf32>
    %60 = vector.broadcast %59 : vector<1x1x1x128xf32> to vector<2x16x16x128xf32>
    %61 = arith.mulf %56, %60 : vector<2x16x16x128xf32>
    %c0_47 = arith.constant 0 : index
    %c1_48 = arith.constant 1 : index
    %c0_49 = arith.constant 0 : index
    %c0_50 = arith.constant 0 : index
    %62 = vector.load %arg13[%c0_47, %c1_48, %c0_49, %c0_50] : memref<2x18x24x128xf32, #tpu.memory_space<vmem>>, vector<2x16x16x128xf32>
    %63 = vector.extract_strided_slice %43 {offsets = [3, 0], sizes = [1, 128], strides = [1, 1]} : vector<9x128xf32> to vector<1x128xf32>
    %64 = vector.shape_cast %63 : vector<1x128xf32> to vector<128xf32>
    %65 = vector.shape_cast %64 : vector<128xf32> to vector<1x1x1x128xf32>
    %66 = vector.broadcast %65 : vector<1x1x1x128xf32> to vector<2x16x16x128xf32>
    %67 = arith.mulf %62, %66 : vector<2x16x16x128xf32>
    %c0_51 = arith.constant 0 : index
    %c1_52 = arith.constant 1 : index
    %c1_53 = arith.constant 1 : index
    %c0_54 = arith.constant 0 : index
    %68 = vector.load %arg13[%c0_51, %c1_52, %c1_53, %c0_54] : memref<2x18x24x128xf32, #tpu.memory_space<vmem>>, vector<2x16x16x128xf32>
    %69 = vector.extract_strided_slice %43 {offsets = [4, 0], sizes = [1, 128], strides = [1, 1]} : vector<9x128xf32> to vector<1x128xf32>
    %70 = vector.shape_cast %69 : vector<1x128xf32> to vector<128xf32>
    %71 = vector.shape_cast %70 : vector<128xf32> to vector<1x1x1x128xf32>
    %72 = vector.broadcast %71 : vector<1x1x1x128xf32> to vector<2x16x16x128xf32>
    %73 = arith.mulf %68, %72 : vector<2x16x16x128xf32>
    %c0_55 = arith.constant 0 : index
    %c1_56 = arith.constant 1 : index
    %c2_57 = arith.constant 2 : index
    %c0_58 = arith.constant 0 : index
    %74 = vector.load %arg13[%c0_55, %c1_56, %c2_57, %c0_58] : memref<2x18x24x128xf32, #tpu.memory_space<vmem>>, vector<2x16x16x128xf32>
    %75 = vector.extract_strided_slice %43 {offsets = [5, 0], sizes = [1, 128], strides = [1, 1]} : vector<9x128xf32> to vector<1x128xf32>
    %76 = vector.shape_cast %75 : vector<1x128xf32> to vector<128xf32>
    %77 = vector.shape_cast %76 : vector<128xf32> to vector<1x1x1x128xf32>
    %78 = vector.broadcast %77 : vector<1x1x1x128xf32> to vector<2x16x16x128xf32>
    %79 = arith.mulf %74, %78 : vector<2x16x16x128xf32>
    %c0_59 = arith.constant 0 : index
    %c2_60 = arith.constant 2 : index
    %c0_61 = arith.constant 0 : index
    %c0_62 = arith.constant 0 : index
    %80 = vector.load %arg13[%c0_59, %c2_60, %c0_61, %c0_62] : memref<2x18x24x128xf32, #tpu.memory_space<vmem>>, vector<2x16x16x128xf32>
    %81 = vector.extract_strided_slice %43 {offsets = [6, 0], sizes = [1, 128], strides = [1, 1]} : vector<9x128xf32> to vector<1x128xf32>
    %82 = vector.shape_cast %81 : vector<1x128xf32> to vector<128xf32>
    %83 = vector.shape_cast %82 : vector<128xf32> to vector<1x1x1x128xf32>
    %84 = vector.broadcast %83 : vector<1x1x1x128xf32> to vector<2x16x16x128xf32>
    %85 = arith.mulf %80, %84 : vector<2x16x16x128xf32>
    %c0_63 = arith.constant 0 : index
    %c2_64 = arith.constant 2 : index
    %c1_65 = arith.constant 1 : index
    %c0_66 = arith.constant 0 : index
    %86 = vector.load %arg13[%c0_63, %c2_64, %c1_65, %c0_66] : memref<2x18x24x128xf32, #tpu.memory_space<vmem>>, vector<2x16x16x128xf32>
    %87 = vector.extract_strided_slice %43 {offsets = [7, 0], sizes = [1, 128], strides = [1, 1]} : vector<9x128xf32> to vector<1x128xf32>
    %88 = vector.shape_cast %87 : vector<1x128xf32> to vector<128xf32>
    %89 = vector.shape_cast %88 : vector<128xf32> to vector<1x1x1x128xf32>
    %90 = vector.broadcast %89 : vector<1x1x1x128xf32> to vector<2x16x16x128xf32>
    %91 = arith.mulf %86, %90 : vector<2x16x16x128xf32>
    %c0_67 = arith.constant 0 : index
    %c2_68 = arith.constant 2 : index
    %c2_69 = arith.constant 2 : index
    %c0_70 = arith.constant 0 : index
    %92 = vector.load %arg13[%c0_67, %c2_68, %c2_69, %c0_70] : memref<2x18x24x128xf32, #tpu.memory_space<vmem>>, vector<2x16x16x128xf32>
    %93 = vector.extract_strided_slice %43 {offsets = [8, 0], sizes = [1, 128], strides = [1, 1]} : vector<9x128xf32> to vector<1x128xf32>
    %94 = vector.shape_cast %93 : vector<1x128xf32> to vector<128xf32>
    %95 = vector.shape_cast %94 : vector<128xf32> to vector<1x1x1x128xf32>
    %96 = vector.broadcast %95 : vector<1x1x1x128xf32> to vector<2x16x16x128xf32>
    %97 = arith.mulf %92, %96 : vector<2x16x16x128xf32>
    %98 = arith.addf %49, %55 : vector<2x16x16x128xf32>
    %99 = arith.addf %61, %67 : vector<2x16x16x128xf32>
    %100 = arith.addf %73, %79 : vector<2x16x16x128xf32>
    %101 = arith.addf %85, %91 : vector<2x16x16x128xf32>
    %102 = arith.addf %98, %99 : vector<2x16x16x128xf32>
    %103 = arith.addf %100, %101 : vector<2x16x16x128xf32>
    %104 = arith.addf %102, %103 : vector<2x16x16x128xf32>
    %105 = arith.addf %104, %97 : vector<2x16x16x128xf32>
    %106 = vector.shape_cast %105 : vector<2x16x16x128xf32> to vector<512x128xf32>
    %c0_71 = arith.constant 0 : index
    %c0_72 = arith.constant 0 : index
    %107 = vector.load %arg6[%c0_71, %c0_72] : memref<1x128xf32, #tpu.memory_space<vmem>>, vector<1x128xf32>
    %c0_73 = arith.constant 0 : index
    %c0_74 = arith.constant 0 : index
    %108 = vector.load %arg7[%c0_73, %c0_74] : memref<1x128xf32, #tpu.memory_space<vmem>>, vector<1x128xf32>
    %109 = vector.extract_strided_slice %106 {offsets = [0, 0], sizes = [1, 128], strides = [1, 1]} : vector<512x128xf32> to vector<1x128xf32>
    %110 = vector.broadcast %109 : vector<1x128xf32> to vector<512x128xf32>
    %111 = arith.subf %106, %110 : vector<512x128xf32>
    %cst_75 = arith.constant dense<0.000000e+00> : vector<128xf32>
    %112 = vector.multi_reduction <add>, %111, %cst_75 [0] : vector<512x128xf32> to vector<128xf32>
    %113 = vector.shape_cast %112 : vector<128xf32> to vector<1x128xf32>
    %114 = arith.mulf %111, %111 : vector<512x128xf32>
    %cst_76 = arith.constant dense<0.000000e+00> : vector<128xf32>
    %115 = vector.multi_reduction <add>, %114, %cst_76 [0] : vector<512x128xf32> to vector<128xf32>
    %116 = vector.shape_cast %115 : vector<128xf32> to vector<1x128xf32>
    %cst_77 = arith.constant 0.001953125 : f32
    %117 = vector.broadcast %cst_77 : f32 to vector<1x128xf32>
    %118 = arith.mulf %113, %117 : vector<1x128xf32>
    %cst_78 = arith.constant 0.001953125 : f32
    %119 = vector.broadcast %cst_78 : f32 to vector<1x128xf32>
    %120 = arith.mulf %116, %119 : vector<1x128xf32>
    %121 = arith.mulf %118, %118 : vector<1x128xf32>
    %122 = arith.subf %120, %121 : vector<1x128xf32>
    %cst_79 = arith.constant 0.000000e+00 : f32
    %123 = vector.broadcast %cst_79 : f32 to vector<1x128xf32>
    %124 = arith.maximumf %122, %123 : vector<1x128xf32>
    %125 = arith.addf %109, %118 : vector<1x128xf32>
    %cst_80 = arith.constant 9.99999974E-6 : f32
    %126 = vector.broadcast %cst_80 : f32 to vector<1x128xf32>
    %127 = arith.addf %124, %126 : vector<1x128xf32>
    %128 = math.rsqrt %127 : vector<1x128xf32>
    %129 = arith.mulf %107, %128 : vector<1x128xf32>
    %130 = arith.mulf %125, %129 : vector<1x128xf32>
    %131 = arith.subf %108, %130 : vector<1x128xf32>
    %132 = vector.broadcast %129 : vector<1x128xf32> to vector<512x128xf32>
    %133 = arith.mulf %106, %132 : vector<512x128xf32>
    %134 = vector.broadcast %131 : vector<1x128xf32> to vector<512x128xf32>
    %135 = arith.addf %133, %134 : vector<512x128xf32>
    %cst_81 = arith.constant 0.000000e+00 : f32
    %136 = vector.broadcast %cst_81 : f32 to vector<512x128xf32>
    %137 = arith.maximumf %135, %136 : vector<512x128xf32>
    %138 = vector.shape_cast %137 : vector<512x128xf32> to vector<2x16x16x128xf32>
    %c0_82 = arith.constant 0 : index
    %c1_83 = arith.constant 1 : index
    %c1_84 = arith.constant 1 : index
    %c0_85 = arith.constant 0 : index
    %139 = vector.load %arg13[%c0_82, %c1_83, %c1_84, %c0_85] : memref<2x18x24x128xf32, #tpu.memory_space<vmem>>, vector<2x16x16x128xf32>
    tpu.vector_store %arg13[%c0_82, %c1_83, %c1_84, %c0_85], %138 {strides = array<i32>} : memref<2x18x24x128xf32, #tpu.memory_space<vmem>>, vector<2x16x16x128xf32>,
    %c0_86 = arith.constant 0 : index
    %c0_87 = arith.constant 0 : index
    %c0_88 = arith.constant 0 : index
    %c0_89 = arith.constant 0 : index
    %140 = vector.load %arg13[%c0_86, %c0_87, %c0_88, %c0_89] : memref<2x18x24x128xf32, #tpu.memory_space<vmem>>, vector<2x16x16x128xf32>
    %141 = vector.shape_cast %140 : vector<2x16x16x128xf32> to vector<512x128xf32>
    %142 = arith.truncf %141 : vector<512x128xf32> to vector<512x128xbf16>
    %c0_90 = arith.constant 0 : index
    %c0_91 = arith.constant 0 : index
    %c0_92 = arith.constant 0 : index
    %143 = vector.load %arg3[%c0_90, %c0_91, %c0_92] : memref<9x128x128xbf16, #tpu.memory_space<vmem>>, vector<1x128x128xbf16>
    %144 = vector.shape_cast %143 : vector<1x128x128xbf16> to vector<128x128xbf16>
    %cst_93 = arith.constant dense<0.000000e+00> : vector<512x128xf32>
    %145 = tpu.matmul %142, %144, %cst_93 {dimension_numbers = #tpu.dot_dimension_numbers<[1], [0], [0], [1], [0, 0, 1, 1], [], []>} : vector<512x128xbf16>, vector<128x128xbf16>, vector<512x128xf32> -> vector<512x128xf32>
    %c0_94 = arith.constant 0 : index
    %c0_95 = arith.constant 0 : index
    %c1_96 = arith.constant 1 : index
    %c0_97 = arith.constant 0 : index
    %146 = vector.load %arg13[%c0_94, %c0_95, %c1_96, %c0_97] : memref<2x18x24x128xf32, #tpu.memory_space<vmem>>, vector<2x16x16x128xf32>
    %147 = vector.shape_cast %146 : vector<2x16x16x128xf32> to vector<512x128xf32>
    %148 = arith.truncf %147 : vector<512x128xf32> to vector<512x128xbf16>
    %c1_98 = arith.constant 1 : index
    %c0_99 = arith.constant 0 : index
    %c0_100 = arith.constant 0 : index
    %149 = vector.load %arg3[%c1_98, %c0_99, %c0_100] : memref<9x128x128xbf16, #tpu.memory_space<vmem>>, vector<1x128x128xbf16>
    %150 = vector.shape_cast %149 : vector<1x128x128xbf16> to vector<128x128xbf16>
    %cst_101 = arith.constant dense<0.000000e+00> : vector<512x128xf32>
    %151 = tpu.matmul %148, %150, %cst_101 {dimension_numbers = #tpu.dot_dimension_numbers<[1], [0], [0], [1], [0, 0, 1, 1], [], []>} : vector<512x128xbf16>, vector<128x128xbf16>, vector<512x128xf32> -> vector<512x128xf32>
    %152 = arith.addf %145, %151 : vector<512x128xf32>
    %c0_102 = arith.constant 0 : index
    %c0_103 = arith.constant 0 : index
    %c2_104 = arith.constant 2 : index
    %c0_105 = arith.constant 0 : index
    %153 = vector.load %arg13[%c0_102, %c0_103, %c2_104, %c0_105] : memref<2x18x24x128xf32, #tpu.memory_space<vmem>>, vector<2x16x16x128xf32>
    %154 = vector.shape_cast %153 : vector<2x16x16x128xf32> to vector<512x128xf32>
    %155 = arith.truncf %154 : vector<512x128xf32> to vector<512x128xbf16>
    %c2_106 = arith.constant 2 : index
    %c0_107 = arith.constant 0 : index
    %c0_108 = arith.constant 0 : index
    %156 = vector.load %arg3[%c2_106, %c0_107, %c0_108] : memref<9x128x128xbf16, #tpu.memory_space<vmem>>, vector<1x128x128xbf16>
    %157 = vector.shape_cast %156 : vector<1x128x128xbf16> to vector<128x128xbf16>
    %cst_109 = arith.constant dense<0.000000e+00> : vector<512x128xf32>
    %158 = tpu.matmul %155, %157, %cst_109 {dimension_numbers = #tpu.dot_dimension_numbers<[1], [0], [0], [1], [0, 0, 1, 1], [], []>} : vector<512x128xbf16>, vector<128x128xbf16>, vector<512x128xf32> -> vector<512x128xf32>
    %159 = arith.addf %152, %158 : vector<512x128xf32>
    %c0_110 = arith.constant 0 : index
    %c1_111 = arith.constant 1 : index
    %c0_112 = arith.constant 0 : index
    %c0_113 = arith.constant 0 : index
    %160 = vector.load %arg13[%c0_110, %c1_111, %c0_112, %c0_113] : memref<2x18x24x128xf32, #tpu.memory_space<vmem>>, vector<2x16x16x128xf32>
    %161 = vector.shape_cast %160 : vector<2x16x16x128xf32> to vector<512x128xf32>
    %162 = arith.truncf %161 : vector<512x128xf32> to vector<512x128xbf16>
    %c3 = arith.constant 3 : index
    %c0_114 = arith.constant 0 : index
    %c0_115 = arith.constant 0 : index
    %163 = vector.load %arg3[%c3, %c0_114, %c0_115] : memref<9x128x128xbf16, #tpu.memory_space<vmem>>, vector<1x128x128xbf16>
    %164 = vector.shape_cast %163 : vector<1x128x128xbf16> to vector<128x128xbf16>
    %cst_116 = arith.constant dense<0.000000e+00> : vector<512x128xf32>
    %165 = tpu.matmul %162, %164, %cst_116 {dimension_numbers = #tpu.dot_dimension_numbers<[1], [0], [0], [1], [0, 0, 1, 1], [], []>} : vector<512x128xbf16>, vector<128x128xbf16>, vector<512x128xf32> -> vector<512x128xf32>
    %166 = arith.addf %159, %165 : vector<512x128xf32>
    %c0_117 = arith.constant 0 : index
    %c1_118 = arith.constant 1 : index
    %c1_119 = arith.constant 1 : index
    %c0_120 = arith.constant 0 : index
    %167 = vector.load %arg13[%c0_117, %c1_118, %c1_119, %c0_120] : memref<2x18x24x128xf32, #tpu.memory_space<vmem>>, vector<2x16x16x128xf32>
    %168 = vector.shape_cast %167 : vector<2x16x16x128xf32> to vector<512x128xf32>
    %169 = arith.truncf %168 : vector<512x128xf32> to vector<512x128xbf16>
    %c4 = arith.constant 4 : index
    %c0_121 = arith.constant 0 : index
    %c0_122 = arith.constant 0 : index
    %170 = vector.load %arg3[%c4, %c0_121, %c0_122] : memref<9x128x128xbf16, #tpu.memory_space<vmem>>, vector<1x128x128xbf16>
    %171 = vector.shape_cast %170 : vector<1x128x128xbf16> to vector<128x128xbf16>
    %cst_123 = arith.constant dense<0.000000e+00> : vector<512x128xf32>
    %172 = tpu.matmul %169, %171, %cst_123 {dimension_numbers = #tpu.dot_dimension_numbers<[1], [0], [0], [1], [0, 0, 1, 1], [], []>} : vector<512x128xbf16>, vector<128x128xbf16>, vector<512x128xf32> -> vector<512x128xf32>
    %173 = arith.addf %166, %172 : vector<512x128xf32>
    %c0_124 = arith.constant 0 : index
    %c1_125 = arith.constant 1 : index
    %c2_126 = arith.constant 2 : index
    %c0_127 = arith.constant 0 : index
    %174 = vector.load %arg13[%c0_124, %c1_125, %c2_126, %c0_127] : memref<2x18x24x128xf32, #tpu.memory_space<vmem>>, vector<2x16x16x128xf32>
    %175 = vector.shape_cast %174 : vector<2x16x16x128xf32> to vector<512x128xf32>
    %176 = arith.truncf %175 : vector<512x128xf32> to vector<512x128xbf16>
    %c5 = arith.constant 5 : index
    %c0_128 = arith.constant 0 : index
    %c0_129 = arith.constant 0 : index
    %177 = vector.load %arg3[%c5, %c0_128, %c0_129] : memref<9x128x128xbf16, #tpu.memory_space<vmem>>, vector<1x128x128xbf16>
    %178 = vector.shape_cast %177 : vector<1x128x128xbf16> to vector<128x128xbf16>
    %cst_130 = arith.constant dense<0.000000e+00> : vector<512x128xf32>
    %179 = tpu.matmul %176, %178, %cst_130 {dimension_numbers = #tpu.dot_dimension_numbers<[1], [0], [0], [1], [0, 0, 1, 1], [], []>} : vector<512x128xbf16>, vector<128x128xbf16>, vector<512x128xf32> -> vector<512x128xf32>
    %180 = arith.addf %173, %179 : vector<512x128xf32>
    %c0_131 = arith.constant 0 : index
    %c2_132 = arith.constant 2 : index
    %c0_133 = arith.constant 0 : index
    %c0_134 = arith.constant 0 : index
    %181 = vector.load %arg13[%c0_131, %c2_132, %c0_133, %c0_134] : memref<2x18x24x128xf32, #tpu.memory_space<vmem>>, vector<2x16x16x128xf32>
    %182 = vector.shape_cast %181 : vector<2x16x16x128xf32> to vector<512x128xf32>
    %183 = arith.truncf %182 : vector<512x128xf32> to vector<512x128xbf16>
    %c6 = arith.constant 6 : index
    %c0_135 = arith.constant 0 : index
    %c0_136 = arith.constant 0 : index
    %184 = vector.load %arg3[%c6, %c0_135, %c0_136] : memref<9x128x128xbf16, #tpu.memory_space<vmem>>, vector<1x128x128xbf16>
    %185 = vector.shape_cast %184 : vector<1x128x128xbf16> to vector<128x128xbf16>
    %cst_137 = arith.constant dense<0.000000e+00> : vector<512x128xf32>
    %186 = tpu.matmul %183, %185, %cst_137 {dimension_numbers = #tpu.dot_dimension_numbers<[1], [0], [0], [1], [0, 0, 1, 1], [], []>} : vector<512x128xbf16>, vector<128x128xbf16>, vector<512x128xf32> -> vector<512x128xf32>
    %187 = arith.addf %180, %186 : vector<512x128xf32>
    %c0_138 = arith.constant 0 : index
    %c2_139 = arith.constant 2 : index
    %c1_140 = arith.constant 1 : index
    %c0_141 = arith.constant 0 : index
    %188 = vector.load %arg13[%c0_138, %c2_139, %c1_140, %c0_141] : memref<2x18x24x128xf32, #tpu.memory_space<vmem>>, vector<2x16x16x128xf32>
    %189 = vector.shape_cast %188 : vector<2x16x16x128xf32> to vector<512x128xf32>
    %190 = arith.truncf %189 : vector<512x128xf32> to vector<512x128xbf16>
    %c7 = arith.constant 7 : index
    %c0_142 = arith.constant 0 : index
    %c0_143 = arith.constant 0 : index
    %191 = vector.load %arg3[%c7, %c0_142, %c0_143] : memref<9x128x128xbf16, #tpu.memory_space<vmem>>, vector<1x128x128xbf16>
    %192 = vector.shape_cast %191 : vector<1x128x128xbf16> to vector<128x128xbf16>
    %cst_144 = arith.constant dense<0.000000e+00> : vector<512x128xf32>
    %193 = tpu.matmul %190, %192, %cst_144 {dimension_numbers = #tpu.dot_dimension_numbers<[1], [0], [0], [1], [0, 0, 1, 1], [], []>} : vector<512x128xbf16>, vector<128x128xbf16>, vector<512x128xf32> -> vector<512x128xf32>
    %194 = arith.addf %187, %193 : vector<512x128xf32>
    %c0_145 = arith.constant 0 : index
    %c2_146 = arith.constant 2 : index
    %c2_147 = arith.constant 2 : index
    %c0_148 = arith.constant 0 : index
    %195 = vector.load %arg13[%c0_145, %c2_146, %c2_147, %c0_148] : memref<2x18x24x128xf32, #tpu.memory_space<vmem>>, vector<2x16x16x128xf32>
    %196 = vector.shape_cast %195 : vector<2x16x16x128xf32> to vector<512x128xf32>
    %197 = arith.truncf %196 : vector<512x128xf32> to vector<512x128xbf16>
    %c8 = arith.constant 8 : index
    %c0_149 = arith.constant 0 : index
    %c0_150 = arith.constant 0 : index
    %198 = vector.load %arg3[%c8, %c0_149, %c0_150] : memref<9x128x128xbf16, #tpu.memory_space<vmem>>, vector<1x128x128xbf16>
    %199 = vector.shape_cast %198 : vector<1x128x128xbf16> to vector<128x128xbf16>
    %cst_151 = arith.constant dense<0.000000e+00> : vector<512x128xf32>
    %200 = tpu.matmul %197, %199, %cst_151 {dimension_numbers = #tpu.dot_dimension_numbers<[1], [0], [0], [1], [0, 0, 1, 1], [], []>} : vector<512x128xbf16>, vector<128x128xbf16>, vector<512x128xf32> -> vector<512x128xf32>
    %201 = arith.addf %194, %200 : vector<512x128xf32>
    %c0_152 = arith.constant 0 : index
    %c0_153 = arith.constant 0 : index
    %202 = vector.load %arg8[%c0_152, %c0_153] : memref<1x128xf32, #tpu.memory_space<vmem>>, vector<1x128xf32>
    %c0_154 = arith.constant 0 : index
    %c0_155 = arith.constant 0 : index
    %203 = vector.load %arg9[%c0_154, %c0_155] : memref<1x128xf32, #tpu.memory_space<vmem>>, vector<1x128xf32>
    %204 = vector.extract_strided_slice %201 {offsets = [0, 0], sizes = [1, 128], strides = [1, 1]} : vector<512x128xf32> to vector<1x128xf32>
    %205 = vector.broadcast %204 : vector<1x128xf32> to vector<512x128xf32>
    %206 = arith.subf %201, %205 : vector<512x128xf32>
    %cst_156 = arith.constant dense<0.000000e+00> : vector<128xf32>
    %207 = vector.multi_reduction <add>, %206, %cst_156 [0] : vector<512x128xf32> to vector<128xf32>
    %208 = vector.shape_cast %207 : vector<128xf32> to vector<1x128xf32>
    %209 = arith.mulf %206, %206 : vector<512x128xf32>
    %cst_157 = arith.constant dense<0.000000e+00> : vector<128xf32>
    %210 = vector.multi_reduction <add>, %209, %cst_157 [0] : vector<512x128xf32> to vector<128xf32>
    %211 = vector.shape_cast %210 : vector<128xf32> to vector<1x128xf32>
    %cst_158 = arith.constant 0.001953125 : f32
    %212 = vector.broadcast %cst_158 : f32 to vector<1x128xf32>
    %213 = arith.mulf %208, %212 : vector<1x128xf32>
    %cst_159 = arith.constant 0.001953125 : f32
    %214 = vector.broadcast %cst_159 : f32 to vector<1x128xf32>
    %215 = arith.mulf %211, %214 : vector<1x128xf32>
    %216 = arith.mulf %213, %213 : vector<1x128xf32>
    %217 = arith.subf %215, %216 : vector<1x128xf32>
    %cst_160 = arith.constant 0.000000e+00 : f32
    %218 = vector.broadcast %cst_160 : f32 to vector<1x128xf32>
    %219 = arith.maximumf %217, %218 : vector<1x128xf32>
    %220 = arith.addf %204, %213 : vector<1x128xf32>
    %cst_161 = arith.constant 9.99999974E-6 : f32
    %221 = vector.broadcast %cst_161 : f32 to vector<1x128xf32>
    %222 = arith.addf %219, %221 : vector<1x128xf32>
    %223 = math.rsqrt %222 : vector<1x128xf32>
    %224 = arith.mulf %202, %223 : vector<1x128xf32>
    %225 = arith.mulf %220, %224 : vector<1x128xf32>
    %226 = arith.subf %203, %225 : vector<1x128xf32>
    %227 = vector.broadcast %224 : vector<1x128xf32> to vector<512x128xf32>
    %228 = arith.mulf %201, %227 : vector<512x128xf32>
    %229 = vector.broadcast %226 : vector<1x128xf32> to vector<512x128xf32>
    %230 = arith.addf %228, %229 : vector<512x128xf32>
    %231 = vector.extract_strided_slice %2 {offsets = [0, 128], sizes = [512, 128], strides = [1, 1]} : vector<512x256xf32> to vector<512x128xf32>
    %c0_162 = arith.constant 0 : index
    %c0_163 = arith.constant 0 : index
    %232 = vector.load %arg10[%c0_162, %c0_163] : memref<1x128xf32, #tpu.memory_space<vmem>>, vector<1x128xf32>
    %c0_164 = arith.constant 0 : index
    %c0_165 = arith.constant 0 : index
    %233 = vector.load %arg11[%c0_164, %c0_165] : memref<1x128xf32, #tpu.memory_space<vmem>>, vector<1x128xf32>
    %234 = vector.extract_strided_slice %231 {offsets = [0, 0], sizes = [1, 128], strides = [1, 1]} : vector<512x128xf32> to vector<1x128xf32>
    %235 = vector.broadcast %234 : vector<1x128xf32> to vector<512x128xf32>
    %236 = arith.subf %231, %235 : vector<512x128xf32>
    %cst_166 = arith.constant dense<0.000000e+00> : vector<128xf32>
    %237 = vector.multi_reduction <add>, %236, %cst_166 [0] : vector<512x128xf32> to vector<128xf32>
    %238 = vector.shape_cast %237 : vector<128xf32> to vector<1x128xf32>
    %239 = arith.mulf %236, %236 : vector<512x128xf32>
    %cst_167 = arith.constant dense<0.000000e+00> : vector<128xf32>
    %240 = vector.multi_reduction <add>, %239, %cst_167 [0] : vector<512x128xf32> to vector<128xf32>
    %241 = vector.shape_cast %240 : vector<128xf32> to vector<1x128xf32>
    %cst_168 = arith.constant 0.001953125 : f32
    %242 = vector.broadcast %cst_168 : f32 to vector<1x128xf32>
    %243 = arith.mulf %238, %242 : vector<1x128xf32>
    %cst_169 = arith.constant 0.001953125 : f32
    %244 = vector.broadcast %cst_169 : f32 to vector<1x128xf32>
    %245 = arith.mulf %241, %244 : vector<1x128xf32>
    %246 = arith.mulf %243, %243 : vector<1x128xf32>
    %247 = arith.subf %245, %246 : vector<1x128xf32>
    %cst_170 = arith.constant 0.000000e+00 : f32
    %248 = vector.broadcast %cst_170 : f32 to vector<1x128xf32>
    %249 = arith.maximumf %247, %248 : vector<1x128xf32>
    %250 = arith.addf %234, %243 : vector<1x128xf32>
    %cst_171 = arith.constant 9.99999974E-6 : f32
    %251 = vector.broadcast %cst_171 : f32 to vector<1x128xf32>
    %252 = arith.addf %249, %251 : vector<1x128xf32>
    %253 = math.rsqrt %252 : vector<1x128xf32>
    %254 = arith.mulf %232, %253 : vector<1x128xf32>
    %255 = arith.mulf %250, %254 : vector<1x128xf32>
    %256 = arith.subf %233, %255 : vector<1x128xf32>
    %257 = vector.broadcast %254 : vector<1x128xf32> to vector<512x128xf32>
    %258 = arith.mulf %231, %257 : vector<512x128xf32>
    %259 = vector.broadcast %256 : vector<1x128xf32> to vector<512x128xf32>
    %260 = arith.addf %258, %259 : vector<512x128xf32>
    %261 = arith.addf %230, %260 : vector<512x128xf32>
    %cst_172 = arith.constant 0.000000e+00 : f32
    %262 = vector.broadcast %cst_172 : f32 to vector<512x128xf32>
    %263 = arith.maximumf %261, %262 : vector<512x128xf32>
    %c0_173 = arith.constant 0 : index
    %c0_174 = arith.constant 0 : index
    %264 = vector.load %arg12[%c0_173, %c0_174] : memref<512x128xf32, #tpu.memory_space<vmem>>, vector<512x128xf32>
    tpu.vector_store %arg12[%c0_173, %c0_174], %263 {strides = array<i32>} : memref<512x128xf32, #tpu.memory_space<vmem>>, vector<512x128xf32>,
    return
  }
}

</mosaic_0001>

<llo_original>
// kernel: cnn_block_forward.1
$region0: #{cnn_block_forward.1}
  #allocation0 [shape = 'u32[]', space=smem, size = 0x4, offset = 0x4, fixed_abs, tag = 'smem constant byte address 0x4 - core index']
  #allocation1 [shape = 'u32[144,128]{1,0:T(1,128)}', space=vmem, size = 0x12000, scoped, tag = 'internal scratch']
  #allocation2 [shape = 'f32[2,18,24,128]{3,2,1,0:T(8,128)}', space=vmem, size = 0x6c000, scoped, tag = 'scratch operand']
  %s0 = inlined_call_operand.vmem [shape: bf16[512,128], index: 0, kind: input, shape index: {}]
  %s1 = inlined_call_operand.vmem [shape: bf16[128,256], index: 1, kind: input, shape index: {}]
  %s2 = inlined_call_operand.vmem [shape: f32[9,128], index: 2, kind: input, shape index: {}]
  %s3 = inlined_call_operand.vmem [shape: bf16[9,128,128], index: 3, kind: input, shape index: {}]
  %s4 = inlined_call_operand.vmem [shape: f32[1,128], index: 4, kind: input, shape index: {}]
  %s5 = inlined_call_operand.vmem [shape: f32[1,128], index: 5, kind: input, shape index: {}]
  %s6 = inlined_call_operand.vmem [shape: f32[1,128], index: 6, kind: input, shape index: {}]
  %s7 = inlined_call_operand.vmem [shape: f32[1,128], index: 7, kind: input, shape index: {}]
  %s8 = inlined_call_operand.vmem [shape: f32[1,128], index: 8, kind: input, shape index: {}]
  %s9 = inlined_call_operand.vmem [shape: f32[1,128], index: 9, kind: input, shape index: {}]
  %s10 = inlined_call_operand.vmem [shape: f32[1,128], index: 10, kind: input, shape index: {}]
  %s11 = inlined_call_operand.vmem [shape: f32[1,128], index: 11, kind: input, shape index: {}]
  %s12 = inlined_call_operand.vmem [shape: f32[512,128], index: 12, kind: output, shape index: {}]
  %s13 = sld [smem:[#allocation0]]
  $region58: #{cnn_block_forward.1} parent=0
    _
  %s15 = ssub.s32 1, %s13
  %s16 = scalar_select 0, %s15, %s13
  // Predicated region
  $region2: #{cnn_block_forward.1} parent=0 // pred_check
    _
  $region3: #{cnn_block_forward.1} parent=0 // pred_check_branch
    %18 = sbr.rel (0) target = $region5
  $region4: #{cnn_block_forward.1} parent=0 // pred_region
    _
  $region5: #{cnn_block_forward.1} parent=0 // pred_fallthru
    _
  // Predicated region
  $region6: #{cnn_block_forward.1} parent=0 // pred_check
    _
  $region7: #{cnn_block_forward.1} parent=0 // pred_check_branch
    %20 = sbr.rel (0) target = $region9
  $region8: #{cnn_block_forward.1} parent=0 // pred_region
    _
  $region9: #{cnn_block_forward.1} parent=0 // pred_fallthru
    _
  // Predicated region
  $region10: #{cnn_block_forward.1} parent=0 // pred_check
    _
  $region11: #{cnn_block_forward.1} parent=0 // pred_check_branch
    %22 = sbr.rel (0) target = $region13
  $region12: #{cnn_block_forward.1} parent=0 // pred_region
    _
  $region13: #{cnn_block_forward.1} parent=0 // pred_fallthru
    _
  // Predicated region
  $region14: #{cnn_block_forward.1} parent=0 // pred_check
    _
  $region15: #{cnn_block_forward.1} parent=0 // pred_check_branch
    %24 = sbr.rel (0) target = $region17
  $region16: #{cnn_block_forward.1} parent=0 // pred_region
    _
  $region17: #{cnn_block_forward.1} parent=0 // pred_fallthru
    _
  // Predicated region
  $region18: #{cnn_block_forward.1} parent=0 // pred_check
    _
  $region19: #{cnn_block_forward.1} parent=0 // pred_check_branch
    %26 = sbr.rel (0) target = $region21
  $region20: #{cnn_block_forward.1} parent=0 // pred_region
    _
  $region21: #{cnn_block_forward.1} parent=0 // pred_fallthru
    _
  // Predicated region
  $region22: #{cnn_block_forward.1} parent=0 // pred_check
    _
  $region23: #{cnn_block_forward.1} parent=0 // pred_check_branch
    %28 = sbr.rel (0) target = $region25
  $region24: #{cnn_block_forward.1} parent=0 // pred_region
    _
  $region25: #{cnn_block_forward.1} parent=0 // pred_fallthru
    _
  // Predicated region
  $region26: #{cnn_block_forward.1} parent=0 // pred_check
    _
  $region27: #{cnn_block_forward.1} parent=0 // pred_check_branch
    %30 = sbr.rel (0) target = $region29
  $region28: #{cnn_block_forward.1} parent=0 // pred_region
    _
  $region29: #{cnn_block_forward.1} parent=0 // pred_fallthru
    _
  // Predicated region
  $region30: #{cnn_block_forward.1} parent=0 // pred_check
    _
  $region31: #{cnn_block_forward.1} parent=0 // pred_check_branch
    %32 = sbr.rel (0) target = $region33
  $region32: #{cnn_block_forward.1} parent=0 // pred_region
    _
  $region33: #{cnn_block_forward.1} parent=0 // pred_fallthru
    _
  // Predicated region
  $region34: #{cnn_block_forward.1} parent=0 // pred_check
    _
  $region35: #{cnn_block_forward.1} parent=0 // pred_check_branch
    %34 = sbr.rel (0) target = $region37
  $region36: #{cnn_block_forward.1} parent=0 // pred_region
    _
  $region37: #{cnn_block_forward.1} parent=0 // pred_fallthru
    _
  // Predicated region
  $region38: #{cnn_block_forward.1} parent=0 // pred_check
    _
  $region39: #{cnn_block_forward.1} parent=0 // pred_check_branch
    %36 = sbr.rel (0) target = $region41
  $region40: #{cnn_block_forward.1} parent=0 // pred_region
    _
  $region41: #{cnn_block_forward.1} parent=0 // pred_fallthru
    _
  // Predicated region
  $region42: #{cnn_block_forward.1} parent=0 // pred_check
    _
  $region43: #{cnn_block_forward.1} parent=0 // pred_check_branch
    %38 = sbr.rel (0) target = $region45
  $region44: #{cnn_block_forward.1} parent=0 // pred_region
    _
  $region45: #{cnn_block_forward.1} parent=0 // pred_fallthru
    _
  // Predicated region
  $region46: #{cnn_block_forward.1} parent=0 // pred_check
    _
  $region47: #{cnn_block_forward.1} parent=0 // pred_check_branch
    %40 = sbr.rel (0) target = $region49
  $region48: #{cnn_block_forward.1} parent=0 // pred_region
    _
  $region49: #{cnn_block_forward.1} parent=0 // pred_fallthru
    _
  %v42 = vld [vmem:[%s0] sm:$0xf]
  %v43 = vld [vmem:[%s0 + $0x4] sm:$0xf]
  %v44 = vld [vmem:[%s0 + $0x8] sm:$0xf]
  %v45 = vld [vmem:[%s0 + $0xc] sm:$0xf]
  %v46 = vld [vmem:[%s0 + $0x10] sm:$0xf]
  %v47 = vld [vmem:[%s0 + $0x14] sm:$0xf]
  %v48 = vld [vmem:[%s0 + $0x18] sm:$0xf]
  %v49 = vld [vmem:[%s0 + $0x1c] sm:$0xf]
  %v50 = vld [vmem:[%s0 + $0x20] sm:$0xf]
  %v51 = vld [vmem:[%s0 + $0x24] sm:$0xf]
  %v52 = vld [vmem:[%s0 + $0x28] sm:$0xf]
  %v53 = vld [vmem:[%s0 + $0x2c] sm:$0xf]
  %v54 = vld [vmem:[%s0 + $0x30] sm:$0xf]
  %v55 = vld [vmem:[%s0 + $0x34] sm:$0xf]
  %v56 = vld [vmem:[%s0 + $0x38] sm:$0xf]
  %v57 = vld [vmem:[%s0 + $0x3c] sm:$0xf]
  %v58 = vld [vmem:[%s0 + $0x40] sm:$0xf]
  %v59 = vld [vmem:[%s0 + $0x44] sm:$0xf]
  %v60 = vld [vmem:[%s0 + $0x48] sm:$0xf]
  %v61 = vld [vmem:[%s0 + $0x4c] sm:$0xf]
  %v62 = vld [vmem:[%s0 + $0x50] sm:$0xf]
  %v63 = vld [vmem:[%s0 + $0x54] sm:$0xf]
  %v64 = vld [vmem:[%s0 + $0x58] sm:$0xf]
  %v65 = vld [vmem:[%s0 + $0x5c] sm:$0xf]
  %v66 = vld [vmem:[%s0 + $0x60] sm:$0xf]
  %v67 = vld [vmem:[%s0 + $0x64] sm:$0xf]
  %v68 = vld [vmem:[%s0 + $0x68] sm:$0xf]
  %v69 = vld [vmem:[%s0 + $0x6c] sm:$0xf]
  %v70 = vld [vmem:[%s0 + $0x70] sm:$0xf]
  %v71 = vld [vmem:[%s0 + $0x74] sm:$0xf]
  %v72 = vld [vmem:[%s0 + $0x78] sm:$0xf]
  %v73 = vld [vmem:[%s0 + $0x7c] sm:$0xf]
  %v74 = vld [vmem:[%s0 + $0x80] sm:$0xf]
  %v75 = vld [vmem:[%s0 + $0x84] sm:$0xf]
  %v76 = vld [vmem:[%s0 + $0x88] sm:$0xf]
  %v77 = vld [vmem:[%s0 + $0x8c] sm:$0xf]
  %v78 = vld [vmem:[%s0 + $0x90] sm:$0xf]
  %v79 = vld [vmem:[%s0 + $0x94] sm:$0xf]
  %v80 = vld [vmem:[%s0 + $0x98] sm:$0xf]
  %v81 = vld [vmem:[%s0 + $0x9c] sm:$0xf]
  %v82 = vld [vmem:[%s0 + $0xa0] sm:$0xf]
  %v83 = vld [vmem:[%s0 + $0xa4] sm:$0xf]
  %v84 = vld [vmem:[%s0 + $0xa8] sm:$0xf]
  %v85 = vld [vmem:[%s0 + $0xac] sm:$0xf]
  %v86 = vld [vmem:[%s0 + $0xb0] sm:$0xf]
  %v87 = vld [vmem:[%s0 + $0xb4] sm:$0xf]
  %v88 = vld [vmem:[%s0 + $0xb8] sm:$0xf]
  %v89 = vld [vmem:[%s0 + $0xbc] sm:$0xf]
  %v90 = vld [vmem:[%s0 + $0xc0] sm:$0xf]
  %v91 = vld [vmem:[%s0 + $0xc4] sm:$0xf]
  %v92 = vld [vmem:[%s0 + $0xc8] sm:$0xf]
  %v93 = vld [vmem:[%s0 + $0xcc] sm:$0xf]
  %v94 = vld [vmem:[%s0 + $0xd0] sm:$0xf]
  %v95 = vld [vmem:[%s0 + $0xd4] sm:$0xf]
  %v96 = vld [vmem:[%s0 + $0xd8] sm:$0xf]
  %v97 = vld [vmem:[%s0 + $0xdc] sm:$0xf]
  %v98 = vld [vmem:[%s0 + $0xe0] sm:$0xf]
  %v99 = vld [vmem:[%s0 + $0xe4] sm:$0xf]
  %v100 = vld [vmem:[%s0 + $0xe8] sm:$0xf]
  %v101 = vld [vmem:[%s0 + $0xec] sm:$0xf]
  %v102 = vld [vmem:[%s0 + $0xf0] sm:$0xf]
  %v103 = vld [vmem:[%s0 + $0xf4] sm:$0xf]
  %v104 = vld [vmem:[%s0 + $0xf8] sm:$0xf]
  %v105 = vld [vmem:[%s0 + $0xfc] sm:$0xf]
  %v106 = vld [vmem:[%s1] sm:$0xff]
  %v107 = vld [vmem:[%s1 + $0x8] sm:$0xff]
  %v108 = vld [vmem:[%s1 + $0x10] sm:$0xff]
  %v109 = vld [vmem:[%s1 + $0x18] sm:$0xff]
  %v110 = vld [vmem:[%s1 + $0x20] sm:$0xff]
  %v111 = vld [vmem:[%s1 + $0x28] sm:$0xff]
  %v112 = vld [vmem:[%s1 + $0x30] sm:$0xff]
  %v113 = vld [vmem:[%s1 + $0x38] sm:$0xff]
  %v114 = vld [vmem:[%s1 + $0x40] sm:$0xff]
  %v115 = vld [vmem:[%s1 + $0x48] sm:$0xff]
  %v116 = vld [vmem:[%s1 + $0x50] sm:$0xff]
  %v117 = vld [vmem:[%s1 + $0x58] sm:$0xff]
  %v118 = vld [vmem:[%s1 + $0x60] sm:$0xff]
  %v119 = vld [vmem:[%s1 + $0x68] sm:$0xff]
  %v120 = vld [vmem:[%s1 + $0x70] sm:$0xff]
  %v121 = vld [vmem:[%s1 + $0x78] sm:$0xff]
  %v186 = vunpack.c.l.b16 %v42
  %v187 = vunpack.c.l.b16 %v43
  %v188 = vunpack.c.l.b16 %v44
  %v189 = vunpack.c.l.b16 %v45
  %v190 = vunpack.c.l.b16 %v46
  %v191 = vunpack.c.l.b16 %v47
  %v192 = vunpack.c.l.b16 %v48
  %v193 = vunpack.c.l.b16 %v49
  %v194 = vunpack.c.l.b16 %v50
  %v195 = vunpack.c.l.b16 %v51
  %v196 = vunpack.c.l.b16 %v52
  %v197 = vunpack.c.l.b16 %v53
  %v198 = vunpack.c.l.b16 %v54
  %v199 = vunpack.c.l.b16 %v55
  %v200 = vunpack.c.l.b16 %v56
  %v201 = vunpack.c.l.b16 %v57
  %v202 = vunpack.c.l.b16 %v58
  %v203 = vunpack.c.l.b16 %v59
  %v204 = vunpack.c.l.b16 %v60
  %v205 = vunpack.c.l.b16 %v61
  %v206 = vunpack.c.l.b16 %v62
  %v207 = vunpack.c.l.b16 %v63
  %v208 = vunpack.c.l.b16 %v64
  %v209 = vunpack.c.l.b16 %v65
  %v210 = vunpack.c.l.b16 %v66
  %v211 = vunpack.c.l.b16 %v67
  %v212 = vunpack.c.l.b16 %v68
  %v213 = vunpack.c.l.b16 %v69
  %v214 = vunpack.c.l.b16 %v70
  %v215 = vunpack.c.l.b16 %v71
  %v216 = vunpack.c.l.b16 %v72
  %v217 = vunpack.c.l.b16 %v73
  %v218 = vunpack.c.l.b16 %v74
  %v219 = vunpack.c.l.b16 %v75
  %v220 = vunpack.c.l.b16 %v76
  %v221 = vunpack.c.l.b16 %v77
  %v222 = vunpack.c.l.b16 %v78
  %v223 = vunpack.c.l.b16 %v79
  %v224 = vunpack.c.l.b16 %v80
  %v225 = vunpack.c.l.b16 %v81
  %v226 = vunpack.c.l.b16 %v82
  %v227 = vunpack.c.l.b16 %v83
  %v228 = vunpack.c.l.b16 %v84
  %v229 = vunpack.c.l.b16 %v85
  %v230 = vunpack.c.l.b16 %v86
  %v231 = vunpack.c.l.b16 %v87
  %v232 = vunpack.c.l.b16 %v88
  %v233 = vunpack.c.l.b16 %v89
  %v234 = vunpack.c.l.b16 %v90
  %v235 = vunpack.c.l.b16 %v91
  %v236 = vunpack.c.l.b16 %v92
  %v237 = vunpack.c.l.b16 %v93
  %v238 = vunpack.c.l.b16 %v94
  %v239 = vunpack.c.l.b16 %v95
  %v240 = vunpack.c.l.b16 %v96
  %v241 = vunpack.c.l.b16 %v97
  %v242 = vunpack.c.l.b16 %v98
  %v243 = vunpack.c.l.b16 %v99
  %v244 = vunpack.c.l.b16 %v100
  %v245 = vunpack.c.l.b16 %v101
  %v246 = vunpack.c.l.b16 %v102
  %v247 = vunpack.c.l.b16 %v103
  %v248 = vunpack.c.l.b16 %v104
  %v249 = vunpack.c.l.b16 %v105
  %v250 = vpack.c.b16 %v187, %v186
  %v251 = vpack.c.b16 %v189, %v188
  %v252 = vpack.c.b16 %v191, %v190
  %v253 = vpack.c.b16 %v193, %v192
  %v254 = vpack.c.b16 %v195, %v194
  %v255 = vpack.c.b16 %v197, %v196
  %v256 = vpack.c.b16 %v199, %v198
  %v257 = vpack.c.b16 %v201, %v200
  %v258 = vpack.c.b16 %v203, %v202
  %v259 = vpack.c.b16 %v205, %v204
  %v260 = vpack.c.b16 %v207, %v206
  %v261 = vpack.c.b16 %v209, %v208
  %v262 = vpack.c.b16 %v211, %v210
  %v263 = vpack.c.b16 %v213, %v212
  %v264 = vpack.c.b16 %v215, %v214
  %v265 = vpack.c.b16 %v217, %v216
  %v266 = vpack.c.b16 %v219, %v218
  %v267 = vpack.c.b16 %v221, %v220
  %v268 = vpack.c.b16 %v223, %v222
  %v269 = vpack.c.b16 %v225, %v224
  %v270 = vpack.c.b16 %v227, %v226
  %v271 = vpack.c.b16 %v229, %v228
  %v272 = vpack.c.b16 %v231, %v230
  %v273 = vpack.c.b16 %v233, %v232
  %v274 = vpack.c.b16 %v235, %v234
  %v275 = vpack.c.b16 %v237, %v236
  %v276 = vpack.c.b16 %v239, %v238
  %v277 = vpack.c.b16 %v241, %v240
  %v278 = vpack.c.b16 %v243, %v242
  %v279 = vpack.c.b16 %v245, %v244
  %v280 = vpack.c.b16 %v247, %v246
  %v281 = vpack.c.b16 %v249, %v248
  %v330 = vunpack.c.l.b16 %v106
  %v331 = vunpack.c.h.b16 %v106
  %v332 = vunpack.c.l.b16 %v107
  %v333 = vunpack.c.h.b16 %v107
  %v334 = vunpack.c.l.b16 %v108
  %v335 = vunpack.c.h.b16 %v108
  %v336 = vunpack.c.l.b16 %v109
  %v337 = vunpack.c.h.b16 %v109
  %v338 = vunpack.c.l.b16 %v110
  %v339 = vunpack.c.h.b16 %v110
  %v340 = vunpack.c.l.b16 %v111
  %v341 = vunpack.c.h.b16 %v111
  %v342 = vunpack.c.l.b16 %v112
  %v343 = vunpack.c.h.b16 %v112
  %v344 = vunpack.c.l.b16 %v113
  %v345 = vunpack.c.h.b16 %v113
  %v346 = vunpack.c.l.b16 %v114
  %v347 = vunpack.c.h.b16 %v114
  %v348 = vunpack.c.l.b16 %v115
  %v349 = vunpack.c.h.b16 %v115
  %v350 = vunpack.c.l.b16 %v116
  %v351 = vunpack.c.h.b16 %v116
  %v352 = vunpack.c.l.b16 %v117
  %v353 = vunpack.c.h.b16 %v117
  %v354 = vunpack.c.l.b16 %v118
  %v355 = vunpack.c.h.b16 %v118
  %v356 = vunpack.c.l.b16 %v119
  %v357 = vunpack.c.h.b16 %v119
  %v358 = vunpack.c.l.b16 %v120
  %v359 = vunpack.c.h.b16 %v120
  %v360 = vunpack.c.l.b16 %v121
  %v361 = vunpack.c.h.b16 %v121
  %v362 = vpack.c.b16 %v332, %v330
  %v363 = vpack.c.b16 %v333, %v331
  %v364 = vpack.c.b16 %v336, %v334
  %v365 = vpack.c.b16 %v337, %v335
  %v366 = vpack.c.b16 %v340, %v338
  %v367 = vpack.c.b16 %v341, %v339
  %v368 = vpack.c.b16 %v344, %v342
  %v369 = vpack.c.b16 %v345, %v343
  %v370 = vpack.c.b16 %v348, %v346
  %v371 = vpack.c.b16 %v349, %v347
  %v372 = vpack.c.b16 %v352, %v350
  %v373 = vpack.c.b16 %v353, %v351
  %v374 = vpack.c.b16 %v356, %v354
  %v375 = vpack.c.b16 %v357, %v355
  %v376 = vpack.c.b16 %v360, %v358
  %v377 = vpack.c.b16 %v361, %v359
  %394 = vmatprep.subr.bf16.mxu0 %v363
  %395 = vmatpush1.bf16.msra.mxu0 %v362
  %396 = vmatprep.subr.bf16.mxu0 %v365
  %397 = vmatpush1.bf16.msra.mxu0 %v364
  %398 = vmatprep.subr.bf16.mxu0 %v367
  %399 = vmatpush1.bf16.msra.mxu0 %v366
  %400 = vmatprep.subr.bf16.mxu0 %v369
  %401 = vmatpush1.bf16.msra.mxu0 %v368
  %402 = vmatprep.subr.bf16.mxu0 %v371
  %403 = vmatpush1.bf16.msra.mxu0 %v370
  %404 = vmatprep.subr.bf16.mxu0 %v373
  %405 = vmatpush1.bf16.msra.mxu0 %v372
  %406 = vmatprep.subr.bf16.mxu0 %v375
  %407 = vmatpush1.bf16.msra.mxu0 %v374
  %408 = vmatprep.subr.bf16.mxu0 %v377
  %409 = vmatpush1.bf16.msra.mxu0 %v376
  %410 = vmatprep.subr.bf16.mxu0 0
  %411 = vmatpush1.bf16.msra.mxu0 0
  %412 = vmatprep.subr.bf16.mxu0 0
  %413 = vmatpush1.bf16.msra.mxu0 0
  %414 = vmatprep.subr.bf16.mxu0 0
  %415 = vmatpush1.bf16.msra.mxu0 0
  %416 = vmatprep.subr.bf16.mxu0 0
  %417 = vmatpush1.bf16.msra.mxu0 0
  %418 = vmatprep.subr.bf16.mxu0 0
  %419 = vmatpush1.bf16.msra.mxu0 0
  %420 = vmatprep.subr.bf16.mxu0 0
  %421 = vmatpush1.bf16.msra.mxu0 0
  %422 = vmatprep.subr.bf16.mxu0 0
  %423 = vmatpush1.bf16.msra.mxu0 0
  %424 = vmatprep.subr.bf16.mxu0 0
  %425 = vmatpush1.bf16.msra.mxu0 0
  %426 = vmatprep.mubr.bf16.mxu0 0
  %427 = vmatmul.mubr.bf16.gmra.mrb[0].mxu0 %v250
  %v428 = vpop.f32.mrb[0].mxu0
  %v429 = vadd.f32 0.0, %v428
  %v430 = vpop.f32.mrb[0].mxu0
  %v431 = vadd.f32 0.0, %v430
  %v432 = vpop.f32.mrb[0].mxu0
  %v433 = vadd.f32 0.0, %v432
  %v434 = vpop.f32.mrb[0].mxu0
  %v435 = vadd.f32 0.0, %v434
  %436 = vmatprep.mubr.bf16.mxu0 0
  %437 = vmatmul.mubr.bf16.gmra.mrb[0].mxu0 %v251
  %v438 = vpop.f32.mrb[0].mxu0
  %v439 = vadd.f32 0.0, %v438
  %v440 = vpop.f32.mrb[0].mxu0
  %v441 = vadd.f32 0.0, %v440
  %v442 = vpop.f32.mrb[0].mxu0
  %v443 = vadd.f32 0.0, %v442
  %v444 = vpop.f32.mrb[0].mxu0
  %v445 = vadd.f32 0.0, %v444
  %446 = vmatprep.mubr.bf16.mxu0 0
  %447 = vmatmul.mubr.bf16.gmra.mrb[0].mxu0 %v252
  %v448 = vpop.f32.mrb[0].mxu0
  %v449 = vadd.f32 0.0, %v448
  %v450 = vpop.f32.mrb[0].mxu0
  %v451 = vadd.f32 0.0, %v450
  %v452 = vpop.f32.mrb[0].mxu0
  %v453 = vadd.f32 0.0, %v452
  %v454 = vpop.f32.mrb[0].mxu0
  %v455 = vadd.f32 0.0, %v454
  %456 = vmatprep.mubr.bf16.mxu0 0
  %457 = vmatmul.mubr.bf16.gmra.mrb[0].mxu0 %v253
  %v458 = vpop.f32.mrb[0].mxu0
  %v459 = vadd.f32 0.0, %v458
  %v460 = vpop.f32.mrb[0].mxu0
  %v461 = vadd.f32 0.0, %v460
  %v462 = vpop.f32.mrb[0].mxu0
  %v463 = vadd.f32 0.0, %v462
  %v464 = vpop.f32.mrb[0].mxu0
  %v465 = vadd.f32 0.0, %v464
  %466 = vmatprep.mubr.bf16.mxu0 0
  %467 = vmatmul.mubr.bf16.gmra.mrb[0].mxu0 %v254
  %v468 = vpop.f32.mrb[0].mxu0
  %v469 = vadd.f32 0.0, %v468
  %v470 = vpop.f32.mrb[0].mxu0
  %v471 = vadd.f32 0.0, %v470
  %v472 = vpop.f32.mrb[0].mxu0
  %v473 = vadd.f32 0.0, %v472
  %v474 = vpop.f32.mrb[0].mxu0
  %v475 = vadd.f32 0.0, %v474
  %476 = vmatprep.mubr.bf16.mxu0 0
  %477 = vmatmul.mubr.bf16.gmra.mrb[0].mxu0 %v255
  %v478 = vpop.f32.mrb[0].mxu0
  %v479 = vadd.f32 0.0, %v478
  %v480 = vpop.f32.mrb[0].mxu0
  %v481 = vadd.f32 0.0, %v480
  %v482 = vpop.f32.mrb[0].mxu0
  %v483 = vadd.f32 0.0, %v482
  %v484 = vpop.f32.mrb[0].mxu0
  %v485 = vadd.f32 0.0, %v484
  %486 = vmatprep.mubr.bf16.mxu0 0
  %487 = vmatmul.mubr.bf16.gmra.mrb[0].mxu0 %v256
  %v488 = vpop.f32.mrb[0].mxu0
  %v489 = vadd.f32 0.0, %v488
  %v490 = vpop.f32.mrb[0].mxu0
  %v491 = vadd.f32 0.0, %v490
  %v492 = vpop.f32.mrb[0].mxu0
  %v493 = vadd.f32 0.0, %v492
  %v494 = vpop.f32.mrb[0].mxu0
  %v495 = vadd.f32 0.0, %v494
  %496 = vmatprep.mubr.bf16.mxu0 0
  %497 = vmatmul.mubr.bf16.gmra.mrb[0].mxu0 %v257
  %v498 = vpop.f32.mrb[0].mxu0
  %v499 = vadd.f32 0.0, %v498
  %v500 = vpop.f32.mrb[0].mxu0
  %v501 = vadd.f32 0.0, %v500
  %v502 = vpop.f32.mrb[0].mxu0
  %v503 = vadd.f32 0.0, %v502
  %v504 = vpop.f32.mrb[0].mxu0
  %v505 = vadd.f32 0.0, %v504
  %506 = vmatprep.mubr.bf16.mxu0 0
  %507 = vmatmul.mubr.bf16.gmra.mrb[0].mxu0 %v258
  %v508 = vpop.f32.mrb[0].mxu0
  %v509 = vadd.f32 0.0, %v508
  %v510 = vpop.f32.mrb[0].mxu0
  %v511 = vadd.f32 0.0, %v510
  %v512 = vpop.f32.mrb[0].mxu0
  %v513 = vadd.f32 0.0, %v512
  %v514 = vpop.f32.mrb[0].mxu0
  %v515 = vadd.f32 0.0, %v514
  %516 = vmatprep.mubr.bf16.mxu0 0
  %517 = vmatmul.mubr.bf16.gmra.mrb[0].mxu0 %v259
  %v518 = vpop.f32.mrb[0].mxu0
  %v519 = vadd.f32 0.0, %v518
  %v520 = vpop.f32.mrb[0].mxu0
  %v521 = vadd.f32 0.0, %v520
  %v522 = vpop.f32.mrb[0].mxu0
  %v523 = vadd.f32 0.0, %v522
  %v524 = vpop.f32.mrb[0].mxu0
  %v525 = vadd.f32 0.0, %v524
  %526 = vmatprep.mubr.bf16.mxu0 0
  %527 = vmatmul.mubr.bf16.gmra.mrb[0].mxu0 %v260
  %v528 = vpop.f32.mrb[0].mxu0
  %v529 = vadd.f32 0.0, %v528
  %v530 = vpop.f32.mrb[0].mxu0
  %v531 = vadd.f32 0.0, %v530
  %v532 = vpop.f32.mrb[0].mxu0
  %v533 = vadd.f32 0.0, %v532
  %v534 = vpop.f32.mrb[0].mxu0
  %v535 = vadd.f32 0.0, %v534
  %536 = vmatprep.mubr.bf16.mxu0 0
  %537 = vmatmul.mubr.bf16.gmra.mrb[0].mxu0 %v261
  %v538 = vpop.f32.mrb[0].mxu0
  %v539 = vadd.f32 0.0, %v538
  %v540 = vpop.f32.mrb[0].mxu0
  %v541 = vadd.f32 0.0, %v540
  %v542 = vpop.f32.mrb[0].mxu0
  %v543 = vadd.f32 0.0, %v542
  %v544 = vpop.f32.mrb[0].mxu0
  %v545 = vadd.f32 0.0, %v544
  %546 = vmatprep.mubr.bf16.mxu0 0
  %547 = vmatmul.mubr.bf16.gmra.mrb[0].mxu0 %v262
  %v548 = vpop.f32.mrb[0].mxu0
  %v549 = vadd.f32 0.0, %v548
  %v550 = vpop.f32.mrb[0].mxu0
  %v551 = vadd.f32 0.0, %v550
  %v552 = vpop.f32.mrb[0].mxu0
  %v553 = vadd.f32 0.0, %v552
  %v554 = vpop.f32.mrb[0].mxu0
  %v555 = vadd.f32 0.0, %v554
  %556 = vmatprep.mubr.bf16.mxu0 0
  %557 = vmatmul.mubr.bf16.gmra.mrb[0].mxu0 %v263
  %v558 = vpop.f32.mrb[0].mxu0
  %v559 = vadd.f32 0.0, %v558
  %v560 = vpop.f32.mrb[0].mxu0
  %v561 = vadd.f32 0.0, %v560
  %v562 = vpop.f32.mrb[0].mxu0
  %v563 = vadd.f32 0.0, %v562
  %v564 = vpop.f32.mrb[0].mxu0
  %v565 = vadd.f32 0.0, %v564
  %566 = vmatprep.mubr.bf16.mxu0 0
  %567 = vmatmul.mubr.bf16.gmra.mrb[0].mxu0 %v264
  %v568 = vpop.f32.mrb[0].mxu0
  %v569 = vadd.f32 0.0, %v568
  %v570 = vpop.f32.mrb[0].mxu0
  %v571 = vadd.f32 0.0, %v570
  %v572 = vpop.f32.mrb[0].mxu0
  %v573 = vadd.f32 0.0, %v572
  %v574 = vpop.f32.mrb[0].mxu0
  %v575 = vadd.f32 0.0, %v574
  %576 = vmatprep.mubr.bf16.mxu0 0
  %577 = vmatmul.mubr.bf16.gmra.mrb[0].mxu0 %v265
  %v578 = vpop.f32.mrb[0].mxu0
  %v579 = vadd.f32 0.0, %v578
  %v580 = vpop.f32.mrb[0].mxu0
  %v581 = vadd.f32 0.0, %v580
  %v582 = vpop.f32.mrb[0].mxu0
  %v583 = vadd.f32 0.0, %v582
  %v584 = vpop.f32.mrb[0].mxu0
  %v585 = vadd.f32 0.0, %v584
  %586 = vmatprep.mubr.bf16.mxu0 0
  %587 = vmatmul.mubr.bf16.gmra.mrb[0].mxu0 %v266
  %v588 = vpop.f32.mrb[0].mxu0
  %v589 = vadd.f32 0.0, %v588
  %v590 = vpop.f32.mrb[0].mxu0
  %v591 = vadd.f32 0.0, %v590
  %v592 = vpop.f32.mrb[0].mxu0
  %v593 = vadd.f32 0.0, %v592
  %v594 = vpop.f32.mrb[0].mxu0
  %v595 = vadd.f32 0.0, %v594
  %596 = vmatprep.mubr.bf16.mxu0 0
  %597 = vmatmul.mubr.bf16.gmra.mrb[0].mxu0 %v267
  %v598 = vpop.f32.mrb[0].mxu0
  %v599 = vadd.f32 0.0, %v598
  %v600 = vpop.f32.mrb[0].mxu0
  %v601 = vadd.f32 0.0, %v600
  %v602 = vpop.f32.mrb[0].mxu0
  %v603 = vadd.f32 0.0, %v602
  %v604 = vpop.f32.mrb[0].mxu0
  %v605 = vadd.f32 0.0, %v604
  %606 = vmatprep.mubr.bf16.mxu0 0
  %607 = vmatmul.mubr.bf16.gmra.mrb[0].mxu0 %v268
  %v608 = vpop.f32.mrb[0].mxu0
  %v609 = vadd.f32 0.0, %v608
  %v610 = vpop.f32.mrb[0].mxu0
  %v611 = vadd.f32 0.0, %v610
  %v612 = vpop.f32.mrb[0].mxu0
  %v613 = vadd.f32 0.0, %v612
  %v614 = vpop.f32.mrb[0].mxu0
  %v615 = vadd.f32 0.0, %v614
  %616 = vmatprep.mubr.bf16.mxu0 0
  %617 = vmatmul.mubr.bf16.gmra.mrb[0].mxu0 %v269
  %v618 = vpop.f32.mrb[0].mxu0
  %v619 = vadd.f32 0.0, %v618
  %v620 = vpop.f32.mrb[0].mxu0
  %v621 = vadd.f32 0.0, %v620
  %v622 = vpop.f32.mrb[0].mxu0
  %v623 = vadd.f32 0.0, %v622
  %v624 = vpop.f32.mrb[0].mxu0
  %v625 = vadd.f32 0.0, %v624
  %626 = vmatprep.mubr.bf16.mxu0 0
  %627 = vmatmul.mubr.bf16.gmra.mrb[0].mxu0 %v270
  %v628 = vpop.f32.mrb[0].mxu0
  %v629 = vadd.f32 0.0, %v628
  %v630 = vpop.f32.mrb[0].mxu0
  %v631 = vadd.f32 0.0, %v630
  %v632 = vpop.f32.mrb[0].mxu0
  %v633 = vadd.f32 0.0, %v632
  %v634 = vpop.f32.mrb[0].mxu0
  %v635 = vadd.f32 0.0, %v634
  %636 = vmatprep.mubr.bf16.mxu0 0
  %637 = vmatmul.mubr.bf16.gmra.mrb[0].mxu0 %v271
  %v638 = vpop.f32.mrb[0].mxu0
  %v639 = vadd.f32 0.0, %v638
  %v640 = vpop.f32.mrb[0].mxu0
  %v641 = vadd.f32 0.0, %v640
  %v642 = vpop.f32.mrb[0].mxu0
  %v643 = vadd.f32 0.0, %v642
  %v644 = vpop.f32.mrb[0].mxu0
  %v645 = vadd.f32 0.0, %v644
  %646 = vmatprep.mubr.bf16.mxu0 0
  %647 = vmatmul.mubr.bf16.gmra.mrb[0].mxu0 %v272
  %v648 = vpop.f32.mrb[0].mxu0
  %v649 = vadd.f32 0.0, %v648
  %v650 = vpop.f32.mrb[0].mxu0
  %v651 = vadd.f32 0.0, %v650
  %v652 = vpop.f32.mrb[0].mxu0
  %v653 = vadd.f32 0.0, %v652
  %v654 = vpop.f32.mrb[0].mxu0
  %v655 = vadd.f32 0.0, %v654
  %656 = vmatprep.mubr.bf16.mxu0 0
  %657 = vmatmul.mubr.bf16.gmra.mrb[0].mxu0 %v273
  %v658 = vpop.f32.mrb[0].mxu0
  %v659 = vadd.f32 0.0, %v658
  %v660 = vpop.f32.mrb[0].mxu0
  %v661 = vadd.f32 0.0, %v660
  %v662 = vpop.f32.mrb[0].mxu0
  %v663 = vadd.f32 0.0, %v662
  %v664 = vpop.f32.mrb[0].mxu0
  %v665 = vadd.f32 0.0, %v664
  %666 = vmatprep.mubr.bf16.mxu0 0
  %667 = vmatmul.mubr.bf16.gmra.mrb[0].mxu0 %v274
  %v668 = vpop.f32.mrb[0].mxu0
  %v669 = vadd.f32 0.0, %v668
  %v670 = vpop.f32.mrb[0].mxu0
  %v671 = vadd.f32 0.0, %v670
  %v672 = vpop.f32.mrb[0].mxu0
  %v673 = vadd.f32 0.0, %v672
  %v674 = vpop.f32.mrb[0].mxu0
  %v675 = vadd.f32 0.0, %v674
  %676 = vmatprep.mubr.bf16.mxu0 0
  %677 = vmatmul.mubr.bf16.gmra.mrb[0].mxu0 %v275
  %v678 = vpop.f32.mrb[0].mxu0
  %v679 = vadd.f32 0.0, %v678
  %v680 = vpop.f32.mrb[0].mxu0
  %v681 = vadd.f32 0.0, %v680
  %v682 = vpop.f32.mrb[0].mxu0
  %v683 = vadd.f32 0.0, %v682
  %v684 = vpop.f32.mrb[0].mxu0
  %v685 = vadd.f32 0.0, %v684
  %686 = vmatprep.mubr.bf16.mxu0 0
  %687 = vmatmul.mubr.bf16.gmra.mrb[0].mxu0 %v276
  %v688 = vpop.f32.mrb[0].mxu0
  %v689 = vadd.f32 0.0, %v688
  %v690 = vpop.f32.mrb[0].mxu0
  %v691 = vadd.f32 0.0, %v690
  %v692 = vpop.f32.mrb[0].mxu0
  %v693 = vadd.f32 0.0, %v692
  %v694 = vpop.f32.mrb[0].mxu0
  %v695 = vadd.f32 0.0, %v694
  %696 = vmatprep.mubr.bf16.mxu0 0
  %697 = vmatmul.mubr.bf16.gmra.mrb[0].mxu0 %v277
  %v698 = vpop.f32.mrb[0].mxu0
  %v699 = vadd.f32 0.0, %v698
  %v700 = vpop.f32.mrb[0].mxu0
  %v701 = vadd.f32 0.0, %v700
  %v702 = vpop.f32.mrb[0].mxu0
  %v703 = vadd.f32 0.0, %v702
  %v704 = vpop.f32.mrb[0].mxu0
  %v705 = vadd.f32 0.0, %v704
  %706 = vmatprep.mubr.bf16.mxu0 0
  %707 = vmatmul.mubr.bf16.gmra.mrb[0].mxu0 %v278
  %v708 = vpop.f32.mrb[0].mxu0
  %v709 = vadd.f32 0.0, %v708
  %v710 = vpop.f32.mrb[0].mxu0
  %v711 = vadd.f32 0.0, %v710
  %v712 = vpop.f32.mrb[0].mxu0
  %v713 = vadd.f32 0.0, %v712
  %v714 = vpop.f32.mrb[0].mxu0
  %v715 = vadd.f32 0.0, %v714
  %716 = vmatprep.mubr.bf16.mxu0 0
  %717 = vmatmul.mubr.bf16.gmra.mrb[0].mxu0 %v279
  %v718 = vpop.f32.mrb[0].mxu0
  %v719 = vadd.f32 0.0, %v718
  %v720 = vpop.f32.mrb[0].mxu0
  %v721 = vadd.f32 0.0, %v720
  %v722 = vpop.f32.mrb[0].mxu0
  %v723 = vadd.f32 0.0, %v722
  %v724 = vpop.f32.mrb[0].mxu0
  %v725 = vadd.f32 0.0, %v724
  %726 = vmatprep.mubr.bf16.mxu0 0
  %727 = vmatmul.mubr.bf16.gmra.mrb[0].mxu0 %v280
  %v728 = vpop.f32.mrb[0].mxu0
  %v729 = vadd.f32 0.0, %v728
  %v730 = vpop.f32.mrb[0].mxu0
  %v731 = vadd.f32 0.0, %v730
  %v732 = vpop.f32.mrb[0].mxu0
  %v733 = vadd.f32 0.0, %v732
  %v734 = vpop.f32.mrb[0].mxu0
  %v735 = vadd.f32 0.0, %v734
  %736 = vmatprep.mubr.bf16.mxu0 0
  %737 = vmatmul.mubr.bf16.gmra.mrb[0].mxu0 %v281
  %v738 = vpop.f32.mrb[0].mxu0
  %v739 = vadd.f32 0.0, %v738
  %v740 = vpop.f32.mrb[0].mxu0
  %v741 = vadd.f32 0.0, %v740
  %v742 = vpop.f32.mrb[0].mxu0
  %v743 = vadd.f32 0.0, %v742
  %v744 = vpop.f32.mrb[0].mxu0
  %v745 = vadd.f32 0.0, %v744
  %746 = vdwg.mxu0
  %v747 = vld [vmem:[%s4] sm:$0x1]
  %v748 = vld [vmem:[%s5] sm:$0x1]
  %v749 = vlaneseq
  %v750 = vshrl.u32 %v749, 7
  %v751 = vsub.s32 0, %v750
  %v752 = vrot.slane %v429, %v751
  %v753 = vsub.f32 %v429, %v752
  %v754 = vsub.f32 %v433, %v752
  %v755 = vsub.f32 %v439, %v752
  %v756 = vsub.f32 %v443, %v752
  %v757 = vsub.f32 %v449, %v752
  %v758 = vsub.f32 %v453, %v752
  %v759 = vsub.f32 %v459, %v752
  %v760 = vsub.f32 %v463, %v752
  %v761 = vsub.f32 %v469, %v752
  %v762 = vsub.f32 %v473, %v752
  %v763 = vsub.f32 %v479, %v752
  %v764 = vsub.f32 %v483, %v752
  %v765 = vsub.f32 %v489, %v752
  %v766 = vsub.f32 %v493, %v752
  %v767 = vsub.f32 %v499, %v752
  %v768 = vsub.f32 %v503, %v752
  %v769 = vsub.f32 %v509, %v752
  %v770 = vsub.f32 %v513, %v752
  %v771 = vsub.f32 %v519, %v752
  %v772 = vsub.f32 %v523, %v752
  %v773 = vsub.f32 %v529, %v752
  %v774 = vsub.f32 %v533, %v752
  %v775 = vsub.f32 %v539, %v752
  %v776 = vsub.f32 %v543, %v752
  %v777 = vsub.f32 %v549, %v752
  %v778 = vsub.f32 %v553, %v752
  %v779 = vsub.f32 %v559, %v752
  %v780 = vsub.f32 %v563, %v752
  %v781 = vsub.f32 %v569, %v752
  %v782 = vsub.f32 %v573, %v752
  %v783 = vsub.f32 %v579, %v752
  %v784 = vsub.f32 %v583, %v752
  %v785 = vsub.f32 %v589, %v752
  %v786 = vsub.f32 %v593, %v752
  %v787 = vsub.f32 %v599, %v752
  %v788 = vsub.f32 %v603, %v752
  %v789 = vsub.f32 %v609, %v752
  %v790 = vsub.f32 %v613, %v752
  %v791 = vsub.f32 %v619, %v752
  %v792 = vsub.f32 %v623, %v752
  %v793 = vsub.f32 %v629, %v752
  %v794 = vsub.f32 %v633, %v752
  %v795 = vsub.f32 %v639, %v752
  %v796 = vsub.f32 %v643, %v752
  %v797 = vsub.f32 %v649, %v752
  %v798 = vsub.f32 %v653, %v752
  %v799 = vsub.f32 %v659, %v752
  %v800 = vsub.f32 %v663, %v752
  %v801 = vsub.f32 %v669, %v752
  %v802 = vsub.f32 %v673, %v752
  %v803 = vsub.f32 %v679, %v752
  %v804 = vsub.f32 %v683, %v752
  %v805 = vsub.f32 %v689, %v752
  %v806 = vsub.f32 %v693, %v752
  %v807 = vsub.f32 %v699, %v752
  %v808 = vsub.f32 %v703, %v752
  %v809 = vsub.f32 %v709, %v752
  %v810 = vsub.f32 %v713, %v752
  %v811 = vsub.f32 %v719, %v752
  %v812 = vsub.f32 %v723, %v752
  %v813 = vsub.f32 %v729, %v752
  %v814 = vsub.f32 %v733, %v752
  %v815 = vsub.f32 %v739, %v752
  %v816 = vsub.f32 %v743, %v752
  %v817 = vadd.f32 %v753, %v754
  %v818 = vadd.f32 %v817, %v755
  %v819 = vadd.f32 %v818, %v756
  %v820 = vadd.f32 %v819, %v757
  %v821 = vadd.f32 %v820, %v758
  %v822 = vadd.f32 %v821, %v759
  %v823 = vadd.f32 %v822, %v760
  %v824 = vadd.f32 %v823, %v761
  %v825 = vadd.f32 %v824, %v762
  %v826 = vadd.f32 %v825, %v763
  %v827 = vadd.f32 %v826, %v764
  %v828 = vadd.f32 %v827, %v765
  %v829 = vadd.f32 %v828, %v766
  %v830 = vadd.f32 %v829, %v767
  %v831 = vadd.f32 %v830, %v768
  %v832 = vadd.f32 %v831, %v769
  %v833 = vadd.f32 %v832, %v770
  %v834 = vadd.f32 %v833, %v771
  %v835 = vadd.f32 %v834, %v772
  %v836 = vadd.f32 %v835, %v773
  %v837 = vadd.f32 %v836, %v774
  %v838 = vadd.f32 %v837, %v775
  %v839 = vadd.f32 %v838, %v776
  %v840 = vadd.f32 %v839, %v777
  %v841 = vadd.f32 %v840, %v778
  %v842 = vadd.f32 %v841, %v779
  %v843 = vadd.f32 %v842, %v780
  %v844 = vadd.f32 %v843, %v781
  %v845 = vadd.f32 %v844, %v782
  %v846 = vadd.f32 %v845, %v783
  %v847 = vadd.f32 %v846, %v784
  %v848 = vadd.f32 %v847, %v785
  %v849 = vadd.f32 %v848, %v786
  %v850 = vadd.f32 %v849, %v787
  %v851 = vadd.f32 %v850, %v788
  %v852 = vadd.f32 %v851, %v789
  %v853 = vadd.f32 %v852, %v790
  %v854 = vadd.f32 %v853, %v791
  %v855 = vadd.f32 %v854, %v792
  %v856 = vadd.f32 %v855, %v793
  %v857 = vadd.f32 %v856, %v794
  %v858 = vadd.f32 %v857, %v795
  %v859 = vadd.f32 %v858, %v796
  %v860 = vadd.f32 %v859, %v797
  %v861 = vadd.f32 %v860, %v798
  %v862 = vadd.f32 %v861, %v799
  %v863 = vadd.f32 %v862, %v800
  %v864 = vadd.f32 %v863, %v801
  %v865 = vadd.f32 %v864, %v802
  %v866 = vadd.f32 %v865, %v803
  %v867 = vadd.f32 %v866, %v804
  %v868 = vadd.f32 %v867, %v805
  %v869 = vadd.f32 %v868, %v806
  %v870 = vadd.f32 %v869, %v807
  %v871 = vadd.f32 %v870, %v808
  %v872 = vadd.f32 %v871, %v809
  %v873 = vadd.f32 %v872, %v810
  %v874 = vadd.f32 %v873, %v811
  %v875 = vadd.f32 %v874, %v812
  %v876 = vadd.f32 %v875, %v813
  %v877 = vadd.f32 %v876, %v814
  %v878 = vadd.f32 %v877, %v815
  %v879 = vadd.f32 %v878, %v816
  %v880 = vrot.slane %v879, 4
  %v881 = vadd.f32 %v879, %v880
  %v882 = vrot.slane %v881, 2
  %v883 = vadd.f32 %v881, %v882
  %v884 = vrot.slane %v883, 1
  %v885 = vadd.f32 %v883, %v884
  %v886 = vmul.f32 %v753, %v753
  %v887 = vmul.f32 %v754, %v754
  %v888 = vmul.f32 %v755, %v755
  %v889 = vmul.f32 %v756, %v756
  %v890 = vmul.f32 %v757, %v757
  %v891 = vmul.f32 %v758, %v758
  %v892 = vmul.f32 %v759, %v759
  %v893 = vmul.f32 %v760, %v760
  %v894 = vmul.f32 %v761, %v761
  %v895 = vmul.f32 %v762, %v762
  %v896 = vmul.f32 %v763, %v763
  %v897 = vmul.f32 %v764, %v764
  %v898 = vmul.f32 %v765, %v765
  %v899 = vmul.f32 %v766, %v766
  %v900 = vmul.f32 %v767, %v767
  %v901 = vmul.f32 %v768, %v768
  %v902 = vmul.f32 %v769, %v769
  %v903 = vmul.f32 %v770, %v770
  %v904 = vmul.f32 %v771, %v771
  %v905 = vmul.f32 %v772, %v772
  %v906 = vmul.f32 %v773, %v773
  %v907 = vmul.f32 %v774, %v774
  %v908 = vmul.f32 %v775, %v775
  %v909 = vmul.f32 %v776, %v776
  %v910 = vmul.f32 %v777, %v777
  %v911 = vmul.f32 %v778, %v778
  %v912 = vmul.f32 %v779, %v779
  %v913 = vmul.f32 %v780, %v780
  %v914 = vmul.f32 %v781, %v781
  %v915 = vmul.f32 %v782, %v782
  %v916 = vmul.f32 %v783, %v783
  %v917 = vmul.f32 %v784, %v784
  %v918 = vmul.f32 %v785, %v785
  %v919 = vmul.f32 %v786, %v786
  %v920 = vmul.f32 %v787, %v787
  %v921 = vmul.f32 %v788, %v788
  %v922 = vmul.f32 %v789, %v789
  %v923 = vmul.f32 %v790, %v790
  %v924 = vmul.f32 %v791, %v791
  %v925 = vmul.f32 %v792, %v792
  %v926 = vmul.f32 %v793, %v793
  %v927 = vmul.f32 %v794, %v794
  %v928 = vmul.f32 %v795, %v795
  %v929 = vmul.f32 %v796, %v796
  %v930 = vmul.f32 %v797, %v797
  %v931 = vmul.f32 %v798, %v798
  %v932 = vmul.f32 %v799, %v799
  %v933 = vmul.f32 %v800, %v800
  %v934 = vmul.f32 %v801, %v801
  %v935 = vmul.f32 %v802, %v802
  %v936 = vmul.f32 %v803, %v803
  %v937 = vmul.f32 %v804, %v804
  %v938 = vmul.f32 %v805, %v805
  %v939 = vmul.f32 %v806, %v806
  %v940 = vmul.f32 %v807, %v807
  %v941 = vmul.f32 %v808, %v808
  %v942 = vmul.f32 %v809, %v809
  %v943 = vmul.f32 %v810, %v810
  %v944 = vmul.f32 %v811, %v811
  %v945 = vmul.f32 %v812, %v812
  %v946 = vmul.f32 %v813, %v813
  %v947 = vmul.f32 %v814, %v814
  %v948 = vmul.f32 %v815, %v815
  %v949 = vmul.f32 %v816, %v816
  %v950 = vadd.f32 %v886, %v887
  %v951 = vadd.f32 %v950, %v888
  %v952 = vadd.f32 %v951, %v889
  %v953 = vadd.f32 %v952, %v890
  %v954 = vadd.f32 %v953, %v891
  %v955 = vadd.f32 %v954, %v892
  %v956 = vadd.f32 %v955, %v893
  %v957 = vadd.f32 %v956, %v894
  %v958 = vadd.f32 %v957, %v895
  %v959 = vadd.f32 %v958, %v896
  %v960 = vadd.f32 %v959, %v897
  %v961 = vadd.f32 %v960, %v898
  %v962 = vadd.f32 %v961, %v899
  %v963 = vadd.f32 %v962, %v900
  %v964 = vadd.f32 %v963, %v901
  %v965 = vadd.f32 %v964, %v902
  %v966 = vadd.f32 %v965, %v903
  %v967 = vadd.f32 %v966, %v904
  %v968 = vadd.f32 %v967, %v905
  %v969 = vadd.f32 %v968, %v906
  %v970 = vadd.f32 %v969, %v907
  %v971 = vadd.f32 %v970, %v908
  %v972 = vadd.f32 %v971, %v909
  %v973 = vadd.f32 %v972, %v910
  %v974 = vadd.f32 %v973, %v911
  %v975 = vadd.f32 %v974, %v912
  %v976 = vadd.f32 %v975, %v913
  %v977 = vadd.f32 %v976, %v914
  %v978 = vadd.f32 %v977, %v915
  %v979 = vadd.f32 %v978, %v916
  %v980 = vadd.f32 %v979, %v917
  %v981 = vadd.f32 %v980, %v918
  %v982 = vadd.f32 %v981, %v919
  %v983 = vadd.f32 %v982, %v920
  %v984 = vadd.f32 %v983, %v921
  %v985 = vadd.f32 %v984, %v922
  %v986 = vadd.f32 %v985, %v923
  %v987 = vadd.f32 %v986, %v924
  %v988 = vadd.f32 %v987, %v925
  %v989 = vadd.f32 %v988, %v926
  %v990 = vadd.f32 %v989, %v927
  %v991 = vadd.f32 %v990, %v928
  %v992 = vadd.f32 %v991, %v929
  %v993 = vadd.f32 %v992, %v930
  %v994 = vadd.f32 %v993, %v931
  %v995 = vadd.f32 %v994, %v932
  %v996 = vadd.f32 %v995, %v933
  %v997 = vadd.f32 %v996, %v934
  %v998 = vadd.f32 %v997, %v935
  %v999 = vadd.f32 %v998, %v936
  %v1000 = vadd.f32 %v999, %v937
  %v1001 = vadd.f32 %v1000, %v938
  %v1002 = vadd.f32 %v1001, %v939
  %v1003 = vadd.f32 %v1002, %v940
  %v1004 = vadd.f32 %v1003, %v941
  %v1005 = vadd.f32 %v1004, %v942
  %v1006 = vadd.f32 %v1005, %v943
  %v1007 = vadd.f32 %v1006, %v944
  %v1008 = vadd.f32 %v1007, %v945
  %v1009 = vadd.f32 %v1008, %v946
  %v1010 = vadd.f32 %v1009, %v947
  %v1011 = vadd.f32 %v1010, %v948
  %v1012 = vadd.f32 %v1011, %v949
  %v1013 = vrot.slane %v1012, 4
  %v1014 = vadd.f32 %v1012, %v1013
  %v1015 = vrot.slane %v1014, 2
  %v1016 = vadd.f32 %v1014, %v1015
  %v1017 = vrot.slane %v1016, 1
  %v1018 = vadd.f32 %v1016, %v1017
  %v1019 = vmul.f32 %v885, 0.001953125
  %v1020 = vmul.f32 %v1018, 0.001953125
  %v1021 = vmul.f32 %v1019, %v1019
  %v1022 = vsub.f32 %v1020, %v1021
  %v1023 = vmax.f32 %v1022, 0.0
  %v1024 = vadd.f32 %v429, %v1019
  %v1025 = vadd.f32 %v1023, 1e-05
  %v1026 = vrsqrt.pop %v1025
  %v1027 = vmul.f32 %v747, %v1026
  %v1028 = vmul.f32 %v1024, %v1027
  %v1029 = vsub.f32 %v748, %v1028
  %v1031 = vlaneseq
  %v1032 = vshrl.u32 %v1031, 7
  %v1033 = vsub.s32 0, %v1032
  %v1034 = vrot.slane %v1027, %v1033
  %v1036 = vmul.f32 %v429, %v1034
  %v1037 = vmul.f32 %v433, %v1034
  %v1038 = vmul.f32 %v439, %v1034
  %v1039 = vmul.f32 %v443, %v1034
  %v1040 = vmul.f32 %v449, %v1034
  %v1041 = vmul.f32 %v453, %v1034
  %v1042 = vmul.f32 %v459, %v1034
  %v1043 = vmul.f32 %v463, %v1034
  %v1044 = vmul.f32 %v469, %v1034
  %v1045 = vmul.f32 %v473, %v1034
  %v1046 = vmul.f32 %v479, %v1034
  %v1047 = vmul.f32 %v483, %v1034
  %v1048 = vmul.f32 %v489, %v1034
  %v1049 = vmul.f32 %v493, %v1034
  %v1050 = vmul.f32 %v499, %v1034
  %v1051 = vmul.f32 %v503, %v1034
  %v1052 = vmul.f32 %v509, %v1034
  %v1053 = vmul.f32 %v513, %v1034
  %v1054 = vmul.f32 %v519, %v1034
  %v1055 = vmul.f32 %v523, %v1034
  %v1056 = vmul.f32 %v529, %v1034
  %v1057 = vmul.f32 %v533, %v1034
  %v1058 = vmul.f32 %v539, %v1034
  %v1059 = vmul.f32 %v543, %v1034
  %v1060 = vmul.f32 %v549, %v1034
  %v1061 = vmul.f32 %v553, %v1034
  %v1062 = vmul.f32 %v559, %v1034
  %v1063 = vmul.f32 %v563, %v1034
  %v1064 = vmul.f32 %v569, %v1034
  %v1065 = vmul.f32 %v573, %v1034
  %v1066 = vmul.f32 %v579, %v1034
  %v1067 = vmul.f32 %v583, %v1034
  %v1068 = vmul.f32 %v589, %v1034
  %v1069 = vmul.f32 %v593, %v1034
  %v1070 = vmul.f32 %v599, %v1034
  %v1071 = vmul.f32 %v603, %v1034
  %v1072 = vmul.f32 %v609, %v1034
  %v1073 = vmul.f32 %v613, %v1034
  %v1074 = vmul.f32 %v619, %v1034
  %v1075 = vmul.f32 %v623, %v1034
  %v1076 = vmul.f32 %v629, %v1034
  %v1077 = vmul.f32 %v633, %v1034
  %v1078 = vmul.f32 %v639, %v1034
  %v1079 = vmul.f32 %v643, %v1034
  %v1080 = vmul.f32 %v649, %v1034
  %v1081 = vmul.f32 %v653, %v1034
  %v1082 = vmul.f32 %v659, %v1034
  %v1083 = vmul.f32 %v663, %v1034
  %v1084 = vmul.f32 %v669, %v1034
  %v1085 = vmul.f32 %v673, %v1034
  %v1086 = vmul.f32 %v679, %v1034
  %v1087 = vmul.f32 %v683, %v1034
  %v1088 = vmul.f32 %v689, %v1034
  %v1089 = vmul.f32 %v693, %v1034
  %v1090 = vmul.f32 %v699, %v1034
  %v1091 = vmul.f32 %v703, %v1034
  %v1092 = vmul.f32 %v709, %v1034
  %v1093 = vmul.f32 %v713, %v1034
  %v1094 = vmul.f32 %v719, %v1034
  %v1095 = vmul.f32 %v723, %v1034
  %v1096 = vmul.f32 %v729, %v1034
  %v1097 = vmul.f32 %v733, %v1034
  %v1098 = vmul.f32 %v739, %v1034
  %v1099 = vmul.f32 %v743, %v1034
  %v1101 = vlaneseq
  %v1102 = vshrl.u32 %v1101, 7
  %v1103 = vsub.s32 0, %v1102
  %v1104 = vrot.slane %v1029, %v1103
  %v1106 = vadd.f32 %v1036, %v1104
  %v1107 = vadd.f32 %v1037, %v1104
  %v1108 = vadd.f32 %v1038, %v1104
  %v1109 = vadd.f32 %v1039, %v1104
  %v1110 = vadd.f32 %v1040, %v1104
  %v1111 = vadd.f32 %v1041, %v1104
  %v1112 = vadd.f32 %v1042, %v1104
  %v1113 = vadd.f32 %v1043, %v1104
  %v1114 = vadd.f32 %v1044, %v1104
  %v1115 = vadd.f32 %v1045, %v1104
  %v1116 = vadd.f32 %v1046, %v1104
  %v1117 = vadd.f32 %v1047, %v1104
  %v1118 = vadd.f32 %v1048, %v1104
  %v1119 = vadd.f32 %v1049, %v1104
  %v1120 = vadd.f32 %v1050, %v1104
  %v1121 = vadd.f32 %v1051, %v1104
  %v1122 = vadd.f32 %v1052, %v1104
  %v1123 = vadd.f32 %v1053, %v1104
  %v1124 = vadd.f32 %v1054, %v1104
  %v1125 = vadd.f32 %v1055, %v1104
  %v1126 = vadd.f32 %v1056, %v1104
  %v1127 = vadd.f32 %v1057, %v1104
  %v1128 = vadd.f32 %v1058, %v1104
  %v1129 = vadd.f32 %v1059, %v1104
  %v1130 = vadd.f32 %v1060, %v1104
  %v1131 = vadd.f32 %v1061, %v1104
  %v1132 = vadd.f32 %v1062, %v1104
  %v1133 = vadd.f32 %v1063, %v1104
  %v1134 = vadd.f32 %v1064, %v1104
  %v1135 = vadd.f32 %v1065, %v1104
  %v1136 = vadd.f32 %v1066, %v1104
  %v1137 = vadd.f32 %v1067, %v1104
  %v1138 = vadd.f32 %v1068, %v1104
  %v1139 = vadd.f32 %v1069, %v1104
  %v1140 = vadd.f32 %v1070, %v1104
  %v1141 = vadd.f32 %v1071, %v1104
  %v1142 = vadd.f32 %v1072, %v1104
  %v1143 = vadd.f32 %v1073, %v1104
  %v1144 = vadd.f32 %v1074, %v1104
  %v1145 = vadd.f32 %v1075, %v1104
  %v1146 = vadd.f32 %v1076, %v1104
  %v1147 = vadd.f32 %v1077, %v1104
  %v1148 = vadd.f32 %v1078, %v1104
  %v1149 = vadd.f32 %v1079, %v1104
  %v1150 = vadd.f32 %v1080, %v1104
  %v1151 = vadd.f32 %v1081, %v1104
  %v1152 = vadd.f32 %v1082, %v1104
  %v1153 = vadd.f32 %v1083, %v1104
  %v1154 = vadd.f32 %v1084, %v1104
  %v1155 = vadd.f32 %v1085, %v1104
  %v1156 = vadd.f32 %v1086, %v1104
  %v1157 = vadd.f32 %v1087, %v1104
  %v1158 = vadd.f32 %v1088, %v1104
  %v1159 = vadd.f32 %v1089, %v1104
  %v1160 = vadd.f32 %v1090, %v1104
  %v1161 = vadd.f32 %v1091, %v1104
  %v1162 = vadd.f32 %v1092, %v1104
  %v1163 = vadd.f32 %v1093, %v1104
  %v1164 = vadd.f32 %v1094, %v1104
  %v1165 = vadd.f32 %v1095, %v1104
  %v1166 = vadd.f32 %v1096, %v1104
  %v1167 = vadd.f32 %v1097, %v1104
  %v1168 = vadd.f32 %v1098, %v1104
  %v1169 = vadd.f32 %v1099, %v1104
  %v1170 = vmax.f32 %v1106, 0.0
  %v1171 = vmax.f32 %v1107, 0.0
  %v1172 = vmax.f32 %v1108, 0.0
  %v1173 = vmax.f32 %v1109, 0.0
  %v1174 = vmax.f32 %v1110, 0.0
  %v1175 = vmax.f32 %v1111, 0.0
  %v1176 = vmax.f32 %v1112, 0.0
  %v1177 = vmax.f32 %v1113, 0.0
  %v1178 = vmax.f32 %v1114, 0.0
  %v1179 = vmax.f32 %v1115, 0.0
  %v1180 = vmax.f32 %v1116, 0.0
  %v1181 = vmax.f32 %v1117, 0.0
  %v1182 = vmax.f32 %v1118, 0.0
  %v1183 = vmax.f32 %v1119, 0.0
  %v1184 = vmax.f32 %v1120, 0.0
  %v1185 = vmax.f32 %v1121, 0.0
  %v1186 = vmax.f32 %v1122, 0.0
  %v1187 = vmax.f32 %v1123, 0.0
  %v1188 = vmax.f32 %v1124, 0.0
  %v1189 = vmax.f32 %v1125, 0.0
  %v1190 = vmax.f32 %v1126, 0.0
  %v1191 = vmax.f32 %v1127, 0.0
  %v1192 = vmax.f32 %v1128, 0.0
  %v1193 = vmax.f32 %v1129, 0.0
  %v1194 = vmax.f32 %v1130, 0.0
  %v1195 = vmax.f32 %v1131, 0.0
  %v1196 = vmax.f32 %v1132, 0.0
  %v1197 = vmax.f32 %v1133, 0.0
  %v1198 = vmax.f32 %v1134, 0.0
  %v1199 = vmax.f32 %v1135, 0.0
  %v1200 = vmax.f32 %v1136, 0.0
  %v1201 = vmax.f32 %v1137, 0.0
  %v1202 = vmax.f32 %v1138, 0.0
  %v1203 = vmax.f32 %v1139, 0.0
  %v1204 = vmax.f32 %v1140, 0.0
  %v1205 = vmax.f32 %v1141, 0.0
  %v1206 = vmax.f32 %v1142, 0.0
  %v1207 = vmax.f32 %v1143, 0.0
  %v1208 = vmax.f32 %v1144, 0.0
  %v1209 = vmax.f32 %v1145, 0.0
  %v1210 = vmax.f32 %v1146, 0.0
  %v1211 = vmax.f32 %v1147, 0.0
  %v1212 = vmax.f32 %v1148, 0.0
  %v1213 = vmax.f32 %v1149, 0.0
  %v1214 = vmax.f32 %v1150, 0.0
  %v1215 = vmax.f32 %v1151, 0.0
  %v1216 = vmax.f32 %v1152, 0.0
  %v1217 = vmax.f32 %v1153, 0.0
  %v1218 = vmax.f32 %v1154, 0.0
  %v1219 = vmax.f32 %v1155, 0.0
  %v1220 = vmax.f32 %v1156, 0.0
  %v1221 = vmax.f32 %v1157, 0.0
  %v1222 = vmax.f32 %v1158, 0.0
  %v1223 = vmax.f32 %v1159, 0.0
  %v1224 = vmax.f32 %v1160, 0.0
  %v1225 = vmax.f32 %v1161, 0.0
  %v1226 = vmax.f32 %v1162, 0.0
  %v1227 = vmax.f32 %v1163, 0.0
  %v1228 = vmax.f32 %v1164, 0.0
  %v1229 = vmax.f32 %v1165, 0.0
  %v1230 = vmax.f32 %v1166, 0.0
  %v1231 = vmax.f32 %v1167, 0.0
  %v1232 = vmax.f32 %v1168, 0.0
  %v1233 = vmax.f32 %v1169, 0.0
  %1234 = vst [vmem:[#allocation2] sm:$0xff] 0.0
  %1235 = vst [vmem:[#allocation2 + $0x8] sm:$0xff] 0.0
  %1236 = vst [vmem:[#allocation2 + $0x10] sm:$0x3] 0.0
  %1237 = vst [vmem:[#allocation2 + $0x1b0] sm:$0xff] 0.0
  %1238 = vst [vmem:[#allocation2 + $0x1b8] sm:$0xff] 0.0
  %1239 = vst [vmem:[#allocation2 + $0x1c0] sm:$0x3] 0.0
  %s1240 = scalar_lea.vmem [#allocation2], 408
  %1241 = vst [vmem:[%s1240] sm:$0xff] 0.0
  %1242 = vst [vmem:[%s1240 + $0x8] sm:$0xff] 0.0
  %1243 = vst [vmem:[%s1240 + $0x10] sm:$0x3] 0.0
  %1244 = vst [vmem:[%s1240 + $0x1b0] sm:$0xff] 0.0
  %1245 = vst [vmem:[%s1240 + $0x1b8] sm:$0xff] 0.0
  %1246 = vst [vmem:[%s1240 + $0x1c0] sm:$0x3] 0.0
  %s1247 = scalar_lea.vmem [#allocation2], 24
  %1248 = vst [vmem:[%s1247] sm:$0x1] 0.0
  %1249 = vst [vmem:[%s1247 + $0x18] sm:$0x1] 0.0
  %1250 = vst [vmem:[%s1247 + $0x30] sm:$0x1] 0.0
  %1251 = vst [vmem:[%s1247 + $0x48] sm:$0x1] 0.0
  %1252 = vst [vmem:[%s1247 + $0x60] sm:$0x1] 0.0
  %1253 = vst [vmem:[%s1247 + $0x78] sm:$0x1] 0.0
  %1254 = vst [vmem:[%s1247 + $0x90] sm:$0x1] 0.0
  %1255 = vst [vmem:[%s1247 + $0xa8] sm:$0x1] 0.0
  %1256 = vst [vmem:[%s1247 + $0xc0] sm:$0x1] 0.0
  %1257 = vst [vmem:[%s1247 + $0xd8] sm:$0x1] 0.0
  %1258 = vst [vmem:[%s1247 + $0xf0] sm:$0x1] 0.0
  %1259 = vst [vmem:[%s1247 + $0x108] sm:$0x1] 0.0
  %1260 = vst [vmem:[%s1247 + $0x120] sm:$0x1] 0.0
  %1261 = vst [vmem:[%s1247 + $0x138] sm:$0x1] 0.0
  %1262 = vst [vmem:[%s1247 + $0x150] sm:$0x1] 0.0
  %1263 = vst [vmem:[%s1247 + $0x168] sm:$0x1] 0.0
  %1264 = vst [vmem:[%s1247 + $0x1b0] sm:$0x1] 0.0
  %1265 = vst [vmem:[%s1247 + $0x1c8] sm:$0x1] 0.0
  %1266 = vst [vmem:[%s1247 + $0x1e0] sm:$0x1] 0.0
  %1267 = vst [vmem:[%s1247 + $0x1f8] sm:$0x1] 0.0
  %1268 = vst [vmem:[%s1247 + $0x210] sm:$0x1] 0.0
  %1269 = vst [vmem:[%s1247 + $0x228] sm:$0x1] 0.0
  %1270 = vst [vmem:[%s1247 + $0x240] sm:$0x1] 0.0
  %1271 = vst [vmem:[%s1247 + $0x258] sm:$0x1] 0.0
  %1272 = vst [vmem:[%s1247 + $0x270] sm:$0x1] 0.0
  %1273 = vst [vmem:[%s1247 + $0x288] sm:$0x1] 0.0
  %1274 = vst [vmem:[%s1247 + $0x2a0] sm:$0x1] 0.0
  %1275 = vst [vmem:[%s1247 + $0x2b8] sm:$0x1] 0.0
  %1276 = vst [vmem:[%s1247 + $0x2d0] sm:$0x1] 0.0
  %1277 = vst [vmem:[%s1247 + $0x2e8] sm:$0x1] 0.0
  %1278 = vst [vmem:[%s1247 + $0x300] sm:$0x1] 0.0
  %1279 = vst [vmem:[%s1247 + $0x318] sm:$0x1] 0.0
  %1280 = vst [vmem:[%s1247 + $0x11] sm:$0x1] 0.0
  %1281 = vst [vmem:[%s1247 + $0x29] sm:$0x1] 0.0
  %1282 = vst [vmem:[%s1247 + $0x41] sm:$0x1] 0.0
  %1283 = vst [vmem:[%s1247 + $0x59] sm:$0x1] 0.0
  %1284 = vst [vmem:[%s1247 + $0x71] sm:$0x1] 0.0
  %1285 = vst [vmem:[%s1247 + $0x89] sm:$0x1] 0.0
  %1286 = vst [vmem:[%s1247 + $0xa1] sm:$0x1] 0.0
  %1287 = vst [vmem:[%s1247 + $0xb9] sm:$0x1] 0.0
  %1288 = vst [vmem:[%s1247 + $0xd1] sm:$0x1] 0.0
  %1289 = vst [vmem:[%s1247 + $0xe9] sm:$0x1] 0.0
  %1290 = vst [vmem:[%s1247 + $0x101] sm:$0x1] 0.0
  %1291 = vst [vmem:[%s1247 + $0x119] sm:$0x1] 0.0
  %1292 = vst [vmem:[%s1247 + $0x131] sm:$0x1] 0.0
  %1293 = vst [vmem:[%s1247 + $0x149] sm:$0x1] 0.0
  %1294 = vst [vmem:[%s1247 + $0x161] sm:$0x1] 0.0
  %1295 = vst [vmem:[%s1247 + $0x179] sm:$0x1] 0.0
  %1296 = vst [vmem:[%s1247 + $0x1c1] sm:$0x1] 0.0
  %1297 = vst [vmem:[%s1247 + $0x1d9] sm:$0x1] 0.0
  %1298 = vst [vmem:[%s1247 + $0x1f1] sm:$0x1] 0.0
  %1299 = vst [vmem:[%s1247 + $0x209] sm:$0x1] 0.0
  %1300 = vst [vmem:[%s1247 + $0x221] sm:$0x1] 0.0
  %1301 = vst [vmem:[%s1247 + $0x239] sm:$0x1] 0.0
  %1302 = vst [vmem:[%s1247 + $0x251] sm:$0x1] 0.0
  %1303 = vst [vmem:[%s1247 + $0x269] sm:$0x1] 0.0
  %1304 = vst [vmem:[%s1247 + $0x281] sm:$0x1] 0.0
  %1305 = vst [vmem:[%s1247 + $0x299] sm:$0x1] 0.0
  %1306 = vst [vmem:[%s1247 + $0x2b1] sm:$0x1] 0.0
  %1307 = vst [vmem:[%s1247 + $0x2c9] sm:$0x1] 0.0
  %1308 = vst [vmem:[%s1247 + $0x2e1] sm:$0x1] 0.0
  %1309 = vst [vmem:[%s1247 + $0x2f9] sm:$0x1] 0.0
  %1310 = vst [vmem:[%s1247 + $0x311] sm:$0x1] 0.0
  %1311 = vst [vmem:[%s1247 + $0x329] sm:$0x1] 0.0
  %1312 = vst [vmem:[%s1247 + $0x1] sm:$0xff] %v1170
  %1313 = vst [vmem:[%s1247 + $0x9] sm:$0xff] %v1171
  %1314 = vst [vmem:[%s1247 + $0x19] sm:$0xff] %v1172
  %1315 = vst [vmem:[%s1247 + $0x21] sm:$0xff] %v1173
  %1316 = vst [vmem:[%s1247 + $0x31] sm:$0xff] %v1174
  %1317 = vst [vmem:[%s1247 + $0x39] sm:$0xff] %v1175
  %1318 = vst [vmem:[%s1247 + $0x49] sm:$0xff] %v1176
  %1319 = vst [vmem:[%s1247 + $0x51] sm:$0xff] %v1177
  %1320 = vst [vmem:[%s1247 + $0x61] sm:$0xff] %v1178
  %1321 = vst [vmem:[%s1247 + $0x69] sm:$0xff] %v1179
  %1322 = vst [vmem:[%s1247 + $0x79] sm:$0xff] %v1180
  %1323 = vst [vmem:[%s1247 + $0x81] sm:$0xff] %v1181
  %1324 = vst [vmem:[%s1247 + $0x91] sm:$0xff] %v1182
  %1325 = vst [vmem:[%s1247 + $0x99] sm:$0xff] %v1183
  %1326 = vst [vmem:[%s1247 + $0xa9] sm:$0xff] %v1184
  %1327 = vst [vmem:[%s1247 + $0xb1] sm:$0xff] %v1185
  %1328 = vst [vmem:[%s1247 + $0xc1] sm:$0xff] %v1186
  %1329 = vst [vmem:[%s1247 + $0xc9] sm:$0xff] %v1187
  %1330 = vst [vmem:[%s1247 + $0xd9] sm:$0xff] %v1188
  %1331 = vst [vmem:[%s1247 + $0xe1] sm:$0xff] %v1189
  %1332 = vst [vmem:[%s1247 + $0xf1] sm:$0xff] %v1190
  %1333 = vst [vmem:[%s1247 + $0xf9] sm:$0xff] %v1191
  %1334 = vst [vmem:[%s1247 + $0x109] sm:$0xff] %v1192
  %1335 = vst [vmem:[%s1247 + $0x111] sm:$0xff] %v1193
  %1336 = vst [vmem:[%s1247 + $0x121] sm:$0xff] %v1194
  %1337 = vst [vmem:[%s1247 + $0x129] sm:$0xff] %v1195
  %1338 = vst [vmem:[%s1247 + $0x139] sm:$0xff] %v1196
  %1339 = vst [vmem:[%s1247 + $0x141] sm:$0xff] %v1197
  %1340 = vst [vmem:[%s1247 + $0x151] sm:$0xff] %v1198
  %1341 = vst [vmem:[%s1247 + $0x159] sm:$0xff] %v1199
  %1342 = vst [vmem:[%s1247 + $0x169] sm:$0xff] %v1200
  %1343 = vst [vmem:[%s1247 + $0x171] sm:$0xff] %v1201
  %1344 = vst [vmem:[%s1247 + $0x1b1] sm:$0xff] %v1202
  %1345 = vst [vmem:[%s1247 + $0x1b9] sm:$0xff] %v1203
  %1346 = vst [vmem:[%s1247 + $0x1c9] sm:$0xff] %v1204
  %1347 = vst [vmem:[%s1247 + $0x1d1] sm:$0xff] %v1205
  %1348 = vst [vmem:[%s1247 + $0x1e1] sm:$0xff] %v1206
  %1349 = vst [vmem:[%s1247 + $0x1e9] sm:$0xff] %v1207
  %1350 = vst [vmem:[%s1247 + $0x1f9] sm:$0xff] %v1208
  %1351 = vst [vmem:[%s1247 + $0x201] sm:$0xff] %v1209
  %1352 = vst [vmem:[%s1247 + $0x211] sm:$0xff] %v1210
  %1353 = vst [vmem:[%s1247 + $0x219] sm:$0xff] %v1211
  %1354 = vst [vmem:[%s1247 + $0x229] sm:$0xff] %v1212
  %1355 = vst [vmem:[%s1247 + $0x231] sm:$0xff] %v1213
  %1356 = vst [vmem:[%s1247 + $0x241] sm:$0xff] %v1214
  %1357 = vst [vmem:[%s1247 + $0x249] sm:$0xff] %v1215
  %1358 = vst [vmem:[%s1247 + $0x259] sm:$0xff] %v1216
  %1359 = vst [vmem:[%s1247 + $0x261] sm:$0xff] %v1217
  %1360 = vst [vmem:[%s1247 + $0x271] sm:$0xff] %v1218
  %1361 = vst [vmem:[%s1247 + $0x279] sm:$0xff] %v1219
  %1362 = vst [vmem:[%s1247 + $0x289] sm:$0xff] %v1220
  %1363 = vst [vmem:[%s1247 + $0x291] sm:$0xff] %v1221
  %1364 = vst [vmem:[%s1247 + $0x2a1] sm:$0xff] %v1222
  %1365 = vst [vmem:[%s1247 + $0x2a9] sm:$0xff] %v1223
  %1366 = vst [vmem:[%s1247 + $0x2b9] sm:$0xff] %v1224
  %1367 = vst [vmem:[%s1247 + $0x2c1] sm:$0xff] %v1225
  %1368 = vst [vmem:[%s1247 + $0x2d1] sm:$0xff] %v1226
  %1369 = vst [vmem:[%s1247 + $0x2d9] sm:$0xff] %v1227
  %1370 = vst [vmem:[%s1247 + $0x2e9] sm:$0xff] %v1228
  %1371 = vst [vmem:[%s1247 + $0x2f1] sm:$0xff] %v1229
  %1372 = vst [vmem:[%s1247 + $0x301] sm:$0xff] %v1230
  %1373 = vst [vmem:[%s1247 + $0x309] sm:$0xff] %v1231
  %1374 = vst [vmem:[%s1247 + $0x319] sm:$0xff] %v1232
  %1375 = vst [vmem:[%s1247 + $0x321] sm:$0xff] %v1233
  %v1376 = vld [vmem:[%s2] sm:$0xff]
  %v1377 = vld [vmem:[%s2 + $0x8] sm:$0x1]
  %v1378 = vld [vmem:[#allocation2] sm:$0xff]
  %v1379 = vld [vmem:[#allocation2 + $0x8] sm:$0xff]
  %v1380 = vld [vmem:[#allocation2 + $0x18] sm:$0xff]
  %v1381 = vld [vmem:[#allocation2 + $0x20] sm:$0xff]
  %v1382 = vld [vmem:[#allocation2 + $0x30] sm:$0xff]
  %v1383 = vld [vmem:[#allocation2 + $0x38] sm:$0xff]
  %v1384 = vld [vmem:[#allocation2 + $0x48] sm:$0xff]
  %v1385 = vld [vmem:[#allocation2 + $0x50] sm:$0xff]
  %v1386 = vld [vmem:[#allocation2 + $0x60] sm:$0xff]
  %v1387 = vld [vmem:[#allocation2 + $0x68] sm:$0xff]
  %v1388 = vld [vmem:[#allocation2 + $0x78] sm:$0xff]
  %v1389 = vld [vmem:[#allocation2 + $0x80] sm:$0xff]
  %v1390 = vld [vmem:[#allocation2 + $0x90] sm:$0xff]
  %v1391 = vld [vmem:[#allocation2 + $0x98] sm:$0xff]
  %v1392 = vld [vmem:[#allocation2 + $0xa8] sm:$0xff]
  %v1393 = vld [vmem:[#allocation2 + $0xb0] sm:$0xff]
  %v1394 = vld [vmem:[#allocation2 + $0xc0] sm:$0xff]
  %v1395 = vld [vmem:[#allocation2 + $0xc8] sm:$0xff]
  %v1396 = vld [vmem:[#allocation2 + $0xd8] sm:$0xff]
  %v1397 = vld [vmem:[#allocation2 + $0xe0] sm:$0xff]
  %v1398 = vld [vmem:[#allocation2 + $0xf0] sm:$0xff]
  %v1399 = vld [vmem:[#allocation2 + $0xf8] sm:$0xff]
  %v1400 = vld [vmem:[#allocation2 + $0x108] sm:$0xff]
  %v1401 = vld [vmem:[#allocation2 + $0x110] sm:$0xff]
  %v1402 = vld [vmem:[#allocation2 + $0x120] sm:$0xff]
  %v1403 = vld [vmem:[#allocation2 + $0x128] sm:$0xff]
  %v1404 = vld [vmem:[#allocation2 + $0x138] sm:$0xff]
  %v1405 = vld [vmem:[#allocation2 + $0x140] sm:$0xff]
  %v1406 = vld [vmem:[#allocation2 + $0x150] sm:$0xff]
  %v1407 = vld [vmem:[#allocation2 + $0x158] sm:$0xff]
  %v1408 = vld [vmem:[#allocation2 + $0x168] sm:$0xff]
  %v1409 = vld [vmem:[#allocation2 + $0x170] sm:$0xff]
  %v1410 = vld [vmem:[#allocation2 + $0x1b0] sm:$0xff]
  %v1411 = vld [vmem:[#allocation2 + $0x1b8] sm:$0xff]
  %v1412 = vld [vmem:[#allocation2 + $0x1c8] sm:$0xff]
  %v1413 = vld [vmem:[#allocation2 + $0x1d0] sm:$0xff]
  %v1414 = vld [vmem:[#allocation2 + $0x1e0] sm:$0xff]
  %v1415 = vld [vmem:[#allocation2 + $0x1e8] sm:$0xff]
  %v1416 = vld [vmem:[#allocation2 + $0x1f8] sm:$0xff]
  %v1417 = vld [vmem:[#allocation2 + $0x200] sm:$0xff]
  %v1418 = vld [vmem:[#allocation2 + $0x210] sm:$0xff]
  %v1419 = vld [vmem:[#allocation2 + $0x218] sm:$0xff]
  %v1420 = vld [vmem:[#allocation2 + $0x228] sm:$0xff]
  %v1421 = vld [vmem:[#allocation2 + $0x230] sm:$0xff]
  %v1422 = vld [vmem:[#allocation2 + $0x240] sm:$0xff]
  %v1423 = vld [vmem:[#allocation2 + $0x248] sm:$0xff]
  %v1424 = vld [vmem:[#allocation2 + $0x258] sm:$0xff]
  %v1425 = vld [vmem:[#allocation2 + $0x260] sm:$0xff]
  %v1426 = vld [vmem:[#allocation2 + $0x270] sm:$0xff]
  %v1427 = vld [vmem:[#allocation2 + $0x278] sm:$0xff]
  %v1428 = vld [vmem:[#allocation2 + $0x288] sm:$0xff]
  %v1429 = vld [vmem:[#allocation2 + $0x290] sm:$0xff]
  %v1430 = vld [vmem:[#allocation2 + $0x2a0] sm:$0xff]
  %v1431 = vld [vmem:[#allocation2 + $0x2a8] sm:$0xff]
  %v1432 = vld [vmem:[#allocation2 + $0x2b8] sm:$0xff]
  %v1433 = vld [vmem:[#allocation2 + $0x2c0] sm:$0xff]
  %v1434 = vld [vmem:[#allocation2 + $0x2d0] sm:$0xff]
  %v1435 = vld [vmem:[#allocation2 + $0x2d8] sm:$0xff]
  %v1436 = vld [vmem:[#allocation2 + $0x2e8] sm:$0xff]
  %v1437 = vld [vmem:[#allocation2 + $0x2f0] sm:$0xff]
  %v1438 = vld [vmem:[#allocation2 + $0x300] sm:$0xff]
  %v1439 = vld [vmem:[#allocation2 + $0x308] sm:$0xff]
  %v1440 = vld [vmem:[#allocation2 + $0x318] sm:$0xff]
  %v1441 = vld [vmem:[#allocation2 + $0x320] sm:$0xff]
  %v1442 = vlaneseq
  %v1443 = vshrl.u32 %v1442, 7
  %v1444 = vsub.s32 0, %v1443
  %v1445 = vrot.slane %v1376, %v1444
  %v1446 = vmul.f32 %v1378, %v1445
  %v1447 = vmul.f32 %v1379, %v1445
  %v1448 = vmul.f32 %v1380, %v1445
  %v1449 = vmul.f32 %v1381, %v1445
  %v1450 = vmul.f32 %v1382, %v1445
  %v1451 = vmul.f32 %v1383, %v1445
  %v1452 = vmul.f32 %v1384, %v1445
  %v1453 = vmul.f32 %v1385, %v1445
  %v1454 = vmul.f32 %v1386, %v1445
  %v1455 = vmul.f32 %v1387, %v1445
  %v1456 = vmul.f32 %v1388, %v1445
  %v1457 = vmul.f32 %v1389, %v1445
  %v1458 = vmul.f32 %v1390, %v1445
  %v1459 = vmul.f32 %v1391, %v1445
  %v1460 = vmul.f32 %v1392, %v1445
  %v1461 = vmul.f32 %v1393, %v1445
  %v1462 = vmul.f32 %v1394, %v1445
  %v1463 = vmul.f32 %v1395, %v1445
  %v1464 = vmul.f32 %v1396, %v1445
  %v1465 = vmul.f32 %v1397, %v1445
  %v1466 = vmul.f32 %v1398, %v1445
  %v1467 = vmul.f32 %v1399, %v1445
  %v1468 = vmul.f32 %v1400, %v1445
  %v1469 = vmul.f32 %v1401, %v1445
  %v1470 = vmul.f32 %v1402, %v1445
  %v1471 = vmul.f32 %v1403, %v1445
  %v1472 = vmul.f32 %v1404, %v1445
  %v1473 = vmul.f32 %v1405, %v1445
  %v1474 = vmul.f32 %v1406, %v1445
  %v1475 = vmul.f32 %v1407, %v1445
  %v1476 = vmul.f32 %v1408, %v1445
  %v1477 = vmul.f32 %v1409, %v1445
  %v1478 = vmul.f32 %v1410, %v1445
  %v1479 = vmul.f32 %v1411, %v1445
  %v1480 = vmul.f32 %v1412, %v1445
  %v1481 = vmul.f32 %v1413, %v1445
  %v1482 = vmul.f32 %v1414, %v1445
  %v1483 = vmul.f32 %v1415, %v1445
  %v1484 = vmul.f32 %v1416, %v1445
  %v1485 = vmul.f32 %v1417, %v1445
  %v1486 = vmul.f32 %v1418, %v1445
  %v1487 = vmul.f32 %v1419, %v1445
  %v1488 = vmul.f32 %v1420, %v1445
  %v1489 = vmul.f32 %v1421, %v1445
  %v1490 = vmul.f32 %v1422, %v1445
  %v1491 = vmul.f32 %v1423, %v1445
  %v1492 = vmul.f32 %v1424, %v1445
  %v1493 = vmul.f32 %v1425, %v1445
  %v1494 = vmul.f32 %v1426, %v1445
  %v1495 = vmul.f32 %v1427, %v1445
  %v1496 = vmul.f32 %v1428, %v1445
  %v1497 = vmul.f32 %v1429, %v1445
  %v1498 = vmul.f32 %v1430, %v1445
  %v1499 = vmul.f32 %v1431, %v1445
  %v1500 = vmul.f32 %v1432, %v1445
  %v1501 = vmul.f32 %v1433, %v1445
  %v1502 = vmul.f32 %v1434, %v1445
  %v1503 = vmul.f32 %v1435, %v1445
  %v1504 = vmul.f32 %v1436, %v1445
  %v1505 = vmul.f32 %v1437, %v1445
  %v1506 = vmul.f32 %v1438, %v1445
  %v1507 = vmul.f32 %v1439, %v1445
  %v1508 = vmul.f32 %v1440, %v1445
  %v1509 = vmul.f32 %v1441, %v1445
  %v1510 = vld [vmem:[#allocation2 + $0x1] sm:$0xff]
  %v1511 = vld [vmem:[#allocation2 + $0x9] sm:$0xff]
  %v1512 = vld [vmem:[#allocation2 + $0x19] sm:$0xff]
  %v1513 = vld [vmem:[#allocation2 + $0x21] sm:$0xff]
  %v1514 = vld [vmem:[#allocation2 + $0x31] sm:$0xff]
  %v1515 = vld [vmem:[#allocation2 + $0x39] sm:$0xff]
  %v1516 = vld [vmem:[#allocation2 + $0x49] sm:$0xff]
  %v1517 = vld [vmem:[#allocation2 + $0x51] sm:$0xff]
  %v1518 = vld [vmem:[#allocation2 + $0x61] sm:$0xff]
  %v1519 = vld [vmem:[#allocation2 + $0x69] sm:$0xff]
  %v1520 = vld [vmem:[#allocation2 + $0x79] sm:$0xff]
  %v1521 = vld [vmem:[#allocation2 + $0x81] sm:$0xff]
  %v1522 = vld [vmem:[#allocation2 + $0x91] sm:$0xff]
  %v1523 = vld [vmem:[#allocation2 + $0x99] sm:$0xff]
  %v1524 = vld [vmem:[#allocation2 + $0xa9] sm:$0xff]
  %v1525 = vld [vmem:[#allocation2 + $0xb1] sm:$0xff]
  %v1526 = vld [vmem:[#allocation2 + $0xc1] sm:$0xff]
  %v1527 = vld [vmem:[#allocation2 + $0xc9] sm:$0xff]
  %v1528 = vld [vmem:[#allocation2 + $0xd9] sm:$0xff]
  %v1529 = vld [vmem:[#allocation2 + $0xe1] sm:$0xff]
  %v1530 = vld [vmem:[#allocation2 + $0xf1] sm:$0xff]
  %v1531 = vld [vmem:[#allocation2 + $0xf9] sm:$0xff]
  %v1532 = vld [vmem:[#allocation2 + $0x109] sm:$0xff]
  %v1533 = vld [vmem:[#allocation2 + $0x111] sm:$0xff]
  %v1534 = vld [vmem:[#allocation2 + $0x121] sm:$0xff]
  %v1535 = vld [vmem:[#allocation2 + $0x129] sm:$0xff]
  %v1536 = vld [vmem:[#allocation2 + $0x139] sm:$0xff]
  %v1537 = vld [vmem:[#allocation2 + $0x141] sm:$0xff]
  %v1538 = vld [vmem:[#allocation2 + $0x151] sm:$0xff]
  %v1539 = vld [vmem:[#allocation2 + $0x159] sm:$0xff]
  %v1540 = vld [vmem:[#allocation2 + $0x169] sm:$0xff]
  %v1541 = vld [vmem:[#allocation2 + $0x171] sm:$0xff]
  %v1542 = vld [vmem:[#allocation2 + $0x1b1] sm:$0xff]
  %v1543 = vld [vmem:[#allocation2 + $0x1b9] sm:$0xff]
  %v1544 = vld [vmem:[#allocation2 + $0x1c9] sm:$0xff]
  %v1545 = vld [vmem:[#allocation2 + $0x1d1] sm:$0xff]
  %v1546 = vld [vmem:[#allocation2 + $0x1e1] sm:$0xff]
  %v1547 = vld [vmem:[#allocation2 + $0x1e9] sm:$0xff]
  %v1548 = vld [vmem:[#allocation2 + $0x1f9] sm:$0xff]
  %v1549 = vld [vmem:[#allocation2 + $0x201] sm:$0xff]
  %v1550 = vld [vmem:[#allocation2 + $0x211] sm:$0xff]
  %v1551 = vld [vmem:[#allocation2 + $0x219] sm:$0xff]
  %v1552 = vld [vmem:[#allocation2 + $0x229] sm:$0xff]
  %v1553 = vld [vmem:[#allocation2 + $0x231] sm:$0xff]
  %v1554 = vld [vmem:[#allocation2 + $0x241] sm:$0xff]
  %v1555 = vld [vmem:[#allocation2 + $0x249] sm:$0xff]
  %v1556 = vld [vmem:[#allocation2 + $0x259] sm:$0xff]
  %v1557 = vld [vmem:[#allocation2 + $0x261] sm:$0xff]
  %v1558 = vld [vmem:[#allocation2 + $0x271] sm:$0xff]
  %v1559 = vld [vmem:[#allocation2 + $0x279] sm:$0xff]
  %v1560 = vld [vmem:[#allocation2 + $0x289] sm:$0xff]
  %v1561 = vld [vmem:[#allocation2 + $0x291] sm:$0xff]
  %v1562 = vld [vmem:[#allocation2 + $0x2a1] sm:$0xff]
  %v1563 = vld [vmem:[#allocation2 + $0x2a9] sm:$0xff]
  %v1564 = vld [vmem:[#allocation2 + $0x2b9] sm:$0xff]
  %v1565 = vld [vmem:[#allocation2 + $0x2c1] sm:$0xff]
  %v1566 = vld [vmem:[#allocation2 + $0x2d1] sm:$0xff]
  %v1567 = vld [vmem:[#allocation2 + $0x2d9] sm:$0xff]
  %v1568 = vld [vmem:[#allocation2 + $0x2e9] sm:$0xff]
  %v1569 = vld [vmem:[#allocation2 + $0x2f1] sm:$0xff]
  %v1570 = vld [vmem:[#allocation2 + $0x301] sm:$0xff]
  %v1571 = vld [vmem:[#allocation2 + $0x309] sm:$0xff]
  %v1572 = vld [vmem:[#allocation2 + $0x319] sm:$0xff]
  %v1573 = vld [vmem:[#allocation2 + $0x321] sm:$0xff]
  %v1574 = vlaneseq
  %v1575 = vshrl.u32 %v1574, 7
  %v1576 = vsub.s32 1, %v1575
  %v1577 = vrot.slane %v1376, %v1576
  %v1578 = vmul.f32 %v1510, %v1577
  %v1579 = vmul.f32 %v1511, %v1577
  %v1580 = vmul.f32 %v1512, %v1577
  %v1581 = vmul.f32 %v1513, %v1577
  %v1582 = vmul.f32 %v1514, %v1577
  %v1583 = vmul.f32 %v1515, %v1577
  %v1584 = vmul.f32 %v1516, %v1577
  %v1585 = vmul.f32 %v1517, %v1577
  %v1586 = vmul.f32 %v1518, %v1577
  %v1587 = vmul.f32 %v1519, %v1577
  %v1588 = vmul.f32 %v1520, %v1577
  %v1589 = vmul.f32 %v1521, %v1577
  %v1590 = vmul.f32 %v1522, %v1577
  %v1591 = vmul.f32 %v1523, %v1577
  %v1592 = vmul.f32 %v1524, %v1577
  %v1593 = vmul.f32 %v1525, %v1577
  %v1594 = vmul.f32 %v1526, %v1577
  %v1595 = vmul.f32 %v1527, %v1577
  %v1596 = vmul.f32 %v1528, %v1577
  %v1597 = vmul.f32 %v1529, %v1577
  %v1598 = vmul.f32 %v1530, %v1577
  %v1599 = vmul.f32 %v1531, %v1577
  %v1600 = vmul.f32 %v1532, %v1577
  %v1601 = vmul.f32 %v1533, %v1577
  %v1602 = vmul.f32 %v1534, %v1577
  %v1603 = vmul.f32 %v1535, %v1577
  %v1604 = vmul.f32 %v1536, %v1577
  %v1605 = vmul.f32 %v1537, %v1577
  %v1606 = vmul.f32 %v1538, %v1577
  %v1607 = vmul.f32 %v1539, %v1577
  %v1608 = vmul.f32 %v1540, %v1577
  %v1609 = vmul.f32 %v1541, %v1577
  %v1610 = vmul.f32 %v1542, %v1577
  %v1611 = vmul.f32 %v1543, %v1577
  %v1612 = vmul.f32 %v1544, %v1577
  %v1613 = vmul.f32 %v1545, %v1577
  %v1614 = vmul.f32 %v1546, %v1577
  %v1615 = vmul.f32 %v1547, %v1577
  %v1616 = vmul.f32 %v1548, %v1577
  %v1617 = vmul.f32 %v1549, %v1577
  %v1618 = vmul.f32 %v1550, %v1577
  %v1619 = vmul.f32 %v1551, %v1577
  %v1620 = vmul.f32 %v1552, %v1577
  %v1621 = vmul.f32 %v1553, %v1577
  %v1622 = vmul.f32 %v1554, %v1577
  %v1623 = vmul.f32 %v1555, %v1577
  %v1624 = vmul.f32 %v1556, %v1577
  %v1625 = vmul.f32 %v1557, %v1577
  %v1626 = vmul.f32 %v1558, %v1577
  %v1627 = vmul.f32 %v1559, %v1577
  %v1628 = vmul.f32 %v1560, %v1577
  %v1629 = vmul.f32 %v1561, %v1577
  %v1630 = vmul.f32 %v1562, %v1577
  %v1631 = vmul.f32 %v1563, %v1577
  %v1632 = vmul.f32 %v1564, %v1577
  %v1633 = vmul.f32 %v1565, %v1577
  %v1634 = vmul.f32 %v1566, %v1577
  %v1635 = vmul.f32 %v1567, %v1577
  %v1636 = vmul.f32 %v1568, %v1577
  %v1637 = vmul.f32 %v1569, %v1577
  %v1638 = vmul.f32 %v1570, %v1577
  %v1639 = vmul.f32 %v1571, %v1577
  %v1640 = vmul.f32 %v1572, %v1577
  %v1641 = vmul.f32 %v1573, %v1577
  %v1642 = vld [vmem:[#allocation2 + $0x2] sm:$0xff]
  %v1643 = vld [vmem:[#allocation2 + $0xa] sm:$0xff]
  %v1644 = vld [vmem:[#allocation2 + $0x1a] sm:$0xff]
  %v1645 = vld [vmem:[#allocation2 + $0x22] sm:$0xff]
  %v1646 = vld [vmem:[#allocation2 + $0x32] sm:$0xff]
  %v1647 = vld [vmem:[#allocation2 + $0x3a] sm:$0xff]
  %v1648 = vld [vmem:[#allocation2 + $0x4a] sm:$0xff]
  %v1649 = vld [vmem:[#allocation2 + $0x52] sm:$0xff]
  %v1650 = vld [vmem:[#allocation2 + $0x62] sm:$0xff]
  %v1651 = vld [vmem:[#allocation2 + $0x6a] sm:$0xff]
  %v1652 = vld [vmem:[#allocation2 + $0x7a] sm:$0xff]
  %v1653 = vld [vmem:[#allocation2 + $0x82] sm:$0xff]
  %v1654 = vld [vmem:[#allocation2 + $0x92] sm:$0xff]
  %v1655 = vld [vmem:[#allocation2 + $0x9a] sm:$0xff]
  %v1656 = vld [vmem:[#allocation2 + $0xaa] sm:$0xff]
  %v1657 = vld [vmem:[#allocation2 + $0xb2] sm:$0xff]
  %v1658 = vld [vmem:[#allocation2 + $0xc2] sm:$0xff]
  %v1659 = vld [vmem:[#allocation2 + $0xca] sm:$0xff]
  %v1660 = vld [vmem:[#allocation2 + $0xda] sm:$0xff]
  %v1661 = vld [vmem:[#allocation2 + $0xe2] sm:$0xff]
  %v1662 = vld [vmem:[#allocation2 + $0xf2] sm:$0xff]
  %v1663 = vld [vmem:[#allocation2 + $0xfa] sm:$0xff]
  %v1664 = vld [vmem:[#allocation2 + $0x10a] sm:$0xff]
  %v1665 = vld [vmem:[#allocation2 + $0x112] sm:$0xff]
  %v1666 = vld [vmem:[#allocation2 + $0x122] sm:$0xff]
  %v1667 = vld [vmem:[#allocation2 + $0x12a] sm:$0xff]
  %v1668 = vld [vmem:[#allocation2 + $0x13a] sm:$0xff]
  %v1669 = vld [vmem:[#allocation2 + $0x142] sm:$0xff]
  %v1670 = vld [vmem:[#allocation2 + $0x152] sm:$0xff]
  %v1671 = vld [vmem:[#allocation2 + $0x15a] sm:$0xff]
  %v1672 = vld [vmem:[#allocation2 + $0x16a] sm:$0xff]
  %v1673 = vld [vmem:[#allocation2 + $0x172] sm:$0xff]
  %v1674 = vld [vmem:[#allocation2 + $0x1b2] sm:$0xff]
  %v1675 = vld [vmem:[#allocation2 + $0x1ba] sm:$0xff]
  %v1676 = vld [vmem:[#allocation2 + $0x1ca] sm:$0xff]
  %v1677 = vld [vmem:[#allocation2 + $0x1d2] sm:$0xff]
  %v1678 = vld [vmem:[#allocation2 + $0x1e2] sm:$0xff]
  %v1679 = vld [vmem:[#allocation2 + $0x1ea] sm:$0xff]
  %v1680 = vld [vmem:[#allocation2 + $0x1fa] sm:$0xff]
  %v1681 = vld [vmem:[#allocation2 + $0x202] sm:$0xff]
  %v1682 = vld [vmem:[#allocation2 + $0x212] sm:$0xff]
  %v1683 = vld [vmem:[#allocation2 + $0x21a] sm:$0xff]
  %v1684 = vld [vmem:[#allocation2 + $0x22a] sm:$0xff]
  %v1685 = vld [vmem:[#allocation2 + $0x232] sm:$0xff]
  %v1686 = vld [vmem:[#allocation2 + $0x242] sm:$0xff]
  %v1687 = vld [vmem:[#allocation2 + $0x24a] sm:$0xff]
  %v1688 = vld [vmem:[#allocation2 + $0x25a] sm:$0xff]
  %v1689 = vld [vmem:[#allocation2 + $0x262] sm:$0xff]
  %v1690 = vld [vmem:[#allocation2 + $0x272] sm:$0xff]
  %v1691 = vld [vmem:[#allocation2 + $0x27a] sm:$0xff]
  %v1692 = vld [vmem:[#allocation2 + $0x28a] sm:$0xff]
  %v1693 = vld [vmem:[#allocation2 + $0x292] sm:$0xff]
  %v1694 = vld [vmem:[#allocation2 + $0x2a2] sm:$0xff]
  %v1695 = vld [vmem:[#allocation2 + $0x2aa] sm:$0xff]
  %v1696 = vld [vmem:[#allocation2 + $0x2ba] sm:$0xff]
  %v1697 = vld [vmem:[#allocation2 + $0x2c2] sm:$0xff]
  %v1698 = vld [vmem:[#allocation2 + $0x2d2] sm:$0xff]
  %v1699 = vld [vmem:[#allocation2 + $0x2da] sm:$0xff]
  %v1700 = vld [vmem:[#allocation2 + $0x2ea] sm:$0xff]
  %v1701 = vld [vmem:[#allocation2 + $0x2f2] sm:$0xff]
  %v1702 = vld [vmem:[#allocation2 + $0x302] sm:$0xff]
  %v1703 = vld [vmem:[#allocation2 + $0x30a] sm:$0xff]
  %v1704 = vld [vmem:[#allocation2 + $0x31a] sm:$0xff]
  %v1705 = vld [vmem:[#allocation2 + $0x322] sm:$0xff]
  %v1706 = vlaneseq
  %v1707 = vshrl.u32 %v1706, 7
  %v1708 = vsub.s32 2, %v1707
  %v1709 = vrot.slane %v1376, %v1708
  %v1710 = vmul.f32 %v1642, %v1709
  %v1711 = vmul.f32 %v1643, %v1709
  %v1712 = vmul.f32 %v1644, %v1709
  %v1713 = vmul.f32 %v1645, %v1709
  %v1714 = vmul.f32 %v1646, %v1709
  %v1715 = vmul.f32 %v1647, %v1709
  %v1716 = vmul.f32 %v1648, %v1709
  %v1717 = vmul.f32 %v1649, %v1709
  %v1718 = vmul.f32 %v1650, %v1709
  %v1719 = vmul.f32 %v1651, %v1709
  %v1720 = vmul.f32 %v1652, %v1709
  %v1721 = vmul.f32 %v1653, %v1709
  %v1722 = vmul.f32 %v1654, %v1709
  %v1723 = vmul.f32 %v1655, %v1709
  %v1724 = vmul.f32 %v1656, %v1709
  %v1725 = vmul.f32 %v1657, %v1709
  %v1726 = vmul.f32 %v1658, %v1709
  %v1727 = vmul.f32 %v1659, %v1709
  %v1728 = vmul.f32 %v1660, %v1709
  %v1729 = vmul.f32 %v1661, %v1709
  %v1730 = vmul.f32 %v1662, %v1709
  %v1731 = vmul.f32 %v1663, %v1709
  %v1732 = vmul.f32 %v1664, %v1709
  %v1733 = vmul.f32 %v1665, %v1709
  %v1734 = vmul.f32 %v1666, %v1709
  %v1735 = vmul.f32 %v1667, %v1709
  %v1736 = vmul.f32 %v1668, %v1709
  %v1737 = vmul.f32 %v1669, %v1709
  %v1738 = vmul.f32 %v1670, %v1709
  %v1739 = vmul.f32 %v1671, %v1709
  %v1740 = vmul.f32 %v1672, %v1709
  %v1741 = vmul.f32 %v1673, %v1709
  %v1742 = vmul.f32 %v1674, %v1709
  %v1743 = vmul.f32 %v1675, %v1709
  %v1744 = vmul.f32 %v1676, %v1709
  %v1745 = vmul.f32 %v1677, %v1709
  %v1746 = vmul.f32 %v1678, %v1709
  %v1747 = vmul.f32 %v1679, %v1709
  %v1748 = vmul.f32 %v1680, %v1709
  %v1749 = vmul.f32 %v1681, %v1709
  %v1750 = vmul.f32 %v1682, %v1709
  %v1751 = vmul.f32 %v1683, %v1709
  %v1752 = vmul.f32 %v1684, %v1709
  %v1753 = vmul.f32 %v1685, %v1709
  %v1754 = vmul.f32 %v1686, %v1709
  %v1755 = vmul.f32 %v1687, %v1709
  %v1756 = vmul.f32 %v1688, %v1709
  %v1757 = vmul.f32 %v1689, %v1709
  %v1758 = vmul.f32 %v1690, %v1709
  %v1759 = vmul.f32 %v1691, %v1709
  %v1760 = vmul.f32 %v1692, %v1709
  %v1761 = vmul.f32 %v1693, %v1709
  %v1762 = vmul.f32 %v1694, %v1709
  %v1763 = vmul.f32 %v1695, %v1709
  %v1764 = vmul.f32 %v1696, %v1709
  %v1765 = vmul.f32 %v1697, %v1709
  %v1766 = vmul.f32 %v1698, %v1709
  %v1767 = vmul.f32 %v1699, %v1709
  %v1768 = vmul.f32 %v1700, %v1709
  %v1769 = vmul.f32 %v1701, %v1709
  %v1770 = vmul.f32 %v1702, %v1709
  %v1771 = vmul.f32 %v1703, %v1709
  %v1772 = vmul.f32 %v1704, %v1709
  %v1773 = vmul.f32 %v1705, %v1709
  %v1774 = vld [vmem:[%s1247] sm:$0xff]
  %v1775 = vld [vmem:[%s1247 + $0x8] sm:$0xff]
  %v1776 = vld [vmem:[%s1247 + $0x18] sm:$0xff]
  %v1777 = vld [vmem:[%s1247 + $0x20] sm:$0xff]
  %v1778 = vld [vmem:[%s1247 + $0x30] sm:$0xff]
  %v1779 = vld [vmem:[%s1247 + $0x38] sm:$0xff]
  %v1780 = vld [vmem:[%s1247 + $0x48] sm:$0xff]
  %v1781 = vld [vmem:[%s1247 + $0x50] sm:$0xff]
  %v1782 = vld [vmem:[%s1247 + $0x60] sm:$0xff]
  %v1783 = vld [vmem:[%s1247 + $0x68] sm:$0xff]
  %v1784 = vld [vmem:[%s1247 + $0x78] sm:$0xff]
  %v1785 = vld [vmem:[%s1247 + $0x80] sm:$0xff]
  %v1786 = vld [vmem:[%s1247 + $0x90] sm:$0xff]
  %v1787 = vld [vmem:[%s1247 + $0x98] sm:$0xff]
  %v1788 = vld [vmem:[%s1247 + $0xa8] sm:$0xff]
  %v1789 = vld [vmem:[%s1247 + $0xb0] sm:$0xff]
  %v1790 = vld [vmem:[%s1247 + $0xc0] sm:$0xff]
  %v1791 = vld [vmem:[%s1247 + $0xc8] sm:$0xff]
  %v1792 = vld [vmem:[%s1247 + $0xd8] sm:$0xff]
  %v1793 = vld [vmem:[%s1247 + $0xe0] sm:$0xff]
  %v1794 = vld [vmem:[%s1247 + $0xf0] sm:$0xff]
  %v1795 = vld [vmem:[%s1247 + $0xf8] sm:$0xff]
  %v1796 = vld [vmem:[%s1247 + $0x108] sm:$0xff]
  %v1797 = vld [vmem:[%s1247 + $0x110] sm:$0xff]
  %v1798 = vld [vmem:[%s1247 + $0x120] sm:$0xff]
  %v1799 = vld [vmem:[%s1247 + $0x128] sm:$0xff]
  %v1800 = vld [vmem:[%s1247 + $0x138] sm:$0xff]
  %v1801 = vld [vmem:[%s1247 + $0x140] sm:$0xff]
  %v1802 = vld [vmem:[%s1247 + $0x150] sm:$0xff]
  %v1803 = vld [vmem:[%s1247 + $0x158] sm:$0xff]
  %v1804 = vld [vmem:[%s1247 + $0x168] sm:$0xff]
  %v1805 = vld [vmem:[%s1247 + $0x170] sm:$0xff]
  %v1806 = vld [vmem:[%s1247 + $0x1b0] sm:$0xff]
  %v1807 = vld [vmem:[%s1247 + $0x1b8] sm:$0xff]
  %v1808 = vld [vmem:[%s1247 + $0x1c8] sm:$0xff]
  %v1809 = vld [vmem:[%s1247 + $0x1d0] sm:$0xff]
  %v1810 = vld [vmem:[%s1247 + $0x1e0] sm:$0xff]
  %v1811 = vld [vmem:[%s1247 + $0x1e8] sm:$0xff]
  %v1812 = vld [vmem:[%s1247 + $0x1f8] sm:$0xff]
  %v1813 = vld [vmem:[%s1247 + $0x200] sm:$0xff]
  %v1814 = vld [vmem:[%s1247 + $0x210] sm:$0xff]
  %v1815 = vld [vmem:[%s1247 + $0x218] sm:$0xff]
  %v1816 = vld [vmem:[%s1247 + $0x228] sm:$0xff]
  %v1817 = vld [vmem:[%s1247 + $0x230] sm:$0xff]
  %v1818 = vld [vmem:[%s1247 + $0x240] sm:$0xff]
  %v1819 = vld [vmem:[%s1247 + $0x248] sm:$0xff]
  %v1820 = vld [vmem:[%s1247 + $0x258] sm:$0xff]
  %v1821 = vld [vmem:[%s1247 + $0x260] sm:$0xff]
  %v1822 = vld [vmem:[%s1247 + $0x270] sm:$0xff]
  %v1823 = vld [vmem:[%s1247 + $0x278] sm:$0xff]
  %v1824 = vld [vmem:[%s1247 + $0x288] sm:$0xff]
  %v1825 = vld [vmem:[%s1247 + $0x290] sm:$0xff]
  %v1826 = vld [vmem:[%s1247 + $0x2a0] sm:$0xff]
  %v1827 = vld [vmem:[%s1247 + $0x2a8] sm:$0xff]
  %v1828 = vld [vmem:[%s1247 + $0x2b8] sm:$0xff]
  %v1829 = vld [vmem:[%s1247 + $0x2c0] sm:$0xff]
  %v1830 = vld [vmem:[%s1247 + $0x2d0] sm:$0xff]
  %v1831 = vld [vmem:[%s1247 + $0x2d8] sm:$0xff]
  %v1832 = vld [vmem:[%s1247 + $0x2e8] sm:$0xff]
  %v1833 = vld [vmem:[%s1247 + $0x2f0] sm:$0xff]
  %v1834 = vld [vmem:[%s1247 + $0x300] sm:$0xff]
  %v1835 = vld [vmem:[%s1247 + $0x308] sm:$0xff]
  %v1836 = vld [vmem:[%s1247 + $0x318] sm:$0xff]
  %v1837 = vld [vmem:[%s1247 + $0x320] sm:$0xff]
  %v1838 = vlaneseq
  %v1839 = vshrl.u32 %v1838, 7
  %v1840 = vsub.s32 3, %v1839
  %v1841 = vrot.slane %v1376, %v1840
  %v1842 = vmul.f32 %v1774, %v1841
  %v1843 = vmul.f32 %v1775, %v1841
  %v1844 = vmul.f32 %v1776, %v1841
  %v1845 = vmul.f32 %v1777, %v1841
  %v1846 = vmul.f32 %v1778, %v1841
  %v1847 = vmul.f32 %v1779, %v1841
  %v1848 = vmul.f32 %v1780, %v1841
  %v1849 = vmul.f32 %v1781, %v1841
  %v1850 = vmul.f32 %v1782, %v1841
  %v1851 = vmul.f32 %v1783, %v1841
  %v1852 = vmul.f32 %v1784, %v1841
  %v1853 = vmul.f32 %v1785, %v1841
  %v1854 = vmul.f32 %v1786, %v1841
  %v1855 = vmul.f32 %v1787, %v1841
  %v1856 = vmul.f32 %v1788, %v1841
  %v1857 = vmul.f32 %v1789, %v1841
  %v1858 = vmul.f32 %v1790, %v1841
  %v1859 = vmul.f32 %v1791, %v1841
  %v1860 = vmul.f32 %v1792, %v1841
  %v1861 = vmul.f32 %v1793, %v1841
  %v1862 = vmul.f32 %v1794, %v1841
  %v1863 = vmul.f32 %v1795, %v1841
  %v1864 = vmul.f32 %v1796, %v1841
  %v1865 = vmul.f32 %v1797, %v1841
  %v1866 = vmul.f32 %v1798, %v1841
  %v1867 = vmul.f32 %v1799, %v1841
  %v1868 = vmul.f32 %v1800, %v1841
  %v1869 = vmul.f32 %v1801, %v1841
  %v1870 = vmul.f32 %v1802, %v1841
  %v1871 = vmul.f32 %v1803, %v1841
  %v1872 = vmul.f32 %v1804, %v1841
  %v1873 = vmul.f32 %v1805, %v1841
  %v1874 = vmul.f32 %v1806, %v1841
  %v1875 = vmul.f32 %v1807, %v1841
  %v1876 = vmul.f32 %v1808, %v1841
  %v1877 = vmul.f32 %v1809, %v1841
  %v1878 = vmul.f32 %v1810, %v1841
  %v1879 = vmul.f32 %v1811, %v1841
  %v1880 = vmul.f32 %v1812, %v1841
  %v1881 = vmul.f32 %v1813, %v1841
  %v1882 = vmul.f32 %v1814, %v1841
  %v1883 = vmul.f32 %v1815, %v1841
  %v1884 = vmul.f32 %v1816, %v1841
  %v1885 = vmul.f32 %v1817, %v1841
  %v1886 = vmul.f32 %v1818, %v1841
  %v1887 = vmul.f32 %v1819, %v1841
  %v1888 = vmul.f32 %v1820, %v1841
  %v1889 = vmul.f32 %v1821, %v1841
  %v1890 = vmul.f32 %v1822, %v1841
  %v1891 = vmul.f32 %v1823, %v1841
  %v1892 = vmul.f32 %v1824, %v1841
  %v1893 = vmul.f32 %v1825, %v1841
  %v1894 = vmul.f32 %v1826, %v1841
  %v1895 = vmul.f32 %v1827, %v1841
  %v1896 = vmul.f32 %v1828, %v1841
  %v1897 = vmul.f32 %v1829, %v1841
  %v1898 = vmul.f32 %v1830, %v1841
  %v1899 = vmul.f32 %v1831, %v1841
  %v1900 = vmul.f32 %v1832, %v1841
  %v1901 = vmul.f32 %v1833, %v1841
  %v1902 = vmul.f32 %v1834, %v1841
  %v1903 = vmul.f32 %v1835, %v1841
  %v1904 = vmul.f32 %v1836, %v1841
  %v1905 = vmul.f32 %v1837, %v1841
  %v1906 = vld [vmem:[%s1247 + $0x1] sm:$0xff]
  %v1907 = vld [vmem:[%s1247 + $0x9] sm:$0xff]
  %v1908 = vld [vmem:[%s1247 + $0x19] sm:$0xff]
  %v1909 = vld [vmem:[%s1247 + $0x21] sm:$0xff]
  %v1910 = vld [vmem:[%s1247 + $0x31] sm:$0xff]
  %v1911 = vld [vmem:[%s1247 + $0x39] sm:$0xff]
  %v1912 = vld [vmem:[%s1247 + $0x49] sm:$0xff]
  %v1913 = vld [vmem:[%s1247 + $0x51] sm:$0xff]
  %v1914 = vld [vmem:[%s1247 + $0x61] sm:$0xff]
  %v1915 = vld [vmem:[%s1247 + $0x69] sm:$0xff]
  %v1916 = vld [vmem:[%s1247 + $0x79] sm:$0xff]
  %v1917 = vld [vmem:[%s1247 + $0x81] sm:$0xff]
  %v1918 = vld [vmem:[%s1247 + $0x91] sm:$0xff]
  %v1919 = vld [vmem:[%s1247 + $0x99] sm:$0xff]
  %v1920 = vld [vmem:[%s1247 + $0xa9] sm:$0xff]
  %v1921 = vld [vmem:[%s1247 + $0xb1] sm:$0xff]
  %v1922 = vld [vmem:[%s1247 + $0xc1] sm:$0xff]
  %v1923 = vld [vmem:[%s1247 + $0xc9] sm:$0xff]
  %v1924 = vld [vmem:[%s1247 + $0xd9] sm:$0xff]
  %v1925 = vld [vmem:[%s1247 + $0xe1] sm:$0xff]
  %v1926 = vld [vmem:[%s1247 + $0xf1] sm:$0xff]
  %v1927 = vld [vmem:[%s1247 + $0xf9] sm:$0xff]
  %v1928 = vld [vmem:[%s1247 + $0x109] sm:$0xff]
  %v1929 = vld [vmem:[%s1247 + $0x111] sm:$0xff]
  %v1930 = vld [vmem:[%s1247 + $0x121] sm:$0xff]
  %v1931 = vld [vmem:[%s1247 + $0x129] sm:$0xff]
  %v1932 = vld [vmem:[%s1247 + $0x139] sm:$0xff]
  %v1933 = vld [vmem:[%s1247 + $0x141] sm:$0xff]
  %v1934 = vld [vmem:[%s1247 + $0x151] sm:$0xff]
  %v1935 = vld [vmem:[%s1247 + $0x159] sm:$0xff]
  %v1936 = vld [vmem:[%s1247 + $0x169] sm:$0xff]
  %v1937 = vld [vmem:[%s1247 + $0x171] sm:$0xff]
  %v1938 = vld [vmem:[%s1247 + $0x1b1] sm:$0xff]
  %v1939 = vld [vmem:[%s1247 + $0x1b9] sm:$0xff]
  %v1940 = vld [vmem:[%s1247 + $0x1c9] sm:$0xff]
  %v1941 = vld [vmem:[%s1247 + $0x1d1] sm:$0xff]
  %v1942 = vld [vmem:[%s1247 + $0x1e1] sm:$0xff]
  %v1943 = vld [vmem:[%s1247 + $0x1e9] sm:$0xff]
  %v1944 = vld [vmem:[%s1247 + $0x1f9] sm:$0xff]
  %v1945 = vld [vmem:[%s1247 + $0x201] sm:$0xff]
  %v1946 = vld [vmem:[%s1247 + $0x211] sm:$0xff]
  %v1947 = vld [vmem:[%s1247 + $0x219] sm:$0xff]
  %v1948 = vld [vmem:[%s1247 + $0x229] sm:$0xff]
  %v1949 = vld [vmem:[%s1247 + $0x231] sm:$0xff]
  %v1950 = vld [vmem:[%s1247 + $0x241] sm:$0xff]
  %v1951 = vld [vmem:[%s1247 + $0x249] sm:$0xff]
  %v1952 = vld [vmem:[%s1247 + $0x259] sm:$0xff]
  %v1953 = vld [vmem:[%s1247 + $0x261] sm:$0xff]
  %v1954 = vld [vmem:[%s1247 + $0x271] sm:$0xff]
  %v1955 = vld [vmem:[%s1247 + $0x279] sm:$0xff]
  %v1956 = vld [vmem:[%s1247 + $0x289] sm:$0xff]
  %v1957 = vld [vmem:[%s1247 + $0x291] sm:$0xff]
  %v1958 = vld [vmem:[%s1247 + $0x2a1] sm:$0xff]
  %v1959 = vld [vmem:[%s1247 + $0x2a9] sm:$0xff]
  %v1960 = vld [vmem:[%s1247 + $0x2b9] sm:$0xff]
  %v1961 = vld [vmem:[%s1247 + $0x2c1] sm:$0xff]
  %v1962 = vld [vmem:[%s1247 + $0x2d1] sm:$0xff]
  %v1963 = vld [vmem:[%s1247 + $0x2d9] sm:$0xff]
  %v1964 = vld [vmem:[%s1247 + $0x2e9] sm:$0xff]
  %v1965 = vld [vmem:[%s1247 + $0x2f1] sm:$0xff]
  %v1966 = vld [vmem:[%s1247 + $0x301] sm:$0xff]
  %v1967 = vld [vmem:[%s1247 + $0x309] sm:$0xff]
  %v1968 = vld [vmem:[%s1247 + $0x319] sm:$0xff]
  %v1969 = vld [vmem:[%s1247 + $0x321] sm:$0xff]
  %v1970 = vlaneseq
  %v1971 = vshrl.u32 %v1970, 7
  %v1972 = vsub.s32 4, %v1971
  %v1973 = vrot.slane %v1376, %v1972
  %v1974 = vmul.f32 %v1906, %v1973
  %v1975 = vmul.f32 %v1907, %v1973
  %v1976 = vmul.f32 %v1908, %v1973
  %v1977 = vmul.f32 %v1909, %v1973
  %v1978 = vmul.f32 %v1910, %v1973
  %v1979 = vmul.f32 %v1911, %v1973
  %v1980 = vmul.f32 %v1912, %v1973
  %v1981 = vmul.f32 %v1913, %v1973
  %v1982 = vmul.f32 %v1914, %v1973
  %v1983 = vmul.f32 %v1915, %v1973
  %v1984 = vmul.f32 %v1916, %v1973
  %v1985 = vmul.f32 %v1917, %v1973
  %v1986 = vmul.f32 %v1918, %v1973
  %v1987 = vmul.f32 %v1919, %v1973
  %v1988 = vmul.f32 %v1920, %v1973
  %v1989 = vmul.f32 %v1921, %v1973
  %v1990 = vmul.f32 %v1922, %v1973
  %v1991 = vmul.f32 %v1923, %v1973
  %v1992 = vmul.f32 %v1924, %v1973
  %v1993 = vmul.f32 %v1925, %v1973
  %v1994 = vmul.f32 %v1926, %v1973
  %v1995 = vmul.f32 %v1927, %v1973
  %v1996 = vmul.f32 %v1928, %v1973
  %v1997 = vmul.f32 %v1929, %v1973
  %v1998 = vmul.f32 %v1930, %v1973
  %v1999 = vmul.f32 %v1931, %v1973
  %v2000 = vmul.f32 %v1932, %v1973
  %v2001 = vmul.f32 %v1933, %v1973
  %v2002 = vmul.f32 %v1934, %v1973
  %v2003 = vmul.f32 %v1935, %v1973
  %v2004 = vmul.f32 %v1936, %v1973
  %v2005 = vmul.f32 %v1937, %v1973
  %v2006 = vmul.f32 %v1938, %v1973
  %v2007 = vmul.f32 %v1939, %v1973
  %v2008 = vmul.f32 %v1940, %v1973
  %v2009 = vmul.f32 %v1941, %v1973
  %v2010 = vmul.f32 %v1942, %v1973
  %v2011 = vmul.f32 %v1943, %v1973
  %v2012 = vmul.f32 %v1944, %v1973
  %v2013 = vmul.f32 %v1945, %v1973
  %v2014 = vmul.f32 %v1946, %v1973
  %v2015 = vmul.f32 %v1947, %v1973
  %v2016 = vmul.f32 %v1948, %v1973
  %v2017 = vmul.f32 %v1949, %v1973
  %v2018 = vmul.f32 %v1950, %v1973
  %v2019 = vmul.f32 %v1951, %v1973
  %v2020 = vmul.f32 %v1952, %v1973
  %v2021 = vmul.f32 %v1953, %v1973
  %v2022 = vmul.f32 %v1954, %v1973
  %v2023 = vmul.f32 %v1955, %v1973
  %v2024 = vmul.f32 %v1956, %v1973
  %v2025 = vmul.f32 %v1957, %v1973
  %v2026 = vmul.f32 %v1958, %v1973
  %v2027 = vmul.f32 %v1959, %v1973
  %v2028 = vmul.f32 %v1960, %v1973
  %v2029 = vmul.f32 %v1961, %v1973
  %v2030 = vmul.f32 %v1962, %v1973
  %v2031 = vmul.f32 %v1963, %v1973
  %v2032 = vmul.f32 %v1964, %v1973
  %v2033 = vmul.f32 %v1965, %v1973
  %v2034 = vmul.f32 %v1966, %v1973
  %v2035 = vmul.f32 %v1967, %v1973
  %v2036 = vmul.f32 %v1968, %v1973
  %v2037 = vmul.f32 %v1969, %v1973
  %v2038 = vld [vmem:[%s1247 + $0x2] sm:$0xff]
  %v2039 = vld [vmem:[%s1247 + $0xa] sm:$0xff]
  %v2040 = vld [vmem:[%s1247 + $0x1a] sm:$0xff]
  %v2041 = vld [vmem:[%s1247 + $0x22] sm:$0xff]
  %v2042 = vld [vmem:[%s1247 + $0x32] sm:$0xff]
  %v2043 = vld [vmem:[%s1247 + $0x3a] sm:$0xff]
  %v2044 = vld [vmem:[%s1247 + $0x4a] sm:$0xff]
  %v2045 = vld [vmem:[%s1247 + $0x52] sm:$0xff]
  %v2046 = vld [vmem:[%s1247 + $0x62] sm:$0xff]
  %v2047 = vld [vmem:[%s1247 + $0x6a] sm:$0xff]
  %v2048 = vld [vmem:[%s1247 + $0x7a] sm:$0xff]
  %v2049 = vld [vmem:[%s1247 + $0x82] sm:$0xff]
  %v2050 = vld [vmem:[%s1247 + $0x92] sm:$0xff]
  %v2051 = vld [vmem:[%s1247 + $0x9a] sm:$0xff]
  %v2052 = vld [vmem:[%s1247 + $0xaa] sm:$0xff]
  %v2053 = vld [vmem:[%s1247 + $0xb2] sm:$0xff]
  %v2054 = vld [vmem:[%s1247 + $0xc2] sm:$0xff]
  %v2055 = vld [vmem:[%s1247 + $0xca] sm:$0xff]
  %v2056 = vld [vmem:[%s1247 + $0xda] sm:$0xff]
  %v2057 = vld [vmem:[%s1247 + $0xe2] sm:$0xff]
  %v2058 = vld [vmem:[%s1247 + $0xf2] sm:$0xff]
  %v2059 = vld [vmem:[%s1247 + $0xfa] sm:$0xff]
  %v2060 = vld [vmem:[%s1247 + $0x10a] sm:$0xff]
  %v2061 = vld [vmem:[%s1247 + $0x112] sm:$0xff]
  %v2062 = vld [vmem:[%s1247 + $0x122] sm:$0xff]
  %v2063 = vld [vmem:[%s1247 + $0x12a] sm:$0xff]
  %v2064 = vld [vmem:[%s1247 + $0x13a] sm:$0xff]
  %v2065 = vld [vmem:[%s1247 + $0x142] sm:$0xff]
  %v2066 = vld [vmem:[%s1247 + $0x152] sm:$0xff]
  %v2067 = vld [vmem:[%s1247 + $0x15a] sm:$0xff]
  %v2068 = vld [vmem:[%s1247 + $0x16a] sm:$0xff]
  %v2069 = vld [vmem:[%s1247 + $0x172] sm:$0xff]
  %v2070 = vld [vmem:[%s1247 + $0x1b2] sm:$0xff]
  %v2071 = vld [vmem:[%s1247 + $0x1ba] sm:$0xff]
  %v2072 = vld [vmem:[%s1247 + $0x1ca] sm:$0xff]
  %v2073 = vld [vmem:[%s1247 + $0x1d2] sm:$0xff]
  %v2074 = vld [vmem:[%s1247 + $0x1e2] sm:$0xff]
  %v2075 = vld [vmem:[%s1247 + $0x1ea] sm:$0xff]
  %v2076 = vld [vmem:[%s1247 + $0x1fa] sm:$0xff]
  %v2077 = vld [vmem:[%s1247 + $0x202] sm:$0xff]
  %v2078 = vld [vmem:[%s1247 + $0x212] sm:$0xff]
  %v2079 = vld [vmem:[%s1247 + $0x21a] sm:$0xff]
  %v2080 = vld [vmem:[%s1247 + $0x22a] sm:$0xff]
  %v2081 = vld [vmem:[%s1247 + $0x232] sm:$0xff]
  %v2082 = vld [vmem:[%s1247 + $0x242] sm:$0xff]
  %v2083 = vld [vmem:[%s1247 + $0x24a] sm:$0xff]
  %v2084 = vld [vmem:[%s1247 + $0x25a] sm:$0xff]
  %v2085 = vld [vmem:[%s1247 + $0x262] sm:$0xff]
  %v2086 = vld [vmem:[%s1247 + $0x272] sm:$0xff]
  %v2087 = vld [vmem:[%s1247 + $0x27a] sm:$0xff]
  %v2088 = vld [vmem:[%s1247 + $0x28a] sm:$0xff]
  %v2089 = vld [vmem:[%s1247 + $0x292] sm:$0xff]
  %v2090 = vld [vmem:[%s1247 + $0x2a2] sm:$0xff]
  %v2091 = vld [vmem:[%s1247 + $0x2aa] sm:$0xff]
  %v2092 = vld [vmem:[%s1247 + $0x2ba] sm:$0xff]
  %v2093 = vld [vmem:[%s1247 + $0x2c2] sm:$0xff]
  %v2094 = vld [vmem:[%s1247 + $0x2d2] sm:$0xff]
  %v2095 = vld [vmem:[%s1247 + $0x2da] sm:$0xff]
  %v2096 = vld [vmem:[%s1247 + $0x2ea] sm:$0xff]
  %v2097 = vld [vmem:[%s1247 + $0x2f2] sm:$0xff]
  %v2098 = vld [vmem:[%s1247 + $0x302] sm:$0xff]
  %v2099 = vld [vmem:[%s1247 + $0x30a] sm:$0xff]
  %v2100 = vld [vmem:[%s1247 + $0x31a] sm:$0xff]
  %v2101 = vld [vmem:[%s1247 + $0x322] sm:$0xff]
  %v2102 = vlaneseq
  %v2103 = vshrl.u32 %v2102, 7
  %v2104 = vsub.s32 5, %v2103
  %v2105 = vrot.slane %v1376, %v2104
  %v2106 = vmul.f32 %v2038, %v2105
  %v2107 = vmul.f32 %v2039, %v2105
  %v2108 = vmul.f32 %v2040, %v2105
  %v2109 = vmul.f32 %v2041, %v2105
  %v2110 = vmul.f32 %v2042, %v2105
  %v2111 = vmul.f32 %v2043, %v2105
  %v2112 = vmul.f32 %v2044, %v2105
  %v2113 = vmul.f32 %v2045, %v2105
  %v2114 = vmul.f32 %v2046, %v2105
  %v2115 = vmul.f32 %v2047, %v2105
  %v2116 = vmul.f32 %v2048, %v2105
  %v2117 = vmul.f32 %v2049, %v2105
  %v2118 = vmul.f32 %v2050, %v2105
  %v2119 = vmul.f32 %v2051, %v2105
  %v2120 = vmul.f32 %v2052, %v2105
  %v2121 = vmul.f32 %v2053, %v2105
  %v2122 = vmul.f32 %v2054, %v2105
  %v2123 = vmul.f32 %v2055, %v2105
  %v2124 = vmul.f32 %v2056, %v2105
  %v2125 = vmul.f32 %v2057, %v2105
  %v2126 = vmul.f32 %v2058, %v2105
  %v2127 = vmul.f32 %v2059, %v2105
  %v2128 = vmul.f32 %v2060, %v2105
  %v2129 = vmul.f32 %v2061, %v2105
  %v2130 = vmul.f32 %v2062, %v2105
  %v2131 = vmul.f32 %v2063, %v2105
  %v2132 = vmul.f32 %v2064, %v2105
  %v2133 = vmul.f32 %v2065, %v2105
  %v2134 = vmul.f32 %v2066, %v2105
  %v2135 = vmul.f32 %v2067, %v2105
  %v2136 = vmul.f32 %v2068, %v2105
  %v2137 = vmul.f32 %v2069, %v2105
  %v2138 = vmul.f32 %v2070, %v2105
  %v2139 = vmul.f32 %v2071, %v2105
  %v2140 = vmul.f32 %v2072, %v2105
  %v2141 = vmul.f32 %v2073, %v2105
  %v2142 = vmul.f32 %v2074, %v2105
  %v2143 = vmul.f32 %v2075, %v2105
  %v2144 = vmul.f32 %v2076, %v2105
  %v2145 = vmul.f32 %v2077, %v2105
  %v2146 = vmul.f32 %v2078, %v2105
  %v2147 = vmul.f32 %v2079, %v2105
  %v2148 = vmul.f32 %v2080, %v2105
  %v2149 = vmul.f32 %v2081, %v2105
  %v2150 = vmul.f32 %v2082, %v2105
  %v2151 = vmul.f32 %v2083, %v2105
  %v2152 = vmul.f32 %v2084, %v2105
  %v2153 = vmul.f32 %v2085, %v2105
  %v2154 = vmul.f32 %v2086, %v2105
  %v2155 = vmul.f32 %v2087, %v2105
  %v2156 = vmul.f32 %v2088, %v2105
  %v2157 = vmul.f32 %v2089, %v2105
  %v2158 = vmul.f32 %v2090, %v2105
  %v2159 = vmul.f32 %v2091, %v2105
  %v2160 = vmul.f32 %v2092, %v2105
  %v2161 = vmul.f32 %v2093, %v2105
  %v2162 = vmul.f32 %v2094, %v2105
  %v2163 = vmul.f32 %v2095, %v2105
  %v2164 = vmul.f32 %v2096, %v2105
  %v2165 = vmul.f32 %v2097, %v2105
  %v2166 = vmul.f32 %v2098, %v2105
  %v2167 = vmul.f32 %v2099, %v2105
  %v2168 = vmul.f32 %v2100, %v2105
  %v2169 = vmul.f32 %v2101, %v2105
  %s2170 = scalar_lea.vmem [#allocation2], 48
  %v2171 = vld [vmem:[%s2170] sm:$0xff]
  %v2172 = vld [vmem:[%s2170 + $0x8] sm:$0xff]
  %v2173 = vld [vmem:[%s2170 + $0x18] sm:$0xff]
  %v2174 = vld [vmem:[%s2170 + $0x20] sm:$0xff]
  %v2175 = vld [vmem:[%s2170 + $0x30] sm:$0xff]
  %v2176 = vld [vmem:[%s2170 + $0x38] sm:$0xff]
  %v2177 = vld [vmem:[%s2170 + $0x48] sm:$0xff]
  %v2178 = vld [vmem:[%s2170 + $0x50] sm:$0xff]
  %v2179 = vld [vmem:[%s2170 + $0x60] sm:$0xff]
  %v2180 = vld [vmem:[%s2170 + $0x68] sm:$0xff]
  %v2181 = vld [vmem:[%s2170 + $0x78] sm:$0xff]
  %v2182 = vld [vmem:[%s2170 + $0x80] sm:$0xff]
  %v2183 = vld [vmem:[%s2170 + $0x90] sm:$0xff]
  %v2184 = vld [vmem:[%s2170 + $0x98] sm:$0xff]
  %v2185 = vld [vmem:[%s2170 + $0xa8] sm:$0xff]
  %v2186 = vld [vmem:[%s2170 + $0xb0] sm:$0xff]
  %v2187 = vld [vmem:[%s2170 + $0xc0] sm:$0xff]
  %v2188 = vld [vmem:[%s2170 + $0xc8] sm:$0xff]
  %v2189 = vld [vmem:[%s2170 + $0xd8] sm:$0xff]
  %v2190 = vld [vmem:[%s2170 + $0xe0] sm:$0xff]
  %v2191 = vld [vmem:[%s2170 + $0xf0] sm:$0xff]
  %v2192 = vld [vmem:[%s2170 + $0xf8] sm:$0xff]
  %v2193 = vld [vmem:[%s2170 + $0x108] sm:$0xff]
  %v2194 = vld [vmem:[%s2170 + $0x110] sm:$0xff]
  %v2195 = vld [vmem:[%s2170 + $0x120] sm:$0xff]
  %v2196 = vld [vmem:[%s2170 + $0x128] sm:$0xff]
  %v2197 = vld [vmem:[%s2170 + $0x138] sm:$0xff]
  %v2198 = vld [vmem:[%s2170 + $0x140] sm:$0xff]
  %v2199 = vld [vmem:[%s2170 + $0x150] sm:$0xff]
  %v2200 = vld [vmem:[%s2170 + $0x158] sm:$0xff]
  %v2201 = vld [vmem:[%s2170 + $0x168] sm:$0xff]
  %v2202 = vld [vmem:[%s2170 + $0x170] sm:$0xff]
  %v2203 = vld [vmem:[%s2170 + $0x1b0] sm:$0xff]
  %v2204 = vld [vmem:[%s2170 + $0x1b8] sm:$0xff]
  %v2205 = vld [vmem:[%s2170 + $0x1c8] sm:$0xff]
  %v2206 = vld [vmem:[%s2170 + $0x1d0] sm:$0xff]
  %v2207 = vld [vmem:[%s2170 + $0x1e0] sm:$0xff]
  %v2208 = vld [vmem:[%s2170 + $0x1e8] sm:$0xff]
  %v2209 = vld [vmem:[%s2170 + $0x1f8] sm:$0xff]
  %v2210 = vld [vmem:[%s2170 + $0x200] sm:$0xff]
  %v2211 = vld [vmem:[%s2170 + $0x210] sm:$0xff]
  %v2212 = vld [vmem:[%s2170 + $0x218] sm:$0xff]
  %v2213 = vld [vmem:[%s2170 + $0x228] sm:$0xff]
  %v2214 = vld [vmem:[%s2170 + $0x230] sm:$0xff]
  %v2215 = vld [vmem:[%s2170 + $0x240] sm:$0xff]
  %v2216 = vld [vmem:[%s2170 + $0x248] sm:$0xff]
  %v2217 = vld [vmem:[%s2170 + $0x258] sm:$0xff]
  %v2218 = vld [vmem:[%s2170 + $0x260] sm:$0xff]
  %v2219 = vld [vmem:[%s2170 + $0x270] sm:$0xff]
  %v2220 = vld [vmem:[%s2170 + $0x278] sm:$0xff]
  %v2221 = vld [vmem:[%s2170 + $0x288] sm:$0xff]
  %v2222 = vld [vmem:[%s2170 + $0x290] sm:$0xff]
  %v2223 = vld [vmem:[%s2170 + $0x2a0] sm:$0xff]
  %v2224 = vld [vmem:[%s2170 + $0x2a8] sm:$0xff]
  %v2225 = vld [vmem:[%s2170 + $0x2b8] sm:$0xff]
  %v2226 = vld [vmem:[%s2170 + $0x2c0] sm:$0xff]
  %v2227 = vld [vmem:[%s2170 + $0x2d0] sm:$0xff]
  %v2228 = vld [vmem:[%s2170 + $0x2d8] sm:$0xff]
  %v2229 = vld [vmem:[%s2170 + $0x2e8] sm:$0xff]
  %v2230 = vld [vmem:[%s2170 + $0x2f0] sm:$0xff]
  %v2231 = vld [vmem:[%s2170 + $0x300] sm:$0xff]
  %v2232 = vld [vmem:[%s2170 + $0x308] sm:$0xff]
  %v2233 = vld [vmem:[%s2170 + $0x318] sm:$0xff]
  %v2234 = vld [vmem:[%s2170 + $0x320] sm:$0xff]
  %v2235 = vlaneseq
  %v2236 = vshrl.u32 %v2235, 7
  %v2237 = vsub.s32 6, %v2236
  %v2238 = vrot.slane %v1376, %v2237
  %v2239 = vmul.f32 %v2171, %v2238
  %v2240 = vmul.f32 %v2172, %v2238
  %v2241 = vmul.f32 %v2173, %v2238
  %v2242 = vmul.f32 %v2174, %v2238
  %v2243 = vmul.f32 %v2175, %v2238
  %v2244 = vmul.f32 %v2176, %v2238
  %v2245 = vmul.f32 %v2177, %v2238
  %v2246 = vmul.f32 %v2178, %v2238
  %v2247 = vmul.f32 %v2179, %v2238
  %v2248 = vmul.f32 %v2180, %v2238
  %v2249 = vmul.f32 %v2181, %v2238
  %v2250 = vmul.f32 %v2182, %v2238
  %v2251 = vmul.f32 %v2183, %v2238
  %v2252 = vmul.f32 %v2184, %v2238
  %v2253 = vmul.f32 %v2185, %v2238
  %v2254 = vmul.f32 %v2186, %v2238
  %v2255 = vmul.f32 %v2187, %v2238
  %v2256 = vmul.f32 %v2188, %v2238
  %v2257 = vmul.f32 %v2189, %v2238
  %v2258 = vmul.f32 %v2190, %v2238
  %v2259 = vmul.f32 %v2191, %v2238
  %v2260 = vmul.f32 %v2192, %v2238
  %v2261 = vmul.f32 %v2193, %v2238
  %v2262 = vmul.f32 %v2194, %v2238
  %v2263 = vmul.f32 %v2195, %v2238
  %v2264 = vmul.f32 %v2196, %v2238
  %v2265 = vmul.f32 %v2197, %v2238
  %v2266 = vmul.f32 %v2198, %v2238
  %v2267 = vmul.f32 %v2199, %v2238
  %v2268 = vmul.f32 %v2200, %v2238
  %v2269 = vmul.f32 %v2201, %v2238
  %v2270 = vmul.f32 %v2202, %v2238
  %v2271 = vmul.f32 %v2203, %v2238
  %v2272 = vmul.f32 %v2204, %v2238
  %v2273 = vmul.f32 %v2205, %v2238
  %v2274 = vmul.f32 %v2206, %v2238
  %v2275 = vmul.f32 %v2207, %v2238
  %v2276 = vmul.f32 %v2208, %v2238
  %v2277 = vmul.f32 %v2209, %v2238
  %v2278 = vmul.f32 %v2210, %v2238
  %v2279 = vmul.f32 %v2211, %v2238
  %v2280 = vmul.f32 %v2212, %v2238
  %v2281 = vmul.f32 %v2213, %v2238
  %v2282 = vmul.f32 %v2214, %v2238
  %v2283 = vmul.f32 %v2215, %v2238
  %v2284 = vmul.f32 %v2216, %v2238
  %v2285 = vmul.f32 %v2217, %v2238
  %v2286 = vmul.f32 %v2218, %v2238
  %v2287 = vmul.f32 %v2219, %v2238
  %v2288 = vmul.f32 %v2220, %v2238
  %v2289 = vmul.f32 %v2221, %v2238
  %v2290 = vmul.f32 %v2222, %v2238
  %v2291 = vmul.f32 %v2223, %v2238
  %v2292 = vmul.f32 %v2224, %v2238
  %v2293 = vmul.f32 %v2225, %v2238
  %v2294 = vmul.f32 %v2226, %v2238
  %v2295 = vmul.f32 %v2227, %v2238
  %v2296 = vmul.f32 %v2228, %v2238
  %v2297 = vmul.f32 %v2229, %v2238
  %v2298 = vmul.f32 %v2230, %v2238
  %v2299 = vmul.f32 %v2231, %v2238
  %v2300 = vmul.f32 %v2232, %v2238
  %v2301 = vmul.f32 %v2233, %v2238
  %v2302 = vmul.f32 %v2234, %v2238
  %v2303 = vld [vmem:[%s2170 + $0x1] sm:$0xff]
  %v2304 = vld [vmem:[%s2170 + $0x9] sm:$0xff]
  %v2305 = vld [vmem:[%s2170 + $0x19] sm:$0xff]
  %v2306 = vld [vmem:[%s2170 + $0x21] sm:$0xff]
  %v2307 = vld [vmem:[%s2170 + $0x31] sm:$0xff]
  %v2308 = vld [vmem:[%s2170 + $0x39] sm:$0xff]
  %v2309 = vld [vmem:[%s2170 + $0x49] sm:$0xff]
  %v2310 = vld [vmem:[%s2170 + $0x51] sm:$0xff]
  %v2311 = vld [vmem:[%s2170 + $0x61] sm:$0xff]
  %v2312 = vld [vmem:[%s2170 + $0x69] sm:$0xff]
  %v2313 = vld [vmem:[%s2170 + $0x79] sm:$0xff]
  %v2314 = vld [vmem:[%s2170 + $0x81] sm:$0xff]
  %v2315 = vld [vmem:[%s2170 + $0x91] sm:$0xff]
  %v2316 = vld [vmem:[%s2170 + $0x99] sm:$0xff]
  %v2317 = vld [vmem:[%s2170 + $0xa9] sm:$0xff]
  %v2318 = vld [vmem:[%s2170 + $0xb1] sm:$0xff]
  %v2319 = vld [vmem:[%s2170 + $0xc1] sm:$0xff]
  %v2320 = vld [vmem:[%s2170 + $0xc9] sm:$0xff]
  %v2321 = vld [vmem:[%s2170 + $0xd9] sm:$0xff]
  %v2322 = vld [vmem:[%s2170 + $0xe1] sm:$0xff]
  %v2323 = vld [vmem:[%s2170 + $0xf1] sm:$0xff]
  %v2324 = vld [vmem:[%s2170 + $0xf9] sm:$0xff]
  %v2325 = vld [vmem:[%s2170 + $0x109] sm:$0xff]
  %v2326 = vld [vmem:[%s2170 + $0x111] sm:$0xff]
  %v2327 = vld [vmem:[%s2170 + $0x121] sm:$0xff]
  %v2328 = vld [vmem:[%s2170 + $0x129] sm:$0xff]
  %v2329 = vld [vmem:[%s2170 + $0x139] sm:$0xff]
  %v2330 = vld [vmem:[%s2170 + $0x141] sm:$0xff]
  %v2331 = vld [vmem:[%s2170 + $0x151] sm:$0xff]
  %v2332 = vld [vmem:[%s2170 + $0x159] sm:$0xff]
  %v2333 = vld [vmem:[%s2170 + $0x169] sm:$0xff]
  %v2334 = vld [vmem:[%s2170 + $0x171] sm:$0xff]
  %v2335 = vld [vmem:[%s2170 + $0x1b1] sm:$0xff]
  %v2336 = vld [vmem:[%s2170 + $0x1b9] sm:$0xff]
  %v2337 = vld [vmem:[%s2170 + $0x1c9] sm:$0xff]
  %v2338 = vld [vmem:[%s2170 + $0x1d1] sm:$0xff]
  %v2339 = vld [vmem:[%s2170 + $0x1e1] sm:$0xff]
  %v2340 = vld [vmem:[%s2170 + $0x1e9] sm:$0xff]
  %v2341 = vld [vmem:[%s2170 + $0x1f9] sm:$0xff]
  %v2342 = vld [vmem:[%s2170 + $0x201] sm:$0xff]
  %v2343 = vld [vmem:[%s2170 + $0x211] sm:$0xff]
  %v2344 = vld [vmem:[%s2170 + $0x219] sm:$0xff]
  %v2345 = vld [vmem:[%s2170 + $0x229] sm:$0xff]
  %v2346 = vld [vmem:[%s2170 + $0x231] sm:$0xff]
  %v2347 = vld [vmem:[%s2170 + $0x241] sm:$0xff]
  %v2348 = vld [vmem:[%s2170 + $0x249] sm:$0xff]
  %v2349 = vld [vmem:[%s2170 + $0x259] sm:$0xff]
  %v2350 = vld [vmem:[%s2170 + $0x261] sm:$0xff]
  %v2351 = vld [vmem:[%s2170 + $0x271] sm:$0xff]
  %v2352 = vld [vmem:[%s2170 + $0x279] sm:$0xff]
  %v2353 = vld [vmem:[%s2170 + $0x289] sm:$0xff]
  %v2354 = vld [vmem:[%s2170 + $0x291] sm:$0xff]
  %v2355 = vld [vmem:[%s2170 + $0x2a1] sm:$0xff]
  %v2356 = vld [vmem:[%s2170 + $0x2a9] sm:$0xff]
  %v2357 = vld [vmem:[%s2170 + $0x2b9] sm:$0xff]
  %v2358 = vld [vmem:[%s2170 + $0x2c1] sm:$0xff]
  %v2359 = vld [vmem:[%s2170 + $0x2d1] sm:$0xff]
  %v2360 = vld [vmem:[%s2170 + $0x2d9] sm:$0xff]
  %v2361 = vld [vmem:[%s2170 + $0x2e9] sm:$0xff]
  %v2362 = vld [vmem:[%s2170 + $0x2f1] sm:$0xff]
  %v2363 = vld [vmem:[%s2170 + $0x301] sm:$0xff]
  %v2364 = vld [vmem:[%s2170 + $0x309] sm:$0xff]
  %v2365 = vld [vmem:[%s2170 + $0x319] sm:$0xff]
  %v2366 = vld [vmem:[%s2170 + $0x321] sm:$0xff]
  %v2367 = vlaneseq
  %v2368 = vshrl.u32 %v2367, 7
  %v2369 = vsub.s32 7, %v2368
  %v2370 = vrot.slane %v1376, %v2369
  %v2371 = vmul.f32 %v2303, %v2370
  %v2372 = vmul.f32 %v2304, %v2370
  %v2373 = vmul.f32 %v2305, %v2370
  %v2374 = vmul.f32 %v2306, %v2370
  %v2375 = vmul.f32 %v2307, %v2370
  %v2376 = vmul.f32 %v2308, %v2370
  %v2377 = vmul.f32 %v2309, %v2370
  %v2378 = vmul.f32 %v2310, %v2370
  %v2379 = vmul.f32 %v2311, %v2370
  %v2380 = vmul.f32 %v2312, %v2370
  %v2381 = vmul.f32 %v2313, %v2370
  %v2382 = vmul.f32 %v2314, %v2370
  %v2383 = vmul.f32 %v2315, %v2370
  %v2384 = vmul.f32 %v2316, %v2370
  %v2385 = vmul.f32 %v2317, %v2370
  %v2386 = vmul.f32 %v2318, %v2370
  %v2387 = vmul.f32 %v2319, %v2370
  %v2388 = vmul.f32 %v2320, %v2370
  %v2389 = vmul.f32 %v2321, %v2370
  %v2390 = vmul.f32 %v2322, %v2370
  %v2391 = vmul.f32 %v2323, %v2370
  %v2392 = vmul.f32 %v2324, %v2370
  %v2393 = vmul.f32 %v2325, %v2370
  %v2394 = vmul.f32 %v2326, %v2370
  %v2395 = vmul.f32 %v2327, %v2370
  %v2396 = vmul.f32 %v2328, %v2370
  %v2397 = vmul.f32 %v2329, %v2370
  %v2398 = vmul.f32 %v2330, %v2370
  %v2399 = vmul.f32 %v2331, %v2370
  %v2400 = vmul.f32 %v2332, %v2370
  %v2401 = vmul.f32 %v2333, %v2370
  %v2402 = vmul.f32 %v2334, %v2370
  %v2403 = vmul.f32 %v2335, %v2370
  %v2404 = vmul.f32 %v2336, %v2370
  %v2405 = vmul.f32 %v2337, %v2370
  %v2406 = vmul.f32 %v2338, %v2370
  %v2407 = vmul.f32 %v2339, %v2370
  %v2408 = vmul.f32 %v2340, %v2370
  %v2409 = vmul.f32 %v2341, %v2370
  %v2410 = vmul.f32 %v2342, %v2370
  %v2411 = vmul.f32 %v2343, %v2370
  %v2412 = vmul.f32 %v2344, %v2370
  %v2413 = vmul.f32 %v2345, %v2370
  %v2414 = vmul.f32 %v2346, %v2370
  %v2415 = vmul.f32 %v2347, %v2370
  %v2416 = vmul.f32 %v2348, %v2370
  %v2417 = vmul.f32 %v2349, %v2370
  %v2418 = vmul.f32 %v2350, %v2370
  %v2419 = vmul.f32 %v2351, %v2370
  %v2420 = vmul.f32 %v2352, %v2370
  %v2421 = vmul.f32 %v2353, %v2370
  %v2422 = vmul.f32 %v2354, %v2370
  %v2423 = vmul.f32 %v2355, %v2370
  %v2424 = vmul.f32 %v2356, %v2370
  %v2425 = vmul.f32 %v2357, %v2370
  %v2426 = vmul.f32 %v2358, %v2370
  %v2427 = vmul.f32 %v2359, %v2370
  %v2428 = vmul.f32 %v2360, %v2370
  %v2429 = vmul.f32 %v2361, %v2370
  %v2430 = vmul.f32 %v2362, %v2370
  %v2431 = vmul.f32 %v2363, %v2370
  %v2432 = vmul.f32 %v2364, %v2370
  %v2433 = vmul.f32 %v2365, %v2370
  %v2434 = vmul.f32 %v2366, %v2370
  %v2435 = vld [vmem:[%s2170 + $0x2] sm:$0xff]
  %v2436 = vld [vmem:[%s2170 + $0xa] sm:$0xff]
  %v2437 = vld [vmem:[%s2170 + $0x1a] sm:$0xff]
  %v2438 = vld [vmem:[%s2170 + $0x22] sm:$0xff]
  %v2439 = vld [vmem:[%s2170 + $0x32] sm:$0xff]
  %v2440 = vld [vmem:[%s2170 + $0x3a] sm:$0xff]
  %v2441 = vld [vmem:[%s2170 + $0x4a] sm:$0xff]
  %v2442 = vld [vmem:[%s2170 + $0x52] sm:$0xff]
  %v2443 = vld [vmem:[%s2170 + $0x62] sm:$0xff]
  %v2444 = vld [vmem:[%s2170 + $0x6a] sm:$0xff]
  %v2445 = vld [vmem:[%s2170 + $0x7a] sm:$0xff]
  %v2446 = vld [vmem:[%s2170 + $0x82] sm:$0xff]
  %v2447 = vld [vmem:[%s2170 + $0x92] sm:$0xff]
  %v2448 = vld [vmem:[%s2170 + $0x9a] sm:$0xff]
  %v2449 = vld [vmem:[%s2170 + $0xaa] sm:$0xff]
  %v2450 = vld [vmem:[%s2170 + $0xb2] sm:$0xff]
  %v2451 = vld [vmem:[%s2170 + $0xc2] sm:$0xff]
  %v2452 = vld [vmem:[%s2170 + $0xca] sm:$0xff]
  %v2453 = vld [vmem:[%s2170 + $0xda] sm:$0xff]
  %v2454 = vld [vmem:[%s2170 + $0xe2] sm:$0xff]
  %v2455 = vld [vmem:[%s2170 + $0xf2] sm:$0xff]
  %v2456 = vld [vmem:[%s2170 + $0xfa] sm:$0xff]
  %v2457 = vld [vmem:[%s2170 + $0x10a] sm:$0xff]
  %v2458 = vld [vmem:[%s2170 + $0x112] sm:$0xff]
  %v2459 = vld [vmem:[%s2170 + $0x122] sm:$0xff]
  %v2460 = vld [vmem:[%s2170 + $0x12a] sm:$0xff]
  %v2461 = vld [vmem:[%s2170 + $0x13a] sm:$0xff]
  %v2462 = vld [vmem:[%s2170 + $0x142] sm:$0xff]
  %v2463 = vld [vmem:[%s2170 + $0x152] sm:$0xff]
  %v2464 = vld [vmem:[%s2170 + $0x15a] sm:$0xff]
  %v2465 = vld [vmem:[%s2170 + $0x16a] sm:$0xff]
  %v2466 = vld [vmem:[%s2170 + $0x172] sm:$0xff]
  %v2467 = vld [vmem:[%s2170 + $0x1b2] sm:$0xff]
  %v2468 = vld [vmem:[%s2170 + $0x1ba] sm:$0xff]
  %v2469 = vld [vmem:[%s2170 + $0x1ca] sm:$0xff]
  %v2470 = vld [vmem:[%s2170 + $0x1d2] sm:$0xff]
  %v2471 = vld [vmem:[%s2170 + $0x1e2] sm:$0xff]
  %v2472 = vld [vmem:[%s2170 + $0x1ea] sm:$0xff]
  %v2473 = vld [vmem:[%s2170 + $0x1fa] sm:$0xff]
  %v2474 = vld [vmem:[%s2170 + $0x202] sm:$0xff]
  %v2475 = vld [vmem:[%s2170 + $0x212] sm:$0xff]
  %v2476 = vld [vmem:[%s2170 + $0x21a] sm:$0xff]
  %v2477 = vld [vmem:[%s2170 + $0x22a] sm:$0xff]
  %v2478 = vld [vmem:[%s2170 + $0x232] sm:$0xff]
  %v2479 = vld [vmem:[%s2170 + $0x242] sm:$0xff]
  %v2480 = vld [vmem:[%s2170 + $0x24a] sm:$0xff]
  %v2481 = vld [vmem:[%s2170 + $0x25a] sm:$0xff]
  %v2482 = vld [vmem:[%s2170 + $0x262] sm:$0xff]
  %v2483 = vld [vmem:[%s2170 + $0x272] sm:$0xff]
  %v2484 = vld [vmem:[%s2170 + $0x27a] sm:$0xff]
  %v2485 = vld [vmem:[%s2170 + $0x28a] sm:$0xff]
  %v2486 = vld [vmem:[%s2170 + $0x292] sm:$0xff]
  %v2487 = vld [vmem:[%s2170 + $0x2a2] sm:$0xff]
  %v2488 = vld [vmem:[%s2170 + $0x2aa] sm:$0xff]
  %v2489 = vld [vmem:[%s2170 + $0x2ba] sm:$0xff]
  %v2490 = vld [vmem:[%s2170 + $0x2c2] sm:$0xff]
  %v2491 = vld [vmem:[%s2170 + $0x2d2] sm:$0xff]
  %v2492 = vld [vmem:[%s2170 + $0x2da] sm:$0xff]
  %v2493 = vld [vmem:[%s2170 + $0x2ea] sm:$0xff]
  %v2494 = vld [vmem:[%s2170 + $0x2f2] sm:$0xff]
  %v2495 = vld [vmem:[%s2170 + $0x302] sm:$0xff]
  %v2496 = vld [vmem:[%s2170 + $0x30a] sm:$0xff]
  %v2497 = vld [vmem:[%s2170 + $0x31a] sm:$0xff]
  %v2498 = vld [vmem:[%s2170 + $0x322] sm:$0xff]
  %v2499 = vlaneseq
  %v2500 = vshrl.u32 %v2499, 7
  %v2501 = vsub.s32 0, %v2500
  %v2502 = vrot.slane %v1377, %v2501
  %v2503 = vmul.f32 %v2435, %v2502
  %v2504 = vmul.f32 %v2436, %v2502
  %v2505 = vmul.f32 %v2437, %v2502
  %v2506 = vmul.f32 %v2438, %v2502
  %v2507 = vmul.f32 %v2439, %v2502
  %v2508 = vmul.f32 %v2440, %v2502
  %v2509 = vmul.f32 %v2441, %v2502
  %v2510 = vmul.f32 %v2442, %v2502
  %v2511 = vmul.f32 %v2443, %v2502
  %v2512 = vmul.f32 %v2444, %v2502
  %v2513 = vmul.f32 %v2445, %v2502
  %v2514 = vmul.f32 %v2446, %v2502
  %v2515 = vmul.f32 %v2447, %v2502
  %v2516 = vmul.f32 %v2448, %v2502
  %v2517 = vmul.f32 %v2449, %v2502
  %v2518 = vmul.f32 %v2450, %v2502
  %v2519 = vmul.f32 %v2451, %v2502
  %v2520 = vmul.f32 %v2452, %v2502
  %v2521 = vmul.f32 %v2453, %v2502
  %v2522 = vmul.f32 %v2454, %v2502
  %v2523 = vmul.f32 %v2455, %v2502
  %v2524 = vmul.f32 %v2456, %v2502
  %v2525 = vmul.f32 %v2457, %v2502
  %v2526 = vmul.f32 %v2458, %v2502
  %v2527 = vmul.f32 %v2459, %v2502
  %v2528 = vmul.f32 %v2460, %v2502
  %v2529 = vmul.f32 %v2461, %v2502
  %v2530 = vmul.f32 %v2462, %v2502
  %v2531 = vmul.f32 %v2463, %v2502
  %v2532 = vmul.f32 %v2464, %v2502
  %v2533 = vmul.f32 %v2465, %v2502
  %v2534 = vmul.f32 %v2466, %v2502
  %v2535 = vmul.f32 %v2467, %v2502
  %v2536 = vmul.f32 %v2468, %v2502
  %v2537 = vmul.f32 %v2469, %v2502
  %v2538 = vmul.f32 %v2470, %v2502
  %v2539 = vmul.f32 %v2471, %v2502
  %v2540 = vmul.f32 %v2472, %v2502
  %v2541 = vmul.f32 %v2473, %v2502
  %v2542 = vmul.f32 %v2474, %v2502
  %v2543 = vmul.f32 %v2475, %v2502
  %v2544 = vmul.f32 %v2476, %v2502
  %v2545 = vmul.f32 %v2477, %v2502
  %v2546 = vmul.f32 %v2478, %v2502
  %v2547 = vmul.f32 %v2479, %v2502
  %v2548 = vmul.f32 %v2480, %v2502
  %v2549 = vmul.f32 %v2481, %v2502
  %v2550 = vmul.f32 %v2482, %v2502
  %v2551 = vmul.f32 %v2483, %v2502
  %v2552 = vmul.f32 %v2484, %v2502
  %v2553 = vmul.f32 %v2485, %v2502
  %v2554 = vmul.f32 %v2486, %v2502
  %v2555 = vmul.f32 %v2487, %v2502
  %v2556 = vmul.f32 %v2488, %v2502
  %v2557 = vmul.f32 %v2489, %v2502
  %v2558 = vmul.f32 %v2490, %v2502
  %v2559 = vmul.f32 %v2491, %v2502
  %v2560 = vmul.f32 %v2492, %v2502
  %v2561 = vmul.f32 %v2493, %v2502
  %v2562 = vmul.f32 %v2494, %v2502
  %v2563 = vmul.f32 %v2495, %v2502
  %v2564 = vmul.f32 %v2496, %v2502
  %v2565 = vmul.f32 %v2497, %v2502
  %v2566 = vmul.f32 %v2498, %v2502
  %v2567 = vadd.f32 %v1446, %v1578
  %v2568 = vadd.f32 %v1447, %v1579
  %v2569 = vadd.f32 %v1448, %v1580
  %v2570 = vadd.f32 %v1449, %v1581
  %v2571 = vadd.f32 %v1450, %v1582
  %v2572 = vadd.f32 %v1451, %v1583
  %v2573 = vadd.f32 %v1452, %v1584
  %v2574 = vadd.f32 %v1453, %v1585
  %v2575 = vadd.f32 %v1454, %v1586
  %v2576 = vadd.f32 %v1455, %v1587
  %v2577 = vadd.f32 %v1456, %v1588
  %v2578 = vadd.f32 %v1457, %v1589
  %v2579 = vadd.f32 %v1458, %v1590
  %v2580 = vadd.f32 %v1459, %v1591
  %v2581 = vadd.f32 %v1460, %v1592
  %v2582 = vadd.f32 %v1461, %v1593
  %v2583 = vadd.f32 %v1462, %v1594
  %v2584 = vadd.f32 %v1463, %v1595
  %v2585 = vadd.f32 %v1464, %v1596
  %v2586 = vadd.f32 %v1465, %v1597
  %v2587 = vadd.f32 %v1466, %v1598
  %v2588 = vadd.f32 %v1467, %v1599
  %v2589 = vadd.f32 %v1468, %v1600
  %v2590 = vadd.f32 %v1469, %v1601
  %v2591 = vadd.f32 %v1470, %v1602
  %v2592 = vadd.f32 %v1471, %v1603
  %v2593 = vadd.f32 %v1472, %v1604
  %v2594 = vadd.f32 %v1473, %v1605
  %v2595 = vadd.f32 %v1474, %v1606
  %v2596 = vadd.f32 %v1475, %v1607
  %v2597 = vadd.f32 %v1476, %v1608
  %v2598 = vadd.f32 %v1477, %v1609
  %v2599 = vadd.f32 %v1478, %v1610
  %v2600 = vadd.f32 %v1479, %v1611
  %v2601 = vadd.f32 %v1480, %v1612
  %v2602 = vadd.f32 %v1481, %v1613
  %v2603 = vadd.f32 %v1482, %v1614
  %v2604 = vadd.f32 %v1483, %v1615
  %v2605 = vadd.f32 %v1484, %v1616
  %v2606 = vadd.f32 %v1485, %v1617
  %v2607 = vadd.f32 %v1486, %v1618
  %v2608 = vadd.f32 %v1487, %v1619
  %v2609 = vadd.f32 %v1488, %v1620
  %v2610 = vadd.f32 %v1489, %v1621
  %v2611 = vadd.f32 %v1490, %v1622
  %v2612 = vadd.f32 %v1491, %v1623
  %v2613 = vadd.f32 %v1492, %v1624
  %v2614 = vadd.f32 %v1493, %v1625
  %v2615 = vadd.f32 %v1494, %v1626
  %v2616 = vadd.f32 %v1495, %v1627
  %v2617 = vadd.f32 %v1496, %v1628
  %v2618 = vadd.f32 %v1497, %v1629
  %v2619 = vadd.f32 %v1498, %v1630
  %v2620 = vadd.f32 %v1499, %v1631
  %v2621 = vadd.f32 %v1500, %v1632
  %v2622 = vadd.f32 %v1501, %v1633
  %v2623 = vadd.f32 %v1502, %v1634
  %v2624 = vadd.f32 %v1503, %v1635
  %v2625 = vadd.f32 %v1504, %v1636
  %v2626 = vadd.f32 %v1505, %v1637
  %v2627 = vadd.f32 %v1506, %v1638
  %v2628 = vadd.f32 %v1507, %v1639
  %v2629 = vadd.f32 %v1508, %v1640
  %v2630 = vadd.f32 %v1509, %v1641
  %v2631 = vadd.f32 %v1710, %v1842
  %v2632 = vadd.f32 %v1711, %v1843
  %v2633 = vadd.f32 %v1712, %v1844
  %v2634 = vadd.f32 %v1713, %v1845
  %v2635 = vadd.f32 %v1714, %v1846
  %v2636 = vadd.f32 %v1715, %v1847
  %v2637 = vadd.f32 %v1716, %v1848
  %v2638 = vadd.f32 %v1717, %v1849
  %v2639 = vadd.f32 %v1718, %v1850
  %v2640 = vadd.f32 %v1719, %v1851
  %v2641 = vadd.f32 %v1720, %v1852
  %v2642 = vadd.f32 %v1721, %v1853
  %v2643 = vadd.f32 %v1722, %v1854
  %v2644 = vadd.f32 %v1723, %v1855
  %v2645 = vadd.f32 %v1724, %v1856
  %v2646 = vadd.f32 %v1725, %v1857
  %v2647 = vadd.f32 %v1726, %v1858
  %v2648 = vadd.f32 %v1727, %v1859
  %v2649 = vadd.f32 %v1728, %v1860
  %v2650 = vadd.f32 %v1729, %v1861
  %v2651 = vadd.f32 %v1730, %v1862
  %v2652 = vadd.f32 %v1731, %v1863
  %v2653 = vadd.f32 %v1732, %v1864
  %v2654 = vadd.f32 %v1733, %v1865
  %v2655 = vadd.f32 %v1734, %v1866
  %v2656 = vadd.f32 %v1735, %v1867
  %v2657 = vadd.f32 %v1736, %v1868
  %v2658 = vadd.f32 %v1737, %v1869
  %v2659 = vadd.f32 %v1738, %v1870
  %v2660 = vadd.f32 %v1739, %v1871
  %v2661 = vadd.f32 %v1740, %v1872
  %v2662 = vadd.f32 %v1741, %v1873
  %v2663 = vadd.f32 %v1742, %v1874
  %v2664 = vadd.f32 %v1743, %v1875
  %v2665 = vadd.f32 %v1744, %v1876
  %v2666 = vadd.f32 %v1745, %v1877
  %v2667 = vadd.f32 %v1746, %v1878
  %v2668 = vadd.f32 %v1747, %v1879
  %v2669 = vadd.f32 %v1748, %v1880
  %v2670 = vadd.f32 %v1749, %v1881
  %v2671 = vadd.f32 %v1750, %v1882
  %v2672 = vadd.f32 %v1751, %v1883
  %v2673 = vadd.f32 %v1752, %v1884
  %v2674 = vadd.f32 %v1753, %v1885
  %v2675 = vadd.f32 %v1754, %v1886
  %v2676 = vadd.f32 %v1755, %v1887
  %v2677 = vadd.f32 %v1756, %v1888
  %v2678 = vadd.f32 %v1757, %v1889
  %v2679 = vadd.f32 %v1758, %v1890
  %v2680 = vadd.f32 %v1759, %v1891
  %v2681 = vadd.f32 %v1760, %v1892
  %v2682 = vadd.f32 %v1761, %v1893
  %v2683 = vadd.f32 %v1762, %v1894
  %v2684 = vadd.f32 %v1763, %v1895
  %v2685 = vadd.f32 %v1764, %v1896
  %v2686 = vadd.f32 %v1765, %v1897
  %v2687 = vadd.f32 %v1766, %v1898
  %v2688 = vadd.f32 %v1767, %v1899
  %v2689 = vadd.f32 %v1768, %v1900
  %v2690 = vadd.f32 %v1769, %v1901
  %v2691 = vadd.f32 %v1770, %v1902
  %v2692 = vadd.f32 %v1771, %v1903
  %v2693 = vadd.f32 %v1772, %v1904
  %v2694 = vadd.f32 %v1773, %v1905
  %v2695 = vadd.f32 %v1974, %v2106
  %v2696 = vadd.f32 %v1975, %v2107
  %v2697 = vadd.f32 %v1976, %v2108
  %v2698 = vadd.f32 %v1977, %v2109
  %v2699 = vadd.f32 %v1978, %v2110
  %v2700 = vadd.f32 %v1979, %v2111
  %v2701 = vadd.f32 %v1980, %v2112
  %v2702 = vadd.f32 %v1981, %v2113
  %v2703 = vadd.f32 %v1982, %v2114
  %v2704 = vadd.f32 %v1983, %v2115
  %v2705 = vadd.f32 %v1984, %v2116
  %v2706 = vadd.f32 %v1985, %v2117
  %v2707 = vadd.f32 %v1986, %v2118
  %v2708 = vadd.f32 %v1987, %v2119
  %v2709 = vadd.f32 %v1988, %v2120
  %v2710 = vadd.f32 %v1989, %v2121
  %v2711 = vadd.f32 %v1990, %v2122
  %v2712 = vadd.f32 %v1991, %v2123
  %v2713 = vadd.f32 %v1992, %v2124
  %v2714 = vadd.f32 %v1993, %v2125
  %v2715 = vadd.f32 %v1994, %v2126
  %v2716 = vadd.f32 %v1995, %v2127
  %v2717 = vadd.f32 %v1996, %v2128
  %v2718 = vadd.f32 %v1997, %v2129
  %v2719 = vadd.f32 %v1998, %v2130
  %v2720 = vadd.f32 %v1999, %v2131
  %v2721 = vadd.f32 %v2000, %v2132
  %v2722 = vadd.f32 %v2001, %v2133
  %v2723 = vadd.f32 %v2002, %v2134
  %v2724 = vadd.f32 %v2003, %v2135
  %v2725 = vadd.f32 %v2004, %v2136
  %v2726 = vadd.f32 %v2005, %v2137
  %v2727 = vadd.f32 %v2006, %v2138
  %v2728 = vadd.f32 %v2007, %v2139
  %v2729 = vadd.f32 %v2008, %v2140
  %v2730 = vadd.f32 %v2009, %v2141
  %v2731 = vadd.f32 %v2010, %v2142
  %v2732 = vadd.f32 %v2011, %v2143
  %v2733 = vadd.f32 %v2012, %v2144
  %v2734 = vadd.f32 %v2013, %v2145
  %v2735 = vadd.f32 %v2014, %v2146
  %v2736 = vadd.f32 %v2015, %v2147
  %v2737 = vadd.f32 %v2016, %v2148
  %v2738 = vadd.f32 %v2017, %v2149
  %v2739 = vadd.f32 %v2018, %v2150
  %v2740 = vadd.f32 %v2019, %v2151
  %v2741 = vadd.f32 %v2020, %v2152
  %v2742 = vadd.f32 %v2021, %v2153
  %v2743 = vadd.f32 %v2022, %v2154
  %v2744 = vadd.f32 %v2023, %v2155
  %v2745 = vadd.f32 %v2024, %v2156
  %v2746 = vadd.f32 %v2025, %v2157
  %v2747 = vadd.f32 %v2026, %v2158
  %v2748 = vadd.f32 %v2027, %v2159
  %v2749 = vadd.f32 %v2028, %v2160
  %v2750 = vadd.f32 %v2029, %v2161
  %v2751 = vadd.f32 %v2030, %v2162
  %v2752 = vadd.f32 %v2031, %v2163
  %v2753 = vadd.f32 %v2032, %v2164
  %v2754 = vadd.f32 %v2033, %v2165
  %v2755 = vadd.f32 %v2034, %v2166
  %v2756 = vadd.f32 %v2035, %v2167
  %v2757 = vadd.f32 %v2036, %v2168
  %v2758 = vadd.f32 %v2037, %v2169
  %v2759 = vadd.f32 %v2239, %v2371
  %v2760 = vadd.f32 %v2240, %v2372
  %v2761 = vadd.f32 %v2241, %v2373
  %v2762 = vadd.f32 %v2242, %v2374
  %v2763 = vadd.f32 %v2243, %v2375
  %v2764 = vadd.f32 %v2244, %v2376
  %v2765 = vadd.f32 %v2245, %v2377
  %v2766 = vadd.f32 %v2246, %v2378
  %v2767 = vadd.f32 %v2247, %v2379
  %v2768 = vadd.f32 %v2248, %v2380
  %v2769 = vadd.f32 %v2249, %v2381
  %v2770 = vadd.f32 %v2250, %v2382
  %v2771 = vadd.f32 %v2251, %v2383
  %v2772 = vadd.f32 %v2252, %v2384
  %v2773 = vadd.f32 %v2253, %v2385
  %v2774 = vadd.f32 %v2254, %v2386
  %v2775 = vadd.f32 %v2255, %v2387
  %v2776 = vadd.f32 %v2256, %v2388
  %v2777 = vadd.f32 %v2257, %v2389
  %v2778 = vadd.f32 %v2258, %v2390
  %v2779 = vadd.f32 %v2259, %v2391
  %v2780 = vadd.f32 %v2260, %v2392
  %v2781 = vadd.f32 %v2261, %v2393
  %v2782 = vadd.f32 %v2262, %v2394
  %v2783 = vadd.f32 %v2263, %v2395
  %v2784 = vadd.f32 %v2264, %v2396
  %v2785 = vadd.f32 %v2265, %v2397
  %v2786 = vadd.f32 %v2266, %v2398
  %v2787 = vadd.f32 %v2267, %v2399
  %v2788 = vadd.f32 %v2268, %v2400
  %v2789 = vadd.f32 %v2269, %v2401
  %v2790 = vadd.f32 %v2270, %v2402
  %v2791 = vadd.f32 %v2271, %v2403
  %v2792 = vadd.f32 %v2272, %v2404
  %v2793 = vadd.f32 %v2273, %v2405
  %v2794 = vadd.f32 %v2274, %v2406
  %v2795 = vadd.f32 %v2275, %v2407
  %v2796 = vadd.f32 %v2276, %v2408
  %v2797 = vadd.f32 %v2277, %v2409
  %v2798 = vadd.f32 %v2278, %v2410
  %v2799 = vadd.f32 %v2279, %v2411
  %v2800 = vadd.f32 %v2280, %v2412
  %v2801 = vadd.f32 %v2281, %v2413
  %v2802 = vadd.f32 %v2282, %v2414
  %v2803 = vadd.f32 %v2283, %v2415
  %v2804 = vadd.f32 %v2284, %v2416
  %v2805 = vadd.f32 %v2285, %v2417
  %v2806 = vadd.f32 %v2286, %v2418
  %v2807 = vadd.f32 %v2287, %v2419
  %v2808 = vadd.f32 %v2288, %v2420
  %v2809 = vadd.f32 %v2289, %v2421
  %v2810 = vadd.f32 %v2290, %v2422
  %v2811 = vadd.f32 %v2291, %v2423
  %v2812 = vadd.f32 %v2292, %v2424
  %v2813 = vadd.f32 %v2293, %v2425
  %v2814 = vadd.f32 %v2294, %v2426
  %v2815 = vadd.f32 %v2295, %v2427
  %v2816 = vadd.f32 %v2296, %v2428
  %v2817 = vadd.f32 %v2297, %v2429
  %v2818 = vadd.f32 %v2298, %v2430
  %v2819 = vadd.f32 %v2299, %v2431
  %v2820 = vadd.f32 %v2300, %v2432
  %v2821 = vadd.f32 %v2301, %v2433
  %v2822 = vadd.f32 %v2302, %v2434
  %v2823 = vadd.f32 %v2567, %v2631
  %v2824 = vadd.f32 %v2568, %v2632
  %v2825 = vadd.f32 %v2569, %v2633
  %v2826 = vadd.f32 %v2570, %v2634
  %v2827 = vadd.f32 %v2571, %v2635
  %v2828 = vadd.f32 %v2572, %v2636
  %v2829 = vadd.f32 %v2573, %v2637
  %v2830 = vadd.f32 %v2574, %v2638
  %v2831 = vadd.f32 %v2575, %v2639
  %v2832 = vadd.f32 %v2576, %v2640
  %v2833 = vadd.f32 %v2577, %v2641
  %v2834 = vadd.f32 %v2578, %v2642
  %v2835 = vadd.f32 %v2579, %v2643
  %v2836 = vadd.f32 %v2580, %v2644
  %v2837 = vadd.f32 %v2581, %v2645
  %v2838 = vadd.f32 %v2582, %v2646
  %v2839 = vadd.f32 %v2583, %v2647
  %v2840 = vadd.f32 %v2584, %v2648
  %v2841 = vadd.f32 %v2585, %v2649
  %v2842 = vadd.f32 %v2586, %v2650
  %v2843 = vadd.f32 %v2587, %v2651
  %v2844 = vadd.f32 %v2588, %v2652
  %v2845 = vadd.f32 %v2589, %v2653
  %v2846 = vadd.f32 %v2590, %v2654
  %v2847 = vadd.f32 %v2591, %v2655
  %v2848 = vadd.f32 %v2592, %v2656
  %v2849 = vadd.f32 %v2593, %v2657
  %v2850 = vadd.f32 %v2594, %v2658
  %v2851 = vadd.f32 %v2595, %v2659
  %v2852 = vadd.f32 %v2596, %v2660
  %v2853 = vadd.f32 %v2597, %v2661
  %v2854 = vadd.f32 %v2598, %v2662
  %v2855 = vadd.f32 %v2599, %v2663
  %v2856 = vadd.f32 %v2600, %v2664
  %v2857 = vadd.f32 %v2601, %v2665
  %v2858 = vadd.f32 %v2602, %v2666
  %v2859 = vadd.f32 %v2603, %v2667
  %v2860 = vadd.f32 %v2604, %v2668
  %v2861 = vadd.f32 %v2605, %v2669
  %v2862 = vadd.f32 %v2606, %v2670
  %v2863 = vadd.f32 %v2607, %v2671
  %v2864 = vadd.f32 %v2608, %v2672
  %v2865 = vadd.f32 %v2609, %v2673
  %v2866 = vadd.f32 %v2610, %v2674
  %v2867 = vadd.f32 %v2611, %v2675
  %v2868 = vadd.f32 %v2612, %v2676
  %v2869 = vadd.f32 %v2613, %v2677
  %v2870 = vadd.f32 %v2614, %v2678
  %v2871 = vadd.f32 %v2615, %v2679
  %v2872 = vadd.f32 %v2616, %v2680
  %v2873 = vadd.f32 %v2617, %v2681
  %v2874 = vadd.f32 %v2618, %v2682
  %v2875 = vadd.f32 %v2619, %v2683
  %v2876 = vadd.f32 %v2620, %v2684
  %v2877 = vadd.f32 %v2621, %v2685
  %v2878 = vadd.f32 %v2622, %v2686
  %v2879 = vadd.f32 %v2623, %v2687
  %v2880 = vadd.f32 %v2624, %v2688
  %v2881 = vadd.f32 %v2625, %v2689
  %v2882 = vadd.f32 %v2626, %v2690
  %v2883 = vadd.f32 %v2627, %v2691
  %v2884 = vadd.f32 %v2628, %v2692
  %v2885 = vadd.f32 %v2629, %v2693
  %v2886 = vadd.f32 %v2630, %v2694
  %v2887 = vadd.f32 %v2695, %v2759
  %v2888 = vadd.f32 %v2696, %v2760
  %v2889 = vadd.f32 %v2697, %v2761
  %v2890 = vadd.f32 %v2698, %v2762
  %v2891 = vadd.f32 %v2699, %v2763
  %v2892 = vadd.f32 %v2700, %v2764
  %v2893 = vadd.f32 %v2701, %v2765
  %v2894 = vadd.f32 %v2702, %v2766
  %v2895 = vadd.f32 %v2703, %v2767
  %v2896 = vadd.f32 %v2704, %v2768
  %v2897 = vadd.f32 %v2705, %v2769
  %v2898 = vadd.f32 %v2706, %v2770
  %v2899 = vadd.f32 %v2707, %v2771
  %v2900 = vadd.f32 %v2708, %v2772
  %v2901 = vadd.f32 %v2709, %v2773
  %v2902 = vadd.f32 %v2710, %v2774
  %v2903 = vadd.f32 %v2711, %v2775
  %v2904 = vadd.f32 %v2712, %v2776
  %v2905 = vadd.f32 %v2713, %v2777
  %v2906 = vadd.f32 %v2714, %v2778
  %v2907 = vadd.f32 %v2715, %v2779
  %v2908 = vadd.f32 %v2716, %v2780
  %v2909 = vadd.f32 %v2717, %v2781
  %v2910 = vadd.f32 %v2718, %v2782
  %v2911 = vadd.f32 %v2719, %v2783
  %v2912 = vadd.f32 %v2720, %v2784
  %v2913 = vadd.f32 %v2721, %v2785
  %v2914 = vadd.f32 %v2722, %v2786
  %v2915 = vadd.f32 %v2723, %v2787
  %v2916 = vadd.f32 %v2724, %v2788
  %v2917 = vadd.f32 %v2725, %v2789
  %v2918 = vadd.f32 %v2726, %v2790
  %v2919 = vadd.f32 %v2727, %v2791
  %v2920 = vadd.f32 %v2728, %v2792
  %v2921 = vadd.f32 %v2729, %v2793
  %v2922 = vadd.f32 %v2730, %v2794
  %v2923 = vadd.f32 %v2731, %v2795
  %v2924 = vadd.f32 %v2732, %v2796
  %v2925 = vadd.f32 %v2733, %v2797
  %v2926 = vadd.f32 %v2734, %v2798
  %v2927 = vadd.f32 %v2735, %v2799
  %v2928 = vadd.f32 %v2736, %v2800
  %v2929 = vadd.f32 %v2737, %v2801
  %v2930 = vadd.f32 %v2738, %v2802
  %v2931 = vadd.f32 %v2739, %v2803
  %v2932 = vadd.f32 %v2740, %v2804
  %v2933 = vadd.f32 %v2741, %v2805
  %v2934 = vadd.f32 %v2742, %v2806
  %v2935 = vadd.f32 %v2743, %v2807
  %v2936 = vadd.f32 %v2744, %v2808
  %v2937 = vadd.f32 %v2745, %v2809
  %v2938 = vadd.f32 %v2746, %v2810
  %v2939 = vadd.f32 %v2747, %v2811
  %v2940 = vadd.f32 %v2748, %v2812
  %v2941 = vadd.f32 %v2749, %v2813
  %v2942 = vadd.f32 %v2750, %v2814
  %v2943 = vadd.f32 %v2751, %v2815
  %v2944 = vadd.f32 %v2752, %v2816
  %v2945 = vadd.f32 %v2753, %v2817
  %v2946 = vadd.f32 %v2754, %v2818
  %v2947 = vadd.f32 %v2755, %v2819
  %v2948 = vadd.f32 %v2756, %v2820
  %v2949 = vadd.f32 %v2757, %v2821
  %v2950 = vadd.f32 %v2758, %v2822
  %v2951 = vadd.f32 %v2823, %v2887
  %v2952 = vadd.f32 %v2824, %v2888
  %v2953 = vadd.f32 %v2825, %v2889
  %v2954 = vadd.f32 %v2826, %v2890
  %v2955 = vadd.f32 %v2827, %v2891
  %v2956 = vadd.f32 %v2828, %v2892
  %v2957 = vadd.f32 %v2829, %v2893
  %v2958 = vadd.f32 %v2830, %v2894
  %v2959 = vadd.f32 %v2831, %v2895
  %v2960 = vadd.f32 %v2832, %v2896
  %v2961 = vadd.f32 %v2833, %v2897
  %v2962 = vadd.f32 %v2834, %v2898
  %v2963 = vadd.f32 %v2835, %v2899
  %v2964 = vadd.f32 %v2836, %v2900
  %v2965 = vadd.f32 %v2837, %v2901
  %v2966 = vadd.f32 %v2838, %v2902
  %v2967 = vadd.f32 %v2839, %v2903
  %v2968 = vadd.f32 %v2840, %v2904
  %v2969 = vadd.f32 %v2841, %v2905
  %v2970 = vadd.f32 %v2842, %v2906
  %v2971 = vadd.f32 %v2843, %v2907
  %v2972 = vadd.f32 %v2844, %v2908
  %v2973 = vadd.f32 %v2845, %v2909
  %v2974 = vadd.f32 %v2846, %v2910
  %v2975 = vadd.f32 %v2847, %v2911
  %v2976 = vadd.f32 %v2848, %v2912
  %v2977 = vadd.f32 %v2849, %v2913
  %v2978 = vadd.f32 %v2850, %v2914
  %v2979 = vadd.f32 %v2851, %v2915
  %v2980 = vadd.f32 %v2852, %v2916
  %v2981 = vadd.f32 %v2853, %v2917
  %v2982 = vadd.f32 %v2854, %v2918
  %v2983 = vadd.f32 %v2855, %v2919
  %v2984 = vadd.f32 %v2856, %v2920
  %v2985 = vadd.f32 %v2857, %v2921
  %v2986 = vadd.f32 %v2858, %v2922
  %v2987 = vadd.f32 %v2859, %v2923
  %v2988 = vadd.f32 %v2860, %v2924
  %v2989 = vadd.f32 %v2861, %v2925
  %v2990 = vadd.f32 %v2862, %v2926
  %v2991 = vadd.f32 %v2863, %v2927
  %v2992 = vadd.f32 %v2864, %v2928
  %v2993 = vadd.f32 %v2865, %v2929
  %v2994 = vadd.f32 %v2866, %v2930
  %v2995 = vadd.f32 %v2867, %v2931
  %v2996 = vadd.f32 %v2868, %v2932
  %v2997 = vadd.f32 %v2869, %v2933
  %v2998 = vadd.f32 %v2870, %v2934
  %v2999 = vadd.f32 %v2871, %v2935
  %v3000 = vadd.f32 %v2872, %v2936
  %v3001 = vadd.f32 %v2873, %v2937
  %v3002 = vadd.f32 %v2874, %v2938
  %v3003 = vadd.f32 %v2875, %v2939
  %v3004 = vadd.f32 %v2876, %v2940
  %v3005 = vadd.f32 %v2877, %v2941
  %v3006 = vadd.f32 %v2878, %v2942
  %v3007 = vadd.f32 %v2879, %v2943
  %v3008 = vadd.f32 %v2880, %v2944
  %v3009 = vadd.f32 %v2881, %v2945
  %v3010 = vadd.f32 %v2882, %v2946
  %v3011 = vadd.f32 %v2883, %v2947
  %v3012 = vadd.f32 %v2884, %v2948
  %v3013 = vadd.f32 %v2885, %v2949
  %v3014 = vadd.f32 %v2886, %v2950
  %v3015 = vadd.f32 %v2951, %v2503
  %v3016 = vadd.f32 %v2952, %v2504
  %v3017 = vadd.f32 %v2953, %v2505
  %v3018 = vadd.f32 %v2954, %v2506
  %v3019 = vadd.f32 %v2955, %v2507
  %v3020 = vadd.f32 %v2956, %v2508
  %v3021 = vadd.f32 %v2957, %v2509
  %v3022 = vadd.f32 %v2958, %v2510
  %v3023 = vadd.f32 %v2959, %v2511
  %v3024 = vadd.f32 %v2960, %v2512
  %v3025 = vadd.f32 %v2961, %v2513
  %v3026 = vadd.f32 %v2962, %v2514
  %v3027 = vadd.f32 %v2963, %v2515
  %v3028 = vadd.f32 %v2964, %v2516
  %v3029 = vadd.f32 %v2965, %v2517
  %v3030 = vadd.f32 %v2966, %v2518
  %v3031 = vadd.f32 %v2967, %v2519
  %v3032 = vadd.f32 %v2968, %v2520
  %v3033 = vadd.f32 %v2969, %v2521
  %v3034 = vadd.f32 %v2970, %v2522
  %v3035 = vadd.f32 %v2971, %v2523
  %v3036 = vadd.f32 %v2972, %v2524
  %v3037 = vadd.f32 %v2973, %v2525
  %v3038 = vadd.f32 %v2974, %v2526
  %v3039 = vadd.f32 %v2975, %v2527
  %v3040 = vadd.f32 %v2976, %v2528
  %v3041 = vadd.f32 %v2977, %v2529
  %v3042 = vadd.f32 %v2978, %v2530
  %v3043 = vadd.f32 %v2979, %v2531
  %v3044 = vadd.f32 %v2980, %v2532
  %v3045 = vadd.f32 %v2981, %v2533
  %v3046 = vadd.f32 %v2982, %v2534
  %v3047 = vadd.f32 %v2983, %v2535
  %v3048 = vadd.f32 %v2984, %v2536
  %v3049 = vadd.f32 %v2985, %v2537
  %v3050 = vadd.f32 %v2986, %v2538
  %v3051 = vadd.f32 %v2987, %v2539
  %v3052 = vadd.f32 %v2988, %v2540
  %v3053 = vadd.f32 %v2989, %v2541
  %v3054 = vadd.f32 %v2990, %v2542
  %v3055 = vadd.f32 %v2991, %v2543
  %v3056 = vadd.f32 %v2992, %v2544
  %v3057 = vadd.f32 %v2993, %v2545
  %v3058 = vadd.f32 %v2994, %v2546
  %v3059 = vadd.f32 %v2995, %v2547
  %v3060 = vadd.f32 %v2996, %v2548
  %v3061 = vadd.f32 %v2997, %v2549
  %v3062 = vadd.f32 %v2998, %v2550
  %v3063 = vadd.f32 %v2999, %v2551
  %v3064 = vadd.f32 %v3000, %v2552
  %v3065 = vadd.f32 %v3001, %v2553
  %v3066 = vadd.f32 %v3002, %v2554
  %v3067 = vadd.f32 %v3003, %v2555
  %v3068 = vadd.f32 %v3004, %v2556
  %v3069 = vadd.f32 %v3005, %v2557
  %v3070 = vadd.f32 %v3006, %v2558
  %v3071 = vadd.f32 %v3007, %v2559
  %v3072 = vadd.f32 %v3008, %v2560
  %v3073 = vadd.f32 %v3009, %v2561
  %v3074 = vadd.f32 %v3010, %v2562
  %v3075 = vadd.f32 %v3011, %v2563
  %v3076 = vadd.f32 %v3012, %v2564
  %v3077 = vadd.f32 %v3013, %v2565
  %v3078 = vadd.f32 %v3014, %v2566
  %v3079 = vld [vmem:[%s6] sm:$0x1]
  %v3080 = vld [vmem:[%s7] sm:$0x1]
  %v3081 = vlaneseq
  %v3082 = vshrl.u32 %v3081, 7
  %v3083 = vsub.s32 0, %v3082
  %v3084 = vrot.slane %v3015, %v3083
  %v3085 = vsub.f32 %v3015, %v3084
  %v3086 = vsub.f32 %v3016, %v3084
  %v3087 = vsub.f32 %v3017, %v3084
  %v3088 = vsub.f32 %v3018, %v3084
  %v3089 = vsub.f32 %v3019, %v3084
  %v3090 = vsub.f32 %v3020, %v3084
  %v3091 = vsub.f32 %v3021, %v3084
  %v3092 = vsub.f32 %v3022, %v3084
  %v3093 = vsub.f32 %v3023, %v3084
  %v3094 = vsub.f32 %v3024, %v3084
  %v3095 = vsub.f32 %v3025, %v3084
  %v3096 = vsub.f32 %v3026, %v3084
  %v3097 = vsub.f32 %v3027, %v3084
  %v3098 = vsub.f32 %v3028, %v3084
  %v3099 = vsub.f32 %v3029, %v3084
  %v3100 = vsub.f32 %v3030, %v3084
  %v3101 = vsub.f32 %v3031, %v3084
  %v3102 = vsub.f32 %v3032, %v3084
  %v3103 = vsub.f32 %v3033, %v3084
  %v3104 = vsub.f32 %v3034, %v3084
  %v3105 = vsub.f32 %v3035, %v3084
  %v3106 = vsub.f32 %v3036, %v3084
  %v3107 = vsub.f32 %v3037, %v3084
  %v3108 = vsub.f32 %v3038, %v3084
  %v3109 = vsub.f32 %v3039, %v3084
  %v3110 = vsub.f32 %v3040, %v3084
  %v3111 = vsub.f32 %v3041, %v3084
  %v3112 = vsub.f32 %v3042, %v3084
  %v3113 = vsub.f32 %v3043, %v3084
  %v3114 = vsub.f32 %v3044, %v3084
  %v3115 = vsub.f32 %v3045, %v3084
  %v3116 = vsub.f32 %v3046, %v3084
  %v3117 = vsub.f32 %v3047, %v3084
  %v3118 = vsub.f32 %v3048, %v3084
  %v3119 = vsub.f32 %v3049, %v3084
  %v3120 = vsub.f32 %v3050, %v3084
  %v3121 = vsub.f32 %v3051, %v3084
  %v3122 = vsub.f32 %v3052, %v3084
  %v3123 = vsub.f32 %v3053, %v3084
  %v3124 = vsub.f32 %v3054, %v3084
  %v3125 = vsub.f32 %v3055, %v3084
  %v3126 = vsub.f32 %v3056, %v3084
  %v3127 = vsub.f32 %v3057, %v3084
  %v3128 = vsub.f32 %v3058, %v3084
  %v3129 = vsub.f32 %v3059, %v3084
  %v3130 = vsub.f32 %v3060, %v3084
  %v3131 = vsub.f32 %v3061, %v3084
  %v3132 = vsub.f32 %v3062, %v3084
  %v3133 = vsub.f32 %v3063, %v3084
  %v3134 = vsub.f32 %v3064, %v3084
  %v3135 = vsub.f32 %v3065, %v3084
  %v3136 = vsub.f32 %v3066, %v3084
  %v3137 = vsub.f32 %v3067, %v3084
  %v3138 = vsub.f32 %v3068, %v3084
  %v3139 = vsub.f32 %v3069, %v3084
  %v3140 = vsub.f32 %v3070, %v3084
  %v3141 = vsub.f32 %v3071, %v3084
  %v3142 = vsub.f32 %v3072, %v3084
  %v3143 = vsub.f32 %v3073, %v3084
  %v3144 = vsub.f32 %v3074, %v3084
  %v3145 = vsub.f32 %v3075, %v3084
  %v3146 = vsub.f32 %v3076, %v3084
  %v3147 = vsub.f32 %v3077, %v3084
  %v3148 = vsub.f32 %v3078, %v3084
  %v3149 = vadd.f32 %v3085, %v3086
  %v3150 = vadd.f32 %v3149, %v3087
  %v3151 = vadd.f32 %v3150, %v3088
  %v3152 = vadd.f32 %v3151, %v3089
  %v3153 = vadd.f32 %v3152, %v3090
  %v3154 = vadd.f32 %v3153, %v3091
  %v3155 = vadd.f32 %v3154, %v3092
  %v3156 = vadd.f32 %v3155, %v3093
  %v3157 = vadd.f32 %v3156, %v3094
  %v3158 = vadd.f32 %v3157, %v3095
  %v3159 = vadd.f32 %v3158, %v3096
  %v3160 = vadd.f32 %v3159, %v3097
  %v3161 = vadd.f32 %v3160, %v3098
  %v3162 = vadd.f32 %v3161, %v3099
  %v3163 = vadd.f32 %v3162, %v3100
  %v3164 = vadd.f32 %v3163, %v3101
  %v3165 = vadd.f32 %v3164, %v3102
  %v3166 = vadd.f32 %v3165, %v3103
  %v3167 = vadd.f32 %v3166, %v3104
  %v3168 = vadd.f32 %v3167, %v3105
  %v3169 = vadd.f32 %v3168, %v3106
  %v3170 = vadd.f32 %v3169, %v3107
  %v3171 = vadd.f32 %v3170, %v3108
  %v3172 = vadd.f32 %v3171, %v3109
  %v3173 = vadd.f32 %v3172, %v3110
  %v3174 = vadd.f32 %v3173, %v3111
  %v3175 = vadd.f32 %v3174, %v3112
  %v3176 = vadd.f32 %v3175, %v3113
  %v3177 = vadd.f32 %v3176, %v3114
  %v3178 = vadd.f32 %v3177, %v3115
  %v3179 = vadd.f32 %v3178, %v3116
  %v3180 = vadd.f32 %v3179, %v3117
  %v3181 = vadd.f32 %v3180, %v3118
  %v3182 = vadd.f32 %v3181, %v3119
  %v3183 = vadd.f32 %v3182, %v3120
  %v3184 = vadd.f32 %v3183, %v3121
  %v3185 = vadd.f32 %v3184, %v3122
  %v3186 = vadd.f32 %v3185, %v3123
  %v3187 = vadd.f32 %v3186, %v3124
  %v3188 = vadd.f32 %v3187, %v3125
  %v3189 = vadd.f32 %v3188, %v3126
  %v3190 = vadd.f32 %v3189, %v3127
  %v3191 = vadd.f32 %v3190, %v3128
  %v3192 = vadd.f32 %v3191, %v3129
  %v3193 = vadd.f32 %v3192, %v3130
  %v3194 = vadd.f32 %v3193, %v3131
  %v3195 = vadd.f32 %v3194, %v3132
  %v3196 = vadd.f32 %v3195, %v3133
  %v3197 = vadd.f32 %v3196, %v3134
  %v3198 = vadd.f32 %v3197, %v3135
  %v3199 = vadd.f32 %v3198, %v3136
  %v3200 = vadd.f32 %v3199, %v3137
  %v3201 = vadd.f32 %v3200, %v3138
  %v3202 = vadd.f32 %v3201, %v3139
  %v3203 = vadd.f32 %v3202, %v3140
  %v3204 = vadd.f32 %v3203, %v3141
  %v3205 = vadd.f32 %v3204, %v3142
  %v3206 = vadd.f32 %v3205, %v3143
  %v3207 = vadd.f32 %v3206, %v3144
  %v3208 = vadd.f32 %v3207, %v3145
  %v3209 = vadd.f32 %v3208, %v3146
  %v3210 = vadd.f32 %v3209, %v3147
  %v3211 = vadd.f32 %v3210, %v3148
  %v3212 = vrot.slane %v3211, 4
  %v3213 = vadd.f32 %v3211, %v3212
  %v3214 = vrot.slane %v3213, 2
  %v3215 = vadd.f32 %v3213, %v3214
  %v3216 = vrot.slane %v3215, 1
  %v3217 = vadd.f32 %v3215, %v3216
  %v3218 = vmul.f32 %v3085, %v3085
  %v3219 = vmul.f32 %v3086, %v3086
  %v3220 = vmul.f32 %v3087, %v3087
  %v3221 = vmul.f32 %v3088, %v3088
  %v3222 = vmul.f32 %v3089, %v3089
  %v3223 = vmul.f32 %v3090, %v3090
  %v3224 = vmul.f32 %v3091, %v3091
  %v3225 = vmul.f32 %v3092, %v3092
  %v3226 = vmul.f32 %v3093, %v3093
  %v3227 = vmul.f32 %v3094, %v3094
  %v3228 = vmul.f32 %v3095, %v3095
  %v3229 = vmul.f32 %v3096, %v3096
  %v3230 = vmul.f32 %v3097, %v3097
  %v3231 = vmul.f32 %v3098, %v3098
  %v3232 = vmul.f32 %v3099, %v3099
  %v3233 = vmul.f32 %v3100, %v3100
  %v3234 = vmul.f32 %v3101, %v3101
  %v3235 = vmul.f32 %v3102, %v3102
  %v3236 = vmul.f32 %v3103, %v3103
  %v3237 = vmul.f32 %v3104, %v3104
  %v3238 = vmul.f32 %v3105, %v3105
  %v3239 = vmul.f32 %v3106, %v3106
  %v3240 = vmul.f32 %v3107, %v3107
  %v3241 = vmul.f32 %v3108, %v3108
  %v3242 = vmul.f32 %v3109, %v3109
  %v3243 = vmul.f32 %v3110, %v3110
  %v3244 = vmul.f32 %v3111, %v3111
  %v3245 = vmul.f32 %v3112, %v3112
  %v3246 = vmul.f32 %v3113, %v3113
  %v3247 = vmul.f32 %v3114, %v3114
  %v3248 = vmul.f32 %v3115, %v3115
  %v3249 = vmul.f32 %v3116, %v3116
  %v3250 = vmul.f32 %v3117, %v3117
  %v3251 = vmul.f32 %v3118, %v3118
  %v3252 = vmul.f32 %v3119, %v3119
  %v3253 = vmul.f32 %v3120, %v3120
  %v3254 = vmul.f32 %v3121, %v3121
  %v3255 = vmul.f32 %v3122, %v3122
  %v3256 = vmul.f32 %v3123, %v3123
  %v3257 = vmul.f32 %v3124, %v3124
  %v3258 = vmul.f32 %v3125, %v3125
  %v3259 = vmul.f32 %v3126, %v3126
  %v3260 = vmul.f32 %v3127, %v3127
  %v3261 = vmul.f32 %v3128, %v3128
  %v3262 = vmul.f32 %v3129, %v3129
  %v3263 = vmul.f32 %v3130, %v3130
  %v3264 = vmul.f32 %v3131, %v3131
  %v3265 = vmul.f32 %v3132, %v3132
  %v3266 = vmul.f32 %v3133, %v3133
  %v3267 = vmul.f32 %v3134, %v3134
  %v3268 = vmul.f32 %v3135, %v3135
  %v3269 = vmul.f32 %v3136, %v3136
  %v3270 = vmul.f32 %v3137, %v3137
  %v3271 = vmul.f32 %v3138, %v3138
  %v3272 = vmul.f32 %v3139, %v3139
  %v3273 = vmul.f32 %v3140, %v3140
  %v3274 = vmul.f32 %v3141, %v3141
  %v3275 = vmul.f32 %v3142, %v3142
  %v3276 = vmul.f32 %v3143, %v3143
  %v3277 = vmul.f32 %v3144, %v3144
  %v3278 = vmul.f32 %v3145, %v3145
  %v3279 = vmul.f32 %v3146, %v3146
  %v3280 = vmul.f32 %v3147, %v3147
  %v3281 = vmul.f32 %v3148, %v3148
  %v3282 = vadd.f32 %v3218, %v3219
  %v3283 = vadd.f32 %v3282, %v3220
  %v3284 = vadd.f32 %v3283, %v3221
  %v3285 = vadd.f32 %v3284, %v3222
  %v3286 = vadd.f32 %v3285, %v3223
  %v3287 = vadd.f32 %v3286, %v3224
  %v3288 = vadd.f32 %v3287, %v3225
  %v3289 = vadd.f32 %v3288, %v3226
  %v3290 = vadd.f32 %v3289, %v3227
  %v3291 = vadd.f32 %v3290, %v3228
  %v3292 = vadd.f32 %v3291, %v3229
  %v3293 = vadd.f32 %v3292, %v3230
  %v3294 = vadd.f32 %v3293, %v3231
  %v3295 = vadd.f32 %v3294, %v3232
  %v3296 = vadd.f32 %v3295, %v3233
  %v3297 = vadd.f32 %v3296, %v3234
  %v3298 = vadd.f32 %v3297, %v3235
  %v3299 = vadd.f32 %v3298, %v3236
  %v3300 = vadd.f32 %v3299, %v3237
  %v3301 = vadd.f32 %v3300, %v3238
  %v3302 = vadd.f32 %v3301, %v3239
  %v3303 = vadd.f32 %v3302, %v3240
  %v3304 = vadd.f32 %v3303, %v3241
  %v3305 = vadd.f32 %v3304, %v3242
  %v3306 = vadd.f32 %v3305, %v3243
  %v3307 = vadd.f32 %v3306, %v3244
  %v3308 = vadd.f32 %v3307, %v3245
  %v3309 = vadd.f32 %v3308, %v3246
  %v3310 = vadd.f32 %v3309, %v3247
  %v3311 = vadd.f32 %v3310, %v3248
  %v3312 = vadd.f32 %v3311, %v3249
  %v3313 = vadd.f32 %v3312, %v3250
  %v3314 = vadd.f32 %v3313, %v3251
  %v3315 = vadd.f32 %v3314, %v3252
  %v3316 = vadd.f32 %v3315, %v3253
  %v3317 = vadd.f32 %v3316, %v3254
  %v3318 = vadd.f32 %v3317, %v3255
  %v3319 = vadd.f32 %v3318, %v3256
  %v3320 = vadd.f32 %v3319, %v3257
  %v3321 = vadd.f32 %v3320, %v3258
  %v3322 = vadd.f32 %v3321, %v3259
  %v3323 = vadd.f32 %v3322, %v3260
  %v3324 = vadd.f32 %v3323, %v3261
  %v3325 = vadd.f32 %v3324, %v3262
  %v3326 = vadd.f32 %v3325, %v3263
  %v3327 = vadd.f32 %v3326, %v3264
  %v3328 = vadd.f32 %v3327, %v3265
  %v3329 = vadd.f32 %v3328, %v3266
  %v3330 = vadd.f32 %v3329, %v3267
  %v3331 = vadd.f32 %v3330, %v3268
  %v3332 = vadd.f32 %v3331, %v3269
  %v3333 = vadd.f32 %v3332, %v3270
  %v3334 = vadd.f32 %v3333, %v3271
  %v3335 = vadd.f32 %v3334, %v3272
  %v3336 = vadd.f32 %v3335, %v3273
  %v3337 = vadd.f32 %v3336, %v3274
  %v3338 = vadd.f32 %v3337, %v3275
  %v3339 = vadd.f32 %v3338, %v3276
  %v3340 = vadd.f32 %v3339, %v3277
  %v3341 = vadd.f32 %v3340, %v3278
  %v3342 = vadd.f32 %v3341, %v3279
  %v3343 = vadd.f32 %v3342, %v3280
  %v3344 = vadd.f32 %v3343, %v3281
  %v3345 = vrot.slane %v3344, 4
  %v3346 = vadd.f32 %v3344, %v3345
  %v3347 = vrot.slane %v3346, 2
  %v3348 = vadd.f32 %v3346, %v3347
  %v3349 = vrot.slane %v3348, 1
  %v3350 = vadd.f32 %v3348, %v3349
  %v3351 = vmul.f32 %v3217, 0.001953125
  %v3352 = vmul.f32 %v3350, 0.001953125
  %v3353 = vmul.f32 %v3351, %v3351
  %v3354 = vsub.f32 %v3352, %v3353
  %v3355 = vmax.f32 %v3354, 0.0
  %v3356 = vadd.f32 %v3015, %v3351
  %v3357 = vadd.f32 %v3355, 1e-05
  %v3358 = vrsqrt.pop %v3357
  %v3359 = vmul.f32 %v3079, %v3358
  %v3360 = vmul.f32 %v3356, %v3359
  %v3361 = vsub.f32 %v3080, %v3360
  %v3363 = vlaneseq
  %v3364 = vshrl.u32 %v3363, 7
  %v3365 = vsub.s32 0, %v3364
  %v3366 = vrot.slane %v3359, %v3365
  %v3368 = vmul.f32 %v3015, %v3366
  %v3369 = vmul.f32 %v3016, %v3366
  %v3370 = vmul.f32 %v3017, %v3366
  %v3371 = vmul.f32 %v3018, %v3366
  %v3372 = vmul.f32 %v3019, %v3366
  %v3373 = vmul.f32 %v3020, %v3366
  %v3374 = vmul.f32 %v3021, %v3366
  %v3375 = vmul.f32 %v3022, %v3366
  %v3376 = vmul.f32 %v3023, %v3366
  %v3377 = vmul.f32 %v3024, %v3366
  %v3378 = vmul.f32 %v3025, %v3366
  %v3379 = vmul.f32 %v3026, %v3366
  %v3380 = vmul.f32 %v3027, %v3366
  %v3381 = vmul.f32 %v3028, %v3366
  %v3382 = vmul.f32 %v3029, %v3366
  %v3383 = vmul.f32 %v3030, %v3366
  %v3384 = vmul.f32 %v3031, %v3366
  %v3385 = vmul.f32 %v3032, %v3366
  %v3386 = vmul.f32 %v3033, %v3366
  %v3387 = vmul.f32 %v3034, %v3366
  %v3388 = vmul.f32 %v3035, %v3366
  %v3389 = vmul.f32 %v3036, %v3366
  %v3390 = vmul.f32 %v3037, %v3366
  %v3391 = vmul.f32 %v3038, %v3366
  %v3392 = vmul.f32 %v3039, %v3366
  %v3393 = vmul.f32 %v3040, %v3366
  %v3394 = vmul.f32 %v3041, %v3366
  %v3395 = vmul.f32 %v3042, %v3366
  %v3396 = vmul.f32 %v3043, %v3366
  %v3397 = vmul.f32 %v3044, %v3366
  %v3398 = vmul.f32 %v3045, %v3366
  %v3399 = vmul.f32 %v3046, %v3366
  %v3400 = vmul.f32 %v3047, %v3366
  %v3401 = vmul.f32 %v3048, %v3366
  %v3402 = vmul.f32 %v3049, %v3366
  %v3403 = vmul.f32 %v3050, %v3366
  %v3404 = vmul.f32 %v3051, %v3366
  %v3405 = vmul.f32 %v3052, %v3366
  %v3406 = vmul.f32 %v3053, %v3366
  %v3407 = vmul.f32 %v3054, %v3366
  %v3408 = vmul.f32 %v3055, %v3366
  %v3409 = vmul.f32 %v3056, %v3366
  %v3410 = vmul.f32 %v3057, %v3366
  %v3411 = vmul.f32 %v3058, %v3366
  %v3412 = vmul.f32 %v3059, %v3366
  %v3413 = vmul.f32 %v3060, %v3366
  %v3414 = vmul.f32 %v3061, %v3366
  %v3415 = vmul.f32 %v3062, %v3366
  %v3416 = vmul.f32 %v3063, %v3366
  %v3417 = vmul.f32 %v3064, %v3366
  %v3418 = vmul.f32 %v3065, %v3366
  %v3419 = vmul.f32 %v3066, %v3366
  %v3420 = vmul.f32 %v3067, %v3366
  %v3421 = vmul.f32 %v3068, %v3366
  %v3422 = vmul.f32 %v3069, %v3366
  %v3423 = vmul.f32 %v3070, %v3366
  %v3424 = vmul.f32 %v3071, %v3366
  %v3425 = vmul.f32 %v3072, %v3366
  %v3426 = vmul.f32 %v3073, %v3366
  %v3427 = vmul.f32 %v3074, %v3366
  %v3428 = vmul.f32 %v3075, %v3366
  %v3429 = vmul.f32 %v3076, %v3366
  %v3430 = vmul.f32 %v3077, %v3366
  %v3431 = vmul.f32 %v3078, %v3366
  %v3433 = vlaneseq
  %v3434 = vshrl.u32 %v3433, 7
  %v3435 = vsub.s32 0, %v3434
  %v3436 = vrot.slane %v3361, %v3435
  %v3438 = vadd.f32 %v3368, %v3436
  %v3439 = vadd.f32 %v3369, %v3436
  %v3440 = vadd.f32 %v3370, %v3436
  %v3441 = vadd.f32 %v3371, %v3436
  %v3442 = vadd.f32 %v3372, %v3436
  %v3443 = vadd.f32 %v3373, %v3436
  %v3444 = vadd.f32 %v3374, %v3436
  %v3445 = vadd.f32 %v3375, %v3436
  %v3446 = vadd.f32 %v3376, %v3436
  %v3447 = vadd.f32 %v3377, %v3436
  %v3448 = vadd.f32 %v3378, %v3436
  %v3449 = vadd.f32 %v3379, %v3436
  %v3450 = vadd.f32 %v3380, %v3436
  %v3451 = vadd.f32 %v3381, %v3436
  %v3452 = vadd.f32 %v3382, %v3436
  %v3453 = vadd.f32 %v3383, %v3436
  %v3454 = vadd.f32 %v3384, %v3436
  %v3455 = vadd.f32 %v3385, %v3436
  %v3456 = vadd.f32 %v3386, %v3436
  %v3457 = vadd.f32 %v3387, %v3436
  %v3458 = vadd.f32 %v3388, %v3436
  %v3459 = vadd.f32 %v3389, %v3436
  %v3460 = vadd.f32 %v3390, %v3436
  %v3461 = vadd.f32 %v3391, %v3436
  %v3462 = vadd.f32 %v3392, %v3436
  %v3463 = vadd.f32 %v3393, %v3436
  %v3464 = vadd.f32 %v3394, %v3436
  %v3465 = vadd.f32 %v3395, %v3436
  %v3466 = vadd.f32 %v3396, %v3436
  %v3467 = vadd.f32 %v3397, %v3436
  %v3468 = vadd.f32 %v3398, %v3436
  %v3469 = vadd.f32 %v3399, %v3436
  %v3470 = vadd.f32 %v3400, %v3436
  %v3471 = vadd.f32 %v3401, %v3436
  %v3472 = vadd.f32 %v3402, %v3436
  %v3473 = vadd.f32 %v3403, %v3436
  %v3474 = vadd.f32 %v3404, %v3436
  %v3475 = vadd.f32 %v3405, %v3436
  %v3476 = vadd.f32 %v3406, %v3436
  %v3477 = vadd.f32 %v3407, %v3436
  %v3478 = vadd.f32 %v3408, %v3436
  %v3479 = vadd.f32 %v3409, %v3436
  %v3480 = vadd.f32 %v3410, %v3436
  %v3481 = vadd.f32 %v3411, %v3436
  %v3482 = vadd.f32 %v3412, %v3436
  %v3483 = vadd.f32 %v3413, %v3436
  %v3484 = vadd.f32 %v3414, %v3436
  %v3485 = vadd.f32 %v3415, %v3436
  %v3486 = vadd.f32 %v3416, %v3436
  %v3487 = vadd.f32 %v3417, %v3436
  %v3488 = vadd.f32 %v3418, %v3436
  %v3489 = vadd.f32 %v3419, %v3436
  %v3490 = vadd.f32 %v3420, %v3436
  %v3491 = vadd.f32 %v3421, %v3436
  %v3492 = vadd.f32 %v3422, %v3436
  %v3493 = vadd.f32 %v3423, %v3436
  %v3494 = vadd.f32 %v3424, %v3436
  %v3495 = vadd.f32 %v3425, %v3436
  %v3496 = vadd.f32 %v3426, %v3436
  %v3497 = vadd.f32 %v3427, %v3436
  %v3498 = vadd.f32 %v3428, %v3436
  %v3499 = vadd.f32 %v3429, %v3436
  %v3500 = vadd.f32 %v3430, %v3436
  %v3501 = vadd.f32 %v3431, %v3436
  %v3502 = vmax.f32 %v3438, 0.0
  %v3503 = vmax.f32 %v3439, 0.0
  %v3504 = vmax.f32 %v3440, 0.0
  %v3505 = vmax.f32 %v3441, 0.0
  %v3506 = vmax.f32 %v3442, 0.0
  %v3507 = vmax.f32 %v3443, 0.0
  %v3508 = vmax.f32 %v3444, 0.0
  %v3509 = vmax.f32 %v3445, 0.0
  %v3510 = vmax.f32 %v3446, 0.0
  %v3511 = vmax.f32 %v3447, 0.0
  %v3512 = vmax.f32 %v3448, 0.0
  %v3513 = vmax.f32 %v3449, 0.0
  %v3514 = vmax.f32 %v3450, 0.0
  %v3515 = vmax.f32 %v3451, 0.0
  %v3516 = vmax.f32 %v3452, 0.0
  %v3517 = vmax.f32 %v3453, 0.0
  %v3518 = vmax.f32 %v3454, 0.0
  %v3519 = vmax.f32 %v3455, 0.0
  %v3520 = vmax.f32 %v3456, 0.0
  %v3521 = vmax.f32 %v3457, 0.0
  %v3522 = vmax.f32 %v3458, 0.0
  %v3523 = vmax.f32 %v3459, 0.0
  %v3524 = vmax.f32 %v3460, 0.0
  %v3525 = vmax.f32 %v3461, 0.0
  %v3526 = vmax.f32 %v3462, 0.0
  %v3527 = vmax.f32 %v3463, 0.0
  %v3528 = vmax.f32 %v3464, 0.0
  %v3529 = vmax.f32 %v3465, 0.0
  %v3530 = vmax.f32 %v3466, 0.0
  %v3531 = vmax.f32 %v3467, 0.0
  %v3532 = vmax.f32 %v3468, 0.0
  %v3533 = vmax.f32 %v3469, 0.0
  %v3534 = vmax.f32 %v3470, 0.0
  %v3535 = vmax.f32 %v3471, 0.0
  %v3536 = vmax.f32 %v3472, 0.0
  %v3537 = vmax.f32 %v3473, 0.0
  %v3538 = vmax.f32 %v3474, 0.0
  %v3539 = vmax.f32 %v3475, 0.0
  %v3540 = vmax.f32 %v3476, 0.0
  %v3541 = vmax.f32 %v3477, 0.0
  %v3542 = vmax.f32 %v3478, 0.0
  %v3543 = vmax.f32 %v3479, 0.0
  %v3544 = vmax.f32 %v3480, 0.0
  %v3545 = vmax.f32 %v3481, 0.0
  %v3546 = vmax.f32 %v3482, 0.0
  %v3547 = vmax.f32 %v3483, 0.0
  %v3548 = vmax.f32 %v3484, 0.0
  %v3549 = vmax.f32 %v3485, 0.0
  %v3550 = vmax.f32 %v3486, 0.0
  %v3551 = vmax.f32 %v3487, 0.0
  %v3552 = vmax.f32 %v3488, 0.0
  %v3553 = vmax.f32 %v3489, 0.0
  %v3554 = vmax.f32 %v3490, 0.0
  %v3555 = vmax.f32 %v3491, 0.0
  %v3556 = vmax.f32 %v3492, 0.0
  %v3557 = vmax.f32 %v3493, 0.0
  %v3558 = vmax.f32 %v3494, 0.0
  %v3559 = vmax.f32 %v3495, 0.0
  %v3560 = vmax.f32 %v3496, 0.0
  %v3561 = vmax.f32 %v3497, 0.0
  %v3562 = vmax.f32 %v3498, 0.0
  %v3563 = vmax.f32 %v3499, 0.0
  %v3564 = vmax.f32 %v3500, 0.0
  %v3565 = vmax.f32 %v3501, 0.0
  %3566 = vst [vmem:[%s1247 + $0x1] sm:$0xff] %v3502
  %3567 = vst [vmem:[%s1247 + $0x9] sm:$0xff] %v3503
  %3568 = vst [vmem:[%s1247 + $0x19] sm:$0xff] %v3504
  %3569 = vst [vmem:[%s1247 + $0x21] sm:$0xff] %v3505
  %3570 = vst [vmem:[%s1247 + $0x31] sm:$0xff] %v3506
  %3571 = vst [vmem:[%s1247 + $0x39] sm:$0xff] %v3507
  %3572 = vst [vmem:[%s1247 + $0x49] sm:$0xff] %v3508
  %3573 = vst [vmem:[%s1247 + $0x51] sm:$0xff] %v3509
  %3574 = vst [vmem:[%s1247 + $0x61] sm:$0xff] %v3510
  %3575 = vst [vmem:[%s1247 + $0x69] sm:$0xff] %v3511
  %3576 = vst [vmem:[%s1247 + $0x79] sm:$0xff] %v3512
  %3577 = vst [vmem:[%s1247 + $0x81] sm:$0xff] %v3513
  %3578 = vst [vmem:[%s1247 + $0x91] sm:$0xff] %v3514
  %3579 = vst [vmem:[%s1247 + $0x99] sm:$0xff] %v3515
  %3580 = vst [vmem:[%s1247 + $0xa9] sm:$0xff] %v3516
  %3581 = vst [vmem:[%s1247 + $0xb1] sm:$0xff] %v3517
  %3582 = vst [vmem:[%s1247 + $0xc1] sm:$0xff] %v3518
  %3583 = vst [vmem:[%s1247 + $0xc9] sm:$0xff] %v3519
  %3584 = vst [vmem:[%s1247 + $0xd9] sm:$0xff] %v3520
  %3585 = vst [vmem:[%s1247 + $0xe1] sm:$0xff] %v3521
  %3586 = vst [vmem:[%s1247 + $0xf1] sm:$0xff] %v3522
  %3587 = vst [vmem:[%s1247 + $0xf9] sm:$0xff] %v3523
  %3588 = vst [vmem:[%s1247 + $0x109] sm:$0xff] %v3524
  %3589 = vst [vmem:[%s1247 + $0x111] sm:$0xff] %v3525
  %3590 = vst [vmem:[%s1247 + $0x121] sm:$0xff] %v3526
  %3591 = vst [vmem:[%s1247 + $0x129] sm:$0xff] %v3527
  %3592 = vst [vmem:[%s1247 + $0x139] sm:$0xff] %v3528
  %3593 = vst [vmem:[%s1247 + $0x141] sm:$0xff] %v3529
  %3594 = vst [vmem:[%s1247 + $0x151] sm:$0xff] %v3530
  %3595 = vst [vmem:[%s1247 + $0x159] sm:$0xff] %v3531
  %3596 = vst [vmem:[%s1247 + $0x169] sm:$0xff] %v3532
  %3597 = vst [vmem:[%s1247 + $0x171] sm:$0xff] %v3533
  %3598 = vst [vmem:[%s1247 + $0x1b1] sm:$0xff] %v3534
  %3599 = vst [vmem:[%s1247 + $0x1b9] sm:$0xff] %v3535
  %3600 = vst [vmem:[%s1247 + $0x1c9] sm:$0xff] %v3536
  %3601 = vst [vmem:[%s1247 + $0x1d1] sm:$0xff] %v3537
  %3602 = vst [vmem:[%s1247 + $0x1e1] sm:$0xff] %v3538
  %3603 = vst [vmem:[%s1247 + $0x1e9] sm:$0xff] %v3539
  %3604 = vst [vmem:[%s1247 + $0x1f9] sm:$0xff] %v3540
  %3605 = vst [vmem:[%s1247 + $0x201] sm:$0xff] %v3541
  %3606 = vst [vmem:[%s1247 + $0x211] sm:$0xff] %v3542
  %3607 = vst [vmem:[%s1247 + $0x219] sm:$0xff] %v3543
  %3608 = vst [vmem:[%s1247 + $0x229] sm:$0xff] %v3544
  %3609 = vst [vmem:[%s1247 + $0x231] sm:$0xff] %v3545
  %3610 = vst [vmem:[%s1247 + $0x241] sm:$0xff] %v3546
  %3611 = vst [vmem:[%s1247 + $0x249] sm:$0xff] %v3547
  %3612 = vst [vmem:[%s1247 + $0x259] sm:$0xff] %v3548
  %3613 = vst [vmem:[%s1247 + $0x261] sm:$0xff] %v3549
  %3614 = vst [vmem:[%s1247 + $0x271] sm:$0xff] %v3550
  %3615 = vst [vmem:[%s1247 + $0x279] sm:$0xff] %v3551
  %3616 = vst [vmem:[%s1247 + $0x289] sm:$0xff] %v3552
  %3617 = vst [vmem:[%s1247 + $0x291] sm:$0xff] %v3553
  %3618 = vst [vmem:[%s1247 + $0x2a1] sm:$0xff] %v3554
  %3619 = vst [vmem:[%s1247 + $0x2a9] sm:$0xff] %v3555
  %3620 = vst [vmem:[%s1247 + $0x2b9] sm:$0xff] %v3556
  %3621 = vst [vmem:[%s1247 + $0x2c1] sm:$0xff] %v3557
  %3622 = vst [vmem:[%s1247 + $0x2d1] sm:$0xff] %v3558
  %3623 = vst [vmem:[%s1247 + $0x2d9] sm:$0xff] %v3559
  %3624 = vst [vmem:[%s1247 + $0x2e9] sm:$0xff] %v3560
  %3625 = vst [vmem:[%s1247 + $0x2f1] sm:$0xff] %v3561
  %3626 = vst [vmem:[%s1247 + $0x301] sm:$0xff] %v3562
  %3627 = vst [vmem:[%s1247 + $0x309] sm:$0xff] %v3563
  %3628 = vst [vmem:[%s1247 + $0x319] sm:$0xff] %v3564
  %3629 = vst [vmem:[%s1247 + $0x321] sm:$0xff] %v3565
  %v3630 = vld [vmem:[#allocation2] sm:$0xff]
  %v3631 = vld [vmem:[#allocation2 + $0x8] sm:$0xff]
  %v3632 = vld [vmem:[#allocation2 + $0x18] sm:$0xff]
  %v3633 = vld [vmem:[#allocation2 + $0x20] sm:$0xff]
  %v3634 = vld [vmem:[#allocation2 + $0x30] sm:$0xff]
  %v3635 = vld [vmem:[#allocation2 + $0x38] sm:$0xff]
  %v3636 = vld [vmem:[#allocation2 + $0x48] sm:$0xff]
  %v3637 = vld [vmem:[#allocation2 + $0x50] sm:$0xff]
  %v3638 = vld [vmem:[#allocation2 + $0x60] sm:$0xff]
  %v3639 = vld [vmem:[#allocation2 + $0x68] sm:$0xff]
  %v3640 = vld [vmem:[#allocation2 + $0x78] sm:$0xff]
  %v3641 = vld [vmem:[#allocation2 + $0x80] sm:$0xff]
  %v3642 = vld [vmem:[#allocation2 + $0x90] sm:$0xff]
  %v3643 = vld [vmem:[#allocation2 + $0x98] sm:$0xff]
  %v3644 = vld [vmem:[#allocation2 + $0xa8] sm:$0xff]
  %v3645 = vld [vmem:[#allocation2 + $0xb0] sm:$0xff]
  %v3646 = vld [vmem:[#allocation2 + $0xc0] sm:$0xff]
  %v3647 = vld [vmem:[#allocation2 + $0xc8] sm:$0xff]
  %v3648 = vld [vmem:[#allocation2 + $0xd8] sm:$0xff]
  %v3649 = vld [vmem:[#allocation2 + $0xe0] sm:$0xff]
  %v3650 = vld [vmem:[#allocation2 + $0xf0] sm:$0xff]
  %v3651 = vld [vmem:[#allocation2 + $0xf8] sm:$0xff]
  %v3652 = vld [vmem:[#allocation2 + $0x108] sm:$0xff]
  %v3653 = vld [vmem:[#allocation2 + $0x110] sm:$0xff]
  %v3654 = vld [vmem:[#allocation2 + $0x120] sm:$0xff]
  %v3655 = vld [vmem:[#allocation2 + $0x128] sm:$0xff]
  %v3656 = vld [vmem:[#allocation2 + $0x138] sm:$0xff]
  %v3657 = vld [vmem:[#allocation2 + $0x140] sm:$0xff]
  %v3658 = vld [vmem:[#allocation2 + $0x150] sm:$0xff]
  %v3659 = vld [vmem:[#allocation2 + $0x158] sm:$0xff]
  %v3660 = vld [vmem:[#allocation2 + $0x168] sm:$0xff]
  %v3661 = vld [vmem:[#allocation2 + $0x170] sm:$0xff]
  %v3662 = vld [vmem:[#allocation2 + $0x1b0] sm:$0xff]
  %v3663 = vld [vmem:[#allocation2 + $0x1b8] sm:$0xff]
  %v3664 = vld [vmem:[#allocation2 + $0x1c8] sm:$0xff]
  %v3665 = vld [vmem:[#allocation2 + $0x1d0] sm:$0xff]
  %v3666 = vld [vmem:[#allocation2 + $0x1e0] sm:$0xff]
  %v3667 = vld [vmem:[#allocation2 + $0x1e8] sm:$0xff]
  %v3668 = vld [vmem:[#allocation2 + $0x1f8] sm:$0xff]
  %v3669 = vld [vmem:[#allocation2 + $0x200] sm:$0xff]
  %v3670 = vld [vmem:[#allocation2 + $0x210] sm:$0xff]
  %v3671 = vld [vmem:[#allocation2 + $0x218] sm:$0xff]
  %v3672 = vld [vmem:[#allocation2 + $0x228] sm:$0xff]
  %v3673 = vld [vmem:[#allocation2 + $0x230] sm:$0xff]
  %v3674 = vld [vmem:[#allocation2 + $0x240] sm:$0xff]
  %v3675 = vld [vmem:[#allocation2 + $0x248] sm:$0xff]
  %v3676 = vld [vmem:[#allocation2 + $0x258] sm:$0xff]
  %v3677 = vld [vmem:[#allocation2 + $0x260] sm:$0xff]
  %v3678 = vld [vmem:[#allocation2 + $0x270] sm:$0xff]
  %v3679 = vld [vmem:[#allocation2 + $0x278] sm:$0xff]
  %v3680 = vld [vmem:[#allocation2 + $0x288] sm:$0xff]
  %v3681 = vld [vmem:[#allocation2 + $0x290] sm:$0xff]
  %v3682 = vld [vmem:[#allocation2 + $0x2a0] sm:$0xff]
  %v3683 = vld [vmem:[#allocation2 + $0x2a8] sm:$0xff]
  %v3684 = vld [vmem:[#allocation2 + $0x2b8] sm:$0xff]
  %v3685 = vld [vmem:[#allocation2 + $0x2c0] sm:$0xff]
  %v3686 = vld [vmem:[#allocation2 + $0x2d0] sm:$0xff]
  %v3687 = vld [vmem:[#allocation2 + $0x2d8] sm:$0xff]
  %v3688 = vld [vmem:[#allocation2 + $0x2e8] sm:$0xff]
  %v3689 = vld [vmem:[#allocation2 + $0x2f0] sm:$0xff]
  %v3690 = vld [vmem:[#allocation2 + $0x300] sm:$0xff]
  %v3691 = vld [vmem:[#allocation2 + $0x308] sm:$0xff]
  %v3692 = vld [vmem:[#allocation2 + $0x318] sm:$0xff]
  %v3693 = vld [vmem:[#allocation2 + $0x320] sm:$0xff]
  %v3694 = vpack.c.bf16 %v3631, %v3630
  %v3695 = vpack.c.bf16 %v3633, %v3632
  %v3696 = vpack.c.bf16 %v3635, %v3634
  %v3697 = vpack.c.bf16 %v3637, %v3636
  %v3698 = vpack.c.bf16 %v3639, %v3638
  %v3699 = vpack.c.bf16 %v3641, %v3640
  %v3700 = vpack.c.bf16 %v3643, %v3642
  %v3701 = vpack.c.bf16 %v3645, %v3644
  %v3702 = vpack.c.bf16 %v3647, %v3646
  %v3703 = vpack.c.bf16 %v3649, %v3648
  %v3704 = vpack.c.bf16 %v3651, %v3650
  %v3705 = vpack.c.bf16 %v3653, %v3652
  %v3706 = vpack.c.bf16 %v3655, %v3654
  %v3707 = vpack.c.bf16 %v3657, %v3656
  %v3708 = vpack.c.bf16 %v3659, %v3658
  %v3709 = vpack.c.bf16 %v3661, %v3660
  %v3710 = vpack.c.bf16 %v3663, %v3662
  %v3711 = vpack.c.bf16 %v3665, %v3664
  %v3712 = vpack.c.bf16 %v3667, %v3666
  %v3713 = vpack.c.bf16 %v3669, %v3668
  %v3714 = vpack.c.bf16 %v3671, %v3670
  %v3715 = vpack.c.bf16 %v3673, %v3672
  %v3716 = vpack.c.bf16 %v3675, %v3674
  %v3717 = vpack.c.bf16 %v3677, %v3676
  %v3718 = vpack.c.bf16 %v3679, %v3678
  %v3719 = vpack.c.bf16 %v3681, %v3680
  %v3720 = vpack.c.bf16 %v3683, %v3682
  %v3721 = vpack.c.bf16 %v3685, %v3684
  %v3722 = vpack.c.bf16 %v3687, %v3686
  %v3723 = vpack.c.bf16 %v3689, %v3688
  %v3724 = vpack.c.bf16 %v3691, %v3690
  %v3725 = vpack.c.bf16 %v3693, %v3692
  %v3726 = vld [vmem:[%s3] sm:$0xf]
  %v3727 = vld [vmem:[%s3 + $0x4] sm:$0xf]
  %v3728 = vld [vmem:[%s3 + $0x8] sm:$0xf]
  %v3729 = vld [vmem:[%s3 + $0xc] sm:$0xf]
  %v3730 = vld [vmem:[%s3 + $0x10] sm:$0xf]
  %v3731 = vld [vmem:[%s3 + $0x14] sm:$0xf]
  %v3732 = vld [vmem:[%s3 + $0x18] sm:$0xf]
  %v3733 = vld [vmem:[%s3 + $0x1c] sm:$0xf]
  %v3734 = vld [vmem:[%s3 + $0x20] sm:$0xf]
  %v3735 = vld [vmem:[%s3 + $0x24] sm:$0xf]
  %v3736 = vld [vmem:[%s3 + $0x28] sm:$0xf]
  %v3737 = vld [vmem:[%s3 + $0x2c] sm:$0xf]
  %v3738 = vld [vmem:[%s3 + $0x30] sm:$0xf]
  %v3739 = vld [vmem:[%s3 + $0x34] sm:$0xf]
  %v3740 = vld [vmem:[%s3 + $0x38] sm:$0xf]
  %v3741 = vld [vmem:[%s3 + $0x3c] sm:$0xf]
  %v3742 = vld [vmem:[#allocation2 + $0x1] sm:$0xff]
  %v3743 = vld [vmem:[#allocation2 + $0x9] sm:$0xff]
  %v3744 = vld [vmem:[#allocation2 + $0x19] sm:$0xff]
  %v3745 = vld [vmem:[#allocation2 + $0x21] sm:$0xff]
  %v3746 = vld [vmem:[#allocation2 + $0x31] sm:$0xff]
  %v3747 = vld [vmem:[#allocation2 + $0x39] sm:$0xff]
  %v3748 = vld [vmem:[#allocation2 + $0x49] sm:$0xff]
  %v3749 = vld [vmem:[#allocation2 + $0x51] sm:$0xff]
  %v3750 = vld [vmem:[#allocation2 + $0x61] sm:$0xff]
  %v3751 = vld [vmem:[#allocation2 + $0x69] sm:$0xff]
  %v3752 = vld [vmem:[#allocation2 + $0x79] sm:$0xff]
  %v3753 = vld [vmem:[#allocation2 + $0x81] sm:$0xff]
  %v3754 = vld [vmem:[#allocation2 + $0x91] sm:$0xff]
  %v3755 = vld [vmem:[#allocation2 + $0x99] sm:$0xff]
  %v3756 = vld [vmem:[#allocation2 + $0xa9] sm:$0xff]
  %v3757 = vld [vmem:[#allocation2 + $0xb1] sm:$0xff]
  %v3758 = vld [vmem:[#allocation2 + $0xc1] sm:$0xff]
  %v3759 = vld [vmem:[#allocation2 + $0xc9] sm:$0xff]
  %v3760 = vld [vmem:[#allocation2 + $0xd9] sm:$0xff]
  %v3761 = vld [vmem:[#allocation2 + $0xe1] sm:$0xff]
  %v3762 = vld [vmem:[#allocation2 + $0xf1] sm:$0xff]
  %v3763 = vld [vmem:[#allocation2 + $0xf9] sm:$0xff]
  %v3764 = vld [vmem:[#allocation2 + $0x109] sm:$0xff]
  %v3765 = vld [vmem:[#allocation2 + $0x111] sm:$0xff]
  %v3766 = vld [vmem:[#allocation2 + $0x121] sm:$0xff]
  %v3767 = vld [vmem:[#allocation2 + $0x129] sm:$0xff]
  %v3768 = vld [vmem:[#allocation2 + $0x139] sm:$0xff]
  %v3769 = vld [vmem:[#allocation2 + $0x141] sm:$0xff]
  %v3770 = vld [vmem:[#allocation2 + $0x151] sm:$0xff]
  %v3771 = vld [vmem:[#allocation2 + $0x159] sm:$0xff]
  %v3772 = vld [vmem:[#allocation2 + $0x169] sm:$0xff]
  %v3773 = vld [vmem:[#allocation2 + $0x171] sm:$0xff]
  %v3774 = vld [vmem:[#allocation2 + $0x1b1] sm:$0xff]
  %v3775 = vld [vmem:[#allocation2 + $0x1b9] sm:$0xff]
  %v3776 = vld [vmem:[#allocation2 + $0x1c9] sm:$0xff]
  %v3777 = vld [vmem:[#allocation2 + $0x1d1] sm:$0xff]
  %v3778 = vld [vmem:[#allocation2 + $0x1e1] sm:$0xff]
  %v3779 = vld [vmem:[#allocation2 + $0x1e9] sm:$0xff]
  %v3780 = vld [vmem:[#allocation2 + $0x1f9] sm:$0xff]
  %v3781 = vld [vmem:[#allocation2 + $0x201] sm:$0xff]
  %v3782 = vld [vmem:[#allocation2 + $0x211] sm:$0xff]
  %v3783 = vld [vmem:[#allocation2 + $0x219] sm:$0xff]
  %v3784 = vld [vmem:[#allocation2 + $0x229] sm:$0xff]
  %v3785 = vld [vmem:[#allocation2 + $0x231] sm:$0xff]
  %v3786 = vld [vmem:[#allocation2 + $0x241] sm:$0xff]
  %v3787 = vld [vmem:[#allocation2 + $0x249] sm:$0xff]
  %v3788 = vld [vmem:[#allocation2 + $0x259] sm:$0xff]
  %v3789 = vld [vmem:[#allocation2 + $0x261] sm:$0xff]
  %v3790 = vld [vmem:[#allocation2 + $0x271] sm:$0xff]
  %v3791 = vld [vmem:[#allocation2 + $0x279] sm:$0xff]
  %v3792 = vld [vmem:[#allocation2 + $0x289] sm:$0xff]
  %v3793 = vld [vmem:[#allocation2 + $0x291] sm:$0xff]
  %v3794 = vld [vmem:[#allocation2 + $0x2a1] sm:$0xff]
  %v3795 = vld [vmem:[#allocation2 + $0x2a9] sm:$0xff]
  %v3796 = vld [vmem:[#allocation2 + $0x2b9] sm:$0xff]
  %v3797 = vld [vmem:[#allocation2 + $0x2c1] sm:$0xff]
  %v3798 = vld [vmem:[#allocation2 + $0x2d1] sm:$0xff]
  %v3799 = vld [vmem:[#allocation2 + $0x2d9] sm:$0xff]
  %v3800 = vld [vmem:[#allocation2 + $0x2e9] sm:$0xff]
  %v3801 = vld [vmem:[#allocation2 + $0x2f1] sm:$0xff]
  %v3802 = vld [vmem:[#allocation2 + $0x301] sm:$0xff]
  %v3803 = vld [vmem:[#allocation2 + $0x309] sm:$0xff]
  %v3804 = vld [vmem:[#allocation2 + $0x319] sm:$0xff]
  %v3805 = vld [vmem:[#allocation2 + $0x321] sm:$0xff]
  %v3806 = vpack.c.bf16 %v3743, %v3742
  %v3807 = vpack.c.bf16 %v3745, %v3744
  %v3808 = vpack.c.bf16 %v3747, %v3746
  %v3809 = vpack.c.bf16 %v3749, %v3748
  %v3810 = vpack.c.bf16 %v3751, %v3750
  %v3811 = vpack.c.bf16 %v3753, %v3752
  %v3812 = vpack.c.bf16 %v3755, %v3754
  %v3813 = vpack.c.bf16 %v3757, %v3756
  %v3814 = vpack.c.bf16 %v3759, %v3758
  %v3815 = vpack.c.bf16 %v3761, %v3760
  %v3816 = vpack.c.bf16 %v3763, %v3762
  %v3817 = vpack.c.bf16 %v3765, %v3764
  %v3818 = vpack.c.bf16 %v3767, %v3766
  %v3819 = vpack.c.bf16 %v3769, %v3768
  %v3820 = vpack.c.bf16 %v3771, %v3770
  %v3821 = vpack.c.bf16 %v3773, %v3772
  %v3822 = vpack.c.bf16 %v3775, %v3774
  %v3823 = vpack.c.bf16 %v3777, %v3776
  %v3824 = vpack.c.bf16 %v3779, %v3778
  %v3825 = vpack.c.bf16 %v3781, %v3780
  %v3826 = vpack.c.bf16 %v3783, %v3782
  %v3827 = vpack.c.bf16 %v3785, %v3784
  %v3828 = vpack.c.bf16 %v3787, %v3786
  %v3829 = vpack.c.bf16 %v3789, %v3788
  %v3830 = vpack.c.bf16 %v3791, %v3790
  %v3831 = vpack.c.bf16 %v3793, %v3792
  %v3832 = vpack.c.bf16 %v3795, %v3794
  %v3833 = vpack.c.bf16 %v3797, %v3796
  %v3834 = vpack.c.bf16 %v3799, %v3798
  %v3835 = vpack.c.bf16 %v3801, %v3800
  %v3836 = vpack.c.bf16 %v3803, %v3802
  %v3837 = vpack.c.bf16 %v3805, %v3804
  %s3838 = scalar_lea.vmem %s3, 64
  %v3839 = vld [vmem:[%s3838] sm:$0xf]
  %v3840 = vld [vmem:[%s3838 + $0x4] sm:$0xf]
  %v3841 = vld [vmem:[%s3838 + $0x8] sm:$0xf]
  %v3842 = vld [vmem:[%s3838 + $0xc] sm:$0xf]
  %v3843 = vld [vmem:[%s3838 + $0x10] sm:$0xf]
  %v3844 = vld [vmem:[%s3838 + $0x14] sm:$0xf]
  %v3845 = vld [vmem:[%s3838 + $0x18] sm:$0xf]
  %v3846 = vld [vmem:[%s3838 + $0x1c] sm:$0xf]
  %v3847 = vld [vmem:[%s3838 + $0x20] sm:$0xf]
  %v3848 = vld [vmem:[%s3838 + $0x24] sm:$0xf]
  %v3849 = vld [vmem:[%s3838 + $0x28] sm:$0xf]
  %v3850 = vld [vmem:[%s3838 + $0x2c] sm:$0xf]
  %v3851 = vld [vmem:[%s3838 + $0x30] sm:$0xf]
  %v3852 = vld [vmem:[%s3838 + $0x34] sm:$0xf]
  %v3853 = vld [vmem:[%s3838 + $0x38] sm:$0xf]
  %v3854 = vld [vmem:[%s3838 + $0x3c] sm:$0xf]
  %v3871 = vunpack.c.l.b16 %v3839
  %v3872 = vunpack.c.l.b16 %v3840
  %v3873 = vunpack.c.l.b16 %v3841
  %v3874 = vunpack.c.l.b16 %v3842
  %v3875 = vunpack.c.l.b16 %v3843
  %v3876 = vunpack.c.l.b16 %v3844
  %v3877 = vunpack.c.l.b16 %v3845
  %v3878 = vunpack.c.l.b16 %v3846
  %v3879 = vunpack.c.l.b16 %v3847
  %v3880 = vunpack.c.l.b16 %v3848
  %v3881 = vunpack.c.l.b16 %v3849
  %v3882 = vunpack.c.l.b16 %v3850
  %v3883 = vunpack.c.l.b16 %v3851
  %v3884 = vunpack.c.l.b16 %v3852
  %v3885 = vunpack.c.l.b16 %v3853
  %v3886 = vunpack.c.l.b16 %v3854
  %v3887 = vpack.c.b16 %v3872, %v3871
  %v3888 = vpack.c.b16 %v3874, %v3873
  %v3889 = vpack.c.b16 %v3876, %v3875
  %v3890 = vpack.c.b16 %v3878, %v3877
  %v3891 = vpack.c.b16 %v3880, %v3879
  %v3892 = vpack.c.b16 %v3882, %v3881
  %v3893 = vpack.c.b16 %v3884, %v3883
  %v3894 = vpack.c.b16 %v3886, %v3885
  %3903 = vmatprep.subr.bf16.mxu0 0
  %3904 = vmatpush1.bf16.msra.mxu0 %v3887
  %3905 = vmatprep.subr.bf16.mxu0 0
  %3906 = vmatpush1.bf16.msra.mxu0 %v3888
  %3907 = vmatprep.subr.bf16.mxu0 0
  %3908 = vmatpush1.bf16.msra.mxu0 %v3889
  %3909 = vmatprep.subr.bf16.mxu0 0
  %3910 = vmatpush1.bf16.msra.mxu0 %v3890
  %3911 = vmatprep.subr.bf16.mxu0 0
  %3912 = vmatpush1.bf16.msra.mxu0 %v3891
  %3913 = vmatprep.subr.bf16.mxu0 0
  %3914 = vmatpush1.bf16.msra.mxu0 %v3892
  %3915 = vmatprep.subr.bf16.mxu0 0
  %3916 = vmatpush1.bf16.msra.mxu0 %v3893
  %3917 = vmatprep.subr.bf16.mxu0 0
  %3918 = vmatpush1.bf16.msra.mxu0 %v3894
  %3919 = vmatprep.subr.bf16.mxu0 0
  %3920 = vmatpush1.bf16.msra.mxu0 0
  %3921 = vmatprep.subr.bf16.mxu0 0
  %3922 = vmatpush1.bf16.msra.mxu0 0
  %3923 = vmatprep.subr.bf16.mxu0 0
  %3924 = vmatpush1.bf16.msra.mxu0 0
  %3925 = vmatprep.subr.bf16.mxu0 0
  %3926 = vmatpush1.bf16.msra.mxu0 0
  %3927 = vmatprep.subr.bf16.mxu0 0
  %3928 = vmatpush1.bf16.msra.mxu0 0
  %3929 = vmatprep.subr.bf16.mxu0 0
  %3930 = vmatpush1.bf16.msra.mxu0 0
  %3931 = vmatprep.subr.bf16.mxu0 0
  %3932 = vmatpush1.bf16.msra.mxu0 0
  %3933 = vmatprep.subr.bf16.mxu0 0
  %3934 = vmatpush1.bf16.msra.mxu0 0
  %3935 = vmatprep.mubr.bf16.mxu0 0
  %3936 = vmatmul.mubr.bf16.gmra.mrb[0].mxu0 %v3806
  %v3937 = vpop.f32.mrb[0].mxu0
  %v3938 = vadd.f32 0.0, %v3937
  %v3939 = vpop.f32.mrb[0].mxu0
  %v3940 = vpop.f32.mrb[0].mxu0
  %v3941 = vadd.f32 0.0, %v3940
  %v3942 = vpop.f32.mrb[0].mxu0
  %3943 = vmatprep.mubr.bf16.mxu0 0
  %3944 = vmatmul.mubr.bf16.gmra.mrb[0].mxu0 %v3807
  %v3945 = vpop.f32.mrb[0].mxu0
  %v3946 = vadd.f32 0.0, %v3945
  %v3947 = vpop.f32.mrb[0].mxu0
  %v3948 = vpop.f32.mrb[0].mxu0
  %v3949 = vadd.f32 0.0, %v3948
  %v3950 = vpop.f32.mrb[0].mxu0
  %3951 = vmatprep.mubr.bf16.mxu0 0
  %3952 = vmatmul.mubr.bf16.gmra.mrb[0].mxu0 %v3808
  %v3953 = vpop.f32.mrb[0].mxu0
  %v3954 = vadd.f32 0.0, %v3953
  %v3955 = vpop.f32.mrb[0].mxu0
  %v3956 = vpop.f32.mrb[0].mxu0
  %v3957 = vadd.f32 0.0, %v3956
  %v3958 = vpop.f32.mrb[0].mxu0
  %3959 = vmatprep.mubr.bf16.mxu0 0
  %3960 = vmatmul.mubr.bf16.gmra.mrb[0].mxu0 %v3809
  %v3961 = vpop.f32.mrb[0].mxu0
  %v3962 = vadd.f32 0.0, %v3961
  %v3963 = vpop.f32.mrb[0].mxu0
  %v3964 = vpop.f32.mrb[0].mxu0
  %v3965 = vadd.f32 0.0, %v3964
  %v3966 = vpop.f32.mrb[0].mxu0
  %3967 = vmatprep.mubr.bf16.mxu0 0
  %3968 = vmatmul.mubr.bf16.gmra.mrb[0].mxu0 %v3810
  %v3969 = vpop.f32.mrb[0].mxu0
  %v3970 = vadd.f32 0.0, %v3969
  %v3971 = vpop.f32.mrb[0].mxu0
  %v3972 = vpop.f32.mrb[0].mxu0
  %v3973 = vadd.f32 0.0, %v3972
  %v3974 = vpop.f32.mrb[0].mxu0
  %3975 = vmatprep.mubr.bf16.mxu0 0
  %3976 = vmatmul.mubr.bf16.gmra.mrb[0].mxu0 %v3811
  %v3977 = vpop.f32.mrb[0].mxu0
  %v3978 = vadd.f32 0.0, %v3977
  %v3979 = vpop.f32.mrb[0].mxu0
  %v3980 = vpop.f32.mrb[0].mxu0
  %v3981 = vadd.f32 0.0, %v3980
  %v3982 = vpop.f32.mrb[0].mxu0
  %3983 = vmatprep.mubr.bf16.mxu0 0
  %3984 = vmatmul.mubr.bf16.gmra.mrb[0].mxu0 %v3812
  %v3985 = vpop.f32.mrb[0].mxu0
  %v3986 = vadd.f32 0.0, %v3985
  %v3987 = vpop.f32.mrb[0].mxu0
  %v3988 = vpop.f32.mrb[0].mxu0
  %v3989 = vadd.f32 0.0, %v3988
  %v3990 = vpop.f32.mrb[0].mxu0
  %3991 = vmatprep.mubr.bf16.mxu0 0
  %3992 = vmatmul.mubr.bf16.gmra.mrb[0].mxu0 %v3813
  %v3993 = vpop.f32.mrb[0].mxu0
  %v3994 = vadd.f32 0.0, %v3993
  %v3995 = vpop.f32.mrb[0].mxu0
  %v3996 = vpop.f32.mrb[0].mxu0
  %v3997 = vadd.f32 0.0, %v3996
  %v3998 = vpop.f32.mrb[0].mxu0
  %3999 = vmatprep.mubr.bf16.mxu0 0
  %4000 = vmatmul.mubr.bf16.gmra.mrb[0].mxu0 %v3814
  %v4001 = vpop.f32.mrb[0].mxu0
  %v4002 = vadd.f32 0.0, %v4001
  %v4003 = vpop.f32.mrb[0].mxu0
  %v4004 = vpop.f32.mrb[0].mxu0
  %v4005 = vadd.f32 0.0, %v4004
  %v4006 = vpop.f32.mrb[0].mxu0
  %4007 = vmatprep.mubr.bf16.mxu0 0
  %4008 = vmatmul.mubr.bf16.gmra.mrb[0].mxu0 %v3815
  %v4009 = vpop.f32.mrb[0].mxu0
  %v4010 = vadd.f32 0.0, %v4009
  %v4011 = vpop.f32.mrb[0].mxu0
  %v4012 = vpop.f32.mrb[0].mxu0
  %v4013 = vadd.f32 0.0, %v4012
  %v4014 = vpop.f32.mrb[0].mxu0
  %4015 = vmatprep.mubr.bf16.mxu0 0
  %4016 = vmatmul.mubr.bf16.gmra.mrb[0].mxu0 %v3816
  %v4017 = vpop.f32.mrb[0].mxu0
  %v4018 = vadd.f32 0.0, %v4017
  %v4019 = vpop.f32.mrb[0].mxu0
  %v4020 = vpop.f32.mrb[0].mxu0
  %v4021 = vadd.f32 0.0, %v4020
  %v4022 = vpop.f32.mrb[0].mxu0
  %4023 = vmatprep.mubr.bf16.mxu0 0
  %4024 = vmatmul.mubr.bf16.gmra.mrb[0].mxu0 %v3817
  %v4025 = vpop.f32.mrb[0].mxu0
  %v4026 = vadd.f32 0.0, %v4025
  %v4027 = vpop.f32.mrb[0].mxu0
  %v4028 = vpop.f32.mrb[0].mxu0
  %v4029 = vadd.f32 0.0, %v4028
  %v4030 = vpop.f32.mrb[0].mxu0
  %4031 = vmatprep.mubr.bf16.mxu0 0
  %4032 = vmatmul.mubr.bf16.gmra.mrb[0].mxu0 %v3818
  %v4033 = vpop.f32.mrb[0].mxu0
  %v4034 = vadd.f32 0.0, %v4033
  %v4035 = vpop.f32.mrb[0].mxu0
  %v4036 = vpop.f32.mrb[0].mxu0
  %v4037 = vadd.f32 0.0, %v4036
  %v4038 = vpop.f32.mrb[0].mxu0
  %4039 = vmatprep.mubr.bf16.mxu0 0
  %4040 = vmatmul.mubr.bf16.gmra.mrb[0].mxu0 %v3819
  %v4041 = vpop.f32.mrb[0].mxu0
  %v4042 = vadd.f32 0.0, %v4041
  %v4043 = vpop.f32.mrb[0].mxu0
  %v4044 = vpop.f32.mrb[0].mxu0
  %v4045 = vadd.f32 0.0, %v4044
  %v4046 = vpop.f32.mrb[0].mxu0
  %4047 = vmatprep.mubr.bf16.mxu0 0
  %4048 = vmatmul.mubr.bf16.gmra.mrb[0].mxu0 %v3820
  %v4049 = vpop.f32.mrb[0].mxu0
  %v4050 = vadd.f32 0.0, %v4049
  %v4051 = vpop.f32.mrb[0].mxu0
  %v4052 = vpop.f32.mrb[0].mxu0
  %v4053 = vadd.f32 0.0, %v4052
  %v4054 = vpop.f32.mrb[0].mxu0
  %4055 = vmatprep.mubr.bf16.mxu0 0
  %4056 = vmatmul.mubr.bf16.gmra.mrb[0].mxu0 %v3821
  %v4057 = vpop.f32.mrb[0].mxu0
  %v4058 = vadd.f32 0.0, %v4057
  %v4059 = vpop.f32.mrb[0].mxu0
  %v4060 = vpop.f32.mrb[0].mxu0
  %v4061 = vadd.f32 0.0, %v4060
  %v4062 = vpop.f32.mrb[0].mxu0
  %4063 = vmatprep.mubr.bf16.mxu0 0
  %4064 = vmatmul.mubr.bf16.gmra.mrb[0].mxu0 %v3822
  %v4065 = vpop.f32.mrb[0].mxu0
  %v4066 = vadd.f32 0.0, %v4065
  %v4067 = vpop.f32.mrb[0].mxu0
  %v4068 = vpop.f32.mrb[0].mxu0
  %v4069 = vadd.f32 0.0, %v4068
  %v4070 = vpop.f32.mrb[0].mxu0
  %4071 = vmatprep.mubr.bf16.mxu0 0
  %4072 = vmatmul.mubr.bf16.gmra.mrb[0].mxu0 %v3823
  %v4073 = vpop.f32.mrb[0].mxu0
  %v4074 = vadd.f32 0.0, %v4073
  %v4075 = vpop.f32.mrb[0].mxu0
  %v4076 = vpop.f32.mrb[0].mxu0
  %v4077 = vadd.f32 0.0, %v4076
  %v4078 = vpop.f32.mrb[0].mxu0
  %4079 = vmatprep.mubr.bf16.mxu0 0
  %4080 = vmatmul.mubr.bf16.gmra.mrb[0].mxu0 %v3824
  %v4081 = vpop.f32.mrb[0].mxu0
  %v4082 = vadd.f32 0.0, %v4081
  %v4083 = vpop.f32.mrb[0].mxu0
  %v4084 = vpop.f32.mrb[0].mxu0
  %v4085 = vadd.f32 0.0, %v4084
  %v4086 = vpop.f32.mrb[0].mxu0
  %4087 = vmatprep.mubr.bf16.mxu0 0
  %4088 = vmatmul.mubr.bf16.gmra.mrb[0].mxu0 %v3825
  %v4089 = vpop.f32.mrb[0].mxu0
  %v4090 = vadd.f32 0.0, %v4089
  %v4091 = vpop.f32.mrb[0].mxu0
  %v4092 = vpop.f32.mrb[0].mxu0
  %v4093 = vadd.f32 0.0, %v4092
  %v4094 = vpop.f32.mrb[0].mxu0
  %4095 = vmatprep.mubr.bf16.mxu0 0
  %4096 = vmatmul.mubr.bf16.gmra.mrb[0].mxu0 %v3826
  %v4097 = vpop.f32.mrb[0].mxu0
  %v4098 = vadd.f32 0.0, %v4097
  %v4099 = vpop.f32.mrb[0].mxu0
  %v4100 = vpop.f32.mrb[0].mxu0
  %v4101 = vadd.f32 0.0, %v4100
  %v4102 = vpop.f32.mrb[0].mxu0
  %4103 = vmatprep.mubr.bf16.mxu0 0
  %4104 = vmatmul.mubr.bf16.gmra.mrb[0].mxu0 %v3827
  %v4105 = vpop.f32.mrb[0].mxu0
  %v4106 = vadd.f32 0.0, %v4105
  %v4107 = vpop.f32.mrb[0].mxu0
  %v4108 = vpop.f32.mrb[0].mxu0
  %v4109 = vadd.f32 0.0, %v4108
  %v4110 = vpop.f32.mrb[0].mxu0
  %4111 = vmatprep.mubr.bf16.mxu0 0
  %4112 = vmatmul.mubr.bf16.gmra.mrb[0].mxu0 %v3828
  %v4113 = vpop.f32.mrb[0].mxu0
  %v4114 = vadd.f32 0.0, %v4113
  %v4115 = vpop.f32.mrb[0].mxu0
  %v4116 = vpop.f32.mrb[0].mxu0
  %v4117 = vadd.f32 0.0, %v4116
  %v4118 = vpop.f32.mrb[0].mxu0
  %4119 = vmatprep.mubr.bf16.mxu0 0
  %4120 = vmatmul.mubr.bf16.gmra.mrb[0].mxu0 %v3829
  %v4121 = vpop.f32.mrb[0].mxu0
  %v4122 = vadd.f32 0.0, %v4121
  %v4123 = vpop.f32.mrb[0].mxu0
  %v4124 = vpop.f32.mrb[0].mxu0
  %v4125 = vadd.f32 0.0, %v4124
  %v4126 = vpop.f32.mrb[0].mxu0
  %4127 = vmatprep.mubr.bf16.mxu0 0
  %4128 = vmatmul.mubr.bf16.gmra.mrb[0].mxu0 %v3830
  %v4129 = vpop.f32.mrb[0].mxu0
  %v4130 = vadd.f32 0.0, %v4129
  %v4131 = vpop.f32.mrb[0].mxu0
  %v4132 = vpop.f32.mrb[0].mxu0
  %v4133 = vadd.f32 0.0, %v4132
  %v4134 = vpop.f32.mrb[0].mxu0
  %4135 = vmatprep.mubr.bf16.mxu0 0
  %4136 = vmatmul.mubr.bf16.gmra.mrb[0].mxu0 %v3831
  %v4137 = vpop.f32.mrb[0].mxu0
  %v4138 = vadd.f32 0.0, %v4137
  %v4139 = vpop.f32.mrb[0].mxu0
  %v4140 = vpop.f32.mrb[0].mxu0
  %v4141 = vadd.f32 0.0, %v4140
  %v4142 = vpop.f32.mrb[0].mxu0
  %4143 = vmatprep.mubr.bf16.mxu0 0
  %4144 = vmatmul.mubr.bf16.gmra.mrb[0].mxu0 %v3832
  %v4145 = vpop.f32.mrb[0].mxu0
  %v4146 = vadd.f32 0.0, %v4145
  %v4147 = vpop.f32.mrb[0].mxu0
  %v4148 = vpop.f32.mrb[0].mxu0
  %v4149 = vadd.f32 0.0, %v4148
  %v4150 = vpop.f32.mrb[0].mxu0
  %4151 = vmatprep.mubr.bf16.mxu0 0
  %4152 = vmatmul.mubr.bf16.gmra.mrb[0].mxu0 %v3833
  %v4153 = vpop.f32.mrb[0].mxu0
  %v4154 = vadd.f32 0.0, %v4153
  %v4155 = vpop.f32.mrb[0].mxu0
  %v4156 = vpop.f32.mrb[0].mxu0
  %v4157 = vadd.f32 0.0, %v4156
  %v4158 = vpop.f32.mrb[0].mxu0
  %4159 = vmatprep.mubr.bf16.mxu0 0
  %4160 = vmatmul.mubr.bf16.gmra.mrb[0].mxu0 %v3834
  %v4161 = vpop.f32.mrb[0].mxu0
  %v4162 = vadd.f32 0.0, %v4161
  %v4163 = vpop.f32.mrb[0].mxu0
  %v4164 = vpop.f32.mrb[0].mxu0
  %v4165 = vadd.f32 0.0, %v4164
  %v4166 = vpop.f32.mrb[0].mxu0
  %4167 = vmatprep.mubr.bf16.mxu0 0
  %4168 = vmatmul.mubr.bf16.gmra.mrb[0].mxu0 %v3835
  %v4169 = vpop.f32.mrb[0].mxu0
  %v4170 = vadd.f32 0.0, %v4169
  %v4171 = vpop.f32.mrb[0].mxu0
  %v4172 = vpop.f32.mrb[0].mxu0
  %v4173 = vadd.f32 0.0, %v4172
  %v4174 = vpop.f32.mrb[0].mxu0
  %4175 = vmatprep.mubr.bf16.mxu0 0
  %4176 = vmatmul.mubr.bf16.gmra.mrb[0].mxu0 %v3836
  %v4177 = vpop.f32.mrb[0].mxu0
  %v4178 = vadd.f32 0.0, %v4177
  %v4179 = vpop.f32.mrb[0].mxu0
  %v4180 = vpop.f32.mrb[0].mxu0
  %v4181 = vadd.f32 0.0, %v4180
  %v4182 = vpop.f32.mrb[0].mxu0
  %4183 = vmatprep.mubr.bf16.mxu0 0
  %4184 = vmatmul.mubr.bf16.gmra.mrb[0].mxu0 %v3837
  %v4185 = vpop.f32.mrb[0].mxu0
  %v4186 = vadd.f32 0.0, %v4185
  %v4187 = vpop.f32.mrb[0].mxu0
  %v4188 = vpop.f32.mrb[0].mxu0
  %v4189 = vadd.f32 0.0, %v4188
  %v4190 = vpop.f32.mrb[0].mxu0
  %4191 = vdwg.mxu0
  %v4208 = vunpack.c.l.b16 %v3726
  %v4209 = vunpack.c.l.b16 %v3727
  %v4210 = vunpack.c.l.b16 %v3728
  %v4211 = vunpack.c.l.b16 %v3729
  %v4212 = vunpack.c.l.b16 %v3730
  %v4213 = vunpack.c.l.b16 %v3731
  %v4214 = vunpack.c.l.b16 %v3732
  %v4215 = vunpack.c.l.b16 %v3733
  %v4216 = vunpack.c.l.b16 %v3734
  %v4217 = vunpack.c.l.b16 %v3735
  %v4218 = vunpack.c.l.b16 %v3736
  %v4219 = vunpack.c.l.b16 %v3737
  %v4220 = vunpack.c.l.b16 %v3738
  %v4221 = vunpack.c.l.b16 %v3739
  %v4222 = vunpack.c.l.b16 %v3740
  %v4223 = vunpack.c.l.b16 %v3741
  %v4224 = vpack.c.b16 %v4209, %v4208
  %v4225 = vpack.c.b16 %v4211, %v4210
  %v4226 = vpack.c.b16 %v4213, %v4212
  %v4227 = vpack.c.b16 %v4215, %v4214
  %v4228 = vpack.c.b16 %v4217, %v4216
  %v4229 = vpack.c.b16 %v4219, %v4218
  %v4230 = vpack.c.b16 %v4221, %v4220
  %v4231 = vpack.c.b16 %v4223, %v4222
  %4240 = vmatprep.subr.bf16.mxu0 0
  %4241 = vmatpush1.bf16.msra.mxu0 %v4224
  %4242 = vmatprep.subr.bf16.mxu0 0
  %4243 = vmatpush1.bf16.msra.mxu0 %v4225
  %4244 = vmatprep.subr.bf16.mxu0 0
  %4245 = vmatpush1.bf16.msra.mxu0 %v4226
  %4246 = vmatprep.subr.bf16.mxu0 0
  %4247 = vmatpush1.bf16.msra.mxu0 %v4227
  %4248 = vmatprep.subr.bf16.mxu0 0
  %4249 = vmatpush1.bf16.msra.mxu0 %v4228
  %4250 = vmatprep.subr.bf16.mxu0 0
  %4251 = vmatpush1.bf16.msra.mxu0 %v4229
  %4252 = vmatprep.subr.bf16.mxu0 0
  %4253 = vmatpush1.bf16.msra.mxu0 %v4230
  %4254 = vmatprep.subr.bf16.mxu0 0
  %4255 = vmatpush1.bf16.msra.mxu0 %v4231
  %4256 = vmatprep.subr.bf16.mxu0 0
  %4257 = vmatpush1.bf16.msra.mxu0 0
  %4258 = vmatprep.subr.bf16.mxu0 0
  %4259 = vmatpush1.bf16.msra.mxu0 0
  %4260 = vmatprep.subr.bf16.mxu0 0
  %4261 = vmatpush1.bf16.msra.mxu0 0
  %4262 = vmatprep.subr.bf16.mxu0 0
  %4263 = vmatpush1.bf16.msra.mxu0 0
  %4264 = vmatprep.subr.bf16.mxu0 0
  %4265 = vmatpush1.bf16.msra.mxu0 0
  %4266 = vmatprep.subr.bf16.mxu0 0
  %4267 = vmatpush1.bf16.msra.mxu0 0
  %4268 = vmatprep.subr.bf16.mxu0 0
  %4269 = vmatpush1.bf16.msra.mxu0 0
  %4270 = vmatprep.subr.bf16.mxu0 0
  %4271 = vmatpush1.bf16.msra.mxu0 0
  %4272 = vmatprep.mubr.bf16.mxu0 0
  %4273 = vmatmul.mubr.bf16.gmra.mrb[0].mxu0 %v3694
  %v4274 = vpop.f32.mrb[0].mxu0
  %v4275 = vadd.f32 %v3938, %v4274
  %v4276 = vpop.f32.mrb[0].mxu0
  %v4277 = vpop.f32.mrb[0].mxu0
  %v4278 = vadd.f32 %v3941, %v4277
  %v4279 = vpop.f32.mrb[0].mxu0
  %4280 = vmatprep.mubr.bf16.mxu0 0
  %4281 = vmatmul.mubr.bf16.gmra.mrb[0].mxu0 %v3695
  %v4282 = vpop.f32.mrb[0].mxu0
  %v4283 = vadd.f32 %v3946, %v4282
  %v4284 = vpop.f32.mrb[0].mxu0
  %v4285 = vpop.f32.mrb[0].mxu0
  %v4286 = vadd.f32 %v3949, %v4285
  %v4287 = vpop.f32.mrb[0].mxu0
  %4288 = vmatprep.mubr.bf16.mxu0 0
  %4289 = vmatmul.mubr.bf16.gmra.mrb[0].mxu0 %v3696
  %v4290 = vpop.f32.mrb[0].mxu0
  %v4291 = vadd.f32 %v3954, %v4290
  %v4292 = vpop.f32.mrb[0].mxu0
  %v4293 = vpop.f32.mrb[0].mxu0
  %v4294 = vadd.f32 %v3957, %v4293
  %v4295 = vpop.f32.mrb[0].mxu0
  %4296 = vmatprep.mubr.bf16.mxu0 0
  %4297 = vmatmul.mubr.bf16.gmra.mrb[0].mxu0 %v3697
  %v4298 = vpop.f32.mrb[0].mxu0
  %v4299 = vadd.f32 %v3962, %v4298
  %v4300 = vpop.f32.mrb[0].mxu0
  %v4301 = vpop.f32.mrb[0].mxu0
  %v4302 = vadd.f32 %v3965, %v4301
  %v4303 = vpop.f32.mrb[0].mxu0
  %4304 = vmatprep.mubr.bf16.mxu0 0
  %4305 = vmatmul.mubr.bf16.gmra.mrb[0].mxu0 %v3698
  %v4306 = vpop.f32.mrb[0].mxu0
  %v4307 = vadd.f32 %v3970, %v4306
  %v4308 = vpop.f32.mrb[0].mxu0
  %v4309 = vpop.f32.mrb[0].mxu0
  %v4310 = vadd.f32 %v3973, %v4309
  %v4311 = vpop.f32.mrb[0].mxu0
  %4312 = vmatprep.mubr.bf16.mxu0 0
  %4313 = vmatmul.mubr.bf16.gmra.mrb[0].mxu0 %v3699
  %v4314 = vpop.f32.mrb[0].mxu0
  %v4315 = vadd.f32 %v3978, %v4314
  %v4316 = vpop.f32.mrb[0].mxu0
  %v4317 = vpop.f32.mrb[0].mxu0
  %v4318 = vadd.f32 %v3981, %v4317
  %v4319 = vpop.f32.mrb[0].mxu0
  %4320 = vmatprep.mubr.bf16.mxu0 0
  %4321 = vmatmul.mubr.bf16.gmra.mrb[0].mxu0 %v3700
  %v4322 = vpop.f32.mrb[0].mxu0
  %v4323 = vadd.f32 %v3986, %v4322
  %v4324 = vpop.f32.mrb[0].mxu0
  %v4325 = vpop.f32.mrb[0].mxu0
  %v4326 = vadd.f32 %v3989, %v4325
  %v4327 = vpop.f32.mrb[0].mxu0
  %4328 = vmatprep.mubr.bf16.mxu0 0
  %4329 = vmatmul.mubr.bf16.gmra.mrb[0].mxu0 %v3701
  %v4330 = vpop.f32.mrb[0].mxu0
  %v4331 = vadd.f32 %v3994, %v4330
  %v4332 = vpop.f32.mrb[0].mxu0
  %v4333 = vpop.f32.mrb[0].mxu0
  %v4334 = vadd.f32 %v3997, %v4333
  %v4335 = vpop.f32.mrb[0].mxu0
  %4336 = vmatprep.mubr.bf16.mxu0 0
  %4337 = vmatmul.mubr.bf16.gmra.mrb[0].mxu0 %v3702
  %v4338 = vpop.f32.mrb[0].mxu0
  %v4339 = vadd.f32 %v4002, %v4338
  %v4340 = vpop.f32.mrb[0].mxu0
  %v4341 = vpop.f32.mrb[0].mxu0
  %v4342 = vadd.f32 %v4005, %v4341
  %v4343 = vpop.f32.mrb[0].mxu0
  %4344 = vmatprep.mubr.bf16.mxu0 0
  %4345 = vmatmul.mubr.bf16.gmra.mrb[0].mxu0 %v3703
  %v4346 = vpop.f32.mrb[0].mxu0
  %v4347 = vadd.f32 %v4010, %v4346
  %v4348 = vpop.f32.mrb[0].mxu0
  %v4349 = vpop.f32.mrb[0].mxu0
  %v4350 = vadd.f32 %v4013, %v4349
  %v4351 = vpop.f32.mrb[0].mxu0
  %4352 = vmatprep.mubr.bf16.mxu0 0
  %4353 = vmatmul.mubr.bf16.gmra.mrb[0].mxu0 %v3704
  %v4354 = vpop.f32.mrb[0].mxu0
  %v4355 = vadd.f32 %v4018, %v4354
  %v4356 = vpop.f32.mrb[0].mxu0
  %v4357 = vpop.f32.mrb[0].mxu0
  %v4358 = vadd.f32 %v4021, %v4357
  %v4359 = vpop.f32.mrb[0].mxu0
  %4360 = vmatprep.mubr.bf16.mxu0 0
  %4361 = vmatmul.mubr.bf16.gmra.mrb[0].mxu0 %v3705
  %v4362 = vpop.f32.mrb[0].mxu0
  %v4363 = vadd.f32 %v4026, %v4362
  %v4364 = vpop.f32.mrb[0].mxu0
  %v4365 = vpop.f32.mrb[0].mxu0
  %v4366 = vadd.f32 %v4029, %v4365
  %v4367 = vpop.f32.mrb[0].mxu0
  %4368 = vmatprep.mubr.bf16.mxu0 0
  %4369 = vmatmul.mubr.bf16.gmra.mrb[0].mxu0 %v3706
  %v4370 = vpop.f32.mrb[0].mxu0
  %v4371 = vadd.f32 %v4034, %v4370
  %v4372 = vpop.f32.mrb[0].mxu0
  %v4373 = vpop.f32.mrb[0].mxu0
  %v4374 = vadd.f32 %v4037, %v4373
  %v4375 = vpop.f32.mrb[0].mxu0
  %4376 = vmatprep.mubr.bf16.mxu0 0
  %4377 = vmatmul.mubr.bf16.gmra.mrb[0].mxu0 %v3707
  %v4378 = vpop.f32.mrb[0].mxu0
  %v4379 = vadd.f32 %v4042, %v4378
  %v4380 = vpop.f32.mrb[0].mxu0
  %v4381 = vpop.f32.mrb[0].mxu0
  %v4382 = vadd.f32 %v4045, %v4381
  %v4383 = vpop.f32.mrb[0].mxu0
  %4384 = vmatprep.mubr.bf16.mxu0 0
  %4385 = vmatmul.mubr.bf16.gmra.mrb[0].mxu0 %v3708
  %v4386 = vpop.f32.mrb[0].mxu0
  %v4387 = vadd.f32 %v4050, %v4386
  %v4388 = vpop.f32.mrb[0].mxu0
  %v4389 = vpop.f32.mrb[0].mxu0
  %v4390 = vadd.f32 %v4053, %v4389
  %v4391 = vpop.f32.mrb[0].mxu0
  %4392 = vmatprep.mubr.bf16.mxu0 0
  %4393 = vmatmul.mubr.bf16.gmra.mrb[0].mxu0 %v3709
  %v4394 = vpop.f32.mrb[0].mxu0
  %v4395 = vadd.f32 %v4058, %v4394
  %v4396 = vpop.f32.mrb[0].mxu0
  %v4397 = vpop.f32.mrb[0].mxu0
  %v4398 = vadd.f32 %v4061, %v4397
  %v4399 = vpop.f32.mrb[0].mxu0
  %4400 = vmatprep.mubr.bf16.mxu0 0
  %4401 = vmatmul.mubr.bf16.gmra.mrb[0].mxu0 %v3710
  %v4402 = vpop.f32.mrb[0].mxu0
  %v4403 = vadd.f32 %v4066, %v4402
  %v4404 = vpop.f32.mrb[0].mxu0
  %v4405 = vpop.f32.mrb[0].mxu0
  %v4406 = vadd.f32 %v4069, %v4405
  %v4407 = vpop.f32.mrb[0].mxu0
  %4408 = vmatprep.mubr.bf16.mxu0 0
  %4409 = vmatmul.mubr.bf16.gmra.mrb[0].mxu0 %v3711
  %v4410 = vpop.f32.mrb[0].mxu0
  %v4411 = vadd.f32 %v4074, %v4410
  %v4412 = vpop.f32.mrb[0].mxu0
  %v4413 = vpop.f32.mrb[0].mxu0
  %v4414 = vadd.f32 %v4077, %v4413
  %v4415 = vpop.f32.mrb[0].mxu0
  %4416 = vmatprep.mubr.bf16.mxu0 0
  %4417 = vmatmul.mubr.bf16.gmra.mrb[0].mxu0 %v3712
  %v4418 = vpop.f32.mrb[0].mxu0
  %v4419 = vadd.f32 %v4082, %v4418
  %v4420 = vpop.f32.mrb[0].mxu0
  %v4421 = vpop.f32.mrb[0].mxu0
  %v4422 = vadd.f32 %v4085, %v4421
  %v4423 = vpop.f32.mrb[0].mxu0
  %4424 = vmatprep.mubr.bf16.mxu0 0
  %4425 = vmatmul.mubr.bf16.gmra.mrb[0].mxu0 %v3713
  %v4426 = vpop.f32.mrb[0].mxu0
  %v4427 = vadd.f32 %v4090, %v4426
  %v4428 = vpop.f32.mrb[0].mxu0
  %v4429 = vpop.f32.mrb[0].mxu0
  %v4430 = vadd.f32 %v4093, %v4429
  %v4431 = vpop.f32.mrb[0].mxu0
  %4432 = vmatprep.mubr.bf16.mxu0 0
  %4433 = vmatmul.mubr.bf16.gmra.mrb[0].mxu0 %v3714
  %v4434 = vpop.f32.mrb[0].mxu0
  %v4435 = vadd.f32 %v4098, %v4434
  %v4436 = vpop.f32.mrb[0].mxu0
  %v4437 = vpop.f32.mrb[0].mxu0
  %v4438 = vadd.f32 %v4101, %v4437
  %v4439 = vpop.f32.mrb[0].mxu0
  %4440 = vmatprep.mubr.bf16.mxu0 0
  %4441 = vmatmul.mubr.bf16.gmra.mrb[0].mxu0 %v3715
  %v4442 = vpop.f32.mrb[0].mxu0
  %v4443 = vadd.f32 %v4106, %v4442
  %v4444 = vpop.f32.mrb[0].mxu0
  %v4445 = vpop.f32.mrb[0].mxu0
  %v4446 = vadd.f32 %v4109, %v4445
  %v4447 = vpop.f32.mrb[0].mxu0
  %4448 = vmatprep.mubr.bf16.mxu0 0
  %4449 = vmatmul.mubr.bf16.gmra.mrb[0].mxu0 %v3716
  %v4450 = vpop.f32.mrb[0].mxu0
  %v4451 = vadd.f32 %v4114, %v4450
  %v4452 = vpop.f32.mrb[0].mxu0
  %v4453 = vpop.f32.mrb[0].mxu0
  %v4454 = vadd.f32 %v4117, %v4453
  %v4455 = vpop.f32.mrb[0].mxu0
  %4456 = vmatprep.mubr.bf16.mxu0 0
  %4457 = vmatmul.mubr.bf16.gmra.mrb[0].mxu0 %v3717
  %v4458 = vpop.f32.mrb[0].mxu0
  %v4459 = vadd.f32 %v4122, %v4458
  %v4460 = vpop.f32.mrb[0].mxu0
  %v4461 = vpop.f32.mrb[0].mxu0
  %v4462 = vadd.f32 %v4125, %v4461
  %v4463 = vpop.f32.mrb[0].mxu0
  %4464 = vmatprep.mubr.bf16.mxu0 0
  %4465 = vmatmul.mubr.bf16.gmra.mrb[0].mxu0 %v3718
  %v4466 = vpop.f32.mrb[0].mxu0
  %v4467 = vadd.f32 %v4130, %v4466
  %v4468 = vpop.f32.mrb[0].mxu0
  %v4469 = vpop.f32.mrb[0].mxu0
  %v4470 = vadd.f32 %v4133, %v4469
  %v4471 = vpop.f32.mrb[0].mxu0
  %4472 = vmatprep.mubr.bf16.mxu0 0
  %4473 = vmatmul.mubr.bf16.gmra.mrb[0].mxu0 %v3719
  %v4474 = vpop.f32.mrb[0].mxu0
  %v4475 = vadd.f32 %v4138, %v4474
  %v4476 = vpop.f32.mrb[0].mxu0
  %v4477 = vpop.f32.mrb[0].mxu0
  %v4478 = vadd.f32 %v4141, %v4477
  %v4479 = vpop.f32.mrb[0].mxu0
  %4480 = vmatprep.mubr.bf16.mxu0 0
  %4481 = vmatmul.mubr.bf16.gmra.mrb[0].mxu0 %v3720
  %v4482 = vpop.f32.mrb[0].mxu0
  %v4483 = vadd.f32 %v4146, %v4482
  %v4484 = vpop.f32.mrb[0].mxu0
  %v4485 = vpop.f32.mrb[0].mxu0
  %v4486 = vadd.f32 %v4149, %v4485
  %v4487 = vpop.f32.mrb[0].mxu0
  %4488 = vmatprep.mubr.bf16.mxu0 0
  %4489 = vmatmul.mubr.bf16.gmra.mrb[0].mxu0 %v3721
  %v4490 = vpop.f32.mrb[0].mxu0
  %v4491 = vadd.f32 %v4154, %v4490
  %v4492 = vpop.f32.mrb[0].mxu0
  %v4493 = vpop.f32.mrb[0].mxu0
  %v4494 = vadd.f32 %v4157, %v4493
  %v4495 = vpop.f32.mrb[0].mxu0
  %4496 = vmatprep.mubr.bf16.mxu0 0
  %4497 = vmatmul.mubr.bf16.gmra.mrb[0].mxu0 %v3722
  %v4498 = vpop.f32.mrb[0].mxu0
  %v4499 = vadd.f32 %v4162, %v4498
  %v4500 = vpop.f32.mrb[0].mxu0
  %v4501 = vpop.f32.mrb[0].mxu0
  %v4502 = vadd.f32 %v4165, %v4501
  %v4503 = vpop.f32.mrb[0].mxu0
  %4504 = vmatprep.mubr.bf16.mxu0 0
  %4505 = vmatmul.mubr.bf16.gmra.mrb[0].mxu0 %v3723
  %v4506 = vpop.f32.mrb[0].mxu0
  %v4507 = vadd.f32 %v4170, %v4506
  %v4508 = vpop.f32.mrb[0].mxu0
  %v4509 = vpop.f32.mrb[0].mxu0
  %v4510 = vadd.f32 %v4173, %v4509
  %v4511 = vpop.f32.mrb[0].mxu0
  %4512 = vmatprep.mubr.bf16.mxu0 0
  %4513 = vmatmul.mubr.bf16.gmra.mrb[0].mxu0 %v3724
  %v4514 = vpop.f32.mrb[0].mxu0
  %v4515 = vadd.f32 %v4178, %v4514
  %v4516 = vpop.f32.mrb[0].mxu0
  %v4517 = vpop.f32.mrb[0].mxu0
  %v4518 = vadd.f32 %v4181, %v4517
  %v4519 = vpop.f32.mrb[0].mxu0
  %4520 = vmatprep.mubr.bf16.mxu0 0
  %4521 = vmatmul.mubr.bf16.gmra.mrb[0].mxu0 %v3725
  %v4522 = vpop.f32.mrb[0].mxu0
  %v4523 = vadd.f32 %v4186, %v4522
  %v4524 = vpop.f32.mrb[0].mxu0
  %v4525 = vpop.f32.mrb[0].mxu0
  %v4526 = vadd.f32 %v4189, %v4525
  %v4527 = vpop.f32.mrb[0].mxu0
  %4528 = vdwg.mxu0
  %v4529 = vld [vmem:[#allocation2 + $0x2] sm:$0xff]
  %v4530 = vld [vmem:[#allocation2 + $0xa] sm:$0xff]
  %v4531 = vld [vmem:[#allocation2 + $0x1a] sm:$0xff]
  %v4532 = vld [vmem:[#allocation2 + $0x22] sm:$0xff]
  %v4533 = vld [vmem:[#allocation2 + $0x32] sm:$0xff]
  %v4534 = vld [vmem:[#allocation2 + $0x3a] sm:$0xff]
  %v4535 = vld [vmem:[#allocation2 + $0x4a] sm:$0xff]
  %v4536 = vld [vmem:[#allocation2 + $0x52] sm:$0xff]
  %v4537 = vld [vmem:[#allocation2 + $0x62] sm:$0xff]
  %v4538 = vld [vmem:[#allocation2 + $0x6a] sm:$0xff]
  %v4539 = vld [vmem:[#allocation2 + $0x7a] sm:$0xff]
  %v4540 = vld [vmem:[#allocation2 + $0x82] sm:$0xff]
  %v4541 = vld [vmem:[#allocation2 + $0x92] sm:$0xff]
  %v4542 = vld [vmem:[#allocation2 + $0x9a] sm:$0xff]
  %v4543 = vld [vmem:[#allocation2 + $0xaa] sm:$0xff]
  %v4544 = vld [vmem:[#allocation2 + $0xb2] sm:$0xff]
  %v4545 = vld [vmem:[#allocation2 + $0xc2] sm:$0xff]
  %v4546 = vld [vmem:[#allocation2 + $0xca] sm:$0xff]
  %v4547 = vld [vmem:[#allocation2 + $0xda] sm:$0xff]
  %v4548 = vld [vmem:[#allocation2 + $0xe2] sm:$0xff]
  %v4549 = vld [vmem:[#allocation2 + $0xf2] sm:$0xff]
  %v4550 = vld [vmem:[#allocation2 + $0xfa] sm:$0xff]
  %v4551 = vld [vmem:[#allocation2 + $0x10a] sm:$0xff]
  %v4552 = vld [vmem:[#allocation2 + $0x112] sm:$0xff]
  %v4553 = vld [vmem:[#allocation2 + $0x122] sm:$0xff]
  %v4554 = vld [vmem:[#allocation2 + $0x12a] sm:$0xff]
  %v4555 = vld [vmem:[#allocation2 + $0x13a] sm:$0xff]
  %v4556 = vld [vmem:[#allocation2 + $0x142] sm:$0xff]
  %v4557 = vld [vmem:[#allocation2 + $0x152] sm:$0xff]
  %v4558 = vld [vmem:[#allocation2 + $0x15a] sm:$0xff]
  %v4559 = vld [vmem:[#allocation2 + $0x16a] sm:$0xff]
  %v4560 = vld [vmem:[#allocation2 + $0x172] sm:$0xff]
  %v4561 = vld [vmem:[#allocation2 + $0x1b2] sm:$0xff]
  %v4562 = vld [vmem:[#allocation2 + $0x1ba] sm:$0xff]
  %v4563 = vld [vmem:[#allocation2 + $0x1ca] sm:$0xff]
  %v4564 = vld [vmem:[#allocation2 + $0x1d2] sm:$0xff]
  %v4565 = vld [vmem:[#allocation2 + $0x1e2] sm:$0xff]
  %v4566 = vld [vmem:[#allocation2 + $0x1ea] sm:$0xff]
  %v4567 = vld [vmem:[#allocation2 + $0x1fa] sm:$0xff]
  %v4568 = vld [vmem:[#allocation2 + $0x202] sm:$0xff]
  %v4569 = vld [vmem:[#allocation2 + $0x212] sm:$0xff]
  %v4570 = vld [vmem:[#allocation2 + $0x21a] sm:$0xff]
  %v4571 = vld [vmem:[#allocation2 + $0x22a] sm:$0xff]
  %v4572 = vld [vmem:[#allocation2 + $0x232] sm:$0xff]
  %v4573 = vld [vmem:[#allocation2 + $0x242] sm:$0xff]
  %v4574 = vld [vmem:[#allocation2 + $0x24a] sm:$0xff]
  %v4575 = vld [vmem:[#allocation2 + $0x25a] sm:$0xff]
  %v4576 = vld [vmem:[#allocation2 + $0x262] sm:$0xff]
  %v4577 = vld [vmem:[#allocation2 + $0x272] sm:$0xff]
  %v4578 = vld [vmem:[#allocation2 + $0x27a] sm:$0xff]
  %v4579 = vld [vmem:[#allocation2 + $0x28a] sm:$0xff]
  %v4580 = vld [vmem:[#allocation2 + $0x292] sm:$0xff]
  %v4581 = vld [vmem:[#allocation2 + $0x2a2] sm:$0xff]
  %v4582 = vld [vmem:[#allocation2 + $0x2aa] sm:$0xff]
  %v4583 = vld [vmem:[#allocation2 + $0x2ba] sm:$0xff]
  %v4584 = vld [vmem:[#allocation2 + $0x2c2] sm:$0xff]
  %v4585 = vld [vmem:[#allocation2 + $0x2d2] sm:$0xff]
  %v4586 = vld [vmem:[#allocation2 + $0x2da] sm:$0xff]
  %v4587 = vld [vmem:[#allocation2 + $0x2ea] sm:$0xff]
  %v4588 = vld [vmem:[#allocation2 + $0x2f2] sm:$0xff]
  %v4589 = vld [vmem:[#allocation2 + $0x302] sm:$0xff]
  %v4590 = vld [vmem:[#allocation2 + $0x30a] sm:$0xff]
  %v4591 = vld [vmem:[#allocation2 + $0x31a] sm:$0xff]
  %v4592 = vld [vmem:[#allocation2 + $0x322] sm:$0xff]
  %v4593 = vpack.c.bf16 %v4530, %v4529
  %v4594 = vpack.c.bf16 %v4532, %v4531
  %v4595 = vpack.c.bf16 %v4534, %v4533
  %v4596 = vpack.c.bf16 %v4536, %v4535
  %v4597 = vpack.c.bf16 %v4538, %v4537
  %v4598 = vpack.c.bf16 %v4540, %v4539
  %v4599 = vpack.c.bf16 %v4542, %v4541
  %v4600 = vpack.c.bf16 %v4544, %v4543
  %v4601 = vpack.c.bf16 %v4546, %v4545
  %v4602 = vpack.c.bf16 %v4548, %v4547
  %v4603 = vpack.c.bf16 %v4550, %v4549
  %v4604 = vpack.c.bf16 %v4552, %v4551
  %v4605 = vpack.c.bf16 %v4554, %v4553
  %v4606 = vpack.c.bf16 %v4556, %v4555
  %v4607 = vpack.c.bf16 %v4558, %v4557
  %v4608 = vpack.c.bf16 %v4560, %v4559
  %v4609 = vpack.c.bf16 %v4562, %v4561
  %v4610 = vpack.c.bf16 %v4564, %v4563
  %v4611 = vpack.c.bf16 %v4566, %v4565
  %v4612 = vpack.c.bf16 %v4568, %v4567
  %v4613 = vpack.c.bf16 %v4570, %v4569
  %v4614 = vpack.c.bf16 %v4572, %v4571
  %v4615 = vpack.c.bf16 %v4574, %v4573
  %v4616 = vpack.c.bf16 %v4576, %v4575
  %v4617 = vpack.c.bf16 %v4578, %v4577
  %v4618 = vpack.c.bf16 %v4580, %v4579
  %v4619 = vpack.c.bf16 %v4582, %v4581
  %v4620 = vpack.c.bf16 %v4584, %v4583
  %v4621 = vpack.c.bf16 %v4586, %v4585
  %v4622 = vpack.c.bf16 %v4588, %v4587
  %v4623 = vpack.c.bf16 %v4590, %v4589
  %v4624 = vpack.c.bf16 %v4592, %v4591
  %s4625 = scalar_lea.vmem %s3, 128
  %v4626 = vld [vmem:[%s4625] sm:$0xf]
  %v4627 = vld [vmem:[%s4625 + $0x4] sm:$0xf]
  %v4628 = vld [vmem:[%s4625 + $0x8] sm:$0xf]
  %v4629 = vld [vmem:[%s4625 + $0xc] sm:$0xf]
  %v4630 = vld [vmem:[%s4625 + $0x10] sm:$0xf]
  %v4631 = vld [vmem:[%s4625 + $0x14] sm:$0xf]
  %v4632 = vld [vmem:[%s4625 + $0x18] sm:$0xf]
  %v4633 = vld [vmem:[%s4625 + $0x1c] sm:$0xf]
  %v4634 = vld [vmem:[%s4625 + $0x20] sm:$0xf]
  %v4635 = vld [vmem:[%s4625 + $0x24] sm:$0xf]
  %v4636 = vld [vmem:[%s4625 + $0x28] sm:$0xf]
  %v4637 = vld [vmem:[%s4625 + $0x2c] sm:$0xf]
  %v4638 = vld [vmem:[%s4625 + $0x30] sm:$0xf]
  %v4639 = vld [vmem:[%s4625 + $0x34] sm:$0xf]
  %v4640 = vld [vmem:[%s4625 + $0x38] sm:$0xf]
  %v4641 = vld [vmem:[%s4625 + $0x3c] sm:$0xf]
  %v4658 = vunpack.c.l.b16 %v4626
  %v4659 = vunpack.c.l.b16 %v4627
  %v4660 = vunpack.c.l.b16 %v4628
  %v4661 = vunpack.c.l.b16 %v4629
  %v4662 = vunpack.c.l.b16 %v4630
  %v4663 = vunpack.c.l.b16 %v4631
  %v4664 = vunpack.c.l.b16 %v4632
  %v4665 = vunpack.c.l.b16 %v4633
  %v4666 = vunpack.c.l.b16 %v4634
  %v4667 = vunpack.c.l.b16 %v4635
  %v4668 = vunpack.c.l.b16 %v4636
  %v4669 = vunpack.c.l.b16 %v4637
  %v4670 = vunpack.c.l.b16 %v4638
  %v4671 = vunpack.c.l.b16 %v4639
  %v4672 = vunpack.c.l.b16 %v4640
  %v4673 = vunpack.c.l.b16 %v4641
  %v4674 = vpack.c.b16 %v4659, %v4658
  %v4675 = vpack.c.b16 %v4661, %v4660
  %v4676 = vpack.c.b16 %v4663, %v4662
  %v4677 = vpack.c.b16 %v4665, %v4664
  %v4678 = vpack.c.b16 %v4667, %v4666
  %v4679 = vpack.c.b16 %v4669, %v4668
  %v4680 = vpack.c.b16 %v4671, %v4670
  %v4681 = vpack.c.b16 %v4673, %v4672
  %4690 = vmatprep.subr.bf16.mxu0 0
  %4691 = vmatpush1.bf16.msra.mxu0 %v4674
  %4692 = vmatprep.subr.bf16.mxu0 0
  %4693 = vmatpush1.bf16.msra.mxu0 %v4675
  %4694 = vmatprep.subr.bf16.mxu0 0
  %4695 = vmatpush1.bf16.msra.mxu0 %v4676
  %4696 = vmatprep.subr.bf16.mxu0 0
  %4697 = vmatpush1.bf16.msra.mxu0 %v4677
  %4698 = vmatprep.subr.bf16.mxu0 0
  %4699 = vmatpush1.bf16.msra.mxu0 %v4678
  %4700 = vmatprep.subr.bf16.mxu0 0
  %4701 = vmatpush1.bf16.msra.mxu0 %v4679
  %4702 = vmatprep.subr.bf16.mxu0 0
  %4703 = vmatpush1.bf16.msra.mxu0 %v4680
  %4704 = vmatprep.subr.bf16.mxu0 0
  %4705 = vmatpush1.bf16.msra.mxu0 %v4681
  %4706 = vmatprep.subr.bf16.mxu0 0
  %4707 = vmatpush1.bf16.msra.mxu0 0
  %4708 = vmatprep.subr.bf16.mxu0 0
  %4709 = vmatpush1.bf16.msra.mxu0 0
  %4710 = vmatprep.subr.bf16.mxu0 0
  %4711 = vmatpush1.bf16.msra.mxu0 0
  %4712 = vmatprep.subr.bf16.mxu0 0
  %4713 = vmatpush1.bf16.msra.mxu0 0
  %4714 = vmatprep.subr.bf16.mxu0 0
  %4715 = vmatpush1.bf16.msra.mxu0 0
  %4716 = vmatprep.subr.bf16.mxu0 0
  %4717 = vmatpush1.bf16.msra.mxu0 0
  %4718 = vmatprep.subr.bf16.mxu0 0
  %4719 = vmatpush1.bf16.msra.mxu0 0
  %4720 = vmatprep.subr.bf16.mxu0 0
  %4721 = vmatpush1.bf16.msra.mxu0 0
  %4722 = vmatprep.mubr.bf16.mxu0 0
  %4723 = vmatmul.mubr.bf16.gmra.mrb[0].mxu0 %v4593
  %v4724 = vpop.f32.mrb[0].mxu0
  %v4725 = vadd.f32 0.0, %v4724
  %v4726 = vpop.f32.mrb[0].mxu0
  %v4727 = vpop.f32.mrb[0].mxu0
  %v4728 = vadd.f32 0.0, %v4727
  %v4729 = vpop.f32.mrb[0].mxu0
  %4730 = vmatprep.mubr.bf16.mxu0 0
  %4731 = vmatmul.mubr.bf16.gmra.mrb[0].mxu0 %v4594
  %v4732 = vpop.f32.mrb[0].mxu0
  %v4733 = vadd.f32 0.0, %v4732
  %v4734 = vpop.f32.mrb[0].mxu0
  %v4735 = vpop.f32.mrb[0].mxu0
  %v4736 = vadd.f32 0.0, %v4735
  %v4737 = vpop.f32.mrb[0].mxu0
  %4738 = vmatprep.mubr.bf16.mxu0 0
  %4739 = vmatmul.mubr.bf16.gmra.mrb[0].mxu0 %v4595
  %v4740 = vpop.f32.mrb[0].mxu0
  %v4741 = vadd.f32 0.0, %v4740
  %v4742 = vpop.f32.mrb[0].mxu0
  %v4743 = vpop.f32.mrb[0].mxu0
  %v4744 = vadd.f32 0.0, %v4743
  %v4745 = vpop.f32.mrb[0].mxu0
  %4746 = vmatprep.mubr.bf16.mxu0 0
  %4747 = vmatmul.mubr.bf16.gmra.mrb[0].mxu0 %v4596
  %v4748 = vpop.f32.mrb[0].mxu0
  %v4749 = vadd.f32 0.0, %v4748
  %v4750 = vpop.f32.mrb[0].mxu0
  %v4751 = vpop.f32.mrb[0].mxu0
  %v4752 = vadd.f32 0.0, %v4751
  %v4753 = vpop.f32.mrb[0].mxu0
  %4754 = vmatprep.mubr.bf16.mxu0 0
  %4755 = vmatmul.mubr.bf16.gmra.mrb[0].mxu0 %v4597
  %v4756 = vpop.f32.mrb[0].mxu0
  %v4757 = vadd.f32 0.0, %v4756
  %v4758 = vpop.f32.mrb[0].mxu0
  %v4759 = vpop.f32.mrb[0].mxu0
  %v4760 = vadd.f32 0.0, %v4759
  %v4761 = vpop.f32.mrb[0].mxu0
  %4762 = vmatprep.mubr.bf16.mxu0 0
  %4763 = vmatmul.mubr.bf16.gmra.mrb[0].mxu0 %v4598
  %v4764 = vpop.f32.mrb[0].mxu0
  %v4765 = vadd.f32 0.0, %v4764
  %v4766 = vpop.f32.mrb[0].mxu0
  %v4767 = vpop.f32.mrb[0].mxu0
  %v4768 = vadd.f32 0.0, %v4767
  %v4769 = vpop.f32.mrb[0].mxu0
  %4770 = vmatprep.mubr.bf16.mxu0 0
  %4771 = vmatmul.mubr.bf16.gmra.mrb[0].mxu0 %v4599
  %v4772 = vpop.f32.mrb[0].mxu0
  %v4773 = vadd.f32 0.0, %v4772
  %v4774 = vpop.f32.mrb[0].mxu0
  %v4775 = vpop.f32.mrb[0].mxu0
  %v4776 = vadd.f32 0.0, %v4775
  %v4777 = vpop.f32.mrb[0].mxu0
  %4778 = vmatprep.mubr.bf16.mxu0 0
  %4779 = vmatmul.mubr.bf16.gmra.mrb[0].mxu0 %v4600
  %v4780 = vpop.f32.mrb[0].mxu0
  %v4781 = vadd.f32 0.0, %v4780
  %v4782 = vpop.f32.mrb[0].mxu0
  %v4783 = vpop.f32.mrb[0].mxu0
  %v4784 = vadd.f32 0.0, %v4783
  %v4785 = vpop.f32.mrb[0].mxu0
  %4786 = vmatprep.mubr.bf16.mxu0 0
  %4787 = vmatmul.mubr.bf16.gmra.mrb[0].mxu0 %v4601
  %v4788 = vpop.f32.mrb[0].mxu0
  %v4789 = vadd.f32 0.0, %v4788
  %v4790 = vpop.f32.mrb[0].mxu0
  %v4791 = vpop.f32.mrb[0].mxu0
  %v4792 = vadd.f32 0.0, %v4791
  %v4793 = vpop.f32.mrb[0].mxu0
  %4794 = vmatprep.mubr.bf16.mxu0 0
  %4795 = vmatmul.mubr.bf16.gmra.mrb[0].mxu0 %v4602
  %v4796 = vpop.f32.mrb[0].mxu0
  %v4797 = vadd.f32 0.0, %v4796
  %v4798 = vpop.f32.mrb[0].mxu0
  %v4799 = vpop.f32.mrb[0].mxu0
  %v4800 = vadd.f32 0.0, %v4799
  %v4801 = vpop.f32.mrb[0].mxu0
  %4802 = vmatprep.mubr.bf16.mxu0 0
  %4803 = vmatmul.mubr.bf16.gmra.mrb[0].mxu0 %v4603
  %v4804 = vpop.f32.mrb[0].mxu0
  %v4805 = vadd.f32 0.0, %v4804
  %v4806 = vpop.f32.mrb[0].mxu0
  %v4807 = vpop.f32.mrb[0].mxu0
  %v4808 = vadd.f32 0.0, %v4807
  %v4809 = vpop.f32.mrb[0].mxu0
  %4810 = vmatprep.mubr.bf16.mxu0 0
  %4811 = vmatmul.mubr.bf16.gmra.mrb[0].mxu0 %v4604
  %v4812 = vpop.f32.mrb[0].mxu0
  %v4813 = vadd.f32 0.0, %v4812
  %v4814 = vpop.f32.mrb[0].mxu0
  %v4815 = vpop.f32.mrb[0].mxu0
  %v4816 = vadd.f32 0.0, %v4815
  %v4817 = vpop.f32.mrb[0].mxu0
  %4818 = vmatprep.mubr.bf16.mxu0 0
  %4819 = vmatmul.mubr.bf16.gmra.mrb[0].mxu0 %v4605
  %v4820 = vpop.f32.mrb[0].mxu0
  %v4821 = vadd.f32 0.0, %v4820
  %v4822 = vpop.f32.mrb[0].mxu0
  %v4823 = vpop.f32.mrb[0].mxu0
  %v4824 = vadd.f32 0.0, %v4823
  %v4825 = vpop.f32.mrb[0].mxu0
  %4826 = vmatprep.mubr.bf16.mxu0 0
  %4827 = vmatmul.mubr.bf16.gmra.mrb[0].mxu0 %v4606
  %v4828 = vpop.f32.mrb[0].mxu0
  %v4829 = vadd.f32 0.0, %v4828
  %v4830 = vpop.f32.mrb[0].mxu0
  %v4831 = vpop.f32.mrb[0].mxu0
  %v4832 = vadd.f32 0.0, %v4831
  %v4833 = vpop.f32.mrb[0].mxu0
  %4834 = vmatprep.mubr.bf16.mxu0 0
  %4835 = vmatmul.mubr.bf16.gmra.mrb[0].mxu0 %v4607
  %v4836 = vpop.f32.mrb[0].mxu0
  %v4837 = vadd.f32 0.0, %v4836
  %v4838 = vpop.f32.mrb[0].mxu0
  %v4839 = vpop.f32.mrb[0].mxu0
  %v4840 = vadd.f32 0.0, %v4839
  %v4841 = vpop.f32.mrb[0].mxu0
  %4842 = vmatprep.mubr.bf16.mxu0 0
  %4843 = vmatmul.mubr.bf16.gmra.mrb[0].mxu0 %v4608
  %v4844 = vpop.f32.mrb[0].mxu0
  %v4845 = vadd.f32 0.0, %v4844
  %v4846 = vpop.f32.mrb[0].mxu0
  %v4847 = vpop.f32.mrb[0].mxu0
  %v4848 = vadd.f32 0.0, %v4847
  %v4849 = vpop.f32.mrb[0].mxu0
  %4850 = vmatprep.mubr.bf16.mxu0 0
  %4851 = vmatmul.mubr.bf16.gmra.mrb[0].mxu0 %v4609
  %v4852 = vpop.f32.mrb[0].mxu0
  %v4853 = vadd.f32 0.0, %v4852
  %v4854 = vpop.f32.mrb[0].mxu0
  %v4855 = vpop.f32.mrb[0].mxu0
  %v4856 = vadd.f32 0.0, %v4855
  %v4857 = vpop.f32.mrb[0].mxu0
  %4858 = vmatprep.mubr.bf16.mxu0 0
  %4859 = vmatmul.mubr.bf16.gmra.mrb[0].mxu0 %v4610
  %v4860 = vpop.f32.mrb[0].mxu0
  %v4861 = vadd.f32 0.0, %v4860
  %v4862 = vpop.f32.mrb[0].mxu0
  %v4863 = vpop.f32.mrb[0].mxu0
  %v4864 = vadd.f32 0.0, %v4863
  %v4865 = vpop.f32.mrb[0].mxu0
  %4866 = vmatprep.mubr.bf16.mxu0 0
  %4867 = vmatmul.mubr.bf16.gmra.mrb[0].mxu0 %v4611
  %v4868 = vpop.f32.mrb[0].mxu0
  %v4869 = vadd.f32 0.0, %v4868
  %v4870 = vpop.f32.mrb[0].mxu0
  %v4871 = vpop.f32.mrb[0].mxu0
  %v4872 = vadd.f32 0.0, %v4871
  %v4873 = vpop.f32.mrb[0].mxu0
  %4874 = vmatprep.mubr.bf16.mxu0 0
  %4875 = vmatmul.mubr.bf16.gmra.mrb[0].mxu0 %v4612
  %v4876 = vpop.f32.mrb[0].mxu0
  %v4877 = vadd.f32 0.0, %v4876
  %v4878 = vpop.f32.mrb[0].mxu0
  %v4879 = vpop.f32.mrb[0].mxu0
  %v4880 = vadd.f32 0.0, %v4879
  %v4881 = vpop.f32.mrb[0].mxu0
  %4882 = vmatprep.mubr.bf16.mxu0 0
  %4883 = vmatmul.mubr.bf16.gmra.mrb[0].mxu0 %v4613
  %v4884 = vpop.f32.mrb[0].mxu0
  %v4885 = vadd.f32 0.0, %v4884
  %v4886 = vpop.f32.mrb[0].mxu0
  %v4887 = vpop.f32.mrb[0].mxu0
  %v4888 = vadd.f32 0.0, %v4887
  %v4889 = vpop.f32.mrb[0].mxu0
  %4890 = vmatprep.mubr.bf16.mxu0 0
  %4891 = vmatmul.mubr.bf16.gmra.mrb[0].mxu0 %v4614
  %v4892 = vpop.f32.mrb[0].mxu0
  %v4893 = vadd.f32 0.0, %v4892
  %v4894 = vpop.f32.mrb[0].mxu0
  %v4895 = vpop.f32.mrb[0].mxu0
  %v4896 = vadd.f32 0.0, %v4895
  %v4897 = vpop.f32.mrb[0].mxu0
  %4898 = vmatprep.mubr.bf16.mxu0 0
  %4899 = vmatmul.mubr.bf16.gmra.mrb[0].mxu0 %v4615
  %v4900 = vpop.f32.mrb[0].mxu0
  %v4901 = vadd.f32 0.0, %v4900
  %v4902 = vpop.f32.mrb[0].mxu0
  %v4903 = vpop.f32.mrb[0].mxu0
  %v4904 = vadd.f32 0.0, %v4903
  %v4905 = vpop.f32.mrb[0].mxu0
  %4906 = vmatprep.mubr.bf16.mxu0 0
  %4907 = vmatmul.mubr.bf16.gmra.mrb[0].mxu0 %v4616
  %v4908 = vpop.f32.mrb[0].mxu0
  %v4909 = vadd.f32 0.0, %v4908
  %v4910 = vpop.f32.mrb[0].mxu0
  %v4911 = vpop.f32.mrb[0].mxu0
  %v4912 = vadd.f32 0.0, %v4911
  %v4913 = vpop.f32.mrb[0].mxu0
  %4914 = vmatprep.mubr.bf16.mxu0 0
  %4915 = vmatmul.mubr.bf16.gmra.mrb[0].mxu0 %v4617
  %v4916 = vpop.f32.mrb[0].mxu0
  %v4917 = vadd.f32 0.0, %v4916
  %v4918 = vpop.f32.mrb[0].mxu0
  %v4919 = vpop.f32.mrb[0].mxu0
  %v4920 = vadd.f32 0.0, %v4919
  %v4921 = vpop.f32.mrb[0].mxu0
  %4922 = vmatprep.mubr.bf16.mxu0 0
  %4923 = vmatmul.mubr.bf16.gmra.mrb[0].mxu0 %v4618
  %v4924 = vpop.f32.mrb[0].mxu0
  %v4925 = vadd.f32 0.0, %v4924
  %v4926 = vpop.f32.mrb[0].mxu0
  %v4927 = vpop.f32.mrb[0].mxu0
  %v4928 = vadd.f32 0.0, %v4927
  %v4929 = vpop.f32.mrb[0].mxu0
  %4930 = vmatprep.mubr.bf16.mxu0 0
  %4931 = vmatmul.mubr.bf16.gmra.mrb[0].mxu0 %v4619
  %v4932 = vpop.f32.mrb[0].mxu0
  %v4933 = vadd.f32 0.0, %v4932
  %v4934 = vpop.f32.mrb[0].mxu0
  %v4935 = vpop.f32.mrb[0].mxu0
  %v4936 = vadd.f32 0.0, %v4935
  %v4937 = vpop.f32.mrb[0].mxu0
  %4938 = vmatprep.mubr.bf16.mxu0 0
  %4939 = vmatmul.mubr.bf16.gmra.mrb[0].mxu0 %v4620
  %v4940 = vpop.f32.mrb[0].mxu0
  %v4941 = vadd.f32 0.0, %v4940
  %v4942 = vpop.f32.mrb[0].mxu0
  %v4943 = vpop.f32.mrb[0].mxu0
  %v4944 = vadd.f32 0.0, %v4943
  %v4945 = vpop.f32.mrb[0].mxu0
  %4946 = vmatprep.mubr.bf16.mxu0 0
  %4947 = vmatmul.mubr.bf16.gmra.mrb[0].mxu0 %v4621
  %v4948 = vpop.f32.mrb[0].mxu0
  %v4949 = vadd.f32 0.0, %v4948
  %v4950 = vpop.f32.mrb[0].mxu0
  %v4951 = vpop.f32.mrb[0].mxu0
  %v4952 = vadd.f32 0.0, %v4951
  %v4953 = vpop.f32.mrb[0].mxu0
  %4954 = vmatprep.mubr.bf16.mxu0 0
  %4955 = vmatmul.mubr.bf16.gmra.mrb[0].mxu0 %v4622
  %v4956 = vpop.f32.mrb[0].mxu0
  %v4957 = vadd.f32 0.0, %v4956
  %v4958 = vpop.f32.mrb[0].mxu0
  %v4959 = vpop.f32.mrb[0].mxu0
  %v4960 = vadd.f32 0.0, %v4959
  %v4961 = vpop.f32.mrb[0].mxu0
  %4962 = vmatprep.mubr.bf16.mxu0 0
  %4963 = vmatmul.mubr.bf16.gmra.mrb[0].mxu0 %v4623
  %v4964 = vpop.f32.mrb[0].mxu0
  %v4965 = vadd.f32 0.0, %v4964
  %v4966 = vpop.f32.mrb[0].mxu0
  %v4967 = vpop.f32.mrb[0].mxu0
  %v4968 = vadd.f32 0.0, %v4967
  %v4969 = vpop.f32.mrb[0].mxu0
  %4970 = vmatprep.mubr.bf16.mxu0 0
  %4971 = vmatmul.mubr.bf16.gmra.mrb[0].mxu0 %v4624
  %v4972 = vpop.f32.mrb[0].mxu0
  %v4973 = vadd.f32 0.0, %v4972
  %v4974 = vpop.f32.mrb[0].mxu0
  %v4975 = vpop.f32.mrb[0].mxu0
  %v4976 = vadd.f32 0.0, %v4975
  %v4977 = vpop.f32.mrb[0].mxu0
  %4978 = vdwg.mxu0
  %v4979 = vadd.f32 %v4275, %v4725
  %v4980 = vadd.f32 %v4278, %v4728
  %v4981 = vadd.f32 %v4283, %v4733
  %v4982 = vadd.f32 %v4286, %v4736
  %v4983 = vadd.f32 %v4291, %v4741
  %v4984 = vadd.f32 %v4294, %v4744
  %v4985 = vadd.f32 %v4299, %v4749
  %v4986 = vadd.f32 %v4302, %v4752
  %v4987 = vadd.f32 %v4307, %v4757
  %v4988 = vadd.f32 %v4310, %v4760
  %v4989 = vadd.f32 %v4315, %v4765
  %v4990 = vadd.f32 %v4318, %v4768
  %v4991 = vadd.f32 %v4323, %v4773
  %v4992 = vadd.f32 %v4326, %v4776
  %v4993 = vadd.f32 %v4331, %v4781
  %v4994 = vadd.f32 %v4334, %v4784
  %v4995 = vadd.f32 %v4339, %v4789
  %v4996 = vadd.f32 %v4342, %v4792
  %v4997 = vadd.f32 %v4347, %v4797
  %v4998 = vadd.f32 %v4350, %v4800
  %v4999 = vadd.f32 %v4355, %v4805
  %v5000 = vadd.f32 %v4358, %v4808
  %v5001 = vadd.f32 %v4363, %v4813
  %v5002 = vadd.f32 %v4366, %v4816
  %v5003 = vadd.f32 %v4371, %v4821
  %v5004 = vadd.f32 %v4374, %v4824
  %v5005 = vadd.f32 %v4379, %v4829
  %v5006 = vadd.f32 %v4382, %v4832
  %v5007 = vadd.f32 %v4387, %v4837
  %v5008 = vadd.f32 %v4390, %v4840
  %v5009 = vadd.f32 %v4395, %v4845
  %v5010 = vadd.f32 %v4398, %v4848
  %v5011 = vadd.f32 %v4403, %v4853
  %v5012 = vadd.f32 %v4406, %v4856
  %v5013 = vadd.f32 %v4411, %v4861
  %v5014 = vadd.f32 %v4414, %v4864
  %v5015 = vadd.f32 %v4419, %v4869
  %v5016 = vadd.f32 %v4422, %v4872
  %v5017 = vadd.f32 %v4427, %v4877
  %v5018 = vadd.f32 %v4430, %v4880
  %v5019 = vadd.f32 %v4435, %v4885
  %v5020 = vadd.f32 %v4438, %v4888
  %v5021 = vadd.f32 %v4443, %v4893
  %v5022 = vadd.f32 %v4446, %v4896
  %v5023 = vadd.f32 %v4451, %v4901
  %v5024 = vadd.f32 %v4454, %v4904
  %v5025 = vadd.f32 %v4459, %v4909
  %v5026 = vadd.f32 %v4462, %v4912
  %v5027 = vadd.f32 %v4467, %v4917
  %v5028 = vadd.f32 %v4470, %v4920
  %v5029 = vadd.f32 %v4475, %v4925
  %v5030 = vadd.f32 %v4478, %v4928
  %v5031 = vadd.f32 %v4483, %v4933
  %v5032 = vadd.f32 %v4486, %v4936
  %v5033 = vadd.f32 %v4491, %v4941
  %v5034 = vadd.f32 %v4494, %v4944
  %v5035 = vadd.f32 %v4499, %v4949
  %v5036 = vadd.f32 %v4502, %v4952
  %v5037 = vadd.f32 %v4507, %v4957
  %v5038 = vadd.f32 %v4510, %v4960
  %v5039 = vadd.f32 %v4515, %v4965
  %v5040 = vadd.f32 %v4518, %v4968
  %v5041 = vadd.f32 %v4523, %v4973
  %v5042 = vadd.f32 %v4526, %v4976
  %v5043 = vld [vmem:[%s1247] sm:$0xff]
  %v5044 = vld [vmem:[%s1247 + $0x8] sm:$0xff]
  %v5045 = vld [vmem:[%s1247 + $0x18] sm:$0xff]
  %v5046 = vld [vmem:[%s1247 + $0x20] sm:$0xff]
  %v5047 = vld [vmem:[%s1247 + $0x30] sm:$0xff]
  %v5048 = vld [vmem:[%s1247 + $0x38] sm:$0xff]
  %v5049 = vld [vmem:[%s1247 + $0x48] sm:$0xff]
  %v5050 = vld [vmem:[%s1247 + $0x50] sm:$0xff]
  %v5051 = vld [vmem:[%s1247 + $0x60] sm:$0xff]
  %v5052 = vld [vmem:[%s1247 + $0x68] sm:$0xff]
  %v5053 = vld [vmem:[%s1247 + $0x78] sm:$0xff]
  %v5054 = vld [vmem:[%s1247 + $0x80] sm:$0xff]
  %v5055 = vld [vmem:[%s1247 + $0x90] sm:$0xff]
  %v5056 = vld [vmem:[%s1247 + $0x98] sm:$0xff]
  %v5057 = vld [vmem:[%s1247 + $0xa8] sm:$0xff]
  %v5058 = vld [vmem:[%s1247 + $0xb0] sm:$0xff]
  %v5059 = vld [vmem:[%s1247 + $0xc0] sm:$0xff]
  %v5060 = vld [vmem:[%s1247 + $0xc8] sm:$0xff]
  %v5061 = vld [vmem:[%s1247 + $0xd8] sm:$0xff]
  %v5062 = vld [vmem:[%s1247 + $0xe0] sm:$0xff]
  %v5063 = vld [vmem:[%s1247 + $0xf0] sm:$0xff]
  %v5064 = vld [vmem:[%s1247 + $0xf8] sm:$0xff]
  %v5065 = vld [vmem:[%s1247 + $0x108] sm:$0xff]
  %v5066 = vld [vmem:[%s1247 + $0x110] sm:$0xff]
  %v5067 = vld [vmem:[%s1247 + $0x120] sm:$0xff]
  %v5068 = vld [vmem:[%s1247 + $0x128] sm:$0xff]
  %v5069 = vld [vmem:[%s1247 + $0x138] sm:$0xff]
  %v5070 = vld [vmem:[%s1247 + $0x140] sm:$0xff]
  %v5071 = vld [vmem:[%s1247 + $0x150] sm:$0xff]
  %v5072 = vld [vmem:[%s1247 + $0x158] sm:$0xff]
  %v5073 = vld [vmem:[%s1247 + $0x168] sm:$0xff]
  %v5074 = vld [vmem:[%s1247 + $0x170] sm:$0xff]
  %v5075 = vld [vmem:[%s1247 + $0x1b0] sm:$0xff]
  %v5076 = vld [vmem:[%s1247 + $0x1b8] sm:$0xff]
  %v5077 = vld [vmem:[%s1247 + $0x1c8] sm:$0xff]
  %v5078 = vld [vmem:[%s1247 + $0x1d0] sm:$0xff]
  %v5079 = vld [vmem:[%s1247 + $0x1e0] sm:$0xff]
  %v5080 = vld [vmem:[%s1247 + $0x1e8] sm:$0xff]
  %v5081 = vld [vmem:[%s1247 + $0x1f8] sm:$0xff]
  %v5082 = vld [vmem:[%s1247 + $0x200] sm:$0xff]
  %v5083 = vld [vmem:[%s1247 + $0x210] sm:$0xff]
  %v5084 = vld [vmem:[%s1247 + $0x218] sm:$0xff]
  %v5085 = vld [vmem:[%s1247 + $0x228] sm:$0xff]
  %v5086 = vld [vmem:[%s1247 + $0x230] sm:$0xff]
  %v5087 = vld [vmem:[%s1247 + $0x240] sm:$0xff]
  %v5088 = vld [vmem:[%s1247 + $0x248] sm:$0xff]
  %v5089 = vld [vmem:[%s1247 + $0x258] sm:$0xff]
  %v5090 = vld [vmem:[%s1247 + $0x260] sm:$0xff]
  %v5091 = vld [vmem:[%s1247 + $0x270] sm:$0xff]
  %v5092 = vld [vmem:[%s1247 + $0x278] sm:$0xff]
  %v5093 = vld [vmem:[%s1247 + $0x288] sm:$0xff]
  %v5094 = vld [vmem:[%s1247 + $0x290] sm:$0xff]
  %v5095 = vld [vmem:[%s1247 + $0x2a0] sm:$0xff]
  %v5096 = vld [vmem:[%s1247 + $0x2a8] sm:$0xff]
  %v5097 = vld [vmem:[%s1247 + $0x2b8] sm:$0xff]
  %v5098 = vld [vmem:[%s1247 + $0x2c0] sm:$0xff]
  %v5099 = vld [vmem:[%s1247 + $0x2d0] sm:$0xff]
  %v5100 = vld [vmem:[%s1247 + $0x2d8] sm:$0xff]
  %v5101 = vld [vmem:[%s1247 + $0x2e8] sm:$0xff]
  %v5102 = vld [vmem:[%s1247 + $0x2f0] sm:$0xff]
  %v5103 = vld [vmem:[%s1247 + $0x300] sm:$0xff]
  %v5104 = vld [vmem:[%s1247 + $0x308] sm:$0xff]
  %v5105 = vld [vmem:[%s1247 + $0x318] sm:$0xff]
  %v5106 = vld [vmem:[%s1247 + $0x320] sm:$0xff]
  %v5107 = vpack.c.bf16 %v5044, %v5043
  %v5108 = vpack.c.bf16 %v5046, %v5045
  %v5109 = vpack.c.bf16 %v5048, %v5047
  %v5110 = vpack.c.bf16 %v5050, %v5049
  %v5111 = vpack.c.bf16 %v5052, %v5051
  %v5112 = vpack.c.bf16 %v5054, %v5053
  %v5113 = vpack.c.bf16 %v5056, %v5055
  %v5114 = vpack.c.bf16 %v5058, %v5057
  %v5115 = vpack.c.bf16 %v5060, %v5059
  %v5116 = vpack.c.bf16 %v5062, %v5061
  %v5117 = vpack.c.bf16 %v5064, %v5063
  %v5118 = vpack.c.bf16 %v5066, %v5065
  %v5119 = vpack.c.bf16 %v5068, %v5067
  %v5120 = vpack.c.bf16 %v5070, %v5069
  %v5121 = vpack.c.bf16 %v5072, %v5071
  %v5122 = vpack.c.bf16 %v5074, %v5073
  %v5123 = vpack.c.bf16 %v5076, %v5075
  %v5124 = vpack.c.bf16 %v5078, %v5077
  %v5125 = vpack.c.bf16 %v5080, %v5079
  %v5126 = vpack.c.bf16 %v5082, %v5081
  %v5127 = vpack.c.bf16 %v5084, %v5083
  %v5128 = vpack.c.bf16 %v5086, %v5085
  %v5129 = vpack.c.bf16 %v5088, %v5087
  %v5130 = vpack.c.bf16 %v5090, %v5089
  %v5131 = vpack.c.bf16 %v5092, %v5091
  %v5132 = vpack.c.bf16 %v5094, %v5093
  %v5133 = vpack.c.bf16 %v5096, %v5095
  %v5134 = vpack.c.bf16 %v5098, %v5097
  %v5135 = vpack.c.bf16 %v5100, %v5099
  %v5136 = vpack.c.bf16 %v5102, %v5101
  %v5137 = vpack.c.bf16 %v5104, %v5103
  %v5138 = vpack.c.bf16 %v5106, %v5105
  %s5139 = scalar_lea.vmem %s3, 192
  %v5140 = vld [vmem:[%s5139] sm:$0xf]
  %v5141 = vld [vmem:[%s5139 + $0x4] sm:$0xf]
  %v5142 = vld [vmem:[%s5139 + $0x8] sm:$0xf]
  %v5143 = vld [vmem:[%s5139 + $0xc] sm:$0xf]
  %v5144 = vld [vmem:[%s5139 + $0x10] sm:$0xf]
  %v5145 = vld [vmem:[%s5139 + $0x14] sm:$0xf]
  %v5146 = vld [vmem:[%s5139 + $0x18] sm:$0xf]
  %v5147 = vld [vmem:[%s5139 + $0x1c] sm:$0xf]
  %v5148 = vld [vmem:[%s5139 + $0x20] sm:$0xf]
  %v5149 = vld [vmem:[%s5139 + $0x24] sm:$0xf]
  %v5150 = vld [vmem:[%s5139 + $0x28] sm:$0xf]
  %v5151 = vld [vmem:[%s5139 + $0x2c] sm:$0xf]
  %v5152 = vld [vmem:[%s5139 + $0x30] sm:$0xf]
  %v5153 = vld [vmem:[%s5139 + $0x34] sm:$0xf]
  %v5154 = vld [vmem:[%s5139 + $0x38] sm:$0xf]
  %v5155 = vld [vmem:[%s5139 + $0x3c] sm:$0xf]
  %v5172 = vunpack.c.l.b16 %v5140
  %v5173 = vunpack.c.l.b16 %v5141
  %v5174 = vunpack.c.l.b16 %v5142
  %v5175 = vunpack.c.l.b16 %v5143
  %v5176 = vunpack.c.l.b16 %v5144
  %v5177 = vunpack.c.l.b16 %v5145
  %v5178 = vunpack.c.l.b16 %v5146
  %v5179 = vunpack.c.l.b16 %v5147
  %v5180 = vunpack.c.l.b16 %v5148
  %v5181 = vunpack.c.l.b16 %v5149
  %v5182 = vunpack.c.l.b16 %v5150
  %v5183 = vunpack.c.l.b16 %v5151
  %v5184 = vunpack.c.l.b16 %v5152
  %v5185 = vunpack.c.l.b16 %v5153
  %v5186 = vunpack.c.l.b16 %v5154
  %v5187 = vunpack.c.l.b16 %v5155
  %v5188 = vpack.c.b16 %v5173, %v5172
  %v5189 = vpack.c.b16 %v5175, %v5174
  %v5190 = vpack.c.b16 %v5177, %v5176
  %v5191 = vpack.c.b16 %v5179, %v5178
  %v5192 = vpack.c.b16 %v5181, %v5180
  %v5193 = vpack.c.b16 %v5183, %v5182
  %v5194 = vpack.c.b16 %v5185, %v5184
  %v5195 = vpack.c.b16 %v5187, %v5186
  %5204 = vmatprep.subr.bf16.mxu0 0
  %5205 = vmatpush1.bf16.msra.mxu0 %v5188
  %5206 = vmatprep.subr.bf16.mxu0 0
  %5207 = vmatpush1.bf16.msra.mxu0 %v5189
  %5208 = vmatprep.subr.bf16.mxu0 0
  %5209 = vmatpush1.bf16.msra.mxu0 %v5190
  %5210 = vmatprep.subr.bf16.mxu0 0
  %5211 = vmatpush1.bf16.msra.mxu0 %v5191
  %5212 = vmatprep.subr.bf16.mxu0 0
  %5213 = vmatpush1.bf16.msra.mxu0 %v5192
  %5214 = vmatprep.subr.bf16.mxu0 0
  %5215 = vmatpush1.bf16.msra.mxu0 %v5193
  %5216 = vmatprep.subr.bf16.mxu0 0
  %5217 = vmatpush1.bf16.msra.mxu0 %v5194
  %5218 = vmatprep.subr.bf16.mxu0 0
  %5219 = vmatpush1.bf16.msra.mxu0 %v5195
  %5220 = vmatprep.subr.bf16.mxu0 0
  %5221 = vmatpush1.bf16.msra.mxu0 0
  %5222 = vmatprep.subr.bf16.mxu0 0
  %5223 = vmatpush1.bf16.msra.mxu0 0
  %5224 = vmatprep.subr.bf16.mxu0 0
  %5225 = vmatpush1.bf16.msra.mxu0 0
  %5226 = vmatprep.subr.bf16.mxu0 0
  %5227 = vmatpush1.bf16.msra.mxu0 0
  %5228 = vmatprep.subr.bf16.mxu0 0
  %5229 = vmatpush1.bf16.msra.mxu0 0
  %5230 = vmatprep.subr.bf16.mxu0 0
  %5231 = vmatpush1.bf16.msra.mxu0 0
  %5232 = vmatprep.subr.bf16.mxu0 0
  %5233 = vmatpush1.bf16.msra.mxu0 0
  %5234 = vmatprep.subr.bf16.mxu0 0
  %5235 = vmatpush1.bf16.msra.mxu0 0
  %5236 = vmatprep.mubr.bf16.mxu0 0
  %5237 = vmatmul.mubr.bf16.gmra.mrb[0].mxu0 %v5107
  %v5238 = vpop.f32.mrb[0].mxu0
  %v5239 = vadd.f32 0.0, %v5238
  %v5240 = vpop.f32.mrb[0].mxu0
  %v5241 = vpop.f32.mrb[0].mxu0
  %v5242 = vadd.f32 0.0, %v5241
  %v5243 = vpop.f32.mrb[0].mxu0
  %5244 = vmatprep.mubr.bf16.mxu0 0
  %5245 = vmatmul.mubr.bf16.gmra.mrb[0].mxu0 %v5108
  %v5246 = vpop.f32.mrb[0].mxu0
  %v5247 = vadd.f32 0.0, %v5246
  %v5248 = vpop.f32.mrb[0].mxu0
  %v5249 = vpop.f32.mrb[0].mxu0
  %v5250 = vadd.f32 0.0, %v5249
  %v5251 = vpop.f32.mrb[0].mxu0
  %5252 = vmatprep.mubr.bf16.mxu0 0
  %5253 = vmatmul.mubr.bf16.gmra.mrb[0].mxu0 %v5109
  %v5254 = vpop.f32.mrb[0].mxu0
  %v5255 = vadd.f32 0.0, %v5254
  %v5256 = vpop.f32.mrb[0].mxu0
  %v5257 = vpop.f32.mrb[0].mxu0
  %v5258 = vadd.f32 0.0, %v5257
  %v5259 = vpop.f32.mrb[0].mxu0
  %5260 = vmatprep.mubr.bf16.mxu0 0
  %5261 = vmatmul.mubr.bf16.gmra.mrb[0].mxu0 %v5110
  %v5262 = vpop.f32.mrb[0].mxu0
  %v5263 = vadd.f32 0.0, %v5262
  %v5264 = vpop.f32.mrb[0].mxu0
  %v5265 = vpop.f32.mrb[0].mxu0
  %v5266 = vadd.f32 0.0, %v5265
  %v5267 = vpop.f32.mrb[0].mxu0
  %5268 = vmatprep.mubr.bf16.mxu0 0
  %5269 = vmatmul.mubr.bf16.gmra.mrb[0].mxu0 %v5111
  %v5270 = vpop.f32.mrb[0].mxu0
  %v5271 = vadd.f32 0.0, %v5270
  %v5272 = vpop.f32.mrb[0].mxu0
  %v5273 = vpop.f32.mrb[0].mxu0
  %v5274 = vadd.f32 0.0, %v5273
  %v5275 = vpop.f32.mrb[0].mxu0
  %5276 = vmatprep.mubr.bf16.mxu0 0
  %5277 = vmatmul.mubr.bf16.gmra.mrb[0].mxu0 %v5112
  %v5278 = vpop.f32.mrb[0].mxu0
  %v5279 = vadd.f32 0.0, %v5278
  %v5280 = vpop.f32.mrb[0].mxu0
  %v5281 = vpop.f32.mrb[0].mxu0
  %v5282 = vadd.f32 0.0, %v5281
  %v5283 = vpop.f32.mrb[0].mxu0
  %5284 = vmatprep.mubr.bf16.mxu0 0
  %5285 = vmatmul.mubr.bf16.gmra.mrb[0].mxu0 %v5113
  %v5286 = vpop.f32.mrb[0].mxu0
  %v5287 = vadd.f32 0.0, %v5286
  %v5288 = vpop.f32.mrb[0].mxu0
  %v5289 = vpop.f32.mrb[0].mxu0
  %v5290 = vadd.f32 0.0, %v5289
  %v5291 = vpop.f32.mrb[0].mxu0
  %5292 = vmatprep.mubr.bf16.mxu0 0
  %5293 = vmatmul.mubr.bf16.gmra.mrb[0].mxu0 %v5114
  %v5294 = vpop.f32.mrb[0].mxu0
  %v5295 = vadd.f32 0.0, %v5294
  %v5296 = vpop.f32.mrb[0].mxu0
  %v5297 = vpop.f32.mrb[0].mxu0
  %v5298 = vadd.f32 0.0, %v5297
  %v5299 = vpop.f32.mrb[0].mxu0
  %5300 = vmatprep.mubr.bf16.mxu0 0
  %5301 = vmatmul.mubr.bf16.gmra.mrb[0].mxu0 %v5115
  %v5302 = vpop.f32.mrb[0].mxu0
  %v5303 = vadd.f32 0.0, %v5302
  %v5304 = vpop.f32.mrb[0].mxu0
  %v5305 = vpop.f32.mrb[0].mxu0
  %v5306 = vadd.f32 0.0, %v5305
  %v5307 = vpop.f32.mrb[0].mxu0
  %5308 = vmatprep.mubr.bf16.mxu0 0
  %5309 = vmatmul.mubr.bf16.gmra.mrb[0].mxu0 %v5116
  %v5310 = vpop.f32.mrb[0].mxu0
  %v5311 = vadd.f32 0.0, %v5310
  %v5312 = vpop.f32.mrb[0].mxu0
  %v5313 = vpop.f32.mrb[0].mxu0
  %v5314 = vadd.f32 0.0, %v5313
  %v5315 = vpop.f32.mrb[0].mxu0
  %5316 = vmatprep.mubr.bf16.mxu0 0
  %5317 = vmatmul.mubr.bf16.gmra.mrb[0].mxu0 %v5117
  %v5318 = vpop.f32.mrb[0].mxu0
  %v5319 = vadd.f32 0.0, %v5318
  %v5320 = vpop.f32.mrb[0].mxu0
  %v5321 = vpop.f32.mrb[0].mxu0
  %v5322 = vadd.f32 0.0, %v5321
  %v5323 = vpop.f32.mrb[0].mxu0
  %5324 = vmatprep.mubr.bf16.mxu0 0
  %5325 = vmatmul.mubr.bf16.gmra.mrb[0].mxu0 %v5118
  %v5326 = vpop.f32.mrb[0].mxu0
  %v5327 = vadd.f32 0.0, %v5326
  %v5328 = vpop.f32.mrb[0].mxu0
  %v5329 = vpop.f32.mrb[0].mxu0
  %v5330 = vadd.f32 0.0, %v5329
  %v5331 = vpop.f32.mrb[0].mxu0
  %5332 = vmatprep.mubr.bf16.mxu0 0
  %5333 = vmatmul.mubr.bf16.gmra.mrb[0].mxu0 %v5119
  %v5334 = vpop.f32.mrb[0].mxu0
  %v5335 = vadd.f32 0.0, %v5334
  %v5336 = vpop.f32.mrb[0].mxu0
  %v5337 = vpop.f32.mrb[0].mxu0
  %v5338 = vadd.f32 0.0, %v5337
  %v5339 = vpop.f32.mrb[0].mxu0
  %5340 = vmatprep.mubr.bf16.mxu0 0
  %5341 = vmatmul.mubr.bf16.gmra.mrb[0].mxu0 %v5120
  %v5342 = vpop.f32.mrb[0].mxu0
  %v5343 = vadd.f32 0.0, %v5342
  %v5344 = vpop.f32.mrb[0].mxu0
  %v5345 = vpop.f32.mrb[0].mxu0
  %v5346 = vadd.f32 0.0, %v5345
  %v5347 = vpop.f32.mrb[0].mxu0
  %5348 = vmatprep.mubr.bf16.mxu0 0
  %5349 = vmatmul.mubr.bf16.gmra.mrb[0].mxu0 %v5121
  %v5350 = vpop.f32.mrb[0].mxu0
  %v5351 = vadd.f32 0.0, %v5350
  %v5352 = vpop.f32.mrb[0].mxu0
  %v5353 = vpop.f32.mrb[0].mxu0
  %v5354 = vadd.f32 0.0, %v5353
  %v5355 = vpop.f32.mrb[0].mxu0
  %5356 = vmatprep.mubr.bf16.mxu0 0
  %5357 = vmatmul.mubr.bf16.gmra.mrb[0].mxu0 %v5122
  %v5358 = vpop.f32.mrb[0].mxu0
  %v5359 = vadd.f32 0.0, %v5358
  %v5360 = vpop.f32.mrb[0].mxu0
  %v5361 = vpop.f32.mrb[0].mxu0
  %v5362 = vadd.f32 0.0, %v5361
  %v5363 = vpop.f32.mrb[0].mxu0
  %5364 = vmatprep.mubr.bf16.mxu0 0
  %5365 = vmatmul.mubr.bf16.gmra.mrb[0].mxu0 %v5123
  %v5366 = vpop.f32.mrb[0].mxu0
  %v5367 = vadd.f32 0.0, %v5366
  %v5368 = vpop.f32.mrb[0].mxu0
  %v5369 = vpop.f32.mrb[0].mxu0
  %v5370 = vadd.f32 0.0, %v5369
  %v5371 = vpop.f32.mrb[0].mxu0
  %5372 = vmatprep.mubr.bf16.mxu0 0
  %5373 = vmatmul.mubr.bf16.gmra.mrb[0].mxu0 %v5124
  %v5374 = vpop.f32.mrb[0].mxu0
  %v5375 = vadd.f32 0.0, %v5374
  %v5376 = vpop.f32.mrb[0].mxu0
  %v5377 = vpop.f32.mrb[0].mxu0
  %v5378 = vadd.f32 0.0, %v5377
  %v5379 = vpop.f32.mrb[0].mxu0
  %5380 = vmatprep.mubr.bf16.mxu0 0
  %5381 = vmatmul.mubr.bf16.gmra.mrb[0].mxu0 %v5125
  %v5382 = vpop.f32.mrb[0].mxu0
  %v5383 = vadd.f32 0.0, %v5382
  %v5384 = vpop.f32.mrb[0].mxu0
  %v5385 = vpop.f32.mrb[0].mxu0
  %v5386 = vadd.f32 0.0, %v5385
  %v5387 = vpop.f32.mrb[0].mxu0
  %5388 = vmatprep.mubr.bf16.mxu0 0
  %5389 = vmatmul.mubr.bf16.gmra.mrb[0].mxu0 %v5126
  %v5390 = vpop.f32.mrb[0].mxu0
  %v5391 = vadd.f32 0.0, %v5390
  %v5392 = vpop.f32.mrb[0].mxu0
  %v5393 = vpop.f32.mrb[0].mxu0
  %v5394 = vadd.f32 0.0, %v5393
  %v5395 = vpop.f32.mrb[0].mxu0
  %5396 = vmatprep.mubr.bf16.mxu0 0
  %5397 = vmatmul.mubr.bf16.gmra.mrb[0].mxu0 %v5127
  %v5398 = vpop.f32.mrb[0].mxu0
  %v5399 = vadd.f32 0.0, %v5398
  %v5400 = vpop.f32.mrb[0].mxu0
  %v5401 = vpop.f32.mrb[0].mxu0
  %v5402 = vadd.f32 0.0, %v5401
  %v5403 = vpop.f32.mrb[0].mxu0
  %5404 = vmatprep.mubr.bf16.mxu0 0
  %5405 = vmatmul.mubr.bf16.gmra.mrb[0].mxu0 %v5128
  %v5406 = vpop.f32.mrb[0].mxu0
  %v5407 = vadd.f32 0.0, %v5406
  %v5408 = vpop.f32.mrb[0].mxu0
  %v5409 = vpop.f32.mrb[0].mxu0
  %v5410 = vadd.f32 0.0, %v5409
  %v5411 = vpop.f32.mrb[0].mxu0
  %5412 = vmatprep.mubr.bf16.mxu0 0
  %5413 = vmatmul.mubr.bf16.gmra.mrb[0].mxu0 %v5129
  %v5414 = vpop.f32.mrb[0].mxu0
  %v5415 = vadd.f32 0.0, %v5414
  %v5416 = vpop.f32.mrb[0].mxu0
  %v5417 = vpop.f32.mrb[0].mxu0
  %v5418 = vadd.f32 0.0, %v5417
  %v5419 = vpop.f32.mrb[0].mxu0
  %5420 = vmatprep.mubr.bf16.mxu0 0
  %5421 = vmatmul.mubr.bf16.gmra.mrb[0].mxu0 %v5130
  %v5422 = vpop.f32.mrb[0].mxu0
  %v5423 = vadd.f32 0.0, %v5422
  %v5424 = vpop.f32.mrb[0].mxu0
  %v5425 = vpop.f32.mrb[0].mxu0
  %v5426 = vadd.f32 0.0, %v5425
  %v5427 = vpop.f32.mrb[0].mxu0
  %5428 = vmatprep.mubr.bf16.mxu0 0
  %5429 = vmatmul.mubr.bf16.gmra.mrb[0].mxu0 %v5131
  %v5430 = vpop.f32.mrb[0].mxu0
  %v5431 = vadd.f32 0.0, %v5430
  %v5432 = vpop.f32.mrb[0].mxu0
  %v5433 = vpop.f32.mrb[0].mxu0
  %v5434 = vadd.f32 0.0, %v5433
  %v5435 = vpop.f32.mrb[0].mxu0
  %5436 = vmatprep.mubr.bf16.mxu0 0
  %5437 = vmatmul.mubr.bf16.gmra.mrb[0].mxu0 %v5132
  %v5438 = vpop.f32.mrb[0].mxu0
  %v5439 = vadd.f32 0.0, %v5438
  %v5440 = vpop.f32.mrb[0].mxu0
  %v5441 = vpop.f32.mrb[0].mxu0
  %v5442 = vadd.f32 0.0, %v5441
  %v5443 = vpop.f32.mrb[0].mxu0
  %5444 = vmatprep.mubr.bf16.mxu0 0
  %5445 = vmatmul.mubr.bf16.gmra.mrb[0].mxu0 %v5133
  %v5446 = vpop.f32.mrb[0].mxu0
  %v5447 = vadd.f32 0.0, %v5446
  %v5448 = vpop.f32.mrb[0].mxu0
  %v5449 = vpop.f32.mrb[0].mxu0
  %v5450 = vadd.f32 0.0, %v5449
  %v5451 = vpop.f32.mrb[0].mxu0
  %5452 = vmatprep.mubr.bf16.mxu0 0
  %5453 = vmatmul.mubr.bf16.gmra.mrb[0].mxu0 %v5134
  %v5454 = vpop.f32.mrb[0].mxu0
  %v5455 = vadd.f32 0.0, %v5454
  %v5456 = vpop.f32.mrb[0].mxu0
  %v5457 = vpop.f32.mrb[0].mxu0
  %v5458 = vadd.f32 0.0, %v5457
  %v5459 = vpop.f32.mrb[0].mxu0
  %5460 = vmatprep.mubr.bf16.mxu0 0
  %5461 = vmatmul.mubr.bf16.gmra.mrb[0].mxu0 %v5135
  %v5462 = vpop.f32.mrb[0].mxu0
  %v5463 = vadd.f32 0.0, %v5462
  %v5464 = vpop.f32.mrb[0].mxu0
  %v5465 = vpop.f32.mrb[0].mxu0
  %v5466 = vadd.f32 0.0, %v5465
  %v5467 = vpop.f32.mrb[0].mxu0
  %5468 = vmatprep.mubr.bf16.mxu0 0
  %5469 = vmatmul.mubr.bf16.gmra.mrb[0].mxu0 %v5136
  %v5470 = vpop.f32.mrb[0].mxu0
  %v5471 = vadd.f32 0.0, %v5470
  %v5472 = vpop.f32.mrb[0].mxu0
  %v5473 = vpop.f32.mrb[0].mxu0
  %v5474 = vadd.f32 0.0, %v5473
  %v5475 = vpop.f32.mrb[0].mxu0
  %5476 = vmatprep.mubr.bf16.mxu0 0
  %5477 = vmatmul.mubr.bf16.gmra.mrb[0].mxu0 %v5137
  %v5478 = vpop.f32.mrb[0].mxu0
  %v5479 = vadd.f32 0.0, %v5478
  %v5480 = vpop.f32.mrb[0].mxu0
  %v5481 = vpop.f32.mrb[0].mxu0
  %v5482 = vadd.f32 0.0, %v5481
  %v5483 = vpop.f32.mrb[0].mxu0
  %5484 = vmatprep.mubr.bf16.mxu0 0
  %5485 = vmatmul.mubr.bf16.gmra.mrb[0].mxu0 %v5138
  %v5486 = vpop.f32.mrb[0].mxu0
  %v5487 = vadd.f32 0.0, %v5486
  %v5488 = vpop.f32.mrb[0].mxu0
  %v5489 = vpop.f32.mrb[0].mxu0
  %v5490 = vadd.f32 0.0, %v5489
  %v5491 = vpop.f32.mrb[0].mxu0
  %5492 = vdwg.mxu0
  %v5493 = vadd.f32 %v4979, %v5239
  %v5494 = vadd.f32 %v4980, %v5242
  %v5495 = vadd.f32 %v4981, %v5247
  %v5496 = vadd.f32 %v4982, %v5250
  %v5497 = vadd.f32 %v4983, %v5255
  %v5498 = vadd.f32 %v4984, %v5258
  %v5499 = vadd.f32 %v4985, %v5263
  %v5500 = vadd.f32 %v4986, %v5266
  %v5501 = vadd.f32 %v4987, %v5271
  %v5502 = vadd.f32 %v4988, %v5274
  %v5503 = vadd.f32 %v4989, %v5279
  %v5504 = vadd.f32 %v4990, %v5282
  %v5505 = vadd.f32 %v4991, %v5287
  %v5506 = vadd.f32 %v4992, %v5290
  %v5507 = vadd.f32 %v4993, %v5295
  %v5508 = vadd.f32 %v4994, %v5298
  %v5509 = vadd.f32 %v4995, %v5303
  %v5510 = vadd.f32 %v4996, %v5306
  %v5511 = vadd.f32 %v4997, %v5311
  %v5512 = vadd.f32 %v4998, %v5314
  %v5513 = vadd.f32 %v4999, %v5319
  %v5514 = vadd.f32 %v5000, %v5322
  %v5515 = vadd.f32 %v5001, %v5327
  %v5516 = vadd.f32 %v5002, %v5330
  %v5517 = vadd.f32 %v5003, %v5335
  %v5518 = vadd.f32 %v5004, %v5338
  %v5519 = vadd.f32 %v5005, %v5343
  %v5520 = vadd.f32 %v5006, %v5346
  %v5521 = vadd.f32 %v5007, %v5351
  %v5522 = vadd.f32 %v5008, %v5354
  %v5523 = vadd.f32 %v5009, %v5359
  %v5524 = vadd.f32 %v5010, %v5362
  %v5525 = vadd.f32 %v5011, %v5367
  %v5526 = vadd.f32 %v5012, %v5370
  %v5527 = vadd.f32 %v5013, %v5375
  %v5528 = vadd.f32 %v5014, %v5378
  %v5529 = vadd.f32 %v5015, %v5383
  %v5530 = vadd.f32 %v5016, %v5386
  %v5531 = vadd.f32 %v5017, %v5391
  %v5532 = vadd.f32 %v5018, %v5394
  %v5533 = vadd.f32 %v5019, %v5399
  %v5534 = vadd.f32 %v5020, %v5402
  %v5535 = vadd.f32 %v5021, %v5407
  %v5536 = vadd.f32 %v5022, %v5410
  %v5537 = vadd.f32 %v5023, %v5415
  %v5538 = vadd.f32 %v5024, %v5418
  %v5539 = vadd.f32 %v5025, %v5423
  %v5540 = vadd.f32 %v5026, %v5426
  %v5541 = vadd.f32 %v5027, %v5431
  %v5542 = vadd.f32 %v5028, %v5434
  %v5543 = vadd.f32 %v5029, %v5439
  %v5544 = vadd.f32 %v5030, %v5442
  %v5545 = vadd.f32 %v5031, %v5447
  %v5546 = vadd.f32 %v5032, %v5450
  %v5547 = vadd.f32 %v5033, %v5455
  %v5548 = vadd.f32 %v5034, %v5458
  %v5549 = vadd.f32 %v5035, %v5463
  %v5550 = vadd.f32 %v5036, %v5466
  %v5551 = vadd.f32 %v5037, %v5471
  %v5552 = vadd.f32 %v5038, %v5474
  %v5553 = vadd.f32 %v5039, %v5479
  %v5554 = vadd.f32 %v5040, %v5482
  %v5555 = vadd.f32 %v5041, %v5487
  %v5556 = vadd.f32 %v5042, %v5490
  %v5557 = vld [vmem:[%s1247 + $0x1] sm:$0xff]
  %v5558 = vld [vmem:[%s1247 + $0x9] sm:$0xff]
  %v5559 = vld [vmem:[%s1247 + $0x19] sm:$0xff]
  %v5560 = vld [vmem:[%s1247 + $0x21] sm:$0xff]
  %v5561 = vld [vmem:[%s1247 + $0x31] sm:$0xff]
  %v5562 = vld [vmem:[%s1247 + $0x39] sm:$0xff]
  %v5563 = vld [vmem:[%s1247 + $0x49] sm:$0xff]
  %v5564 = vld [vmem:[%s1247 + $0x51] sm:$0xff]
  %v5565 = vld [vmem:[%s1247 + $0x61] sm:$0xff]
  %v5566 = vld [vmem:[%s1247 + $0x69] sm:$0xff]
  %v5567 = vld [vmem:[%s1247 + $0x79] sm:$0xff]
  %v5568 = vld [vmem:[%s1247 + $0x81] sm:$0xff]
  %v5569 = vld [vmem:[%s1247 + $0x91] sm:$0xff]
  %v5570 = vld [vmem:[%s1247 + $0x99] sm:$0xff]
  %v5571 = vld [vmem:[%s1247 + $0xa9] sm:$0xff]
  %v5572 = vld [vmem:[%s1247 + $0xb1] sm:$0xff]
  %v5573 = vld [vmem:[%s1247 + $0xc1] sm:$0xff]
  %v5574 = vld [vmem:[%s1247 + $0xc9] sm:$0xff]
  %v5575 = vld [vmem:[%s1247 + $0xd9] sm:$0xff]
  %v5576 = vld [vmem:[%s1247 + $0xe1] sm:$0xff]
  %v5577 = vld [vmem:[%s1247 + $0xf1] sm:$0xff]
  %v5578 = vld [vmem:[%s1247 + $0xf9] sm:$0xff]
  %v5579 = vld [vmem:[%s1247 + $0x109] sm:$0xff]
  %v5580 = vld [vmem:[%s1247 + $0x111] sm:$0xff]
  %v5581 = vld [vmem:[%s1247 + $0x121] sm:$0xff]
  %v5582 = vld [vmem:[%s1247 + $0x129] sm:$0xff]
  %v5583 = vld [vmem:[%s1247 + $0x139] sm:$0xff]
  %v5584 = vld [vmem:[%s1247 + $0x141] sm:$0xff]
  %v5585 = vld [vmem:[%s1247 + $0x151] sm:$0xff]
  %v5586 = vld [vmem:[%s1247 + $0x159] sm:$0xff]
  %v5587 = vld [vmem:[%s1247 + $0x169] sm:$0xff]
  %v5588 = vld [vmem:[%s1247 + $0x171] sm:$0xff]
  %v5589 = vld [vmem:[%s1247 + $0x1b1] sm:$0xff]
  %v5590 = vld [vmem:[%s1247 + $0x1b9] sm:$0xff]
  %v5591 = vld [vmem:[%s1247 + $0x1c9] sm:$0xff]
  %v5592 = vld [vmem:[%s1247 + $0x1d1] sm:$0xff]
  %v5593 = vld [vmem:[%s1247 + $0x1e1] sm:$0xff]
  %v5594 = vld [vmem:[%s1247 + $0x1e9] sm:$0xff]
  %v5595 = vld [vmem:[%s1247 + $0x1f9] sm:$0xff]
  %v5596 = vld [vmem:[%s1247 + $0x201] sm:$0xff]
  %v5597 = vld [vmem:[%s1247 + $0x211] sm:$0xff]
  %v5598 = vld [vmem:[%s1247 + $0x219] sm:$0xff]
  %v5599 = vld [vmem:[%s1247 + $0x229] sm:$0xff]
  %v5600 = vld [vmem:[%s1247 + $0x231] sm:$0xff]
  %v5601 = vld [vmem:[%s1247 + $0x241] sm:$0xff]
  %v5602 = vld [vmem:[%s1247 + $0x249] sm:$0xff]
  %v5603 = vld [vmem:[%s1247 + $0x259] sm:$0xff]
  %v5604 = vld [vmem:[%s1247 + $0x261] sm:$0xff]
  %v5605 = vld [vmem:[%s1247 + $0x271] sm:$0xff]
  %v5606 = vld [vmem:[%s1247 + $0x279] sm:$0xff]
  %v5607 = vld [vmem:[%s1247 + $0x289] sm:$0xff]
  %v5608 = vld [vmem:[%s1247 + $0x291] sm:$0xff]
  %v5609 = vld [vmem:[%s1247 + $0x2a1] sm:$0xff]
  %v5610 = vld [vmem:[%s1247 + $0x2a9] sm:$0xff]
  %v5611 = vld [vmem:[%s1247 + $0x2b9] sm:$0xff]
  %v5612 = vld [vmem:[%s1247 + $0x2c1] sm:$0xff]
  %v5613 = vld [vmem:[%s1247 + $0x2d1] sm:$0xff]
  %v5614 = vld [vmem:[%s1247 + $0x2d9] sm:$0xff]
  %v5615 = vld [vmem:[%s1247 + $0x2e9] sm:$0xff]
  %v5616 = vld [vmem:[%s1247 + $0x2f1] sm:$0xff]
  %v5617 = vld [vmem:[%s1247 + $0x301] sm:$0xff]
  %v5618 = vld [vmem:[%s1247 + $0x309] sm:$0xff]
  %v5619 = vld [vmem:[%s1247 + $0x319] sm:$0xff]
  %v5620 = vld [vmem:[%s1247 + $0x321] sm:$0xff]
  %v5621 = vpack.c.bf16 %v5558, %v5557
  %v5622 = vpack.c.bf16 %v5560, %v5559
  %v5623 = vpack.c.bf16 %v5562, %v5561
  %v5624 = vpack.c.bf16 %v5564, %v5563
  %v5625 = vpack.c.bf16 %v5566, %v5565
  %v5626 = vpack.c.bf16 %v5568, %v5567
  %v5627 = vpack.c.bf16 %v5570, %v5569
  %v5628 = vpack.c.bf16 %v5572, %v5571
  %v5629 = vpack.c.bf16 %v5574, %v5573
  %v5630 = vpack.c.bf16 %v5576, %v5575
  %v5631 = vpack.c.bf16 %v5578, %v5577
  %v5632 = vpack.c.bf16 %v5580, %v5579
  %v5633 = vpack.c.bf16 %v5582, %v5581
  %v5634 = vpack.c.bf16 %v5584, %v5583
  %v5635 = vpack.c.bf16 %v5586, %v5585
  %v5636 = vpack.c.bf16 %v5588, %v5587
  %v5637 = vpack.c.bf16 %v5590, %v5589
  %v5638 = vpack.c.bf16 %v5592, %v5591
  %v5639 = vpack.c.bf16 %v5594, %v5593
  %v5640 = vpack.c.bf16 %v5596, %v5595
  %v5641 = vpack.c.bf16 %v5598, %v5597
  %v5642 = vpack.c.bf16 %v5600, %v5599
  %v5643 = vpack.c.bf16 %v5602, %v5601
  %v5644 = vpack.c.bf16 %v5604, %v5603
  %v5645 = vpack.c.bf16 %v5606, %v5605
  %v5646 = vpack.c.bf16 %v5608, %v5607
  %v5647 = vpack.c.bf16 %v5610, %v5609
  %v5648 = vpack.c.bf16 %v5612, %v5611
  %v5649 = vpack.c.bf16 %v5614, %v5613
  %v5650 = vpack.c.bf16 %v5616, %v5615
  %v5651 = vpack.c.bf16 %v5618, %v5617
  %v5652 = vpack.c.bf16 %v5620, %v5619
  %s5653 = scalar_lea.vmem %s3, 256
  %v5654 = vld [vmem:[%s5653] sm:$0xf]
  %v5655 = vld [vmem:[%s5653 + $0x4] sm:$0xf]
  %v5656 = vld [vmem:[%s5653 + $0x8] sm:$0xf]
  %v5657 = vld [vmem:[%s5653 + $0xc] sm:$0xf]
  %v5658 = vld [vmem:[%s5653 + $0x10] sm:$0xf]
  %v5659 = vld [vmem:[%s5653 + $0x14] sm:$0xf]
  %v5660 = vld [vmem:[%s5653 + $0x18] sm:$0xf]
  %v5661 = vld [vmem:[%s5653 + $0x1c] sm:$0xf]
  %v5662 = vld [vmem:[%s5653 + $0x20] sm:$0xf]
  %v5663 = vld [vmem:[%s5653 + $0x24] sm:$0xf]
  %v5664 = vld [vmem:[%s5653 + $0x28] sm:$0xf]
  %v5665 = vld [vmem:[%s5653 + $0x2c] sm:$0xf]
  %v5666 = vld [vmem:[%s5653 + $0x30] sm:$0xf]
  %v5667 = vld [vmem:[%s5653 + $0x34] sm:$0xf]
  %v5668 = vld [vmem:[%s5653 + $0x38] sm:$0xf]
  %v5669 = vld [vmem:[%s5653 + $0x3c] sm:$0xf]
  %v5686 = vunpack.c.l.b16 %v5654
  %v5687 = vunpack.c.l.b16 %v5655
  %v5688 = vunpack.c.l.b16 %v5656
  %v5689 = vunpack.c.l.b16 %v5657
  %v5690 = vunpack.c.l.b16 %v5658
  %v5691 = vunpack.c.l.b16 %v5659
  %v5692 = vunpack.c.l.b16 %v5660
  %v5693 = vunpack.c.l.b16 %v5661
  %v5694 = vunpack.c.l.b16 %v5662
  %v5695 = vunpack.c.l.b16 %v5663
  %v5696 = vunpack.c.l.b16 %v5664
  %v5697 = vunpack.c.l.b16 %v5665
  %v5698 = vunpack.c.l.b16 %v5666
  %v5699 = vunpack.c.l.b16 %v5667
  %v5700 = vunpack.c.l.b16 %v5668
  %v5701 = vunpack.c.l.b16 %v5669
  %v5702 = vpack.c.b16 %v5687, %v5686
  %v5703 = vpack.c.b16 %v5689, %v5688
  %v5704 = vpack.c.b16 %v5691, %v5690
  %v5705 = vpack.c.b16 %v5693, %v5692
  %v5706 = vpack.c.b16 %v5695, %v5694
  %v5707 = vpack.c.b16 %v5697, %v5696
  %v5708 = vpack.c.b16 %v5699, %v5698
  %v5709 = vpack.c.b16 %v5701, %v5700
  %5718 = vmatprep.subr.bf16.mxu0 0
  %5719 = vmatpush1.bf16.msra.mxu0 %v5702
  %5720 = vmatprep.subr.bf16.mxu0 0
  %5721 = vmatpush1.bf16.msra.mxu0 %v5703
  %5722 = vmatprep.subr.bf16.mxu0 0
  %5723 = vmatpush1.bf16.msra.mxu0 %v5704
  %5724 = vmatprep.subr.bf16.mxu0 0
  %5725 = vmatpush1.bf16.msra.mxu0 %v5705
  %5726 = vmatprep.subr.bf16.mxu0 0
  %5727 = vmatpush1.bf16.msra.mxu0 %v5706
  %5728 = vmatprep.subr.bf16.mxu0 0
  %5729 = vmatpush1.bf16.msra.mxu0 %v5707
  %5730 = vmatprep.subr.bf16.mxu0 0
  %5731 = vmatpush1.bf16.msra.mxu0 %v5708
  %5732 = vmatprep.subr.bf16.mxu0 0
  %5733 = vmatpush1.bf16.msra.mxu0 %v5709
  %5734 = vmatprep.subr.bf16.mxu0 0
  %5735 = vmatpush1.bf16.msra.mxu0 0
  %5736 = vmatprep.subr.bf16.mxu0 0
  %5737 = vmatpush1.bf16.msra.mxu0 0
  %5738 = vmatprep.subr.bf16.mxu0 0
  %5739 = vmatpush1.bf16.msra.mxu0 0
  %5740 = vmatprep.subr.bf16.mxu0 0
  %5741 = vmatpush1.bf16.msra.mxu0 0
  %5742 = vmatprep.subr.bf16.mxu0 0
  %5743 = vmatpush1.bf16.msra.mxu0 0
  %5744 = vmatprep.subr.bf16.mxu0 0
  %5745 = vmatpush1.bf16.msra.mxu0 0
  %5746 = vmatprep.subr.bf16.mxu0 0
  %5747 = vmatpush1.bf16.msra.mxu0 0
  %5748 = vmatprep.subr.bf16.mxu0 0
  %5749 = vmatpush1.bf16.msra.mxu0 0
  %5750 = vmatprep.mubr.bf16.mxu0 0
  %5751 = vmatmul.mubr.bf16.gmra.mrb[0].mxu0 %v5621
  %v5752 = vpop.f32.mrb[0].mxu0
  %v5753 = vadd.f32 0.0, %v5752
  %v5754 = vpop.f32.mrb[0].mxu0
  %v5755 = vpop.f32.mrb[0].mxu0
  %v5756 = vadd.f32 0.0, %v5755
  %v5757 = vpop.f32.mrb[0].mxu0
  %5758 = vmatprep.mubr.bf16.mxu0 0
  %5759 = vmatmul.mubr.bf16.gmra.mrb[0].mxu0 %v5622
  %v5760 = vpop.f32.mrb[0].mxu0
  %v5761 = vadd.f32 0.0, %v5760
  %v5762 = vpop.f32.mrb[0].mxu0
  %v5763 = vpop.f32.mrb[0].mxu0
  %v5764 = vadd.f32 0.0, %v5763
  %v5765 = vpop.f32.mrb[0].mxu0
  %5766 = vmatprep.mubr.bf16.mxu0 0
  %5767 = vmatmul.mubr.bf16.gmra.mrb[0].mxu0 %v5623
  %v5768 = vpop.f32.mrb[0].mxu0
  %v5769 = vadd.f32 0.0, %v5768
  %v5770 = vpop.f32.mrb[0].mxu0
  %v5771 = vpop.f32.mrb[0].mxu0
  %v5772 = vadd.f32 0.0, %v5771
  %v5773 = vpop.f32.mrb[0].mxu0
  %5774 = vmatprep.mubr.bf16.mxu0 0
  %5775 = vmatmul.mubr.bf16.gmra.mrb[0].mxu0 %v5624
  %v5776 = vpop.f32.mrb[0].mxu0
  %v5777 = vadd.f32 0.0, %v5776
  %v5778 = vpop.f32.mrb[0].mxu0
  %v5779 = vpop.f32.mrb[0].mxu0
  %v5780 = vadd.f32 0.0, %v5779
  %v5781 = vpop.f32.mrb[0].mxu0
  %5782 = vmatprep.mubr.bf16.mxu0 0
  %5783 = vmatmul.mubr.bf16.gmra.mrb[0].mxu0 %v5625
  %v5784 = vpop.f32.mrb[0].mxu0
  %v5785 = vadd.f32 0.0, %v5784
  %v5786 = vpop.f32.mrb[0].mxu0
  %v5787 = vpop.f32.mrb[0].mxu0
  %v5788 = vadd.f32 0.0, %v5787
  %v5789 = vpop.f32.mrb[0].mxu0
  %5790 = vmatprep.mubr.bf16.mxu0 0
  %5791 = vmatmul.mubr.bf16.gmra.mrb[0].mxu0 %v5626
  %v5792 = vpop.f32.mrb[0].mxu0
  %v5793 = vadd.f32 0.0, %v5792
  %v5794 = vpop.f32.mrb[0].mxu0
  %v5795 = vpop.f32.mrb[0].mxu0
  %v5796 = vadd.f32 0.0, %v5795
  %v5797 = vpop.f32.mrb[0].mxu0
  %5798 = vmatprep.mubr.bf16.mxu0 0
  %5799 = vmatmul.mubr.bf16.gmra.mrb[0].mxu0 %v5627
  %v5800 = vpop.f32.mrb[0].mxu0
  %v5801 = vadd.f32 0.0, %v5800
  %v5802 = vpop.f32.mrb[0].mxu0
  %v5803 = vpop.f32.mrb[0].mxu0
  %v5804 = vadd.f32 0.0, %v5803
  %v5805 = vpop.f32.mrb[0].mxu0
  %5806 = vmatprep.mubr.bf16.mxu0 0
  %5807 = vmatmul.mubr.bf16.gmra.mrb[0].mxu0 %v5628
  %v5808 = vpop.f32.mrb[0].mxu0
  %v5809 = vadd.f32 0.0, %v5808
  %v5810 = vpop.f32.mrb[0].mxu0
  %v5811 = vpop.f32.mrb[0].mxu0
  %v5812 = vadd.f32 0.0, %v5811
  %v5813 = vpop.f32.mrb[0].mxu0
  %5814 = vmatprep.mubr.bf16.mxu0 0
  %5815 = vmatmul.mubr.bf16.gmra.mrb[0].mxu0 %v5629
  %v5816 = vpop.f32.mrb[0].mxu0
  %v5817 = vadd.f32 0.0, %v5816
  %v5818 = vpop.f32.mrb[0].mxu0
  %v5819 = vpop.f32.mrb[0].mxu0
  %v5820 = vadd.f32 0.0, %v5819
  %v5821 = vpop.f32.mrb[0].mxu0
  %5822 = vmatprep.mubr.bf16.mxu0 0
  %5823 = vmatmul.mubr.bf16.gmra.mrb[0].mxu0 %v5630
  %v5824 = vpop.f32.mrb[0].mxu0
  %v5825 = vadd.f32 0.0, %v5824
  %v5826 = vpop.f32.mrb[0].mxu0
  %v5827 = vpop.f32.mrb[0].mxu0
  %v5828 = vadd.f32 0.0, %v5827
  %v5829 = vpop.f32.mrb[0].mxu0
  %5830 = vmatprep.mubr.bf16.mxu0 0
  %5831 = vmatmul.mubr.bf16.gmra.mrb[0].mxu0 %v5631
  %v5832 = vpop.f32.mrb[0].mxu0
  %v5833 = vadd.f32 0.0, %v5832
  %v5834 = vpop.f32.mrb[0].mxu0
  %v5835 = vpop.f32.mrb[0].mxu0
  %v5836 = vadd.f32 0.0, %v5835
  %v5837 = vpop.f32.mrb[0].mxu0
  %5838 = vmatprep.mubr.bf16.mxu0 0
  %5839 = vmatmul.mubr.bf16.gmra.mrb[0].mxu0 %v5632
  %v5840 = vpop.f32.mrb[0].mxu0
  %v5841 = vadd.f32 0.0, %v5840
  %v5842 = vpop.f32.mrb[0].mxu0
  %v5843 = vpop.f32.mrb[0].mxu0
  %v5844 = vadd.f32 0.0, %v5843
  %v5845 = vpop.f32.mrb[0].mxu0
  %5846 = vmatprep.mubr.bf16.mxu0 0
  %5847 = vmatmul.mubr.bf16.gmra.mrb[0].mxu0 %v5633
  %v5848 = vpop.f32.mrb[0].mxu0
  %v5849 = vadd.f32 0.0, %v5848
  %v5850 = vpop.f32.mrb[0].mxu0
  %v5851 = vpop.f32.mrb[0].mxu0
  %v5852 = vadd.f32 0.0, %v5851
  %v5853 = vpop.f32.mrb[0].mxu0
  %5854 = vmatprep.mubr.bf16.mxu0 0
  %5855 = vmatmul.mubr.bf16.gmra.mrb[0].mxu0 %v5634
  %v5856 = vpop.f32.mrb[0].mxu0
  %v5857 = vadd.f32 0.0, %v5856
  %v5858 = vpop.f32.mrb[0].mxu0
  %v5859 = vpop.f32.mrb[0].mxu0
  %v5860 = vadd.f32 0.0, %v5859
  %v5861 = vpop.f32.mrb[0].mxu0
  %5862 = vmatprep.mubr.bf16.mxu0 0
  %5863 = vmatmul.mubr.bf16.gmra.mrb[0].mxu0 %v5635
  %v5864 = vpop.f32.mrb[0].mxu0
  %v5865 = vadd.f32 0.0, %v5864
  %v5866 = vpop.f32.mrb[0].mxu0
  %v5867 = vpop.f32.mrb[0].mxu0
  %v5868 = vadd.f32 0.0, %v5867
  %v5869 = vpop.f32.mrb[0].mxu0
  %5870 = vmatprep.mubr.bf16.mxu0 0
  %5871 = vmatmul.mubr.bf16.gmra.mrb[0].mxu0 %v5636
  %v5872 = vpop.f32.mrb[0].mxu0
  %v5873 = vadd.f32 0.0, %v5872
  %v5874 = vpop.f32.mrb[0].mxu0
  %v5875 = vpop.f32.mrb[0].mxu0
  %v5876 = vadd.f32 0.0, %v5875
  %v5877 = vpop.f32.mrb[0].mxu0
  %5878 = vmatprep.mubr.bf16.mxu0 0
  %5879 = vmatmul.mubr.bf16.gmra.mrb[0].mxu0 %v5637
  %v5880 = vpop.f32.mrb[0].mxu0
  %v5881 = vadd.f32 0.0, %v5880
  %v5882 = vpop.f32.mrb[0].mxu0
  %v5883 = vpop.f32.mrb[0].mxu0
  %v5884 = vadd.f32 0.0, %v5883
  %v5885 = vpop.f32.mrb[0].mxu0
  %5886 = vmatprep.mubr.bf16.mxu0 0
  %5887 = vmatmul.mubr.bf16.gmra.mrb[0].mxu0 %v5638
  %v5888 = vpop.f32.mrb[0].mxu0
  %v5889 = vadd.f32 0.0, %v5888
  %v5890 = vpop.f32.mrb[0].mxu0
  %v5891 = vpop.f32.mrb[0].mxu0
  %v5892 = vadd.f32 0.0, %v5891
  %v5893 = vpop.f32.mrb[0].mxu0
  %5894 = vmatprep.mubr.bf16.mxu0 0
  %5895 = vmatmul.mubr.bf16.gmra.mrb[0].mxu0 %v5639
  %v5896 = vpop.f32.mrb[0].mxu0
  %v5897 = vadd.f32 0.0, %v5896
  %v5898 = vpop.f32.mrb[0].mxu0
  %v5899 = vpop.f32.mrb[0].mxu0
  %v5900 = vadd.f32 0.0, %v5899
  %v5901 = vpop.f32.mrb[0].mxu0
  %5902 = vmatprep.mubr.bf16.mxu0 0
  %5903 = vmatmul.mubr.bf16.gmra.mrb[0].mxu0 %v5640
  %v5904 = vpop.f32.mrb[0].mxu0
  %v5905 = vadd.f32 0.0, %v5904
  %v5906 = vpop.f32.mrb[0].mxu0
  %v5907 = vpop.f32.mrb[0].mxu0
  %v5908 = vadd.f32 0.0, %v5907
  %v5909 = vpop.f32.mrb[0].mxu0
  %5910 = vmatprep.mubr.bf16.mxu0 0
  %5911 = vmatmul.mubr.bf16.gmra.mrb[0].mxu0 %v5641
  %v5912 = vpop.f32.mrb[0].mxu0
  %v5913 = vadd.f32 0.0, %v5912
  %v5914 = vpop.f32.mrb[0].mxu0
  %v5915 = vpop.f32.mrb[0].mxu0
  %v5916 = vadd.f32 0.0, %v5915
  %v5917 = vpop.f32.mrb[0].mxu0
  %5918 = vmatprep.mubr.bf16.mxu0 0
  %5919 = vmatmul.mubr.bf16.gmra.mrb[0].mxu0 %v5642
  %v5920 = vpop.f32.mrb[0].mxu0
  %v5921 = vadd.f32 0.0, %v5920
  %v5922 = vpop.f32.mrb[0].mxu0
  %v5923 = vpop.f32.mrb[0].mxu0
  %v5924 = vadd.f32 0.0, %v5923
  %v5925 = vpop.f32.mrb[0].mxu0
  %5926 = vmatprep.mubr.bf16.mxu0 0
  %5927 = vmatmul.mubr.bf16.gmra.mrb[0].mxu0 %v5643
  %v5928 = vpop.f32.mrb[0].mxu0
  %v5929 = vadd.f32 0.0, %v5928
  %v5930 = vpop.f32.mrb[0].mxu0
  %v5931 = vpop.f32.mrb[0].mxu0
  %v5932 = vadd.f32 0.0, %v5931
  %v5933 = vpop.f32.mrb[0].mxu0
  %5934 = vmatprep.mubr.bf16.mxu0 0
  %5935 = vmatmul.mubr.bf16.gmra.mrb[0].mxu0 %v5644
  %v5936 = vpop.f32.mrb[0].mxu0
  %v5937 = vadd.f32 0.0, %v5936
  %v5938 = vpop.f32.mrb[0].mxu0
  %v5939 = vpop.f32.mrb[0].mxu0
  %v5940 = vadd.f32 0.0, %v5939
  %v5941 = vpop.f32.mrb[0].mxu0
  %5942 = vmatprep.mubr.bf16.mxu0 0
  %5943 = vmatmul.mubr.bf16.gmra.mrb[0].mxu0 %v5645
  %v5944 = vpop.f32.mrb[0].mxu0
  %v5945 = vadd.f32 0.0, %v5944
  %v5946 = vpop.f32.mrb[0].mxu0
  %v5947 = vpop.f32.mrb[0].mxu0
  %v5948 = vadd.f32 0.0, %v5947
  %v5949 = vpop.f32.mrb[0].mxu0
  %5950 = vmatprep.mubr.bf16.mxu0 0
  %5951 = vmatmul.mubr.bf16.gmra.mrb[0].mxu0 %v5646
  %v5952 = vpop.f32.mrb[0].mxu0
  %v5953 = vadd.f32 0.0, %v5952
  %v5954 = vpop.f32.mrb[0].mxu0
  %v5955 = vpop.f32.mrb[0].mxu0
  %v5956 = vadd.f32 0.0, %v5955
  %v5957 = vpop.f32.mrb[0].mxu0
  %5958 = vmatprep.mubr.bf16.mxu0 0
  %5959 = vmatmul.mubr.bf16.gmra.mrb[0].mxu0 %v5647
  %v5960 = vpop.f32.mrb[0].mxu0
  %v5961 = vadd.f32 0.0, %v5960
  %v5962 = vpop.f32.mrb[0].mxu0
  %v5963 = vpop.f32.mrb[0].mxu0
  %v5964 = vadd.f32 0.0, %v5963
  %v5965 = vpop.f32.mrb[0].mxu0
  %5966 = vmatprep.mubr.bf16.mxu0 0
  %5967 = vmatmul.mubr.bf16.gmra.mrb[0].mxu0 %v5648
  %v5968 = vpop.f32.mrb[0].mxu0
  %v5969 = vadd.f32 0.0, %v5968
  %v5970 = vpop.f32.mrb[0].mxu0
  %v5971 = vpop.f32.mrb[0].mxu0
  %v5972 = vadd.f32 0.0, %v5971
  %v5973 = vpop.f32.mrb[0].mxu0
  %5974 = vmatprep.mubr.bf16.mxu0 0
  %5975 = vmatmul.mubr.bf16.gmra.mrb[0].mxu0 %v5649
  %v5976 = vpop.f32.mrb[0].mxu0
  %v5977 = vadd.f32 0.0, %v5976
  %v5978 = vpop.f32.mrb[0].mxu0
  %v5979 = vpop.f32.mrb[0].mxu0
  %v5980 = vadd.f32 0.0, %v5979
  %v5981 = vpop.f32.mrb[0].mxu0
  %5982 = vmatprep.mubr.bf16.mxu0 0
  %5983 = vmatmul.mubr.bf16.gmra.mrb[0].mxu0 %v5650
  %v5984 = vpop.f32.mrb[0].mxu0
  %v5985 = vadd.f32 0.0, %v5984
  %v5986 = vpop.f32.mrb[0].mxu0
  %v5987 = vpop.f32.mrb[0].mxu0
  %v5988 = vadd.f32 0.0, %v5987
  %v5989 = vpop.f32.mrb[0].mxu0
  %5990 = vmatprep.mubr.bf16.mxu0 0
  %5991 = vmatmul.mubr.bf16.gmra.mrb[0].mxu0 %v5651
  %v5992 = vpop.f32.mrb[0].mxu0
  %v5993 = vadd.f32 0.0, %v5992
  %v5994 = vpop.f32.mrb[0].mxu0
  %v5995 = vpop.f32.mrb[0].mxu0
  %v5996 = vadd.f32 0.0, %v5995
  %v5997 = vpop.f32.mrb[0].mxu0
  %5998 = vmatprep.mubr.bf16.mxu0 0
  %5999 = vmatmul.mubr.bf16.gmra.mrb[0].mxu0 %v5652
  %v6000 = vpop.f32.mrb[0].mxu0
  %v6001 = vadd.f32 0.0, %v6000
  %v6002 = vpop.f32.mrb[0].mxu0
  %v6003 = vpop.f32.mrb[0].mxu0
  %v6004 = vadd.f32 0.0, %v6003
  %v6005 = vpop.f32.mrb[0].mxu0
  %6006 = vdwg.mxu0
  %v6007 = vadd.f32 %v5493, %v5753
  %v6008 = vadd.f32 %v5494, %v5756
  %v6009 = vadd.f32 %v5495, %v5761
  %v6010 = vadd.f32 %v5496, %v5764
  %v6011 = vadd.f32 %v5497, %v5769
  %v6012 = vadd.f32 %v5498, %v5772
  %v6013 = vadd.f32 %v5499, %v5777
  %v6014 = vadd.f32 %v5500, %v5780
  %v6015 = vadd.f32 %v5501, %v5785
  %v6016 = vadd.f32 %v5502, %v5788
  %v6017 = vadd.f32 %v5503, %v5793
  %v6018 = vadd.f32 %v5504, %v5796
  %v6019 = vadd.f32 %v5505, %v5801
  %v6020 = vadd.f32 %v5506, %v5804
  %v6021 = vadd.f32 %v5507, %v5809
  %v6022 = vadd.f32 %v5508, %v5812
  %v6023 = vadd.f32 %v5509, %v5817
  %v6024 = vadd.f32 %v5510, %v5820
  %v6025 = vadd.f32 %v5511, %v5825
  %v6026 = vadd.f32 %v5512, %v5828
  %v6027 = vadd.f32 %v5513, %v5833
  %v6028 = vadd.f32 %v5514, %v5836
  %v6029 = vadd.f32 %v5515, %v5841
  %v6030 = vadd.f32 %v5516, %v5844
  %v6031 = vadd.f32 %v5517, %v5849
  %v6032 = vadd.f32 %v5518, %v5852
  %v6033 = vadd.f32 %v5519, %v5857
  %v6034 = vadd.f32 %v5520, %v5860
  %v6035 = vadd.f32 %v5521, %v5865
  %v6036 = vadd.f32 %v5522, %v5868
  %v6037 = vadd.f32 %v5523, %v5873
  %v6038 = vadd.f32 %v5524, %v5876
  %v6039 = vadd.f32 %v5525, %v5881
  %v6040 = vadd.f32 %v5526, %v5884
  %v6041 = vadd.f32 %v5527, %v5889
  %v6042 = vadd.f32 %v5528, %v5892
  %v6043 = vadd.f32 %v5529, %v5897
  %v6044 = vadd.f32 %v5530, %v5900
  %v6045 = vadd.f32 %v5531, %v5905
  %v6046 = vadd.f32 %v5532, %v5908
  %v6047 = vadd.f32 %v5533, %v5913
  %v6048 = vadd.f32 %v5534, %v5916
  %v6049 = vadd.f32 %v5535, %v5921
  %v6050 = vadd.f32 %v5536, %v5924
  %v6051 = vadd.f32 %v5537, %v5929
  %v6052 = vadd.f32 %v5538, %v5932
  %v6053 = vadd.f32 %v5539, %v5937
  %v6054 = vadd.f32 %v5540, %v5940
  %v6055 = vadd.f32 %v5541, %v5945
  %v6056 = vadd.f32 %v5542, %v5948
  %v6057 = vadd.f32 %v5543, %v5953
  %v6058 = vadd.f32 %v5544, %v5956
  %v6059 = vadd.f32 %v5545, %v5961
  %v6060 = vadd.f32 %v5546, %v5964
  %v6061 = vadd.f32 %v5547, %v5969
  %v6062 = vadd.f32 %v5548, %v5972
  %v6063 = vadd.f32 %v5549, %v5977
  %v6064 = vadd.f32 %v5550, %v5980
  %v6065 = vadd.f32 %v5551, %v5985
  %v6066 = vadd.f32 %v5552, %v5988
  %v6067 = vadd.f32 %v5553, %v5993
  %v6068 = vadd.f32 %v5554, %v5996
  %v6069 = vadd.f32 %v5555, %v6001
  %v6070 = vadd.f32 %v5556, %v6004
  %v6071 = vld [vmem:[%s1247 + $0x2] sm:$0xff]
  %v6072 = vld [vmem:[%s1247 + $0xa] sm:$0xff]
  %v6073 = vld [vmem:[%s1247 + $0x1a] sm:$0xff]
  %v6074 = vld [vmem:[%s1247 + $0x22] sm:$0xff]
  %v6075 = vld [vmem:[%s1247 + $0x32] sm:$0xff]
  %v6076 = vld [vmem:[%s1247 + $0x3a] sm:$0xff]
  %v6077 = vld [vmem:[%s1247 + $0x4a] sm:$0xff]
  %v6078 = vld [vmem:[%s1247 + $0x52] sm:$0xff]
  %v6079 = vld [vmem:[%s1247 + $0x62] sm:$0xff]
  %v6080 = vld [vmem:[%s1247 + $0x6a] sm:$0xff]
  %v6081 = vld [vmem:[%s1247 + $0x7a] sm:$0xff]
  %v6082 = vld [vmem:[%s1247 + $0x82] sm:$0xff]
  %v6083 = vld [vmem:[%s1247 + $0x92] sm:$0xff]
  %v6084 = vld [vmem:[%s1247 + $0x9a] sm:$0xff]
  %v6085 = vld [vmem:[%s1247 + $0xaa] sm:$0xff]
  %v6086 = vld [vmem:[%s1247 + $0xb2] sm:$0xff]
  %v6087 = vld [vmem:[%s1247 + $0xc2] sm:$0xff]
  %v6088 = vld [vmem:[%s1247 + $0xca] sm:$0xff]
  %v6089 = vld [vmem:[%s1247 + $0xda] sm:$0xff]
  %v6090 = vld [vmem:[%s1247 + $0xe2] sm:$0xff]
  %v6091 = vld [vmem:[%s1247 + $0xf2] sm:$0xff]
  %v6092 = vld [vmem:[%s1247 + $0xfa] sm:$0xff]
  %v6093 = vld [vmem:[%s1247 + $0x10a] sm:$0xff]
  %v6094 = vld [vmem:[%s1247 + $0x112] sm:$0xff]
  %v6095 = vld [vmem:[%s1247 + $0x122] sm:$0xff]
  %v6096 = vld [vmem:[%s1247 + $0x12a] sm:$0xff]
  %v6097 = vld [vmem:[%s1247 + $0x13a] sm:$0xff]
  %v6098 = vld [vmem:[%s1247 + $0x142] sm:$0xff]
  %v6099 = vld [vmem:[%s1247 + $0x152] sm:$0xff]
  %v6100 = vld [vmem:[%s1247 + $0x15a] sm:$0xff]
  %v6101 = vld [vmem:[%s1247 + $0x16a] sm:$0xff]
  %v6102 = vld [vmem:[%s1247 + $0x172] sm:$0xff]
  %v6103 = vld [vmem:[%s1247 + $0x1b2] sm:$0xff]
  %v6104 = vld [vmem:[%s1247 + $0x1ba] sm:$0xff]
  %v6105 = vld [vmem:[%s1247 + $0x1ca] sm:$0xff]
  %v6106 = vld [vmem:[%s1247 + $0x1d2] sm:$0xff]
  %v6107 = vld [vmem:[%s1247 + $0x1e2] sm:$0xff]
  %v6108 = vld [vmem:[%s1247 + $0x1ea] sm:$0xff]
  %v6109 = vld [vmem:[%s1247 + $0x1fa] sm:$0xff]
  %v6110 = vld [vmem:[%s1247 + $0x202] sm:$0xff]
  %v6111 = vld [vmem:[%s1247 + $0x212] sm:$0xff]
  %v6112 = vld [vmem:[%s1247 + $0x21a] sm:$0xff]
  %v6113 = vld [vmem:[%s1247 + $0x22a] sm:$0xff]
  %v6114 = vld [vmem:[%s1247 + $0x232] sm:$0xff]
  %v6115 = vld [vmem:[%s1247 + $0x242] sm:$0xff]
  %v6116 = vld [vmem:[%s1247 + $0x24a] sm:$0xff]
  %v6117 = vld [vmem:[%s1247 + $0x25a] sm:$0xff]
  %v6118 = vld [vmem:[%s1247 + $0x262] sm:$0xff]
  %v6119 = vld [vmem:[%s1247 + $0x272] sm:$0xff]
  %v6120 = vld [vmem:[%s1247 + $0x27a] sm:$0xff]
  %v6121 = vld [vmem:[%s1247 + $0x28a] sm:$0xff]
  %v6122 = vld [vmem:[%s1247 + $0x292] sm:$0xff]
  %v6123 = vld [vmem:[%s1247 + $0x2a2] sm:$0xff]
  %v6124 = vld [vmem:[%s1247 + $0x2aa] sm:$0xff]
  %v6125 = vld [vmem:[%s1247 + $0x2ba] sm:$0xff]
  %v6126 = vld [vmem:[%s1247 + $0x2c2] sm:$0xff]
  %v6127 = vld [vmem:[%s1247 + $0x2d2] sm:$0xff]
  %v6128 = vld [vmem:[%s1247 + $0x2da] sm:$0xff]
  %v6129 = vld [vmem:[%s1247 + $0x2ea] sm:$0xff]
  %v6130 = vld [vmem:[%s1247 + $0x2f2] sm:$0xff]
  %v6131 = vld [vmem:[%s1247 + $0x302] sm:$0xff]
  %v6132 = vld [vmem:[%s1247 + $0x30a] sm:$0xff]
  %v6133 = vld [vmem:[%s1247 + $0x31a] sm:$0xff]
  %v6134 = vld [vmem:[%s1247 + $0x322] sm:$0xff]
  %v6135 = vpack.c.bf16 %v6072, %v6071
  %v6136 = vpack.c.bf16 %v6074, %v6073
  %v6137 = vpack.c.bf16 %v6076, %v6075
  %v6138 = vpack.c.bf16 %v6078, %v6077
  %v6139 = vpack.c.bf16 %v6080, %v6079
  %v6140 = vpack.c.bf16 %v6082, %v6081
  %v6141 = vpack.c.bf16 %v6084, %v6083
  %v6142 = vpack.c.bf16 %v6086, %v6085
  %v6143 = vpack.c.bf16 %v6088, %v6087
  %v6144 = vpack.c.bf16 %v6090, %v6089
  %v6145 = vpack.c.bf16 %v6092, %v6091
  %v6146 = vpack.c.bf16 %v6094, %v6093
  %v6147 = vpack.c.bf16 %v6096, %v6095
  %v6148 = vpack.c.bf16 %v6098, %v6097
  %v6149 = vpack.c.bf16 %v6100, %v6099
  %v6150 = vpack.c.bf16 %v6102, %v6101
  %v6151 = vpack.c.bf16 %v6104, %v6103
  %v6152 = vpack.c.bf16 %v6106, %v6105
  %v6153 = vpack.c.bf16 %v6108, %v6107
  %v6154 = vpack.c.bf16 %v6110, %v6109
  %v6155 = vpack.c.bf16 %v6112, %v6111
  %v6156 = vpack.c.bf16 %v6114, %v6113
  %v6157 = vpack.c.bf16 %v6116, %v6115
  %v6158 = vpack.c.bf16 %v6118, %v6117
  %v6159 = vpack.c.bf16 %v6120, %v6119
  %v6160 = vpack.c.bf16 %v6122, %v6121
  %v6161 = vpack.c.bf16 %v6124, %v6123
  %v6162 = vpack.c.bf16 %v6126, %v6125
  %v6163 = vpack.c.bf16 %v6128, %v6127
  %v6164 = vpack.c.bf16 %v6130, %v6129
  %v6165 = vpack.c.bf16 %v6132, %v6131
  %v6166 = vpack.c.bf16 %v6134, %v6133
  %s6167 = scalar_lea.vmem %s3, 320
  %v6168 = vld [vmem:[%s6167] sm:$0xf]
  %v6169 = vld [vmem:[%s6167 + $0x4] sm:$0xf]
  %v6170 = vld [vmem:[%s6167 + $0x8] sm:$0xf]
  %v6171 = vld [vmem:[%s6167 + $0xc] sm:$0xf]
  %v6172 = vld [vmem:[%s6167 + $0x10] sm:$0xf]
  %v6173 = vld [vmem:[%s6167 + $0x14] sm:$0xf]
  %v6174 = vld [vmem:[%s6167 + $0x18] sm:$0xf]
  %v6175 = vld [vmem:[%s6167 + $0x1c] sm:$0xf]
  %v6176 = vld [vmem:[%s6167 + $0x20] sm:$0xf]
  %v6177 = vld [vmem:[%s6167 + $0x24] sm:$0xf]
  %v6178 = vld [vmem:[%s6167 + $0x28] sm:$0xf]
  %v6179 = vld [vmem:[%s6167 + $0x2c] sm:$0xf]
  %v6180 = vld [vmem:[%s6167 + $0x30] sm:$0xf]
  %v6181 = vld [vmem:[%s6167 + $0x34] sm:$0xf]
  %v6182 = vld [vmem:[%s6167 + $0x38] sm:$0xf]
  %v6183 = vld [vmem:[%s6167 + $0x3c] sm:$0xf]
  %v6200 = vunpack.c.l.b16 %v6168
  %v6201 = vunpack.c.l.b16 %v6169
  %v6202 = vunpack.c.l.b16 %v6170
  %v6203 = vunpack.c.l.b16 %v6171
  %v6204 = vunpack.c.l.b16 %v6172
  %v6205 = vunpack.c.l.b16 %v6173
  %v6206 = vunpack.c.l.b16 %v6174
  %v6207 = vunpack.c.l.b16 %v6175
  %v6208 = vunpack.c.l.b16 %v6176
  %v6209 = vunpack.c.l.b16 %v6177
  %v6210 = vunpack.c.l.b16 %v6178
  %v6211 = vunpack.c.l.b16 %v6179
  %v6212 = vunpack.c.l.b16 %v6180
  %v6213 = vunpack.c.l.b16 %v6181
  %v6214 = vunpack.c.l.b16 %v6182
  %v6215 = vunpack.c.l.b16 %v6183
  %v6216 = vpack.c.b16 %v6201, %v6200
  %v6217 = vpack.c.b16 %v6203, %v6202
  %v6218 = vpack.c.b16 %v6205, %v6204
  %v6219 = vpack.c.b16 %v6207, %v6206
  %v6220 = vpack.c.b16 %v6209, %v6208
  %v6221 = vpack.c.b16 %v6211, %v6210
  %v6222 = vpack.c.b16 %v6213, %v6212
  %v6223 = vpack.c.b16 %v6215, %v6214
  %6232 = vmatprep.subr.bf16.mxu0 0
  %6233 = vmatpush1.bf16.msra.mxu0 %v6216
  %6234 = vmatprep.subr.bf16.mxu0 0
  %6235 = vmatpush1.bf16.msra.mxu0 %v6217
  %6236 = vmatprep.subr.bf16.mxu0 0
  %6237 = vmatpush1.bf16.msra.mxu0 %v6218
  %6238 = vmatprep.subr.bf16.mxu0 0
  %6239 = vmatpush1.bf16.msra.mxu0 %v6219
  %6240 = vmatprep.subr.bf16.mxu0 0
  %6241 = vmatpush1.bf16.msra.mxu0 %v6220
  %6242 = vmatprep.subr.bf16.mxu0 0
  %6243 = vmatpush1.bf16.msra.mxu0 %v6221
  %6244 = vmatprep.subr.bf16.mxu0 0
  %6245 = vmatpush1.bf16.msra.mxu0 %v6222
  %6246 = vmatprep.subr.bf16.mxu0 0
  %6247 = vmatpush1.bf16.msra.mxu0 %v6223
  %6248 = vmatprep.subr.bf16.mxu0 0
  %6249 = vmatpush1.bf16.msra.mxu0 0
  %6250 = vmatprep.subr.bf16.mxu0 0
  %6251 = vmatpush1.bf16.msra.mxu0 0
  %6252 = vmatprep.subr.bf16.mxu0 0
  %6253 = vmatpush1.bf16.msra.mxu0 0
  %6254 = vmatprep.subr.bf16.mxu0 0
  %6255 = vmatpush1.bf16.msra.mxu0 0
  %6256 = vmatprep.subr.bf16.mxu0 0
  %6257 = vmatpush1.bf16.msra.mxu0 0
  %6258 = vmatprep.subr.bf16.mxu0 0
  %6259 = vmatpush1.bf16.msra.mxu0 0
  %6260 = vmatprep.subr.bf16.mxu0 0
  %6261 = vmatpush1.bf16.msra.mxu0 0
  %6262 = vmatprep.subr.bf16.mxu0 0
  %6263 = vmatpush1.bf16.msra.mxu0 0
  %6264 = vmatprep.mubr.bf16.mxu0 0
  %6265 = vmatmul.mubr.bf16.gmra.mrb[0].mxu0 %v6135
  %v6266 = vpop.f32.mrb[0].mxu0
  %v6267 = vadd.f32 0.0, %v6266
  %v6268 = vpop.f32.mrb[0].mxu0
  %v6269 = vpop.f32.mrb[0].mxu0
  %v6270 = vadd.f32 0.0, %v6269
  %v6271 = vpop.f32.mrb[0].mxu0
  %6272 = vmatprep.mubr.bf16.mxu0 0
  %6273 = vmatmul.mubr.bf16.gmra.mrb[0].mxu0 %v6136
  %v6274 = vpop.f32.mrb[0].mxu0
  %v6275 = vadd.f32 0.0, %v6274
  %v6276 = vpop.f32.mrb[0].mxu0
  %v6277 = vpop.f32.mrb[0].mxu0
  %v6278 = vadd.f32 0.0, %v6277
  %v6279 = vpop.f32.mrb[0].mxu0
  %6280 = vmatprep.mubr.bf16.mxu0 0
  %6281 = vmatmul.mubr.bf16.gmra.mrb[0].mxu0 %v6137
  %v6282 = vpop.f32.mrb[0].mxu0
  %v6283 = vadd.f32 0.0, %v6282
  %v6284 = vpop.f32.mrb[0].mxu0
  %v6285 = vpop.f32.mrb[0].mxu0
  %v6286 = vadd.f32 0.0, %v6285
  %v6287 = vpop.f32.mrb[0].mxu0
  %6288 = vmatprep.mubr.bf16.mxu0 0
  %6289 = vmatmul.mubr.bf16.gmra.mrb[0].mxu0 %v6138
  %v6290 = vpop.f32.mrb[0].mxu0
  %v6291 = vadd.f32 0.0, %v6290
  %v6292 = vpop.f32.mrb[0].mxu0
  %v6293 = vpop.f32.mrb[0].mxu0
  %v6294 = vadd.f32 0.0, %v6293
  %v6295 = vpop.f32.mrb[0].mxu0
  %6296 = vmatprep.mubr.bf16.mxu0 0
  %6297 = vmatmul.mubr.bf16.gmra.mrb[0].mxu0 %v6139
  %v6298 = vpop.f32.mrb[0].mxu0
  %v6299 = vadd.f32 0.0, %v6298
  %v6300 = vpop.f32.mrb[0].mxu0
  %v6301 = vpop.f32.mrb[0].mxu0
  %v6302 = vadd.f32 0.0, %v6301
  %v6303 = vpop.f32.mrb[0].mxu0
  %6304 = vmatprep.mubr.bf16.mxu0 0
  %6305 = vmatmul.mubr.bf16.gmra.mrb[0].mxu0 %v6140
  %v6306 = vpop.f32.mrb[0].mxu0
  %v6307 = vadd.f32 0.0, %v6306
  %v6308 = vpop.f32.mrb[0].mxu0
  %v6309 = vpop.f32.mrb[0].mxu0
  %v6310 = vadd.f32 0.0, %v6309
  %v6311 = vpop.f32.mrb[0].mxu0
  %6312 = vmatprep.mubr.bf16.mxu0 0
  %6313 = vmatmul.mubr.bf16.gmra.mrb[0].mxu0 %v6141
  %v6314 = vpop.f32.mrb[0].mxu0
  %v6315 = vadd.f32 0.0, %v6314
  %v6316 = vpop.f32.mrb[0].mxu0
  %v6317 = vpop.f32.mrb[0].mxu0
  %v6318 = vadd.f32 0.0, %v6317
  %v6319 = vpop.f32.mrb[0].mxu0
  %6320 = vmatprep.mubr.bf16.mxu0 0
  %6321 = vmatmul.mubr.bf16.gmra.mrb[0].mxu0 %v6142
  %v6322 = vpop.f32.mrb[0].mxu0
  %v6323 = vadd.f32 0.0, %v6322
  %v6324 = vpop.f32.mrb[0].mxu0
  %v6325 = vpop.f32.mrb[0].mxu0
  %v6326 = vadd.f32 0.0, %v6325
  %v6327 = vpop.f32.mrb[0].mxu0
  %6328 = vmatprep.mubr.bf16.mxu0 0
  %6329 = vmatmul.mubr.bf16.gmra.mrb[0].mxu0 %v6143
  %v6330 = vpop.f32.mrb[0].mxu0
  %v6331 = vadd.f32 0.0, %v6330
  %v6332 = vpop.f32.mrb[0].mxu0
  %v6333 = vpop.f32.mrb[0].mxu0
  %v6334 = vadd.f32 0.0, %v6333
  %v6335 = vpop.f32.mrb[0].mxu0
  %6336 = vmatprep.mubr.bf16.mxu0 0
  %6337 = vmatmul.mubr.bf16.gmra.mrb[0].mxu0 %v6144
  %v6338 = vpop.f32.mrb[0].mxu0
  %v6339 = vadd.f32 0.0, %v6338
  %v6340 = vpop.f32.mrb[0].mxu0
  %v6341 = vpop.f32.mrb[0].mxu0
  %v6342 = vadd.f32 0.0, %v6341
  %v6343 = vpop.f32.mrb[0].mxu0
  %6344 = vmatprep.mubr.bf16.mxu0 0
  %6345 = vmatmul.mubr.bf16.gmra.mrb[0].mxu0 %v6145
  %v6346 = vpop.f32.mrb[0].mxu0
  %v6347 = vadd.f32 0.0, %v6346
  %v6348 = vpop.f32.mrb[0].mxu0
  %v6349 = vpop.f32.mrb[0].mxu0
  %v6350 = vadd.f32 0.0, %v6349
  %v6351 = vpop.f32.mrb[0].mxu0
  %6352 = vmatprep.mubr.bf16.mxu0 0
  %6353 = vmatmul.mubr.bf16.gmra.mrb[0].mxu0 %v6146
  %v6354 = vpop.f32.mrb[0].mxu0
  %v6355 = vadd.f32 0.0, %v6354
  %v6356 = vpop.f32.mrb[0].mxu0
  %v6357 = vpop.f32.mrb[0].mxu0
  %v6358 = vadd.f32 0.0, %v6357
  %v6359 = vpop.f32.mrb[0].mxu0
  %6360 = vmatprep.mubr.bf16.mxu0 0
  %6361 = vmatmul.mubr.bf16.gmra.mrb[0].mxu0 %v6147
  %v6362 = vpop.f32.mrb[0].mxu0
  %v6363 = vadd.f32 0.0, %v6362
  %v6364 = vpop.f32.mrb[0].mxu0
  %v6365 = vpop.f32.mrb[0].mxu0
  %v6366 = vadd.f32 0.0, %v6365
  %v6367 = vpop.f32.mrb[0].mxu0
  %6368 = vmatprep.mubr.bf16.mxu0 0
  %6369 = vmatmul.mubr.bf16.gmra.mrb[0].mxu0 %v6148
  %v6370 = vpop.f32.mrb[0].mxu0
  %v6371 = vadd.f32 0.0, %v6370
  %v6372 = vpop.f32.mrb[0].mxu0
  %v6373 = vpop.f32.mrb[0].mxu0
  %v6374 = vadd.f32 0.0, %v6373
  %v6375 = vpop.f32.mrb[0].mxu0
  %6376 = vmatprep.mubr.bf16.mxu0 0
  %6377 = vmatmul.mubr.bf16.gmra.mrb[0].mxu0 %v6149
  %v6378 = vpop.f32.mrb[0].mxu0
  %v6379 = vadd.f32 0.0, %v6378
  %v6380 = vpop.f32.mrb[0].mxu0
  %v6381 = vpop.f32.mrb[0].mxu0
  %v6382 = vadd.f32 0.0, %v6381
  %v6383 = vpop.f32.mrb[0].mxu0
  %6384 = vmatprep.mubr.bf16.mxu0 0
  %6385 = vmatmul.mubr.bf16.gmra.mrb[0].mxu0 %v6150
  %v6386 = vpop.f32.mrb[0].mxu0
  %v6387 = vadd.f32 0.0, %v6386
  %v6388 = vpop.f32.mrb[0].mxu0
  %v6389 = vpop.f32.mrb[0].mxu0
  %v6390 = vadd.f32 0.0, %v6389
  %v6391 = vpop.f32.mrb[0].mxu0
  %6392 = vmatprep.mubr.bf16.mxu0 0
  %6393 = vmatmul.mubr.bf16.gmra.mrb[0].mxu0 %v6151
  %v6394 = vpop.f32.mrb[0].mxu0
  %v6395 = vadd.f32 0.0, %v6394
  %v6396 = vpop.f32.mrb[0].mxu0
  %v6397 = vpop.f32.mrb[0].mxu0
  %v6398 = vadd.f32 0.0, %v6397
  %v6399 = vpop.f32.mrb[0].mxu0
  %6400 = vmatprep.mubr.bf16.mxu0 0
  %6401 = vmatmul.mubr.bf16.gmra.mrb[0].mxu0 %v6152
  %v6402 = vpop.f32.mrb[0].mxu0
  %v6403 = vadd.f32 0.0, %v6402
  %v6404 = vpop.f32.mrb[0].mxu0
  %v6405 = vpop.f32.mrb[0].mxu0
  %v6406 = vadd.f32 0.0, %v6405
  %v6407 = vpop.f32.mrb[0].mxu0
  %6408 = vmatprep.mubr.bf16.mxu0 0
  %6409 = vmatmul.mubr.bf16.gmra.mrb[0].mxu0 %v6153
  %v6410 = vpop.f32.mrb[0].mxu0
  %v6411 = vadd.f32 0.0, %v6410
  %v6412 = vpop.f32.mrb[0].mxu0
  %v6413 = vpop.f32.mrb[0].mxu0
  %v6414 = vadd.f32 0.0, %v6413
  %v6415 = vpop.f32.mrb[0].mxu0
  %6416 = vmatprep.mubr.bf16.mxu0 0
  %6417 = vmatmul.mubr.bf16.gmra.mrb[0].mxu0 %v6154
  %v6418 = vpop.f32.mrb[0].mxu0
  %v6419 = vadd.f32 0.0, %v6418
  %v6420 = vpop.f32.mrb[0].mxu0
  %v6421 = vpop.f32.mrb[0].mxu0
  %v6422 = vadd.f32 0.0, %v6421
  %v6423 = vpop.f32.mrb[0].mxu0
  %6424 = vmatprep.mubr.bf16.mxu0 0
  %6425 = vmatmul.mubr.bf16.gmra.mrb[0].mxu0 %v6155
  %v6426 = vpop.f32.mrb[0].mxu0
  %v6427 = vadd.f32 0.0, %v6426
  %v6428 = vpop.f32.mrb[0].mxu0
  %v6429 = vpop.f32.mrb[0].mxu0
  %v6430 = vadd.f32 0.0, %v6429
  %v6431 = vpop.f32.mrb[0].mxu0
  %6432 = vmatprep.mubr.bf16.mxu0 0
  %6433 = vmatmul.mubr.bf16.gmra.mrb[0].mxu0 %v6156
  %v6434 = vpop.f32.mrb[0].mxu0
  %v6435 = vadd.f32 0.0, %v6434
  %v6436 = vpop.f32.mrb[0].mxu0
  %v6437 = vpop.f32.mrb[0].mxu0
  %v6438 = vadd.f32 0.0, %v6437
  %v6439 = vpop.f32.mrb[0].mxu0
  %6440 = vmatprep.mubr.bf16.mxu0 0
  %6441 = vmatmul.mubr.bf16.gmra.mrb[0].mxu0 %v6157
  %v6442 = vpop.f32.mrb[0].mxu0
  %v6443 = vadd.f32 0.0, %v6442
  %v6444 = vpop.f32.mrb[0].mxu0
  %v6445 = vpop.f32.mrb[0].mxu0
  %v6446 = vadd.f32 0.0, %v6445
  %v6447 = vpop.f32.mrb[0].mxu0
  %6448 = vmatprep.mubr.bf16.mxu0 0
  %6449 = vmatmul.mubr.bf16.gmra.mrb[0].mxu0 %v6158
  %v6450 = vpop.f32.mrb[0].mxu0
  %v6451 = vadd.f32 0.0, %v6450
  %v6452 = vpop.f32.mrb[0].mxu0
  %v6453 = vpop.f32.mrb[0].mxu0
  %v6454 = vadd.f32 0.0, %v6453
  %v6455 = vpop.f32.mrb[0].mxu0
  %6456 = vmatprep.mubr.bf16.mxu0 0
  %6457 = vmatmul.mubr.bf16.gmra.mrb[0].mxu0 %v6159
  %v6458 = vpop.f32.mrb[0].mxu0
  %v6459 = vadd.f32 0.0, %v6458
  %v6460 = vpop.f32.mrb[0].mxu0
  %v6461 = vpop.f32.mrb[0].mxu0
  %v6462 = vadd.f32 0.0, %v6461
  %v6463 = vpop.f32.mrb[0].mxu0
  %6464 = vmatprep.mubr.bf16.mxu0 0
  %6465 = vmatmul.mubr.bf16.gmra.mrb[0].mxu0 %v6160
  %v6466 = vpop.f32.mrb[0].mxu0
  %v6467 = vadd.f32 0.0, %v6466
  %v6468 = vpop.f32.mrb[0].mxu0
  %v6469 = vpop.f32.mrb[0].mxu0
  %v6470 = vadd.f32 0.0, %v6469
  %v6471 = vpop.f32.mrb[0].mxu0
  %6472 = vmatprep.mubr.bf16.mxu0 0
  %6473 = vmatmul.mubr.bf16.gmra.mrb[0].mxu0 %v6161
  %v6474 = vpop.f32.mrb[0].mxu0
  %v6475 = vadd.f32 0.0, %v6474
  %v6476 = vpop.f32.mrb[0].mxu0
  %v6477 = vpop.f32.mrb[0].mxu0
  %v6478 = vadd.f32 0.0, %v6477
  %v6479 = vpop.f32.mrb[0].mxu0
  %6480 = vmatprep.mubr.bf16.mxu0 0
  %6481 = vmatmul.mubr.bf16.gmra.mrb[0].mxu0 %v6162
  %v6482 = vpop.f32.mrb[0].mxu0
  %v6483 = vadd.f32 0.0, %v6482
  %v6484 = vpop.f32.mrb[0].mxu0
  %v6485 = vpop.f32.mrb[0].mxu0
  %v6486 = vadd.f32 0.0, %v6485
  %v6487 = vpop.f32.mrb[0].mxu0
  %6488 = vmatprep.mubr.bf16.mxu0 0
  %6489 = vmatmul.mubr.bf16.gmra.mrb[0].mxu0 %v6163
  %v6490 = vpop.f32.mrb[0].mxu0
  %v6491 = vadd.f32 0.0, %v6490
  %v6492 = vpop.f32.mrb[0].mxu0
  %v6493 = vpop.f32.mrb[0].mxu0
  %v6494 = vadd.f32 0.0, %v6493
  %v6495 = vpop.f32.mrb[0].mxu0
  %6496 = vmatprep.mubr.bf16.mxu0 0
  %6497 = vmatmul.mubr.bf16.gmra.mrb[0].mxu0 %v6164
  %v6498 = vpop.f32.mrb[0].mxu0
  %v6499 = vadd.f32 0.0, %v6498
  %v6500 = vpop.f32.mrb[0].mxu0
  %v6501 = vpop.f32.mrb[0].mxu0
  %v6502 = vadd.f32 0.0, %v6501
  %v6503 = vpop.f32.mrb[0].mxu0
  %6504 = vmatprep.mubr.bf16.mxu0 0
  %6505 = vmatmul.mubr.bf16.gmra.mrb[0].mxu0 %v6165
  %v6506 = vpop.f32.mrb[0].mxu0
  %v6507 = vadd.f32 0.0, %v6506
  %v6508 = vpop.f32.mrb[0].mxu0
  %v6509 = vpop.f32.mrb[0].mxu0
  %v6510 = vadd.f32 0.0, %v6509
  %v6511 = vpop.f32.mrb[0].mxu0
  %6512 = vmatprep.mubr.bf16.mxu0 0
  %6513 = vmatmul.mubr.bf16.gmra.mrb[0].mxu0 %v6166
  %v6514 = vpop.f32.mrb[0].mxu0
  %v6515 = vadd.f32 0.0, %v6514
  %v6516 = vpop.f32.mrb[0].mxu0
  %v6517 = vpop.f32.mrb[0].mxu0
  %v6518 = vadd.f32 0.0, %v6517
  %v6519 = vpop.f32.mrb[0].mxu0
  %6520 = vdwg.mxu0
  %v6521 = vadd.f32 %v6007, %v6267
  %v6522 = vadd.f32 %v6008, %v6270
  %v6523 = vadd.f32 %v6009, %v6275
  %v6524 = vadd.f32 %v6010, %v6278
  %v6525 = vadd.f32 %v6011, %v6283
  %v6526 = vadd.f32 %v6012, %v6286
  %v6527 = vadd.f32 %v6013, %v6291
  %v6528 = vadd.f32 %v6014, %v6294
  %v6529 = vadd.f32 %v6015, %v6299
  %v6530 = vadd.f32 %v6016, %v6302
  %v6531 = vadd.f32 %v6017, %v6307
  %v6532 = vadd.f32 %v6018, %v6310
  %v6533 = vadd.f32 %v6019, %v6315
  %v6534 = vadd.f32 %v6020, %v6318
  %v6535 = vadd.f32 %v6021, %v6323
  %v6536 = vadd.f32 %v6022, %v6326
  %v6537 = vadd.f32 %v6023, %v6331
  %v6538 = vadd.f32 %v6024, %v6334
  %v6539 = vadd.f32 %v6025, %v6339
  %v6540 = vadd.f32 %v6026, %v6342
  %v6541 = vadd.f32 %v6027, %v6347
  %v6542 = vadd.f32 %v6028, %v6350
  %v6543 = vadd.f32 %v6029, %v6355
  %v6544 = vadd.f32 %v6030, %v6358
  %v6545 = vadd.f32 %v6031, %v6363
  %v6546 = vadd.f32 %v6032, %v6366
  %v6547 = vadd.f32 %v6033, %v6371
  %v6548 = vadd.f32 %v6034, %v6374
  %v6549 = vadd.f32 %v6035, %v6379
  %v6550 = vadd.f32 %v6036, %v6382
  %v6551 = vadd.f32 %v6037, %v6387
  %v6552 = vadd.f32 %v6038, %v6390
  %v6553 = vadd.f32 %v6039, %v6395
  %v6554 = vadd.f32 %v6040, %v6398
  %v6555 = vadd.f32 %v6041, %v6403
  %v6556 = vadd.f32 %v6042, %v6406
  %v6557 = vadd.f32 %v6043, %v6411
  %v6558 = vadd.f32 %v6044, %v6414
  %v6559 = vadd.f32 %v6045, %v6419
  %v6560 = vadd.f32 %v6046, %v6422
  %v6561 = vadd.f32 %v6047, %v6427
  %v6562 = vadd.f32 %v6048, %v6430
  %v6563 = vadd.f32 %v6049, %v6435
  %v6564 = vadd.f32 %v6050, %v6438
  %v6565 = vadd.f32 %v6051, %v6443
  %v6566 = vadd.f32 %v6052, %v6446
  %v6567 = vadd.f32 %v6053, %v6451
  %v6568 = vadd.f32 %v6054, %v6454
  %v6569 = vadd.f32 %v6055, %v6459
  %v6570 = vadd.f32 %v6056, %v6462
  %v6571 = vadd.f32 %v6057, %v6467
  %v6572 = vadd.f32 %v6058, %v6470
  %v6573 = vadd.f32 %v6059, %v6475
  %v6574 = vadd.f32 %v6060, %v6478
  %v6575 = vadd.f32 %v6061, %v6483
  %v6576 = vadd.f32 %v6062, %v6486
  %v6577 = vadd.f32 %v6063, %v6491
  %v6578 = vadd.f32 %v6064, %v6494
  %v6579 = vadd.f32 %v6065, %v6499
  %v6580 = vadd.f32 %v6066, %v6502
  %v6581 = vadd.f32 %v6067, %v6507
  %v6582 = vadd.f32 %v6068, %v6510
  %v6583 = vadd.f32 %v6069, %v6515
  %v6584 = vadd.f32 %v6070, %v6518
  %v6585 = vld [vmem:[%s2170] sm:$0xff]
  %v6586 = vld [vmem:[%s2170 + $0x8] sm:$0xff]
  %v6587 = vld [vmem:[%s2170 + $0x18] sm:$0xff]
  %v6588 = vld [vmem:[%s2170 + $0x20] sm:$0xff]
  %v6589 = vld [vmem:[%s2170 + $0x30] sm:$0xff]
  %v6590 = vld [vmem:[%s2170 + $0x38] sm:$0xff]
  %v6591 = vld [vmem:[%s2170 + $0x48] sm:$0xff]
  %v6592 = vld [vmem:[%s2170 + $0x50] sm:$0xff]
  %v6593 = vld [vmem:[%s2170 + $0x60] sm:$0xff]
  %v6594 = vld [vmem:[%s2170 + $0x68] sm:$0xff]
  %v6595 = vld [vmem:[%s2170 + $0x78] sm:$0xff]
  %v6596 = vld [vmem:[%s2170 + $0x80] sm:$0xff]
  %v6597 = vld [vmem:[%s2170 + $0x90] sm:$0xff]
  %v6598 = vld [vmem:[%s2170 + $0x98] sm:$0xff]
  %v6599 = vld [vmem:[%s2170 + $0xa8] sm:$0xff]
  %v6600 = vld [vmem:[%s2170 + $0xb0] sm:$0xff]
  %v6601 = vld [vmem:[%s2170 + $0xc0] sm:$0xff]
  %v6602 = vld [vmem:[%s2170 + $0xc8] sm:$0xff]
  %v6603 = vld [vmem:[%s2170 + $0xd8] sm:$0xff]
  %v6604 = vld [vmem:[%s2170 + $0xe0] sm:$0xff]
  %v6605 = vld [vmem:[%s2170 + $0xf0] sm:$0xff]
  %v6606 = vld [vmem:[%s2170 + $0xf8] sm:$0xff]
  %v6607 = vld [vmem:[%s2170 + $0x108] sm:$0xff]
  %v6608 = vld [vmem:[%s2170 + $0x110] sm:$0xff]
  %v6609 = vld [vmem:[%s2170 + $0x120] sm:$0xff]
  %v6610 = vld [vmem:[%s2170 + $0x128] sm:$0xff]
  %v6611 = vld [vmem:[%s2170 + $0x138] sm:$0xff]
  %v6612 = vld [vmem:[%s2170 + $0x140] sm:$0xff]
  %v6613 = vld [vmem:[%s2170 + $0x150] sm:$0xff]
  %v6614 = vld [vmem:[%s2170 + $0x158] sm:$0xff]
  %v6615 = vld [vmem:[%s2170 + $0x168] sm:$0xff]
  %v6616 = vld [vmem:[%s2170 + $0x170] sm:$0xff]
  %v6617 = vld [vmem:[%s2170 + $0x1b0] sm:$0xff]
  %v6618 = vld [vmem:[%s2170 + $0x1b8] sm:$0xff]
  %v6619 = vld [vmem:[%s2170 + $0x1c8] sm:$0xff]
  %v6620 = vld [vmem:[%s2170 + $0x1d0] sm:$0xff]
  %v6621 = vld [vmem:[%s2170 + $0x1e0] sm:$0xff]
  %v6622 = vld [vmem:[%s2170 + $0x1e8] sm:$0xff]
  %v6623 = vld [vmem:[%s2170 + $0x1f8] sm:$0xff]
  %v6624 = vld [vmem:[%s2170 + $0x200] sm:$0xff]
  %v6625 = vld [vmem:[%s2170 + $0x210] sm:$0xff]
  %v6626 = vld [vmem:[%s2170 + $0x218] sm:$0xff]
  %v6627 = vld [vmem:[%s2170 + $0x228] sm:$0xff]
  %v6628 = vld [vmem:[%s2170 + $0x230] sm:$0xff]
  %v6629 = vld [vmem:[%s2170 + $0x240] sm:$0xff]
  %v6630 = vld [vmem:[%s2170 + $0x248] sm:$0xff]
  %v6631 = vld [vmem:[%s2170 + $0x258] sm:$0xff]
  %v6632 = vld [vmem:[%s2170 + $0x260] sm:$0xff]
  %v6633 = vld [vmem:[%s2170 + $0x270] sm:$0xff]
  %v6634 = vld [vmem:[%s2170 + $0x278] sm:$0xff]
  %v6635 = vld [vmem:[%s2170 + $0x288] sm:$0xff]
  %v6636 = vld [vmem:[%s2170 + $0x290] sm:$0xff]
  %v6637 = vld [vmem:[%s2170 + $0x2a0] sm:$0xff]
  %v6638 = vld [vmem:[%s2170 + $0x2a8] sm:$0xff]
  %v6639 = vld [vmem:[%s2170 + $0x2b8] sm:$0xff]
  %v6640 = vld [vmem:[%s2170 + $0x2c0] sm:$0xff]
  %v6641 = vld [vmem:[%s2170 + $0x2d0] sm:$0xff]
  %v6642 = vld [vmem:[%s2170 + $0x2d8] sm:$0xff]
  %v6643 = vld [vmem:[%s2170 + $0x2e8] sm:$0xff]
  %v6644 = vld [vmem:[%s2170 + $0x2f0] sm:$0xff]
  %v6645 = vld [vmem:[%s2170 + $0x300] sm:$0xff]
  %v6646 = vld [vmem:[%s2170 + $0x308] sm:$0xff]
  %v6647 = vld [vmem:[%s2170 + $0x318] sm:$0xff]
  %v6648 = vld [vmem:[%s2170 + $0x320] sm:$0xff]
  %v6649 = vpack.c.bf16 %v6586, %v6585
  %v6650 = vpack.c.bf16 %v6588, %v6587
  %v6651 = vpack.c.bf16 %v6590, %v6589
  %v6652 = vpack.c.bf16 %v6592, %v6591
  %v6653 = vpack.c.bf16 %v6594, %v6593
  %v6654 = vpack.c.bf16 %v6596, %v6595
  %v6655 = vpack.c.bf16 %v6598, %v6597
  %v6656 = vpack.c.bf16 %v6600, %v6599
  %v6657 = vpack.c.bf16 %v6602, %v6601
  %v6658 = vpack.c.bf16 %v6604, %v6603
  %v6659 = vpack.c.bf16 %v6606, %v6605
  %v6660 = vpack.c.bf16 %v6608, %v6607
  %v6661 = vpack.c.bf16 %v6610, %v6609
  %v6662 = vpack.c.bf16 %v6612, %v6611
  %v6663 = vpack.c.bf16 %v6614, %v6613
  %v6664 = vpack.c.bf16 %v6616, %v6615
  %v6665 = vpack.c.bf16 %v6618, %v6617
  %v6666 = vpack.c.bf16 %v6620, %v6619
  %v6667 = vpack.c.bf16 %v6622, %v6621
  %v6668 = vpack.c.bf16 %v6624, %v6623
  %v6669 = vpack.c.bf16 %v6626, %v6625
  %v6670 = vpack.c.bf16 %v6628, %v6627
  %v6671 = vpack.c.bf16 %v6630, %v6629
  %v6672 = vpack.c.bf16 %v6632, %v6631
  %v6673 = vpack.c.bf16 %v6634, %v6633
  %v6674 = vpack.c.bf16 %v6636, %v6635
  %v6675 = vpack.c.bf16 %v6638, %v6637
  %v6676 = vpack.c.bf16 %v6640, %v6639
  %v6677 = vpack.c.bf16 %v6642, %v6641
  %v6678 = vpack.c.bf16 %v6644, %v6643
  %v6679 = vpack.c.bf16 %v6646, %v6645
  %v6680 = vpack.c.bf16 %v6648, %v6647
  %s6681 = scalar_lea.vmem %s3, 384
  %v6682 = vld [vmem:[%s6681] sm:$0xf]
  %v6683 = vld [vmem:[%s6681 + $0x4] sm:$0xf]
  %v6684 = vld [vmem:[%s6681 + $0x8] sm:$0xf]
  %v6685 = vld [vmem:[%s6681 + $0xc] sm:$0xf]
  %v6686 = vld [vmem:[%s6681 + $0x10] sm:$0xf]
  %v6687 = vld [vmem:[%s6681 + $0x14] sm:$0xf]
  %v6688 = vld [vmem:[%s6681 + $0x18] sm:$0xf]
  %v6689 = vld [vmem:[%s6681 + $0x1c] sm:$0xf]
  %v6690 = vld [vmem:[%s6681 + $0x20] sm:$0xf]
  %v6691 = vld [vmem:[%s6681 + $0x24] sm:$0xf]
  %v6692 = vld [vmem:[%s6681 + $0x28] sm:$0xf]
  %v6693 = vld [vmem:[%s6681 + $0x2c] sm:$0xf]
  %v6694 = vld [vmem:[%s6681 + $0x30] sm:$0xf]
  %v6695 = vld [vmem:[%s6681 + $0x34] sm:$0xf]
  %v6696 = vld [vmem:[%s6681 + $0x38] sm:$0xf]
  %v6697 = vld [vmem:[%s6681 + $0x3c] sm:$0xf]
  %v6714 = vunpack.c.l.b16 %v6682
  %v6715 = vunpack.c.l.b16 %v6683
  %v6716 = vunpack.c.l.b16 %v6684
  %v6717 = vunpack.c.l.b16 %v6685
  %v6718 = vunpack.c.l.b16 %v6686
  %v6719 = vunpack.c.l.b16 %v6687
  %v6720 = vunpack.c.l.b16 %v6688
  %v6721 = vunpack.c.l.b16 %v6689
  %v6722 = vunpack.c.l.b16 %v6690
  %v6723 = vunpack.c.l.b16 %v6691
  %v6724 = vunpack.c.l.b16 %v6692
  %v6725 = vunpack.c.l.b16 %v6693
  %v6726 = vunpack.c.l.b16 %v6694
  %v6727 = vunpack.c.l.b16 %v6695
  %v6728 = vunpack.c.l.b16 %v6696
  %v6729 = vunpack.c.l.b16 %v6697
  %v6730 = vpack.c.b16 %v6715, %v6714
  %v6731 = vpack.c.b16 %v6717, %v6716
  %v6732 = vpack.c.b16 %v6719, %v6718
  %v6733 = vpack.c.b16 %v6721, %v6720
  %v6734 = vpack.c.b16 %v6723, %v6722
  %v6735 = vpack.c.b16 %v6725, %v6724
  %v6736 = vpack.c.b16 %v6727, %v6726
  %v6737 = vpack.c.b16 %v6729, %v6728
  %6746 = vmatprep.subr.bf16.mxu0 0
  %6747 = vmatpush1.bf16.msra.mxu0 %v6730
  %6748 = vmatprep.subr.bf16.mxu0 0
  %6749 = vmatpush1.bf16.msra.mxu0 %v6731
  %6750 = vmatprep.subr.bf16.mxu0 0
  %6751 = vmatpush1.bf16.msra.mxu0 %v6732
  %6752 = vmatprep.subr.bf16.mxu0 0
  %6753 = vmatpush1.bf16.msra.mxu0 %v6733
  %6754 = vmatprep.subr.bf16.mxu0 0
  %6755 = vmatpush1.bf16.msra.mxu0 %v6734
  %6756 = vmatprep.subr.bf16.mxu0 0
  %6757 = vmatpush1.bf16.msra.mxu0 %v6735
  %6758 = vmatprep.subr.bf16.mxu0 0
  %6759 = vmatpush1.bf16.msra.mxu0 %v6736
  %6760 = vmatprep.subr.bf16.mxu0 0
  %6761 = vmatpush1.bf16.msra.mxu0 %v6737
  %6762 = vmatprep.subr.bf16.mxu0 0
  %6763 = vmatpush1.bf16.msra.mxu0 0
  %6764 = vmatprep.subr.bf16.mxu0 0
  %6765 = vmatpush1.bf16.msra.mxu0 0
  %6766 = vmatprep.subr.bf16.mxu0 0
  %6767 = vmatpush1.bf16.msra.mxu0 0
  %6768 = vmatprep.subr.bf16.mxu0 0
  %6769 = vmatpush1.bf16.msra.mxu0 0
  %6770 = vmatprep.subr.bf16.mxu0 0
  %6771 = vmatpush1.bf16.msra.mxu0 0
  %6772 = vmatprep.subr.bf16.mxu0 0
  %6773 = vmatpush1.bf16.msra.mxu0 0
  %6774 = vmatprep.subr.bf16.mxu0 0
  %6775 = vmatpush1.bf16.msra.mxu0 0
  %6776 = vmatprep.subr.bf16.mxu0 0
  %6777 = vmatpush1.bf16.msra.mxu0 0
  %6778 = vmatprep.mubr.bf16.mxu0 0
  %6779 = vmatmul.mubr.bf16.gmra.mrb[0].mxu0 %v6649
  %v6780 = vpop.f32.mrb[0].mxu0
  %v6781 = vadd.f32 0.0, %v6780
  %v6782 = vpop.f32.mrb[0].mxu0
  %v6783 = vpop.f32.mrb[0].mxu0
  %v6784 = vadd.f32 0.0, %v6783
  %v6785 = vpop.f32.mrb[0].mxu0
  %6786 = vmatprep.mubr.bf16.mxu0 0
  %6787 = vmatmul.mubr.bf16.gmra.mrb[0].mxu0 %v6650
  %v6788 = vpop.f32.mrb[0].mxu0
  %v6789 = vadd.f32 0.0, %v6788
  %v6790 = vpop.f32.mrb[0].mxu0
  %v6791 = vpop.f32.mrb[0].mxu0
  %v6792 = vadd.f32 0.0, %v6791
  %v6793 = vpop.f32.mrb[0].mxu0
  %6794 = vmatprep.mubr.bf16.mxu0 0
  %6795 = vmatmul.mubr.bf16.gmra.mrb[0].mxu0 %v6651
  %v6796 = vpop.f32.mrb[0].mxu0
  %v6797 = vadd.f32 0.0, %v6796
  %v6798 = vpop.f32.mrb[0].mxu0
  %v6799 = vpop.f32.mrb[0].mxu0
  %v6800 = vadd.f32 0.0, %v6799
  %v6801 = vpop.f32.mrb[0].mxu0
  %6802 = vmatprep.mubr.bf16.mxu0 0
  %6803 = vmatmul.mubr.bf16.gmra.mrb[0].mxu0 %v6652
  %v6804 = vpop.f32.mrb[0].mxu0
  %v6805 = vadd.f32 0.0, %v6804
  %v6806 = vpop.f32.mrb[0].mxu0
  %v6807 = vpop.f32.mrb[0].mxu0
  %v6808 = vadd.f32 0.0, %v6807
  %v6809 = vpop.f32.mrb[0].mxu0
  %6810 = vmatprep.mubr.bf16.mxu0 0
  %6811 = vmatmul.mubr.bf16.gmra.mrb[0].mxu0 %v6653
  %v6812 = vpop.f32.mrb[0].mxu0
  %v6813 = vadd.f32 0.0, %v6812
  %v6814 = vpop.f32.mrb[0].mxu0
  %v6815 = vpop.f32.mrb[0].mxu0
  %v6816 = vadd.f32 0.0, %v6815
  %v6817 = vpop.f32.mrb[0].mxu0
  %6818 = vmatprep.mubr.bf16.mxu0 0
  %6819 = vmatmul.mubr.bf16.gmra.mrb[0].mxu0 %v6654
  %v6820 = vpop.f32.mrb[0].mxu0
  %v6821 = vadd.f32 0.0, %v6820
  %v6822 = vpop.f32.mrb[0].mxu0
  %v6823 = vpop.f32.mrb[0].mxu0
  %v6824 = vadd.f32 0.0, %v6823
  %v6825 = vpop.f32.mrb[0].mxu0
  %6826 = vmatprep.mubr.bf16.mxu0 0
  %6827 = vmatmul.mubr.bf16.gmra.mrb[0].mxu0 %v6655
  %v6828 = vpop.f32.mrb[0].mxu0
  %v6829 = vadd.f32 0.0, %v6828
  %v6830 = vpop.f32.mrb[0].mxu0
  %v6831 = vpop.f32.mrb[0].mxu0
  %v6832 = vadd.f32 0.0, %v6831
  %v6833 = vpop.f32.mrb[0].mxu0
  %6834 = vmatprep.mubr.bf16.mxu0 0
  %6835 = vmatmul.mubr.bf16.gmra.mrb[0].mxu0 %v6656
  %v6836 = vpop.f32.mrb[0].mxu0
  %v6837 = vadd.f32 0.0, %v6836
  %v6838 = vpop.f32.mrb[0].mxu0
  %v6839 = vpop.f32.mrb[0].mxu0
  %v6840 = vadd.f32 0.0, %v6839
  %v6841 = vpop.f32.mrb[0].mxu0
  %6842 = vmatprep.mubr.bf16.mxu0 0
  %6843 = vmatmul.mubr.bf16.gmra.mrb[0].mxu0 %v6657
  %v6844 = vpop.f32.mrb[0].mxu0
  %v6845 = vadd.f32 0.0, %v6844
  %v6846 = vpop.f32.mrb[0].mxu0
  %v6847 = vpop.f32.mrb[0].mxu0
  %v6848 = vadd.f32 0.0, %v6847
  %v6849 = vpop.f32.mrb[0].mxu0
  %6850 = vmatprep.mubr.bf16.mxu0 0
  %6851 = vmatmul.mubr.bf16.gmra.mrb[0].mxu0 %v6658
  %v6852 = vpop.f32.mrb[0].mxu0
  %v6853 = vadd.f32 0.0, %v6852
  %v6854 = vpop.f32.mrb[0].mxu0
  %v6855 = vpop.f32.mrb[0].mxu0
  %v6856 = vadd.f32 0.0, %v6855
  %v6857 = vpop.f32.mrb[0].mxu0
  %6858 = vmatprep.mubr.bf16.mxu0 0
  %6859 = vmatmul.mubr.bf16.gmra.mrb[0].mxu0 %v6659
  %v6860 = vpop.f32.mrb[0].mxu0
  %v6861 = vadd.f32 0.0, %v6860
  %v6862 = vpop.f32.mrb[0].mxu0
  %v6863 = vpop.f32.mrb[0].mxu0
  %v6864 = vadd.f32 0.0, %v6863
  %v6865 = vpop.f32.mrb[0].mxu0
  %6866 = vmatprep.mubr.bf16.mxu0 0
  %6867 = vmatmul.mubr.bf16.gmra.mrb[0].mxu0 %v6660
  %v6868 = vpop.f32.mrb[0].mxu0
  %v6869 = vadd.f32 0.0, %v6868
  %v6870 = vpop.f32.mrb[0].mxu0
  %v6871 = vpop.f32.mrb[0].mxu0
  %v6872 = vadd.f32 0.0, %v6871
  %v6873 = vpop.f32.mrb[0].mxu0
  %6874 = vmatprep.mubr.bf16.mxu0 0
  %6875 = vmatmul.mubr.bf16.gmra.mrb[0].mxu0 %v6661
  %v6876 = vpop.f32.mrb[0].mxu0
  %v6877 = vadd.f32 0.0, %v6876
  %v6878 = vpop.f32.mrb[0].mxu0
  %v6879 = vpop.f32.mrb[0].mxu0
  %v6880 = vadd.f32 0.0, %v6879
  %v6881 = vpop.f32.mrb[0].mxu0
  %6882 = vmatprep.mubr.bf16.mxu0 0
  %6883 = vmatmul.mubr.bf16.gmra.mrb[0].mxu0 %v6662
  %v6884 = vpop.f32.mrb[0].mxu0
  %v6885 = vadd.f32 0.0, %v6884
  %v6886 = vpop.f32.mrb[0].mxu0
  %v6887 = vpop.f32.mrb[0].mxu0
  %v6888 = vadd.f32 0.0, %v6887
  %v6889 = vpop.f32.mrb[0].mxu0
  %6890 = vmatprep.mubr.bf16.mxu0 0
  %6891 = vmatmul.mubr.bf16.gmra.mrb[0].mxu0 %v6663
  %v6892 = vpop.f32.mrb[0].mxu0
  %v6893 = vadd.f32 0.0, %v6892
  %v6894 = vpop.f32.mrb[0].mxu0
  %v6895 = vpop.f32.mrb[0].mxu0
  %v6896 = vadd.f32 0.0, %v6895
  %v6897 = vpop.f32.mrb[0].mxu0
  %6898 = vmatprep.mubr.bf16.mxu0 0
  %6899 = vmatmul.mubr.bf16.gmra.mrb[0].mxu0 %v6664
  %v6900 = vpop.f32.mrb[0].mxu0
  %v6901 = vadd.f32 0.0, %v6900
  %v6902 = vpop.f32.mrb[0].mxu0
  %v6903 = vpop.f32.mrb[0].mxu0
  %v6904 = vadd.f32 0.0, %v6903
  %v6905 = vpop.f32.mrb[0].mxu0
  %6906 = vmatprep.mubr.bf16.mxu0 0
  %6907 = vmatmul.mubr.bf16.gmra.mrb[0].mxu0 %v6665
  %v6908 = vpop.f32.mrb[0].mxu0
  %v6909 = vadd.f32 0.0, %v6908
  %v6910 = vpop.f32.mrb[0].mxu0
  %v6911 = vpop.f32.mrb[0].mxu0
  %v6912 = vadd.f32 0.0, %v6911
  %v6913 = vpop.f32.mrb[0].mxu0
  %6914 = vmatprep.mubr.bf16.mxu0 0
  %6915 = vmatmul.mubr.bf16.gmra.mrb[0].mxu0 %v6666
  %v6916 = vpop.f32.mrb[0].mxu0
  %v6917 = vadd.f32 0.0, %v6916
  %v6918 = vpop.f32.mrb[0].mxu0
  %v6919 = vpop.f32.mrb[0].mxu0
  %v6920 = vadd.f32 0.0, %v6919
  %v6921 = vpop.f32.mrb[0].mxu0
  %6922 = vmatprep.mubr.bf16.mxu0 0
  %6923 = vmatmul.mubr.bf16.gmra.mrb[0].mxu0 %v6667
  %v6924 = vpop.f32.mrb[0].mxu0
  %v6925 = vadd.f32 0.0, %v6924
  %v6926 = vpop.f32.mrb[0].mxu0
  %v6927 = vpop.f32.mrb[0].mxu0
  %v6928 = vadd.f32 0.0, %v6927
  %v6929 = vpop.f32.mrb[0].mxu0
  %6930 = vmatprep.mubr.bf16.mxu0 0
  %6931 = vmatmul.mubr.bf16.gmra.mrb[0].mxu0 %v6668
  %v6932 = vpop.f32.mrb[0].mxu0
  %v6933 = vadd.f32 0.0, %v6932
  %v6934 = vpop.f32.mrb[0].mxu0
  %v6935 = vpop.f32.mrb[0].mxu0
  %v6936 = vadd.f32 0.0, %v6935
  %v6937 = vpop.f32.mrb[0].mxu0
  %6938 = vmatprep.mubr.bf16.mxu0 0
  %6939 = vmatmul.mubr.bf16.gmra.mrb[0].mxu0 %v6669
  %v6940 = vpop.f32.mrb[0].mxu0
  %v6941 = vadd.f32 0.0, %v6940
  %v6942 = vpop.f32.mrb[0].mxu0
  %v6943 = vpop.f32.mrb[0].mxu0
  %v6944 = vadd.f32 0.0, %v6943
  %v6945 = vpop.f32.mrb[0].mxu0
  %6946 = vmatprep.mubr.bf16.mxu0 0
  %6947 = vmatmul.mubr.bf16.gmra.mrb[0].mxu0 %v6670
  %v6948 = vpop.f32.mrb[0].mxu0
  %v6949 = vadd.f32 0.0, %v6948
  %v6950 = vpop.f32.mrb[0].mxu0
  %v6951 = vpop.f32.mrb[0].mxu0
  %v6952 = vadd.f32 0.0, %v6951
  %v6953 = vpop.f32.mrb[0].mxu0
  %6954 = vmatprep.mubr.bf16.mxu0 0
  %6955 = vmatmul.mubr.bf16.gmra.mrb[0].mxu0 %v6671
  %v6956 = vpop.f32.mrb[0].mxu0
  %v6957 = vadd.f32 0.0, %v6956
  %v6958 = vpop.f32.mrb[0].mxu0
  %v6959 = vpop.f32.mrb[0].mxu0
  %v6960 = vadd.f32 0.0, %v6959
  %v6961 = vpop.f32.mrb[0].mxu0
  %6962 = vmatprep.mubr.bf16.mxu0 0
  %6963 = vmatmul.mubr.bf16.gmra.mrb[0].mxu0 %v6672
  %v6964 = vpop.f32.mrb[0].mxu0
  %v6965 = vadd.f32 0.0, %v6964
  %v6966 = vpop.f32.mrb[0].mxu0
  %v6967 = vpop.f32.mrb[0].mxu0
  %v6968 = vadd.f32 0.0, %v6967
  %v6969 = vpop.f32.mrb[0].mxu0
  %6970 = vmatprep.mubr.bf16.mxu0 0
  %6971 = vmatmul.mubr.bf16.gmra.mrb[0].mxu0 %v6673
  %v6972 = vpop.f32.mrb[0].mxu0
  %v6973 = vadd.f32 0.0, %v6972
  %v6974 = vpop.f32.mrb[0].mxu0
  %v6975 = vpop.f32.mrb[0].mxu0
  %v6976 = vadd.f32 0.0, %v6975
  %v6977 = vpop.f32.mrb[0].mxu0
  %6978 = vmatprep.mubr.bf16.mxu0 0
  %6979 = vmatmul.mubr.bf16.gmra.mrb[0].mxu0 %v6674
  %v6980 = vpop.f32.mrb[0].mxu0
  %v6981 = vadd.f32 0.0, %v6980
  %v6982 = vpop.f32.mrb[0].mxu0
  %v6983 = vpop.f32.mrb[0].mxu0
  %v6984 = vadd.f32 0.0, %v6983
  %v6985 = vpop.f32.mrb[0].mxu0
  %6986 = vmatprep.mubr.bf16.mxu0 0
  %6987 = vmatmul.mubr.bf16.gmra.mrb[0].mxu0 %v6675
  %v6988 = vpop.f32.mrb[0].mxu0
  %v6989 = vadd.f32 0.0, %v6988
  %v6990 = vpop.f32.mrb[0].mxu0
  %v6991 = vpop.f32.mrb[0].mxu0
  %v6992 = vadd.f32 0.0, %v6991
  %v6993 = vpop.f32.mrb[0].mxu0
  %6994 = vmatprep.mubr.bf16.mxu0 0
  %6995 = vmatmul.mubr.bf16.gmra.mrb[0].mxu0 %v6676
  %v6996 = vpop.f32.mrb[0].mxu0
  %v6997 = vadd.f32 0.0, %v6996
  %v6998 = vpop.f32.mrb[0].mxu0
  %v6999 = vpop.f32.mrb[0].mxu0
  %v7000 = vadd.f32 0.0, %v6999
  %v7001 = vpop.f32.mrb[0].mxu0
  %7002 = vmatprep.mubr.bf16.mxu0 0
  %7003 = vmatmul.mubr.bf16.gmra.mrb[0].mxu0 %v6677
  %v7004 = vpop.f32.mrb[0].mxu0
  %v7005 = vadd.f32 0.0, %v7004
  %v7006 = vpop.f32.mrb[0].mxu0
  %v7007 = vpop.f32.mrb[0].mxu0
  %v7008 = vadd.f32 0.0, %v7007
  %v7009 = vpop.f32.mrb[0].mxu0
  %7010 = vmatprep.mubr.bf16.mxu0 0
  %7011 = vmatmul.mubr.bf16.gmra.mrb[0].mxu0 %v6678
  %v7012 = vpop.f32.mrb[0].mxu0
  %v7013 = vadd.f32 0.0, %v7012
  %v7014 = vpop.f32.mrb[0].mxu0
  %v7015 = vpop.f32.mrb[0].mxu0
  %v7016 = vadd.f32 0.0, %v7015
  %v7017 = vpop.f32.mrb[0].mxu0
  %7018 = vmatprep.mubr.bf16.mxu0 0
  %7019 = vmatmul.mubr.bf16.gmra.mrb[0].mxu0 %v6679
  %v7020 = vpop.f32.mrb[0].mxu0
  %v7021 = vadd.f32 0.0, %v7020
  %v7022 = vpop.f32.mrb[0].mxu0
  %v7023 = vpop.f32.mrb[0].mxu0
  %v7024 = vadd.f32 0.0, %v7023
  %v7025 = vpop.f32.mrb[0].mxu0
  %7026 = vmatprep.mubr.bf16.mxu0 0
  %7027 = vmatmul.mubr.bf16.gmra.mrb[0].mxu0 %v6680
  %v7028 = vpop.f32.mrb[0].mxu0
  %v7029 = vadd.f32 0.0, %v7028
  %v7030 = vpop.f32.mrb[0].mxu0
  %v7031 = vpop.f32.mrb[0].mxu0
  %v7032 = vadd.f32 0.0, %v7031
  %v7033 = vpop.f32.mrb[0].mxu0
  %7034 = vdwg.mxu0
  %v7035 = vadd.f32 %v6521, %v6781
  %v7036 = vadd.f32 %v6522, %v6784
  %v7037 = vadd.f32 %v6523, %v6789
  %v7038 = vadd.f32 %v6524, %v6792
  %v7039 = vadd.f32 %v6525, %v6797
  %v7040 = vadd.f32 %v6526, %v6800
  %v7041 = vadd.f32 %v6527, %v6805
  %v7042 = vadd.f32 %v6528, %v6808
  %v7043 = vadd.f32 %v6529, %v6813
  %v7044 = vadd.f32 %v6530, %v6816
  %v7045 = vadd.f32 %v6531, %v6821
  %v7046 = vadd.f32 %v6532, %v6824
  %v7047 = vadd.f32 %v6533, %v6829
  %v7048 = vadd.f32 %v6534, %v6832
  %v7049 = vadd.f32 %v6535, %v6837
  %v7050 = vadd.f32 %v6536, %v6840
  %v7051 = vadd.f32 %v6537, %v6845
  %v7052 = vadd.f32 %v6538, %v6848
  %v7053 = vadd.f32 %v6539, %v6853
  %v7054 = vadd.f32 %v6540, %v6856
  %v7055 = vadd.f32 %v6541, %v6861
  %v7056 = vadd.f32 %v6542, %v6864
  %v7057 = vadd.f32 %v6543, %v6869
  %v7058 = vadd.f32 %v6544, %v6872
  %v7059 = vadd.f32 %v6545, %v6877
  %v7060 = vadd.f32 %v6546, %v6880
  %v7061 = vadd.f32 %v6547, %v6885
  %v7062 = vadd.f32 %v6548, %v6888
  %v7063 = vadd.f32 %v6549, %v6893
  %v7064 = vadd.f32 %v6550, %v6896
  %v7065 = vadd.f32 %v6551, %v6901
  %v7066 = vadd.f32 %v6552, %v6904
  %v7067 = vadd.f32 %v6553, %v6909
  %v7068 = vadd.f32 %v6554, %v6912
  %v7069 = vadd.f32 %v6555, %v6917
  %v7070 = vadd.f32 %v6556, %v6920
  %v7071 = vadd.f32 %v6557, %v6925
  %v7072 = vadd.f32 %v6558, %v6928
  %v7073 = vadd.f32 %v6559, %v6933
  %v7074 = vadd.f32 %v6560, %v6936
  %v7075 = vadd.f32 %v6561, %v6941
  %v7076 = vadd.f32 %v6562, %v6944
  %v7077 = vadd.f32 %v6563, %v6949
  %v7078 = vadd.f32 %v6564, %v6952
  %v7079 = vadd.f32 %v6565, %v6957
  %v7080 = vadd.f32 %v6566, %v6960
  %v7081 = vadd.f32 %v6567, %v6965
  %v7082 = vadd.f32 %v6568, %v6968
  %v7083 = vadd.f32 %v6569, %v6973
  %v7084 = vadd.f32 %v6570, %v6976
  %v7085 = vadd.f32 %v6571, %v6981
  %v7086 = vadd.f32 %v6572, %v6984
  %v7087 = vadd.f32 %v6573, %v6989
  %v7088 = vadd.f32 %v6574, %v6992
  %v7089 = vadd.f32 %v6575, %v6997
  %v7090 = vadd.f32 %v6576, %v7000
  %v7091 = vadd.f32 %v6577, %v7005
  %v7092 = vadd.f32 %v6578, %v7008
  %v7093 = vadd.f32 %v6579, %v7013
  %v7094 = vadd.f32 %v6580, %v7016
  %v7095 = vadd.f32 %v6581, %v7021
  %v7096 = vadd.f32 %v6582, %v7024
  %v7097 = vadd.f32 %v6583, %v7029
  %v7098 = vadd.f32 %v6584, %v7032
  %v7099 = vld [vmem:[%s2170 + $0x1] sm:$0xff]
  %v7100 = vld [vmem:[%s2170 + $0x9] sm:$0xff]
  %v7101 = vld [vmem:[%s2170 + $0x19] sm:$0xff]
  %v7102 = vld [vmem:[%s2170 + $0x21] sm:$0xff]
  %v7103 = vld [vmem:[%s2170 + $0x31] sm:$0xff]
  %v7104 = vld [vmem:[%s2170 + $0x39] sm:$0xff]
  %v7105 = vld [vmem:[%s2170 + $0x49] sm:$0xff]
  %v7106 = vld [vmem:[%s2170 + $0x51] sm:$0xff]
  %v7107 = vld [vmem:[%s2170 + $0x61] sm:$0xff]
  %v7108 = vld [vmem:[%s2170 + $0x69] sm:$0xff]
  %v7109 = vld [vmem:[%s2170 + $0x79] sm:$0xff]
  %v7110 = vld [vmem:[%s2170 + $0x81] sm:$0xff]
  %v7111 = vld [vmem:[%s2170 + $0x91] sm:$0xff]
  %v7112 = vld [vmem:[%s2170 + $0x99] sm:$0xff]
  %v7113 = vld [vmem:[%s2170 + $0xa9] sm:$0xff]
  %v7114 = vld [vmem:[%s2170 + $0xb1] sm:$0xff]
  %v7115 = vld [vmem:[%s2170 + $0xc1] sm:$0xff]
  %v7116 = vld [vmem:[%s2170 + $0xc9] sm:$0xff]
  %v7117 = vld [vmem:[%s2170 + $0xd9] sm:$0xff]
  %v7118 = vld [vmem:[%s2170 + $0xe1] sm:$0xff]
  %v7119 = vld [vmem:[%s2170 + $0xf1] sm:$0xff]
  %v7120 = vld [vmem:[%s2170 + $0xf9] sm:$0xff]
  %v7121 = vld [vmem:[%s2170 + $0x109] sm:$0xff]
  %v7122 = vld [vmem:[%s2170 + $0x111] sm:$0xff]
  %v7123 = vld [vmem:[%s2170 + $0x121] sm:$0xff]
  %v7124 = vld [vmem:[%s2170 + $0x129] sm:$0xff]
  %v7125 = vld [vmem:[%s2170 + $0x139] sm:$0xff]
  %v7126 = vld [vmem:[%s2170 + $0x141] sm:$0xff]
  %v7127 = vld [vmem:[%s2170 + $0x151] sm:$0xff]
  %v7128 = vld [vmem:[%s2170 + $0x159] sm:$0xff]
  %v7129 = vld [vmem:[%s2170 + $0x169] sm:$0xff]
  %v7130 = vld [vmem:[%s2170 + $0x171] sm:$0xff]
  %v7131 = vld [vmem:[%s2170 + $0x1b1] sm:$0xff]
  %v7132 = vld [vmem:[%s2170 + $0x1b9] sm:$0xff]
  %v7133 = vld [vmem:[%s2170 + $0x1c9] sm:$0xff]
  %v7134 = vld [vmem:[%s2170 + $0x1d1] sm:$0xff]
  %v7135 = vld [vmem:[%s2170 + $0x1e1] sm:$0xff]
  %v7136 = vld [vmem:[%s2170 + $0x1e9] sm:$0xff]
  %v7137 = vld [vmem:[%s2170 + $0x1f9] sm:$0xff]
  %v7138 = vld [vmem:[%s2170 + $0x201] sm:$0xff]
  %v7139 = vld [vmem:[%s2170 + $0x211] sm:$0xff]
  %v7140 = vld [vmem:[%s2170 + $0x219] sm:$0xff]
  %v7141 = vld [vmem:[%s2170 + $0x229] sm:$0xff]
  %v7142 = vld [vmem:[%s2170 + $0x231] sm:$0xff]
  %v7143 = vld [vmem:[%s2170 + $0x241] sm:$0xff]
  %v7144 = vld [vmem:[%s2170 + $0x249] sm:$0xff]
  %v7145 = vld [vmem:[%s2170 + $0x259] sm:$0xff]
  %v7146 = vld [vmem:[%s2170 + $0x261] sm:$0xff]
  %v7147 = vld [vmem:[%s2170 + $0x271] sm:$0xff]
  %v7148 = vld [vmem:[%s2170 + $0x279] sm:$0xff]
  %v7149 = vld [vmem:[%s2170 + $0x289] sm:$0xff]
  %v7150 = vld [vmem:[%s2170 + $0x291] sm:$0xff]
  %v7151 = vld [vmem:[%s2170 + $0x2a1] sm:$0xff]
  %v7152 = vld [vmem:[%s2170 + $0x2a9] sm:$0xff]
  %v7153 = vld [vmem:[%s2170 + $0x2b9] sm:$0xff]
  %v7154 = vld [vmem:[%s2170 + $0x2c1] sm:$0xff]
  %v7155 = vld [vmem:[%s2170 + $0x2d1] sm:$0xff]
  %v7156 = vld [vmem:[%s2170 + $0x2d9] sm:$0xff]
  %v7157 = vld [vmem:[%s2170 + $0x2e9] sm:$0xff]
  %v7158 = vld [vmem:[%s2170 + $0x2f1] sm:$0xff]
  %v7159 = vld [vmem:[%s2170 + $0x301] sm:$0xff]
  %v7160 = vld [vmem:[%s2170 + $0x309] sm:$0xff]
  %v7161 = vld [vmem:[%s2170 + $0x319] sm:$0xff]
  %v7162 = vld [vmem:[%s2170 + $0x321] sm:$0xff]
  %v7163 = vpack.c.bf16 %v7100, %v7099
  %v7164 = vpack.c.bf16 %v7102, %v7101
  %v7165 = vpack.c.bf16 %v7104, %v7103
  %v7166 = vpack.c.bf16 %v7106, %v7105
  %v7167 = vpack.c.bf16 %v7108, %v7107
  %v7168 = vpack.c.bf16 %v7110, %v7109
  %v7169 = vpack.c.bf16 %v7112, %v7111
  %v7170 = vpack.c.bf16 %v7114, %v7113
  %v7171 = vpack.c.bf16 %v7116, %v7115
  %v7172 = vpack.c.bf16 %v7118, %v7117
  %v7173 = vpack.c.bf16 %v7120, %v7119
  %v7174 = vpack.c.bf16 %v7122, %v7121
  %v7175 = vpack.c.bf16 %v7124, %v7123
  %v7176 = vpack.c.bf16 %v7126, %v7125
  %v7177 = vpack.c.bf16 %v7128, %v7127
  %v7178 = vpack.c.bf16 %v7130, %v7129
  %v7179 = vpack.c.bf16 %v7132, %v7131
  %v7180 = vpack.c.bf16 %v7134, %v7133
  %v7181 = vpack.c.bf16 %v7136, %v7135
  %v7182 = vpack.c.bf16 %v7138, %v7137
  %v7183 = vpack.c.bf16 %v7140, %v7139
  %v7184 = vpack.c.bf16 %v7142, %v7141
  %v7185 = vpack.c.bf16 %v7144, %v7143
  %v7186 = vpack.c.bf16 %v7146, %v7145
  %v7187 = vpack.c.bf16 %v7148, %v7147
  %v7188 = vpack.c.bf16 %v7150, %v7149
  %v7189 = vpack.c.bf16 %v7152, %v7151
  %v7190 = vpack.c.bf16 %v7154, %v7153
  %v7191 = vpack.c.bf16 %v7156, %v7155
  %v7192 = vpack.c.bf16 %v7158, %v7157
  %v7193 = vpack.c.bf16 %v7160, %v7159
  %v7194 = vpack.c.bf16 %v7162, %v7161
  %s7195 = scalar_lea.vmem %s3, 448
  %v7196 = vld [vmem:[%s7195] sm:$0xf]
  %v7197 = vld [vmem:[%s7195 + $0x4] sm:$0xf]
  %v7198 = vld [vmem:[%s7195 + $0x8] sm:$0xf]
  %v7199 = vld [vmem:[%s7195 + $0xc] sm:$0xf]
  %v7200 = vld [vmem:[%s7195 + $0x10] sm:$0xf]
  %v7201 = vld [vmem:[%s7195 + $0x14] sm:$0xf]
  %v7202 = vld [vmem:[%s7195 + $0x18] sm:$0xf]
  %v7203 = vld [vmem:[%s7195 + $0x1c] sm:$0xf]
  %v7204 = vld [vmem:[%s7195 + $0x20] sm:$0xf]
  %v7205 = vld [vmem:[%s7195 + $0x24] sm:$0xf]
  %v7206 = vld [vmem:[%s7195 + $0x28] sm:$0xf]
  %v7207 = vld [vmem:[%s7195 + $0x2c] sm:$0xf]
  %v7208 = vld [vmem:[%s7195 + $0x30] sm:$0xf]
  %v7209 = vld [vmem:[%s7195 + $0x34] sm:$0xf]
  %v7210 = vld [vmem:[%s7195 + $0x38] sm:$0xf]
  %v7211 = vld [vmem:[%s7195 + $0x3c] sm:$0xf]
  %v7228 = vunpack.c.l.b16 %v7196
  %v7229 = vunpack.c.l.b16 %v7197
  %v7230 = vunpack.c.l.b16 %v7198
  %v7231 = vunpack.c.l.b16 %v7199
  %v7232 = vunpack.c.l.b16 %v7200
  %v7233 = vunpack.c.l.b16 %v7201
  %v7234 = vunpack.c.l.b16 %v7202
  %v7235 = vunpack.c.l.b16 %v7203
  %v7236 = vunpack.c.l.b16 %v7204
  %v7237 = vunpack.c.l.b16 %v7205
  %v7238 = vunpack.c.l.b16 %v7206
  %v7239 = vunpack.c.l.b16 %v7207
  %v7240 = vunpack.c.l.b16 %v7208
  %v7241 = vunpack.c.l.b16 %v7209
  %v7242 = vunpack.c.l.b16 %v7210
  %v7243 = vunpack.c.l.b16 %v7211
  %v7244 = vpack.c.b16 %v7229, %v7228
  %v7245 = vpack.c.b16 %v7231, %v7230
  %v7246 = vpack.c.b16 %v7233, %v7232
  %v7247 = vpack.c.b16 %v7235, %v7234
  %v7248 = vpack.c.b16 %v7237, %v7236
  %v7249 = vpack.c.b16 %v7239, %v7238
  %v7250 = vpack.c.b16 %v7241, %v7240
  %v7251 = vpack.c.b16 %v7243, %v7242
  %7260 = vmatprep.subr.bf16.mxu0 0
  %7261 = vmatpush1.bf16.msra.mxu0 %v7244
  %7262 = vmatprep.subr.bf16.mxu0 0
  %7263 = vmatpush1.bf16.msra.mxu0 %v7245
  %7264 = vmatprep.subr.bf16.mxu0 0
  %7265 = vmatpush1.bf16.msra.mxu0 %v7246
  %7266 = vmatprep.subr.bf16.mxu0 0
  %7267 = vmatpush1.bf16.msra.mxu0 %v7247
  %7268 = vmatprep.subr.bf16.mxu0 0
  %7269 = vmatpush1.bf16.msra.mxu0 %v7248
  %7270 = vmatprep.subr.bf16.mxu0 0
  %7271 = vmatpush1.bf16.msra.mxu0 %v7249
  %7272 = vmatprep.subr.bf16.mxu0 0
  %7273 = vmatpush1.bf16.msra.mxu0 %v7250
  %7274 = vmatprep.subr.bf16.mxu0 0
  %7275 = vmatpush1.bf16.msra.mxu0 %v7251
  %7276 = vmatprep.subr.bf16.mxu0 0
  %7277 = vmatpush1.bf16.msra.mxu0 0
  %7278 = vmatprep.subr.bf16.mxu0 0
  %7279 = vmatpush1.bf16.msra.mxu0 0
  %7280 = vmatprep.subr.bf16.mxu0 0
  %7281 = vmatpush1.bf16.msra.mxu0 0
  %7282 = vmatprep.subr.bf16.mxu0 0
  %7283 = vmatpush1.bf16.msra.mxu0 0
  %7284 = vmatprep.subr.bf16.mxu0 0
  %7285 = vmatpush1.bf16.msra.mxu0 0
  %7286 = vmatprep.subr.bf16.mxu0 0
  %7287 = vmatpush1.bf16.msra.mxu0 0
  %7288 = vmatprep.subr.bf16.mxu0 0
  %7289 = vmatpush1.bf16.msra.mxu0 0
  %7290 = vmatprep.subr.bf16.mxu0 0
  %7291 = vmatpush1.bf16.msra.mxu0 0
  %7292 = vmatprep.mubr.bf16.mxu0 0
  %7293 = vmatmul.mubr.bf16.gmra.mrb[0].mxu0 %v7163
  %v7294 = vpop.f32.mrb[0].mxu0
  %v7295 = vadd.f32 0.0, %v7294
  %v7296 = vpop.f32.mrb[0].mxu0
  %v7297 = vpop.f32.mrb[0].mxu0
  %v7298 = vadd.f32 0.0, %v7297
  %v7299 = vpop.f32.mrb[0].mxu0
  %7300 = vmatprep.mubr.bf16.mxu0 0
  %7301 = vmatmul.mubr.bf16.gmra.mrb[0].mxu0 %v7164
  %v7302 = vpop.f32.mrb[0].mxu0
  %v7303 = vadd.f32 0.0, %v7302
  %v7304 = vpop.f32.mrb[0].mxu0
  %v7305 = vpop.f32.mrb[0].mxu0
  %v7306 = vadd.f32 0.0, %v7305
  %v7307 = vpop.f32.mrb[0].mxu0
  %7308 = vmatprep.mubr.bf16.mxu0 0
  %7309 = vmatmul.mubr.bf16.gmra.mrb[0].mxu0 %v7165
  %v7310 = vpop.f32.mrb[0].mxu0
  %v7311 = vadd.f32 0.0, %v7310
  %v7312 = vpop.f32.mrb[0].mxu0
  %v7313 = vpop.f32.mrb[0].mxu0
  %v7314 = vadd.f32 0.0, %v7313
  %v7315 = vpop.f32.mrb[0].mxu0
  %7316 = vmatprep.mubr.bf16.mxu0 0
  %7317 = vmatmul.mubr.bf16.gmra.mrb[0].mxu0 %v7166
  %v7318 = vpop.f32.mrb[0].mxu0
  %v7319 = vadd.f32 0.0, %v7318
  %v7320 = vpop.f32.mrb[0].mxu0
  %v7321 = vpop.f32.mrb[0].mxu0
  %v7322 = vadd.f32 0.0, %v7321
  %v7323 = vpop.f32.mrb[0].mxu0
  %7324 = vmatprep.mubr.bf16.mxu0 0
  %7325 = vmatmul.mubr.bf16.gmra.mrb[0].mxu0 %v7167
  %v7326 = vpop.f32.mrb[0].mxu0
  %v7327 = vadd.f32 0.0, %v7326
  %v7328 = vpop.f32.mrb[0].mxu0
  %v7329 = vpop.f32.mrb[0].mxu0
  %v7330 = vadd.f32 0.0, %v7329
  %v7331 = vpop.f32.mrb[0].mxu0
  %7332 = vmatprep.mubr.bf16.mxu0 0
  %7333 = vmatmul.mubr.bf16.gmra.mrb[0].mxu0 %v7168
  %v7334 = vpop.f32.mrb[0].mxu0
  %v7335 = vadd.f32 0.0, %v7334
  %v7336 = vpop.f32.mrb[0].mxu0
  %v7337 = vpop.f32.mrb[0].mxu0
  %v7338 = vadd.f32 0.0, %v7337
  %v7339 = vpop.f32.mrb[0].mxu0
  %7340 = vmatprep.mubr.bf16.mxu0 0
  %7341 = vmatmul.mubr.bf16.gmra.mrb[0].mxu0 %v7169
  %v7342 = vpop.f32.mrb[0].mxu0
  %v7343 = vadd.f32 0.0, %v7342
  %v7344 = vpop.f32.mrb[0].mxu0
  %v7345 = vpop.f32.mrb[0].mxu0
  %v7346 = vadd.f32 0.0, %v7345
  %v7347 = vpop.f32.mrb[0].mxu0
  %7348 = vmatprep.mubr.bf16.mxu0 0
  %7349 = vmatmul.mubr.bf16.gmra.mrb[0].mxu0 %v7170
  %v7350 = vpop.f32.mrb[0].mxu0
  %v7351 = vadd.f32 0.0, %v7350
  %v7352 = vpop.f32.mrb[0].mxu0
  %v7353 = vpop.f32.mrb[0].mxu0
  %v7354 = vadd.f32 0.0, %v7353
  %v7355 = vpop.f32.mrb[0].mxu0
  %7356 = vmatprep.mubr.bf16.mxu0 0
  %7357 = vmatmul.mubr.bf16.gmra.mrb[0].mxu0 %v7171
  %v7358 = vpop.f32.mrb[0].mxu0
  %v7359 = vadd.f32 0.0, %v7358
  %v7360 = vpop.f32.mrb[0].mxu0
  %v7361 = vpop.f32.mrb[0].mxu0
  %v7362 = vadd.f32 0.0, %v7361
  %v7363 = vpop.f32.mrb[0].mxu0
  %7364 = vmatprep.mubr.bf16.mxu0 0
  %7365 = vmatmul.mubr.bf16.gmra.mrb[0].mxu0 %v7172
  %v7366 = vpop.f32.mrb[0].mxu0
  %v7367 = vadd.f32 0.0, %v7366
  %v7368 = vpop.f32.mrb[0].mxu0
  %v7369 = vpop.f32.mrb[0].mxu0
  %v7370 = vadd.f32 0.0, %v7369
  %v7371 = vpop.f32.mrb[0].mxu0
  %7372 = vmatprep.mubr.bf16.mxu0 0
  %7373 = vmatmul.mubr.bf16.gmra.mrb[0].mxu0 %v7173
  %v7374 = vpop.f32.mrb[0].mxu0
  %v7375 = vadd.f32 0.0, %v7374
  %v7376 = vpop.f32.mrb[0].mxu0
  %v7377 = vpop.f32.mrb[0].mxu0
  %v7378 = vadd.f32 0.0, %v7377
  %v7379 = vpop.f32.mrb[0].mxu0
  %7380 = vmatprep.mubr.bf16.mxu0 0
  %7381 = vmatmul.mubr.bf16.gmra.mrb[0].mxu0 %v7174
  %v7382 = vpop.f32.mrb[0].mxu0
  %v7383 = vadd.f32 0.0, %v7382
  %v7384 = vpop.f32.mrb[0].mxu0
  %v7385 = vpop.f32.mrb[0].mxu0
  %v7386 = vadd.f32 0.0, %v7385
  %v7387 = vpop.f32.mrb[0].mxu0
  %7388 = vmatprep.mubr.bf16.mxu0 0
  %7389 = vmatmul.mubr.bf16.gmra.mrb[0].mxu0 %v7175
  %v7390 = vpop.f32.mrb[0].mxu0
  %v7391 = vadd.f32 0.0, %v7390
  %v7392 = vpop.f32.mrb[0].mxu0
  %v7393 = vpop.f32.mrb[0].mxu0
  %v7394 = vadd.f32 0.0, %v7393
  %v7395 = vpop.f32.mrb[0].mxu0
  %7396 = vmatprep.mubr.bf16.mxu0 0
  %7397 = vmatmul.mubr.bf16.gmra.mrb[0].mxu0 %v7176
  %v7398 = vpop.f32.mrb[0].mxu0
  %v7399 = vadd.f32 0.0, %v7398
  %v7400 = vpop.f32.mrb[0].mxu0
  %v7401 = vpop.f32.mrb[0].mxu0
  %v7402 = vadd.f32 0.0, %v7401
  %v7403 = vpop.f32.mrb[0].mxu0
  %7404 = vmatprep.mubr.bf16.mxu0 0
  %7405 = vmatmul.mubr.bf16.gmra.mrb[0].mxu0 %v7177
  %v7406 = vpop.f32.mrb[0].mxu0
  %v7407 = vadd.f32 0.0, %v7406
  %v7408 = vpop.f32.mrb[0].mxu0
  %v7409 = vpop.f32.mrb[0].mxu0
  %v7410 = vadd.f32 0.0, %v7409
  %v7411 = vpop.f32.mrb[0].mxu0
  %7412 = vmatprep.mubr.bf16.mxu0 0
  %7413 = vmatmul.mubr.bf16.gmra.mrb[0].mxu0 %v7178
  %v7414 = vpop.f32.mrb[0].mxu0
  %v7415 = vadd.f32 0.0, %v7414
  %v7416 = vpop.f32.mrb[0].mxu0
  %v7417 = vpop.f32.mrb[0].mxu0
  %v7418 = vadd.f32 0.0, %v7417
  %v7419 = vpop.f32.mrb[0].mxu0
  %7420 = vmatprep.mubr.bf16.mxu0 0
  %7421 = vmatmul.mubr.bf16.gmra.mrb[0].mxu0 %v7179
  %v7422 = vpop.f32.mrb[0].mxu0
  %v7423 = vadd.f32 0.0, %v7422
  %v7424 = vpop.f32.mrb[0].mxu0
  %v7425 = vpop.f32.mrb[0].mxu0
  %v7426 = vadd.f32 0.0, %v7425
  %v7427 = vpop.f32.mrb[0].mxu0
  %7428 = vmatprep.mubr.bf16.mxu0 0
  %7429 = vmatmul.mubr.bf16.gmra.mrb[0].mxu0 %v7180
  %v7430 = vpop.f32.mrb[0].mxu0
  %v7431 = vadd.f32 0.0, %v7430
  %v7432 = vpop.f32.mrb[0].mxu0
  %v7433 = vpop.f32.mrb[0].mxu0
  %v7434 = vadd.f32 0.0, %v7433
  %v7435 = vpop.f32.mrb[0].mxu0
  %7436 = vmatprep.mubr.bf16.mxu0 0
  %7437 = vmatmul.mubr.bf16.gmra.mrb[0].mxu0 %v7181
  %v7438 = vpop.f32.mrb[0].mxu0
  %v7439 = vadd.f32 0.0, %v7438
  %v7440 = vpop.f32.mrb[0].mxu0
  %v7441 = vpop.f32.mrb[0].mxu0
  %v7442 = vadd.f32 0.0, %v7441
  %v7443 = vpop.f32.mrb[0].mxu0
  %7444 = vmatprep.mubr.bf16.mxu0 0
  %7445 = vmatmul.mubr.bf16.gmra.mrb[0].mxu0 %v7182
  %v7446 = vpop.f32.mrb[0].mxu0
  %v7447 = vadd.f32 0.0, %v7446
  %v7448 = vpop.f32.mrb[0].mxu0
  %v7449 = vpop.f32.mrb[0].mxu0
  %v7450 = vadd.f32 0.0, %v7449
  %v7451 = vpop.f32.mrb[0].mxu0
  %7452 = vmatprep.mubr.bf16.mxu0 0
  %7453 = vmatmul.mubr.bf16.gmra.mrb[0].mxu0 %v7183
  %v7454 = vpop.f32.mrb[0].mxu0
  %v7455 = vadd.f32 0.0, %v7454
  %v7456 = vpop.f32.mrb[0].mxu0
  %v7457 = vpop.f32.mrb[0].mxu0
  %v7458 = vadd.f32 0.0, %v7457
  %v7459 = vpop.f32.mrb[0].mxu0
  %7460 = vmatprep.mubr.bf16.mxu0 0
  %7461 = vmatmul.mubr.bf16.gmra.mrb[0].mxu0 %v7184
  %v7462 = vpop.f32.mrb[0].mxu0
  %v7463 = vadd.f32 0.0, %v7462
  %v7464 = vpop.f32.mrb[0].mxu0
  %v7465 = vpop.f32.mrb[0].mxu0
  %v7466 = vadd.f32 0.0, %v7465
  %v7467 = vpop.f32.mrb[0].mxu0
  %7468 = vmatprep.mubr.bf16.mxu0 0
  %7469 = vmatmul.mubr.bf16.gmra.mrb[0].mxu0 %v7185
  %v7470 = vpop.f32.mrb[0].mxu0
  %v7471 = vadd.f32 0.0, %v7470
  %v7472 = vpop.f32.mrb[0].mxu0
  %v7473 = vpop.f32.mrb[0].mxu0
  %v7474 = vadd.f32 0.0, %v7473
  %v7475 = vpop.f32.mrb[0].mxu0
  %7476 = vmatprep.mubr.bf16.mxu0 0
  %7477 = vmatmul.mubr.bf16.gmra.mrb[0].mxu0 %v7186
  %v7478 = vpop.f32.mrb[0].mxu0
  %v7479 = vadd.f32 0.0, %v7478
  %v7480 = vpop.f32.mrb[0].mxu0
  %v7481 = vpop.f32.mrb[0].mxu0
  %v7482 = vadd.f32 0.0, %v7481
  %v7483 = vpop.f32.mrb[0].mxu0
  %7484 = vmatprep.mubr.bf16.mxu0 0
  %7485 = vmatmul.mubr.bf16.gmra.mrb[0].mxu0 %v7187
  %v7486 = vpop.f32.mrb[0].mxu0
  %v7487 = vadd.f32 0.0, %v7486
  %v7488 = vpop.f32.mrb[0].mxu0
  %v7489 = vpop.f32.mrb[0].mxu0
  %v7490 = vadd.f32 0.0, %v7489
  %v7491 = vpop.f32.mrb[0].mxu0
  %7492 = vmatprep.mubr.bf16.mxu0 0
  %7493 = vmatmul.mubr.bf16.gmra.mrb[0].mxu0 %v7188
  %v7494 = vpop.f32.mrb[0].mxu0
  %v7495 = vadd.f32 0.0, %v7494
  %v7496 = vpop.f32.mrb[0].mxu0
  %v7497 = vpop.f32.mrb[0].mxu0
  %v7498 = vadd.f32 0.0, %v7497
  %v7499 = vpop.f32.mrb[0].mxu0
  %7500 = vmatprep.mubr.bf16.mxu0 0
  %7501 = vmatmul.mubr.bf16.gmra.mrb[0].mxu0 %v7189
  %v7502 = vpop.f32.mrb[0].mxu0
  %v7503 = vadd.f32 0.0, %v7502
  %v7504 = vpop.f32.mrb[0].mxu0
  %v7505 = vpop.f32.mrb[0].mxu0
  %v7506 = vadd.f32 0.0, %v7505
  %v7507 = vpop.f32.mrb[0].mxu0
  %7508 = vmatprep.mubr.bf16.mxu0 0
  %7509 = vmatmul.mubr.bf16.gmra.mrb[0].mxu0 %v7190
  %v7510 = vpop.f32.mrb[0].mxu0
  %v7511 = vadd.f32 0.0, %v7510
  %v7512 = vpop.f32.mrb[0].mxu0
  %v7513 = vpop.f32.mrb[0].mxu0
  %v7514 = vadd.f32 0.0, %v7513
  %v7515 = vpop.f32.mrb[0].mxu0
  %7516 = vmatprep.mubr.bf16.mxu0 0
  %7517 = vmatmul.mubr.bf16.gmra.mrb[0].mxu0 %v7191
  %v7518 = vpop.f32.mrb[0].mxu0
  %v7519 = vadd.f32 0.0, %v7518
  %v7520 = vpop.f32.mrb[0].mxu0
  %v7521 = vpop.f32.mrb[0].mxu0
  %v7522 = vadd.f32 0.0, %v7521
  %v7523 = vpop.f32.mrb[0].mxu0
  %7524 = vmatprep.mubr.bf16.mxu0 0
  %7525 = vmatmul.mubr.bf16.gmra.mrb[0].mxu0 %v7192
  %v7526 = vpop.f32.mrb[0].mxu0
  %v7527 = vadd.f32 0.0, %v7526
  %v7528 = vpop.f32.mrb[0].mxu0
  %v7529 = vpop.f32.mrb[0].mxu0
  %v7530 = vadd.f32 0.0, %v7529
  %v7531 = vpop.f32.mrb[0].mxu0
  %7532 = vmatprep.mubr.bf16.mxu0 0
  %7533 = vmatmul.mubr.bf16.gmra.mrb[0].mxu0 %v7193
  %v7534 = vpop.f32.mrb[0].mxu0
  %v7535 = vadd.f32 0.0, %v7534
  %v7536 = vpop.f32.mrb[0].mxu0
  %v7537 = vpop.f32.mrb[0].mxu0
  %v7538 = vadd.f32 0.0, %v7537
  %v7539 = vpop.f32.mrb[0].mxu0
  %7540 = vmatprep.mubr.bf16.mxu0 0
  %7541 = vmatmul.mubr.bf16.gmra.mrb[0].mxu0 %v7194
  %v7542 = vpop.f32.mrb[0].mxu0
  %v7543 = vadd.f32 0.0, %v7542
  %v7544 = vpop.f32.mrb[0].mxu0
  %v7545 = vpop.f32.mrb[0].mxu0
  %v7546 = vadd.f32 0.0, %v7545
  %v7547 = vpop.f32.mrb[0].mxu0
  %7548 = vdwg.mxu0
  %v7549 = vadd.f32 %v7035, %v7295
  %v7550 = vadd.f32 %v7036, %v7298
  %v7551 = vadd.f32 %v7037, %v7303
  %v7552 = vadd.f32 %v7038, %v7306
  %v7553 = vadd.f32 %v7039, %v7311
  %v7554 = vadd.f32 %v7040, %v7314
  %v7555 = vadd.f32 %v7041, %v7319
  %v7556 = vadd.f32 %v7042, %v7322
  %v7557 = vadd.f32 %v7043, %v7327
  %v7558 = vadd.f32 %v7044, %v7330
  %v7559 = vadd.f32 %v7045, %v7335
  %v7560 = vadd.f32 %v7046, %v7338
  %v7561 = vadd.f32 %v7047, %v7343
  %v7562 = vadd.f32 %v7048, %v7346
  %v7563 = vadd.f32 %v7049, %v7351
  %v7564 = vadd.f32 %v7050, %v7354
  %v7565 = vadd.f32 %v7051, %v7359
  %v7566 = vadd.f32 %v7052, %v7362
  %v7567 = vadd.f32 %v7053, %v7367
  %v7568 = vadd.f32 %v7054, %v7370
  %v7569 = vadd.f32 %v7055, %v7375
  %v7570 = vadd.f32 %v7056, %v7378
  %v7571 = vadd.f32 %v7057, %v7383
  %v7572 = vadd.f32 %v7058, %v7386
  %v7573 = vadd.f32 %v7059, %v7391
  %v7574 = vadd.f32 %v7060, %v7394
  %v7575 = vadd.f32 %v7061, %v7399
  %v7576 = vadd.f32 %v7062, %v7402
  %v7577 = vadd.f32 %v7063, %v7407
  %v7578 = vadd.f32 %v7064, %v7410
  %v7579 = vadd.f32 %v7065, %v7415
  %v7580 = vadd.f32 %v7066, %v7418
  %v7581 = vadd.f32 %v7067, %v7423
  %v7582 = vadd.f32 %v7068, %v7426
  %v7583 = vadd.f32 %v7069, %v7431
  %v7584 = vadd.f32 %v7070, %v7434
  %v7585 = vadd.f32 %v7071, %v7439
  %v7586 = vadd.f32 %v7072, %v7442
  %v7587 = vadd.f32 %v7073, %v7447
  %v7588 = vadd.f32 %v7074, %v7450
  %v7589 = vadd.f32 %v7075, %v7455
  %v7590 = vadd.f32 %v7076, %v7458
  %v7591 = vadd.f32 %v7077, %v7463
  %v7592 = vadd.f32 %v7078, %v7466
  %v7593 = vadd.f32 %v7079, %v7471
  %v7594 = vadd.f32 %v7080, %v7474
  %v7595 = vadd.f32 %v7081, %v7479
  %v7596 = vadd.f32 %v7082, %v7482
  %v7597 = vadd.f32 %v7083, %v7487
  %v7598 = vadd.f32 %v7084, %v7490
  %v7599 = vadd.f32 %v7085, %v7495
  %v7600 = vadd.f32 %v7086, %v7498
  %v7601 = vadd.f32 %v7087, %v7503
  %v7602 = vadd.f32 %v7088, %v7506
  %v7603 = vadd.f32 %v7089, %v7511
  %v7604 = vadd.f32 %v7090, %v7514
  %v7605 = vadd.f32 %v7091, %v7519
  %v7606 = vadd.f32 %v7092, %v7522
  %v7607 = vadd.f32 %v7093, %v7527
  %v7608 = vadd.f32 %v7094, %v7530
  %v7609 = vadd.f32 %v7095, %v7535
  %v7610 = vadd.f32 %v7096, %v7538
  %v7611 = vadd.f32 %v7097, %v7543
  %v7612 = vadd.f32 %v7098, %v7546
  %v7613 = vld [vmem:[%s2170 + $0x2] sm:$0xff]
  %v7614 = vld [vmem:[%s2170 + $0xa] sm:$0xff]
  %v7615 = vld [vmem:[%s2170 + $0x1a] sm:$0xff]
  %v7616 = vld [vmem:[%s2170 + $0x22] sm:$0xff]
  %v7617 = vld [vmem:[%s2170 + $0x32] sm:$0xff]
  %v7618 = vld [vmem:[%s2170 + $0x3a] sm:$0xff]
  %v7619 = vld [vmem:[%s2170 + $0x4a] sm:$0xff]
  %v7620 = vld [vmem:[%s2170 + $0x52] sm:$0xff]
  %v7621 = vld [vmem:[%s2170 + $0x62] sm:$0xff]
  %v7622 = vld [vmem:[%s2170 + $0x6a] sm:$0xff]
  %v7623 = vld [vmem:[%s2170 + $0x7a] sm:$0xff]
  %v7624 = vld [vmem:[%s2170 + $0x82] sm:$0xff]
  %v7625 = vld [vmem:[%s2170 + $0x92] sm:$0xff]
  %v7626 = vld [vmem:[%s2170 + $0x9a] sm:$0xff]
  %v7627 = vld [vmem:[%s2170 + $0xaa] sm:$0xff]
  %v7628 = vld [vmem:[%s2170 + $0xb2] sm:$0xff]
  %v7629 = vld [vmem:[%s2170 + $0xc2] sm:$0xff]
  %v7630 = vld [vmem:[%s2170 + $0xca] sm:$0xff]
  %v7631 = vld [vmem:[%s2170 + $0xda] sm:$0xff]
  %v7632 = vld [vmem:[%s2170 + $0xe2] sm:$0xff]
  %v7633 = vld [vmem:[%s2170 + $0xf2] sm:$0xff]
  %v7634 = vld [vmem:[%s2170 + $0xfa] sm:$0xff]
  %v7635 = vld [vmem:[%s2170 + $0x10a] sm:$0xff]
  %v7636 = vld [vmem:[%s2170 + $0x112] sm:$0xff]
  %v7637 = vld [vmem:[%s2170 + $0x122] sm:$0xff]
  %v7638 = vld [vmem:[%s2170 + $0x12a] sm:$0xff]
  %v7639 = vld [vmem:[%s2170 + $0x13a] sm:$0xff]
  %v7640 = vld [vmem:[%s2170 + $0x142] sm:$0xff]
  %v7641 = vld [vmem:[%s2170 + $0x152] sm:$0xff]
  %v7642 = vld [vmem:[%s2170 + $0x15a] sm:$0xff]
  %v7643 = vld [vmem:[%s2170 + $0x16a] sm:$0xff]
  %v7644 = vld [vmem:[%s2170 + $0x172] sm:$0xff]
  %v7645 = vld [vmem:[%s2170 + $0x1b2] sm:$0xff]
  %v7646 = vld [vmem:[%s2170 + $0x1ba] sm:$0xff]
  %v7647 = vld [vmem:[%s2170 + $0x1ca] sm:$0xff]
  %v7648 = vld [vmem:[%s2170 + $0x1d2] sm:$0xff]
  %v7649 = vld [vmem:[%s2170 + $0x1e2] sm:$0xff]
  %v7650 = vld [vmem:[%s2170 + $0x1ea] sm:$0xff]
  %v7651 = vld [vmem:[%s2170 + $0x1fa] sm:$0xff]
  %v7652 = vld [vmem:[%s2170 + $0x202] sm:$0xff]
  %v7653 = vld [vmem:[%s2170 + $0x212] sm:$0xff]
  %v7654 = vld [vmem:[%s2170 + $0x21a] sm:$0xff]
  %v7655 = vld [vmem:[%s2170 + $0x22a] sm:$0xff]
  %v7656 = vld [vmem:[%s2170 + $0x232] sm:$0xff]
  %v7657 = vld [vmem:[%s2170 + $0x242] sm:$0xff]
  %v7658 = vld [vmem:[%s2170 + $0x24a] sm:$0xff]
  %v7659 = vld [vmem:[%s2170 + $0x25a] sm:$0xff]
  %v7660 = vld [vmem:[%s2170 + $0x262] sm:$0xff]
  %v7661 = vld [vmem:[%s2170 + $0x272] sm:$0xff]
  %v7662 = vld [vmem:[%s2170 + $0x27a] sm:$0xff]
  %v7663 = vld [vmem:[%s2170 + $0x28a] sm:$0xff]
  %v7664 = vld [vmem:[%s2170 + $0x292] sm:$0xff]
  %v7665 = vld [vmem:[%s2170 + $0x2a2] sm:$0xff]
  %v7666 = vld [vmem:[%s2170 + $0x2aa] sm:$0xff]
  %v7667 = vld [vmem:[%s2170 + $0x2ba] sm:$0xff]
  %v7668 = vld [vmem:[%s2170 + $0x2c2] sm:$0xff]
  %v7669 = vld [vmem:[%s2170 + $0x2d2] sm:$0xff]
  %v7670 = vld [vmem:[%s2170 + $0x2da] sm:$0xff]
  %v7671 = vld [vmem:[%s2170 + $0x2ea] sm:$0xff]
  %v7672 = vld [vmem:[%s2170 + $0x2f2] sm:$0xff]
  %v7673 = vld [vmem:[%s2170 + $0x302] sm:$0xff]
  %v7674 = vld [vmem:[%s2170 + $0x30a] sm:$0xff]
  %v7675 = vld [vmem:[%s2170 + $0x31a] sm:$0xff]
  %v7676 = vld [vmem:[%s2170 + $0x322] sm:$0xff]
  %v7677 = vpack.c.bf16 %v7614, %v7613
  %v7678 = vpack.c.bf16 %v7616, %v7615
  %v7679 = vpack.c.bf16 %v7618, %v7617
  %v7680 = vpack.c.bf16 %v7620, %v7619
  %v7681 = vpack.c.bf16 %v7622, %v7621
  %v7682 = vpack.c.bf16 %v7624, %v7623
  %v7683 = vpack.c.bf16 %v7626, %v7625
  %v7684 = vpack.c.bf16 %v7628, %v7627
  %v7685 = vpack.c.bf16 %v7630, %v7629
  %v7686 = vpack.c.bf16 %v7632, %v7631
  %v7687 = vpack.c.bf16 %v7634, %v7633
  %v7688 = vpack.c.bf16 %v7636, %v7635
  %v7689 = vpack.c.bf16 %v7638, %v7637
  %v7690 = vpack.c.bf16 %v7640, %v7639
  %v7691 = vpack.c.bf16 %v7642, %v7641
  %v7692 = vpack.c.bf16 %v7644, %v7643
  %v7693 = vpack.c.bf16 %v7646, %v7645
  %v7694 = vpack.c.bf16 %v7648, %v7647
  %v7695 = vpack.c.bf16 %v7650, %v7649
  %v7696 = vpack.c.bf16 %v7652, %v7651
  %v7697 = vpack.c.bf16 %v7654, %v7653
  %v7698 = vpack.c.bf16 %v7656, %v7655
  %v7699 = vpack.c.bf16 %v7658, %v7657
  %v7700 = vpack.c.bf16 %v7660, %v7659
  %v7701 = vpack.c.bf16 %v7662, %v7661
  %v7702 = vpack.c.bf16 %v7664, %v7663
  %v7703 = vpack.c.bf16 %v7666, %v7665
  %v7704 = vpack.c.bf16 %v7668, %v7667
  %v7705 = vpack.c.bf16 %v7670, %v7669
  %v7706 = vpack.c.bf16 %v7672, %v7671
  %v7707 = vpack.c.bf16 %v7674, %v7673
  %v7708 = vpack.c.bf16 %v7676, %v7675
  %s7709 = scalar_lea.vmem %s3, 512
  %v7710 = vld [vmem:[%s7709] sm:$0xf]
  %v7711 = vld [vmem:[%s7709 + $0x4] sm:$0xf]
  %v7712 = vld [vmem:[%s7709 + $0x8] sm:$0xf]
  %v7713 = vld [vmem:[%s7709 + $0xc] sm:$0xf]
  %v7714 = vld [vmem:[%s7709 + $0x10] sm:$0xf]
  %v7715 = vld [vmem:[%s7709 + $0x14] sm:$0xf]
  %v7716 = vld [vmem:[%s7709 + $0x18] sm:$0xf]
  %v7717 = vld [vmem:[%s7709 + $0x1c] sm:$0xf]
  %v7718 = vld [vmem:[%s7709 + $0x20] sm:$0xf]
  %v7719 = vld [vmem:[%s7709 + $0x24] sm:$0xf]
  %v7720 = vld [vmem:[%s7709 + $0x28] sm:$0xf]
  %v7721 = vld [vmem:[%s7709 + $0x2c] sm:$0xf]
  %v7722 = vld [vmem:[%s7709 + $0x30] sm:$0xf]
  %v7723 = vld [vmem:[%s7709 + $0x34] sm:$0xf]
  %v7724 = vld [vmem:[%s7709 + $0x38] sm:$0xf]
  %v7725 = vld [vmem:[%s7709 + $0x3c] sm:$0xf]
  %v7742 = vunpack.c.l.b16 %v7710
  %v7743 = vunpack.c.l.b16 %v7711
  %v7744 = vunpack.c.l.b16 %v7712
  %v7745 = vunpack.c.l.b16 %v7713
  %v7746 = vunpack.c.l.b16 %v7714
  %v7747 = vunpack.c.l.b16 %v7715
  %v7748 = vunpack.c.l.b16 %v7716
  %v7749 = vunpack.c.l.b16 %v7717
  %v7750 = vunpack.c.l.b16 %v7718
  %v7751 = vunpack.c.l.b16 %v7719
  %v7752 = vunpack.c.l.b16 %v7720
  %v7753 = vunpack.c.l.b16 %v7721
  %v7754 = vunpack.c.l.b16 %v7722
  %v7755 = vunpack.c.l.b16 %v7723
  %v7756 = vunpack.c.l.b16 %v7724
  %v7757 = vunpack.c.l.b16 %v7725
  %v7758 = vpack.c.b16 %v7743, %v7742
  %v7759 = vpack.c.b16 %v7745, %v7744
  %v7760 = vpack.c.b16 %v7747, %v7746
  %v7761 = vpack.c.b16 %v7749, %v7748
  %v7762 = vpack.c.b16 %v7751, %v7750
  %v7763 = vpack.c.b16 %v7753, %v7752
  %v7764 = vpack.c.b16 %v7755, %v7754
  %v7765 = vpack.c.b16 %v7757, %v7756
  %7774 = vmatprep.subr.bf16.mxu0 0
  %7775 = vmatpush1.bf16.msra.mxu0 %v7758
  %7776 = vmatprep.subr.bf16.mxu0 0
  %7777 = vmatpush1.bf16.msra.mxu0 %v7759
  %7778 = vmatprep.subr.bf16.mxu0 0
  %7779 = vmatpush1.bf16.msra.mxu0 %v7760
  %7780 = vmatprep.subr.bf16.mxu0 0
  %7781 = vmatpush1.bf16.msra.mxu0 %v7761
  %7782 = vmatprep.subr.bf16.mxu0 0
  %7783 = vmatpush1.bf16.msra.mxu0 %v7762
  %7784 = vmatprep.subr.bf16.mxu0 0
  %7785 = vmatpush1.bf16.msra.mxu0 %v7763
  %7786 = vmatprep.subr.bf16.mxu0 0
  %7787 = vmatpush1.bf16.msra.mxu0 %v7764
  %7788 = vmatprep.subr.bf16.mxu0 0
  %7789 = vmatpush1.bf16.msra.mxu0 %v7765
  %7790 = vmatprep.subr.bf16.mxu0 0
  %7791 = vmatpush1.bf16.msra.mxu0 0
  %7792 = vmatprep.subr.bf16.mxu0 0
  %7793 = vmatpush1.bf16.msra.mxu0 0
  %7794 = vmatprep.subr.bf16.mxu0 0
  %7795 = vmatpush1.bf16.msra.mxu0 0
  %7796 = vmatprep.subr.bf16.mxu0 0
  %7797 = vmatpush1.bf16.msra.mxu0 0
  %7798 = vmatprep.subr.bf16.mxu0 0
  %7799 = vmatpush1.bf16.msra.mxu0 0
  %7800 = vmatprep.subr.bf16.mxu0 0
  %7801 = vmatpush1.bf16.msra.mxu0 0
  %7802 = vmatprep.subr.bf16.mxu0 0
  %7803 = vmatpush1.bf16.msra.mxu0 0
  %7804 = vmatprep.subr.bf16.mxu0 0
  %7805 = vmatpush1.bf16.msra.mxu0 0
  %7806 = vmatprep.mubr.bf16.mxu0 0
  %7807 = vmatmul.mubr.bf16.gmra.mrb[0].mxu0 %v7677
  %v7808 = vpop.f32.mrb[0].mxu0
  %v7809 = vadd.f32 0.0, %v7808
  %v7810 = vpop.f32.mrb[0].mxu0
  %v7811 = vpop.f32.mrb[0].mxu0
  %v7812 = vadd.f32 0.0, %v7811
  %v7813 = vpop.f32.mrb[0].mxu0
  %7814 = vmatprep.mubr.bf16.mxu0 0
  %7815 = vmatmul.mubr.bf16.gmra.mrb[0].mxu0 %v7678
  %v7816 = vpop.f32.mrb[0].mxu0
  %v7817 = vadd.f32 0.0, %v7816
  %v7818 = vpop.f32.mrb[0].mxu0
  %v7819 = vpop.f32.mrb[0].mxu0
  %v7820 = vadd.f32 0.0, %v7819
  %v7821 = vpop.f32.mrb[0].mxu0
  %7822 = vmatprep.mubr.bf16.mxu0 0
  %7823 = vmatmul.mubr.bf16.gmra.mrb[0].mxu0 %v7679
  %v7824 = vpop.f32.mrb[0].mxu0
  %v7825 = vadd.f32 0.0, %v7824
  %v7826 = vpop.f32.mrb[0].mxu0
  %v7827 = vpop.f32.mrb[0].mxu0
  %v7828 = vadd.f32 0.0, %v7827
  %v7829 = vpop.f32.mrb[0].mxu0
  %7830 = vmatprep.mubr.bf16.mxu0 0
  %7831 = vmatmul.mubr.bf16.gmra.mrb[0].mxu0 %v7680
  %v7832 = vpop.f32.mrb[0].mxu0
  %v7833 = vadd.f32 0.0, %v7832
  %v7834 = vpop.f32.mrb[0].mxu0
  %v7835 = vpop.f32.mrb[0].mxu0
  %v7836 = vadd.f32 0.0, %v7835
  %v7837 = vpop.f32.mrb[0].mxu0
  %7838 = vmatprep.mubr.bf16.mxu0 0
  %7839 = vmatmul.mubr.bf16.gmra.mrb[0].mxu0 %v7681
  %v7840 = vpop.f32.mrb[0].mxu0
  %v7841 = vadd.f32 0.0, %v7840
  %v7842 = vpop.f32.mrb[0].mxu0
  %v7843 = vpop.f32.mrb[0].mxu0
  %v7844 = vadd.f32 0.0, %v7843
  %v7845 = vpop.f32.mrb[0].mxu0
  %7846 = vmatprep.mubr.bf16.mxu0 0
  %7847 = vmatmul.mubr.bf16.gmra.mrb[0].mxu0 %v7682
  %v7848 = vpop.f32.mrb[0].mxu0
  %v7849 = vadd.f32 0.0, %v7848
  %v7850 = vpop.f32.mrb[0].mxu0
  %v7851 = vpop.f32.mrb[0].mxu0
  %v7852 = vadd.f32 0.0, %v7851
  %v7853 = vpop.f32.mrb[0].mxu0
  %7854 = vmatprep.mubr.bf16.mxu0 0
  %7855 = vmatmul.mubr.bf16.gmra.mrb[0].mxu0 %v7683
  %v7856 = vpop.f32.mrb[0].mxu0
  %v7857 = vadd.f32 0.0, %v7856
  %v7858 = vpop.f32.mrb[0].mxu0
  %v7859 = vpop.f32.mrb[0].mxu0
  %v7860 = vadd.f32 0.0, %v7859
  %v7861 = vpop.f32.mrb[0].mxu0
  %7862 = vmatprep.mubr.bf16.mxu0 0
  %7863 = vmatmul.mubr.bf16.gmra.mrb[0].mxu0 %v7684
  %v7864 = vpop.f32.mrb[0].mxu0
  %v7865 = vadd.f32 0.0, %v7864
  %v7866 = vpop.f32.mrb[0].mxu0
  %v7867 = vpop.f32.mrb[0].mxu0
  %v7868 = vadd.f32 0.0, %v7867
  %v7869 = vpop.f32.mrb[0].mxu0
  %7870 = vmatprep.mubr.bf16.mxu0 0
  %7871 = vmatmul.mubr.bf16.gmra.mrb[0].mxu0 %v7685
  %v7872 = vpop.f32.mrb[0].mxu0
  %v7873 = vadd.f32 0.0, %v7872
  %v7874 = vpop.f32.mrb[0].mxu0
  %v7875 = vpop.f32.mrb[0].mxu0
  %v7876 = vadd.f32 0.0, %v7875
  %v7877 = vpop.f32.mrb[0].mxu0
  %7878 = vmatprep.mubr.bf16.mxu0 0
  %7879 = vmatmul.mubr.bf16.gmra.mrb[0].mxu0 %v7686
  %v7880 = vpop.f32.mrb[0].mxu0
  %v7881 = vadd.f32 0.0, %v7880
  %v7882 = vpop.f32.mrb[0].mxu0
  %v7883 = vpop.f32.mrb[0].mxu0
  %v7884 = vadd.f32 0.0, %v7883
  %v7885 = vpop.f32.mrb[0].mxu0
  %7886 = vmatprep.mubr.bf16.mxu0 0
  %7887 = vmatmul.mubr.bf16.gmra.mrb[0].mxu0 %v7687
  %v7888 = vpop.f32.mrb[0].mxu0
  %v7889 = vadd.f32 0.0, %v7888
  %v7890 = vpop.f32.mrb[0].mxu0
  %v7891 = vpop.f32.mrb[0].mxu0
  %v7892 = vadd.f32 0.0, %v7891
  %v7893 = vpop.f32.mrb[0].mxu0
  %7894 = vmatprep.mubr.bf16.mxu0 0
  %7895 = vmatmul.mubr.bf16.gmra.mrb[0].mxu0 %v7688
  %v7896 = vpop.f32.mrb[0].mxu0
  %v7897 = vadd.f32 0.0, %v7896
  %v7898 = vpop.f32.mrb[0].mxu0
  %v7899 = vpop.f32.mrb[0].mxu0
  %v7900 = vadd.f32 0.0, %v7899
  %v7901 = vpop.f32.mrb[0].mxu0
  %7902 = vmatprep.mubr.bf16.mxu0 0
  %7903 = vmatmul.mubr.bf16.gmra.mrb[0].mxu0 %v7689
  %v7904 = vpop.f32.mrb[0].mxu0
  %v7905 = vadd.f32 0.0, %v7904
  %v7906 = vpop.f32.mrb[0].mxu0
  %v7907 = vpop.f32.mrb[0].mxu0
  %v7908 = vadd.f32 0.0, %v7907
  %v7909 = vpop.f32.mrb[0].mxu0
  %7910 = vmatprep.mubr.bf16.mxu0 0
  %7911 = vmatmul.mubr.bf16.gmra.mrb[0].mxu0 %v7690
  %v7912 = vpop.f32.mrb[0].mxu0
  %v7913 = vadd.f32 0.0, %v7912
  %v7914 = vpop.f32.mrb[0].mxu0
  %v7915 = vpop.f32.mrb[0].mxu0
  %v7916 = vadd.f32 0.0, %v7915
  %v7917 = vpop.f32.mrb[0].mxu0
  %7918 = vmatprep.mubr.bf16.mxu0 0
  %7919 = vmatmul.mubr.bf16.gmra.mrb[0].mxu0 %v7691
  %v7920 = vpop.f32.mrb[0].mxu0
  %v7921 = vadd.f32 0.0, %v7920
  %v7922 = vpop.f32.mrb[0].mxu0
  %v7923 = vpop.f32.mrb[0].mxu0
  %v7924 = vadd.f32 0.0, %v7923
  %v7925 = vpop.f32.mrb[0].mxu0
  %7926 = vmatprep.mubr.bf16.mxu0 0
  %7927 = vmatmul.mubr.bf16.gmra.mrb[0].mxu0 %v7692
  %v7928 = vpop.f32.mrb[0].mxu0
  %v7929 = vadd.f32 0.0, %v7928
  %v7930 = vpop.f32.mrb[0].mxu0
  %v7931 = vpop.f32.mrb[0].mxu0
  %v7932 = vadd.f32 0.0, %v7931
  %v7933 = vpop.f32.mrb[0].mxu0
  %7934 = vmatprep.mubr.bf16.mxu0 0
  %7935 = vmatmul.mubr.bf16.gmra.mrb[0].mxu0 %v7693
  %v7936 = vpop.f32.mrb[0].mxu0
  %v7937 = vadd.f32 0.0, %v7936
  %v7938 = vpop.f32.mrb[0].mxu0
  %v7939 = vpop.f32.mrb[0].mxu0
  %v7940 = vadd.f32 0.0, %v7939
  %v7941 = vpop.f32.mrb[0].mxu0
  %7942 = vmatprep.mubr.bf16.mxu0 0
  %7943 = vmatmul.mubr.bf16.gmra.mrb[0].mxu0 %v7694
  %v7944 = vpop.f32.mrb[0].mxu0
  %v7945 = vadd.f32 0.0, %v7944
  %v7946 = vpop.f32.mrb[0].mxu0
  %v7947 = vpop.f32.mrb[0].mxu0
  %v7948 = vadd.f32 0.0, %v7947
  %v7949 = vpop.f32.mrb[0].mxu0
  %7950 = vmatprep.mubr.bf16.mxu0 0
  %7951 = vmatmul.mubr.bf16.gmra.mrb[0].mxu0 %v7695
  %v7952 = vpop.f32.mrb[0].mxu0
  %v7953 = vadd.f32 0.0, %v7952
  %v7954 = vpop.f32.mrb[0].mxu0
  %v7955 = vpop.f32.mrb[0].mxu0
  %v7956 = vadd.f32 0.0, %v7955
  %v7957 = vpop.f32.mrb[0].mxu0
  %7958 = vmatprep.mubr.bf16.mxu0 0
  %7959 = vmatmul.mubr.bf16.gmra.mrb[0].mxu0 %v7696
  %v7960 = vpop.f32.mrb[0].mxu0
  %v7961 = vadd.f32 0.0, %v7960
  %v7962 = vpop.f32.mrb[0].mxu0
  %v7963 = vpop.f32.mrb[0].mxu0
  %v7964 = vadd.f32 0.0, %v7963
  %v7965 = vpop.f32.mrb[0].mxu0
  %7966 = vmatprep.mubr.bf16.mxu0 0
  %7967 = vmatmul.mubr.bf16.gmra.mrb[0].mxu0 %v7697
  %v7968 = vpop.f32.mrb[0].mxu0
  %v7969 = vadd.f32 0.0, %v7968
  %v7970 = vpop.f32.mrb[0].mxu0
  %v7971 = vpop.f32.mrb[0].mxu0
  %v7972 = vadd.f32 0.0, %v7971
  %v7973 = vpop.f32.mrb[0].mxu0
  %7974 = vmatprep.mubr.bf16.mxu0 0
  %7975 = vmatmul.mubr.bf16.gmra.mrb[0].mxu0 %v7698
  %v7976 = vpop.f32.mrb[0].mxu0
  %v7977 = vadd.f32 0.0, %v7976
  %v7978 = vpop.f32.mrb[0].mxu0
  %v7979 = vpop.f32.mrb[0].mxu0
  %v7980 = vadd.f32 0.0, %v7979
  %v7981 = vpop.f32.mrb[0].mxu0
  %7982 = vmatprep.mubr.bf16.mxu0 0
  %7983 = vmatmul.mubr.bf16.gmra.mrb[0].mxu0 %v7699
  %v7984 = vpop.f32.mrb[0].mxu0
  %v7985 = vadd.f32 0.0, %v7984
  %v7986 = vpop.f32.mrb[0].mxu0
  %v7987 = vpop.f32.mrb[0].mxu0
  %v7988 = vadd.f32 0.0, %v7987
  %v7989 = vpop.f32.mrb[0].mxu0
  %7990 = vmatprep.mubr.bf16.mxu0 0
  %7991 = vmatmul.mubr.bf16.gmra.mrb[0].mxu0 %v7700
  %v7992 = vpop.f32.mrb[0].mxu0
  %v7993 = vadd.f32 0.0, %v7992
  %v7994 = vpop.f32.mrb[0].mxu0
  %v7995 = vpop.f32.mrb[0].mxu0
  %v7996 = vadd.f32 0.0, %v7995
  %v7997 = vpop.f32.mrb[0].mxu0
  %7998 = vmatprep.mubr.bf16.mxu0 0
  %7999 = vmatmul.mubr.bf16.gmra.mrb[0].mxu0 %v7701
  %v8000 = vpop.f32.mrb[0].mxu0
  %v8001 = vadd.f32 0.0, %v8000
  %v8002 = vpop.f32.mrb[0].mxu0
  %v8003 = vpop.f32.mrb[0].mxu0
  %v8004 = vadd.f32 0.0, %v8003
  %v8005 = vpop.f32.mrb[0].mxu0
  %8006 = vmatprep.mubr.bf16.mxu0 0
  %8007 = vmatmul.mubr.bf16.gmra.mrb[0].mxu0 %v7702
  %v8008 = vpop.f32.mrb[0].mxu0
  %v8009 = vadd.f32 0.0, %v8008
  %v8010 = vpop.f32.mrb[0].mxu0
  %v8011 = vpop.f32.mrb[0].mxu0
  %v8012 = vadd.f32 0.0, %v8011
  %v8013 = vpop.f32.mrb[0].mxu0
  %8014 = vmatprep.mubr.bf16.mxu0 0
  %8015 = vmatmul.mubr.bf16.gmra.mrb[0].mxu0 %v7703
  %v8016 = vpop.f32.mrb[0].mxu0
  %v8017 = vadd.f32 0.0, %v8016
  %v8018 = vpop.f32.mrb[0].mxu0
  %v8019 = vpop.f32.mrb[0].mxu0
  %v8020 = vadd.f32 0.0, %v8019
  %v8021 = vpop.f32.mrb[0].mxu0
  %8022 = vmatprep.mubr.bf16.mxu0 0
  %8023 = vmatmul.mubr.bf16.gmra.mrb[0].mxu0 %v7704
  %v8024 = vpop.f32.mrb[0].mxu0
  %v8025 = vadd.f32 0.0, %v8024
  %v8026 = vpop.f32.mrb[0].mxu0
  %v8027 = vpop.f32.mrb[0].mxu0
  %v8028 = vadd.f32 0.0, %v8027
  %v8029 = vpop.f32.mrb[0].mxu0
  %8030 = vmatprep.mubr.bf16.mxu0 0
  %8031 = vmatmul.mubr.bf16.gmra.mrb[0].mxu0 %v7705
  %v8032 = vpop.f32.mrb[0].mxu0
  %v8033 = vadd.f32 0.0, %v8032
  %v8034 = vpop.f32.mrb[0].mxu0
  %v8035 = vpop.f32.mrb[0].mxu0
  %v8036 = vadd.f32 0.0, %v8035
  %v8037 = vpop.f32.mrb[0].mxu0
  %8038 = vmatprep.mubr.bf16.mxu0 0
  %8039 = vmatmul.mubr.bf16.gmra.mrb[0].mxu0 %v7706
  %v8040 = vpop.f32.mrb[0].mxu0
  %v8041 = vadd.f32 0.0, %v8040
  %v8042 = vpop.f32.mrb[0].mxu0
  %v8043 = vpop.f32.mrb[0].mxu0
  %v8044 = vadd.f32 0.0, %v8043
  %v8045 = vpop.f32.mrb[0].mxu0
  %8046 = vmatprep.mubr.bf16.mxu0 0
  %8047 = vmatmul.mubr.bf16.gmra.mrb[0].mxu0 %v7707
  %v8048 = vpop.f32.mrb[0].mxu0
  %v8049 = vadd.f32 0.0, %v8048
  %v8050 = vpop.f32.mrb[0].mxu0
  %v8051 = vpop.f32.mrb[0].mxu0
  %v8052 = vadd.f32 0.0, %v8051
  %v8053 = vpop.f32.mrb[0].mxu0
  %8054 = vmatprep.mubr.bf16.mxu0 0
  %8055 = vmatmul.mubr.bf16.gmra.mrb[0].mxu0 %v7708
  %v8056 = vpop.f32.mrb[0].mxu0
  %v8057 = vadd.f32 0.0, %v8056
  %v8058 = vpop.f32.mrb[0].mxu0
  %v8059 = vpop.f32.mrb[0].mxu0
  %v8060 = vadd.f32 0.0, %v8059
  %v8061 = vpop.f32.mrb[0].mxu0
  %8062 = vdwg.mxu0
  %v8063 = vadd.f32 %v7549, %v7809
  %v8064 = vadd.f32 %v7550, %v7812
  %v8065 = vadd.f32 %v7551, %v7817
  %v8066 = vadd.f32 %v7552, %v7820
  %v8067 = vadd.f32 %v7553, %v7825
  %v8068 = vadd.f32 %v7554, %v7828
  %v8069 = vadd.f32 %v7555, %v7833
  %v8070 = vadd.f32 %v7556, %v7836
  %v8071 = vadd.f32 %v7557, %v7841
  %v8072 = vadd.f32 %v7558, %v7844
  %v8073 = vadd.f32 %v7559, %v7849
  %v8074 = vadd.f32 %v7560, %v7852
  %v8075 = vadd.f32 %v7561, %v7857
  %v8076 = vadd.f32 %v7562, %v7860
  %v8077 = vadd.f32 %v7563, %v7865
  %v8078 = vadd.f32 %v7564, %v7868
  %v8079 = vadd.f32 %v7565, %v7873
  %v8080 = vadd.f32 %v7566, %v7876
  %v8081 = vadd.f32 %v7567, %v7881
  %v8082 = vadd.f32 %v7568, %v7884
  %v8083 = vadd.f32 %v7569, %v7889
  %v8084 = vadd.f32 %v7570, %v7892
  %v8085 = vadd.f32 %v7571, %v7897
  %v8086 = vadd.f32 %v7572, %v7900
  %v8087 = vadd.f32 %v7573, %v7905
  %v8088 = vadd.f32 %v7574, %v7908
  %v8089 = vadd.f32 %v7575, %v7913
  %v8090 = vadd.f32 %v7576, %v7916
  %v8091 = vadd.f32 %v7577, %v7921
  %v8092 = vadd.f32 %v7578, %v7924
  %v8093 = vadd.f32 %v7579, %v7929
  %v8094 = vadd.f32 %v7580, %v7932
  %v8095 = vadd.f32 %v7581, %v7937
  %v8096 = vadd.f32 %v7582, %v7940
  %v8097 = vadd.f32 %v7583, %v7945
  %v8098 = vadd.f32 %v7584, %v7948
  %v8099 = vadd.f32 %v7585, %v7953
  %v8100 = vadd.f32 %v7586, %v7956
  %v8101 = vadd.f32 %v7587, %v7961
  %v8102 = vadd.f32 %v7588, %v7964
  %v8103 = vadd.f32 %v7589, %v7969
  %v8104 = vadd.f32 %v7590, %v7972
  %v8105 = vadd.f32 %v7591, %v7977
  %v8106 = vadd.f32 %v7592, %v7980
  %v8107 = vadd.f32 %v7593, %v7985
  %v8108 = vadd.f32 %v7594, %v7988
  %v8109 = vadd.f32 %v7595, %v7993
  %v8110 = vadd.f32 %v7596, %v7996
  %v8111 = vadd.f32 %v7597, %v8001
  %v8112 = vadd.f32 %v7598, %v8004
  %v8113 = vadd.f32 %v7599, %v8009
  %v8114 = vadd.f32 %v7600, %v8012
  %v8115 = vadd.f32 %v7601, %v8017
  %v8116 = vadd.f32 %v7602, %v8020
  %v8117 = vadd.f32 %v7603, %v8025
  %v8118 = vadd.f32 %v7604, %v8028
  %v8119 = vadd.f32 %v7605, %v8033
  %v8120 = vadd.f32 %v7606, %v8036
  %v8121 = vadd.f32 %v7607, %v8041
  %v8122 = vadd.f32 %v7608, %v8044
  %v8123 = vadd.f32 %v7609, %v8049
  %v8124 = vadd.f32 %v7610, %v8052
  %v8125 = vadd.f32 %v7611, %v8057
  %v8126 = vadd.f32 %v7612, %v8060
  %v8127 = vld [vmem:[%s8] sm:$0x1]
  %v8128 = vld [vmem:[%s9] sm:$0x1]
  %v8129 = vlaneseq
  %v8130 = vshrl.u32 %v8129, 7
  %v8131 = vsub.s32 0, %v8130
  %v8132 = vrot.slane %v8063, %v8131
  %v8133 = vsub.f32 %v8063, %v8132
  %v8134 = vsub.f32 %v8064, %v8132
  %v8135 = vsub.f32 %v8065, %v8132
  %v8136 = vsub.f32 %v8066, %v8132
  %v8137 = vsub.f32 %v8067, %v8132
  %v8138 = vsub.f32 %v8068, %v8132
  %v8139 = vsub.f32 %v8069, %v8132
  %v8140 = vsub.f32 %v8070, %v8132
  %v8141 = vsub.f32 %v8071, %v8132
  %v8142 = vsub.f32 %v8072, %v8132
  %v8143 = vsub.f32 %v8073, %v8132
  %v8144 = vsub.f32 %v8074, %v8132
  %v8145 = vsub.f32 %v8075, %v8132
  %v8146 = vsub.f32 %v8076, %v8132
  %v8147 = vsub.f32 %v8077, %v8132
  %v8148 = vsub.f32 %v8078, %v8132
  %v8149 = vsub.f32 %v8079, %v8132
  %v8150 = vsub.f32 %v8080, %v8132
  %v8151 = vsub.f32 %v8081, %v8132
  %v8152 = vsub.f32 %v8082, %v8132
  %v8153 = vsub.f32 %v8083, %v8132
  %v8154 = vsub.f32 %v8084, %v8132
  %v8155 = vsub.f32 %v8085, %v8132
  %v8156 = vsub.f32 %v8086, %v8132
  %v8157 = vsub.f32 %v8087, %v8132
  %v8158 = vsub.f32 %v8088, %v8132
  %v8159 = vsub.f32 %v8089, %v8132
  %v8160 = vsub.f32 %v8090, %v8132
  %v8161 = vsub.f32 %v8091, %v8132
  %v8162 = vsub.f32 %v8092, %v8132
  %v8163 = vsub.f32 %v8093, %v8132
  %v8164 = vsub.f32 %v8094, %v8132
  %v8165 = vsub.f32 %v8095, %v8132
  %v8166 = vsub.f32 %v8096, %v8132
  %v8167 = vsub.f32 %v8097, %v8132
  %v8168 = vsub.f32 %v8098, %v8132
  %v8169 = vsub.f32 %v8099, %v8132
  %v8170 = vsub.f32 %v8100, %v8132
  %v8171 = vsub.f32 %v8101, %v8132
  %v8172 = vsub.f32 %v8102, %v8132
  %v8173 = vsub.f32 %v8103, %v8132
  %v8174 = vsub.f32 %v8104, %v8132
  %v8175 = vsub.f32 %v8105, %v8132
  %v8176 = vsub.f32 %v8106, %v8132
  %v8177 = vsub.f32 %v8107, %v8132
  %v8178 = vsub.f32 %v8108, %v8132
  %v8179 = vsub.f32 %v8109, %v8132
  %v8180 = vsub.f32 %v8110, %v8132
  %v8181 = vsub.f32 %v8111, %v8132
  %v8182 = vsub.f32 %v8112, %v8132
  %v8183 = vsub.f32 %v8113, %v8132
  %v8184 = vsub.f32 %v8114, %v8132
  %v8185 = vsub.f32 %v8115, %v8132
  %v8186 = vsub.f32 %v8116, %v8132
  %v8187 = vsub.f32 %v8117, %v8132
  %v8188 = vsub.f32 %v8118, %v8132
  %v8189 = vsub.f32 %v8119, %v8132
  %v8190 = vsub.f32 %v8120, %v8132
  %v8191 = vsub.f32 %v8121, %v8132
  %v8192 = vsub.f32 %v8122, %v8132
  %v8193 = vsub.f32 %v8123, %v8132
  %v8194 = vsub.f32 %v8124, %v8132
  %v8195 = vsub.f32 %v8125, %v8132
  %v8196 = vsub.f32 %v8126, %v8132
  %v8197 = vadd.f32 %v8133, %v8134
  %v8198 = vadd.f32 %v8197, %v8135
  %v8199 = vadd.f32 %v8198, %v8136
  %v8200 = vadd.f32 %v8199, %v8137
  %v8201 = vadd.f32 %v8200, %v8138
  %v8202 = vadd.f32 %v8201, %v8139
  %v8203 = vadd.f32 %v8202, %v8140
  %v8204 = vadd.f32 %v8203, %v8141
  %v8205 = vadd.f32 %v8204, %v8142
  %v8206 = vadd.f32 %v8205, %v8143
  %v8207 = vadd.f32 %v8206, %v8144
  %v8208 = vadd.f32 %v8207, %v8145
  %v8209 = vadd.f32 %v8208, %v8146
  %v8210 = vadd.f32 %v8209, %v8147
  %v8211 = vadd.f32 %v8210, %v8148
  %v8212 = vadd.f32 %v8211, %v8149
  %v8213 = vadd.f32 %v8212, %v8150
  %v8214 = vadd.f32 %v8213, %v8151
  %v8215 = vadd.f32 %v8214, %v8152
  %v8216 = vadd.f32 %v8215, %v8153
  %v8217 = vadd.f32 %v8216, %v8154
  %v8218 = vadd.f32 %v8217, %v8155
  %v8219 = vadd.f32 %v8218, %v8156
  %v8220 = vadd.f32 %v8219, %v8157
  %v8221 = vadd.f32 %v8220, %v8158
  %v8222 = vadd.f32 %v8221, %v8159
  %v8223 = vadd.f32 %v8222, %v8160
  %v8224 = vadd.f32 %v8223, %v8161
  %v8225 = vadd.f32 %v8224, %v8162
  %v8226 = vadd.f32 %v8225, %v8163
  %v8227 = vadd.f32 %v8226, %v8164
  %v8228 = vadd.f32 %v8227, %v8165
  %v8229 = vadd.f32 %v8228, %v8166
  %v8230 = vadd.f32 %v8229, %v8167
  %v8231 = vadd.f32 %v8230, %v8168
  %v8232 = vadd.f32 %v8231, %v8169
  %v8233 = vadd.f32 %v8232, %v8170
  %v8234 = vadd.f32 %v8233, %v8171
  %v8235 = vadd.f32 %v8234, %v8172
  %v8236 = vadd.f32 %v8235, %v8173
  %v8237 = vadd.f32 %v8236, %v8174
  %v8238 = vadd.f32 %v8237, %v8175
  %v8239 = vadd.f32 %v8238, %v8176
  %v8240 = vadd.f32 %v8239, %v8177
  %v8241 = vadd.f32 %v8240, %v8178
  %v8242 = vadd.f32 %v8241, %v8179
  %v8243 = vadd.f32 %v8242, %v8180
  %v8244 = vadd.f32 %v8243, %v8181
  %v8245 = vadd.f32 %v8244, %v8182
  %v8246 = vadd.f32 %v8245, %v8183
  %v8247 = vadd.f32 %v8246, %v8184
  %v8248 = vadd.f32 %v8247, %v8185
  %v8249 = vadd.f32 %v8248, %v8186
  %v8250 = vadd.f32 %v8249, %v8187
  %v8251 = vadd.f32 %v8250, %v8188
  %v8252 = vadd.f32 %v8251, %v8189
  %v8253 = vadd.f32 %v8252, %v8190
  %v8254 = vadd.f32 %v8253, %v8191
  %v8255 = vadd.f32 %v8254, %v8192
  %v8256 = vadd.f32 %v8255, %v8193
  %v8257 = vadd.f32 %v8256, %v8194
  %v8258 = vadd.f32 %v8257, %v8195
  %v8259 = vadd.f32 %v8258, %v8196
  %v8260 = vrot.slane %v8259, 4
  %v8261 = vadd.f32 %v8259, %v8260
  %v8262 = vrot.slane %v8261, 2
  %v8263 = vadd.f32 %v8261, %v8262
  %v8264 = vrot.slane %v8263, 1
  %v8265 = vadd.f32 %v8263, %v8264
  %v8266 = vmul.f32 %v8133, %v8133
  %v8267 = vmul.f32 %v8134, %v8134
  %v8268 = vmul.f32 %v8135, %v8135
  %v8269 = vmul.f32 %v8136, %v8136
  %v8270 = vmul.f32 %v8137, %v8137
  %v8271 = vmul.f32 %v8138, %v8138
  %v8272 = vmul.f32 %v8139, %v8139
  %v8273 = vmul.f32 %v8140, %v8140
  %v8274 = vmul.f32 %v8141, %v8141
  %v8275 = vmul.f32 %v8142, %v8142
  %v8276 = vmul.f32 %v8143, %v8143
  %v8277 = vmul.f32 %v8144, %v8144
  %v8278 = vmul.f32 %v8145, %v8145
  %v8279 = vmul.f32 %v8146, %v8146
  %v8280 = vmul.f32 %v8147, %v8147
  %v8281 = vmul.f32 %v8148, %v8148
  %v8282 = vmul.f32 %v8149, %v8149
  %v8283 = vmul.f32 %v8150, %v8150
  %v8284 = vmul.f32 %v8151, %v8151
  %v8285 = vmul.f32 %v8152, %v8152
  %v8286 = vmul.f32 %v8153, %v8153
  %v8287 = vmul.f32 %v8154, %v8154
  %v8288 = vmul.f32 %v8155, %v8155
  %v8289 = vmul.f32 %v8156, %v8156
  %v8290 = vmul.f32 %v8157, %v8157
  %v8291 = vmul.f32 %v8158, %v8158
  %v8292 = vmul.f32 %v8159, %v8159
  %v8293 = vmul.f32 %v8160, %v8160
  %v8294 = vmul.f32 %v8161, %v8161
  %v8295 = vmul.f32 %v8162, %v8162
  %v8296 = vmul.f32 %v8163, %v8163
  %v8297 = vmul.f32 %v8164, %v8164
  %v8298 = vmul.f32 %v8165, %v8165
  %v8299 = vmul.f32 %v8166, %v8166
  %v8300 = vmul.f32 %v8167, %v8167
  %v8301 = vmul.f32 %v8168, %v8168
  %v8302 = vmul.f32 %v8169, %v8169
  %v8303 = vmul.f32 %v8170, %v8170
  %v8304 = vmul.f32 %v8171, %v8171
  %v8305 = vmul.f32 %v8172, %v8172
  %v8306 = vmul.f32 %v8173, %v8173
  %v8307 = vmul.f32 %v8174, %v8174
  %v8308 = vmul.f32 %v8175, %v8175
  %v8309 = vmul.f32 %v8176, %v8176
  %v8310 = vmul.f32 %v8177, %v8177
  %v8311 = vmul.f32 %v8178, %v8178
  %v8312 = vmul.f32 %v8179, %v8179
  %v8313 = vmul.f32 %v8180, %v8180
  %v8314 = vmul.f32 %v8181, %v8181
  %v8315 = vmul.f32 %v8182, %v8182
  %v8316 = vmul.f32 %v8183, %v8183
  %v8317 = vmul.f32 %v8184, %v8184
  %v8318 = vmul.f32 %v8185, %v8185
  %v8319 = vmul.f32 %v8186, %v8186
  %v8320 = vmul.f32 %v8187, %v8187
  %v8321 = vmul.f32 %v8188, %v8188
  %v8322 = vmul.f32 %v8189, %v8189
  %v8323 = vmul.f32 %v8190, %v8190
  %v8324 = vmul.f32 %v8191, %v8191
  %v8325 = vmul.f32 %v8192, %v8192
  %v8326 = vmul.f32 %v8193, %v8193
  %v8327 = vmul.f32 %v8194, %v8194
  %v8328 = vmul.f32 %v8195, %v8195
  %v8329 = vmul.f32 %v8196, %v8196
  %v8330 = vadd.f32 %v8266, %v8267
  %v8331 = vadd.f32 %v8330, %v8268
  %v8332 = vadd.f32 %v8331, %v8269
  %v8333 = vadd.f32 %v8332, %v8270
  %v8334 = vadd.f32 %v8333, %v8271
  %v8335 = vadd.f32 %v8334, %v8272
  %v8336 = vadd.f32 %v8335, %v8273
  %v8337 = vadd.f32 %v8336, %v8274
  %v8338 = vadd.f32 %v8337, %v8275
  %v8339 = vadd.f32 %v8338, %v8276
  %v8340 = vadd.f32 %v8339, %v8277
  %v8341 = vadd.f32 %v8340, %v8278
  %v8342 = vadd.f32 %v8341, %v8279
  %v8343 = vadd.f32 %v8342, %v8280
  %v8344 = vadd.f32 %v8343, %v8281
  %v8345 = vadd.f32 %v8344, %v8282
  %v8346 = vadd.f32 %v8345, %v8283
  %v8347 = vadd.f32 %v8346, %v8284
  %v8348 = vadd.f32 %v8347, %v8285
  %v8349 = vadd.f32 %v8348, %v8286
  %v8350 = vadd.f32 %v8349, %v8287
  %v8351 = vadd.f32 %v8350, %v8288
  %v8352 = vadd.f32 %v8351, %v8289
  %v8353 = vadd.f32 %v8352, %v8290
  %v8354 = vadd.f32 %v8353, %v8291
  %v8355 = vadd.f32 %v8354, %v8292
  %v8356 = vadd.f32 %v8355, %v8293
  %v8357 = vadd.f32 %v8356, %v8294
  %v8358 = vadd.f32 %v8357, %v8295
  %v8359 = vadd.f32 %v8358, %v8296
  %v8360 = vadd.f32 %v8359, %v8297
  %v8361 = vadd.f32 %v8360, %v8298
  %v8362 = vadd.f32 %v8361, %v8299
  %v8363 = vadd.f32 %v8362, %v8300
  %v8364 = vadd.f32 %v8363, %v8301
  %v8365 = vadd.f32 %v8364, %v8302
  %v8366 = vadd.f32 %v8365, %v8303
  %v8367 = vadd.f32 %v8366, %v8304
  %v8368 = vadd.f32 %v8367, %v8305
  %v8369 = vadd.f32 %v8368, %v8306
  %v8370 = vadd.f32 %v8369, %v8307
  %v8371 = vadd.f32 %v8370, %v8308
  %v8372 = vadd.f32 %v8371, %v8309
  %v8373 = vadd.f32 %v8372, %v8310
  %v8374 = vadd.f32 %v8373, %v8311
  %v8375 = vadd.f32 %v8374, %v8312
  %v8376 = vadd.f32 %v8375, %v8313
  %v8377 = vadd.f32 %v8376, %v8314
  %v8378 = vadd.f32 %v8377, %v8315
  %v8379 = vadd.f32 %v8378, %v8316
  %v8380 = vadd.f32 %v8379, %v8317
  %v8381 = vadd.f32 %v8380, %v8318
  %v8382 = vadd.f32 %v8381, %v8319
  %v8383 = vadd.f32 %v8382, %v8320
  %v8384 = vadd.f32 %v8383, %v8321
  %v8385 = vadd.f32 %v8384, %v8322
  %v8386 = vadd.f32 %v8385, %v8323
  %v8387 = vadd.f32 %v8386, %v8324
  %v8388 = vadd.f32 %v8387, %v8325
  %v8389 = vadd.f32 %v8388, %v8326
  %v8390 = vadd.f32 %v8389, %v8327
  %v8391 = vadd.f32 %v8390, %v8328
  %v8392 = vadd.f32 %v8391, %v8329
  %v8393 = vrot.slane %v8392, 4
  %v8394 = vadd.f32 %v8392, %v8393
  %v8395 = vrot.slane %v8394, 2
  %v8396 = vadd.f32 %v8394, %v8395
  %v8397 = vrot.slane %v8396, 1
  %v8398 = vadd.f32 %v8396, %v8397
  %v8399 = vmul.f32 %v8265, 0.001953125
  %v8400 = vmul.f32 %v8398, 0.001953125
  %v8401 = vmul.f32 %v8399, %v8399
  %v8402 = vsub.f32 %v8400, %v8401
  %v8403 = vmax.f32 %v8402, 0.0
  %v8404 = vadd.f32 %v8063, %v8399
  %v8405 = vadd.f32 %v8403, 1e-05
  %v8406 = vrsqrt.pop %v8405
  %v8407 = vmul.f32 %v8127, %v8406
  %v8408 = vmul.f32 %v8404, %v8407
  %v8409 = vsub.f32 %v8128, %v8408
  %v8411 = vlaneseq
  %v8412 = vshrl.u32 %v8411, 7
  %v8413 = vsub.s32 0, %v8412
  %v8414 = vrot.slane %v8407, %v8413
  %v8416 = vmul.f32 %v8063, %v8414
  %v8417 = vmul.f32 %v8064, %v8414
  %v8418 = vmul.f32 %v8065, %v8414
  %v8419 = vmul.f32 %v8066, %v8414
  %v8420 = vmul.f32 %v8067, %v8414
  %v8421 = vmul.f32 %v8068, %v8414
  %v8422 = vmul.f32 %v8069, %v8414
  %v8423 = vmul.f32 %v8070, %v8414
  %v8424 = vmul.f32 %v8071, %v8414
  %v8425 = vmul.f32 %v8072, %v8414
  %v8426 = vmul.f32 %v8073, %v8414
  %v8427 = vmul.f32 %v8074, %v8414
  %v8428 = vmul.f32 %v8075, %v8414
  %v8429 = vmul.f32 %v8076, %v8414
  %v8430 = vmul.f32 %v8077, %v8414
  %v8431 = vmul.f32 %v8078, %v8414
  %v8432 = vmul.f32 %v8079, %v8414
  %v8433 = vmul.f32 %v8080, %v8414
  %v8434 = vmul.f32 %v8081, %v8414
  %v8435 = vmul.f32 %v8082, %v8414
  %v8436 = vmul.f32 %v8083, %v8414
  %v8437 = vmul.f32 %v8084, %v8414
  %v8438 = vmul.f32 %v8085, %v8414
  %v8439 = vmul.f32 %v8086, %v8414
  %v8440 = vmul.f32 %v8087, %v8414
  %v8441 = vmul.f32 %v8088, %v8414
  %v8442 = vmul.f32 %v8089, %v8414
  %v8443 = vmul.f32 %v8090, %v8414
  %v8444 = vmul.f32 %v8091, %v8414
  %v8445 = vmul.f32 %v8092, %v8414
  %v8446 = vmul.f32 %v8093, %v8414
  %v8447 = vmul.f32 %v8094, %v8414
  %v8448 = vmul.f32 %v8095, %v8414
  %v8449 = vmul.f32 %v8096, %v8414
  %v8450 = vmul.f32 %v8097, %v8414
  %v8451 = vmul.f32 %v8098, %v8414
  %v8452 = vmul.f32 %v8099, %v8414
  %v8453 = vmul.f32 %v8100, %v8414
  %v8454 = vmul.f32 %v8101, %v8414
  %v8455 = vmul.f32 %v8102, %v8414
  %v8456 = vmul.f32 %v8103, %v8414
  %v8457 = vmul.f32 %v8104, %v8414
  %v8458 = vmul.f32 %v8105, %v8414
  %v8459 = vmul.f32 %v8106, %v8414
  %v8460 = vmul.f32 %v8107, %v8414
  %v8461 = vmul.f32 %v8108, %v8414
  %v8462 = vmul.f32 %v8109, %v8414
  %v8463 = vmul.f32 %v8110, %v8414
  %v8464 = vmul.f32 %v8111, %v8414
  %v8465 = vmul.f32 %v8112, %v8414
  %v8466 = vmul.f32 %v8113, %v8414
  %v8467 = vmul.f32 %v8114, %v8414
  %v8468 = vmul.f32 %v8115, %v8414
  %v8469 = vmul.f32 %v8116, %v8414
  %v8470 = vmul.f32 %v8117, %v8414
  %v8471 = vmul.f32 %v8118, %v8414
  %v8472 = vmul.f32 %v8119, %v8414
  %v8473 = vmul.f32 %v8120, %v8414
  %v8474 = vmul.f32 %v8121, %v8414
  %v8475 = vmul.f32 %v8122, %v8414
  %v8476 = vmul.f32 %v8123, %v8414
  %v8477 = vmul.f32 %v8124, %v8414
  %v8478 = vmul.f32 %v8125, %v8414
  %v8479 = vmul.f32 %v8126, %v8414
  %v8481 = vlaneseq
  %v8482 = vshrl.u32 %v8481, 7
  %v8483 = vsub.s32 0, %v8482
  %v8484 = vrot.slane %v8409, %v8483
  %v8486 = vadd.f32 %v8416, %v8484
  %v8487 = vadd.f32 %v8417, %v8484
  %v8488 = vadd.f32 %v8418, %v8484
  %v8489 = vadd.f32 %v8419, %v8484
  %v8490 = vadd.f32 %v8420, %v8484
  %v8491 = vadd.f32 %v8421, %v8484
  %v8492 = vadd.f32 %v8422, %v8484
  %v8493 = vadd.f32 %v8423, %v8484
  %v8494 = vadd.f32 %v8424, %v8484
  %v8495 = vadd.f32 %v8425, %v8484
  %v8496 = vadd.f32 %v8426, %v8484
  %v8497 = vadd.f32 %v8427, %v8484
  %v8498 = vadd.f32 %v8428, %v8484
  %v8499 = vadd.f32 %v8429, %v8484
  %v8500 = vadd.f32 %v8430, %v8484
  %v8501 = vadd.f32 %v8431, %v8484
  %v8502 = vadd.f32 %v8432, %v8484
  %v8503 = vadd.f32 %v8433, %v8484
  %v8504 = vadd.f32 %v8434, %v8484
  %v8505 = vadd.f32 %v8435, %v8484
  %v8506 = vadd.f32 %v8436, %v8484
  %v8507 = vadd.f32 %v8437, %v8484
  %v8508 = vadd.f32 %v8438, %v8484
  %v8509 = vadd.f32 %v8439, %v8484
  %v8510 = vadd.f32 %v8440, %v8484
  %v8511 = vadd.f32 %v8441, %v8484
  %v8512 = vadd.f32 %v8442, %v8484
  %v8513 = vadd.f32 %v8443, %v8484
  %v8514 = vadd.f32 %v8444, %v8484
  %v8515 = vadd.f32 %v8445, %v8484
  %v8516 = vadd.f32 %v8446, %v8484
  %v8517 = vadd.f32 %v8447, %v8484
  %v8518 = vadd.f32 %v8448, %v8484
  %v8519 = vadd.f32 %v8449, %v8484
  %v8520 = vadd.f32 %v8450, %v8484
  %v8521 = vadd.f32 %v8451, %v8484
  %v8522 = vadd.f32 %v8452, %v8484
  %v8523 = vadd.f32 %v8453, %v8484
  %v8524 = vadd.f32 %v8454, %v8484
  %v8525 = vadd.f32 %v8455, %v8484
  %v8526 = vadd.f32 %v8456, %v8484
  %v8527 = vadd.f32 %v8457, %v8484
  %v8528 = vadd.f32 %v8458, %v8484
  %v8529 = vadd.f32 %v8459, %v8484
  %v8530 = vadd.f32 %v8460, %v8484
  %v8531 = vadd.f32 %v8461, %v8484
  %v8532 = vadd.f32 %v8462, %v8484
  %v8533 = vadd.f32 %v8463, %v8484
  %v8534 = vadd.f32 %v8464, %v8484
  %v8535 = vadd.f32 %v8465, %v8484
  %v8536 = vadd.f32 %v8466, %v8484
  %v8537 = vadd.f32 %v8467, %v8484
  %v8538 = vadd.f32 %v8468, %v8484
  %v8539 = vadd.f32 %v8469, %v8484
  %v8540 = vadd.f32 %v8470, %v8484
  %v8541 = vadd.f32 %v8471, %v8484
  %v8542 = vadd.f32 %v8472, %v8484
  %v8543 = vadd.f32 %v8473, %v8484
  %v8544 = vadd.f32 %v8474, %v8484
  %v8545 = vadd.f32 %v8475, %v8484
  %v8546 = vadd.f32 %v8476, %v8484
  %v8547 = vadd.f32 %v8477, %v8484
  %v8548 = vadd.f32 %v8478, %v8484
  %v8549 = vadd.f32 %v8479, %v8484
  %v8550 = vld [vmem:[%s10] sm:$0x1]
  %v8551 = vld [vmem:[%s11] sm:$0x1]
  %v8552 = vlaneseq
  %v8553 = vshrl.u32 %v8552, 7
  %v8554 = vsub.s32 0, %v8553
  %v8555 = vrot.slane %v431, %v8554
  %v8556 = vsub.f32 %v431, %v8555
  %v8557 = vsub.f32 %v435, %v8555
  %v8558 = vsub.f32 %v441, %v8555
  %v8559 = vsub.f32 %v445, %v8555
  %v8560 = vsub.f32 %v451, %v8555
  %v8561 = vsub.f32 %v455, %v8555
  %v8562 = vsub.f32 %v461, %v8555
  %v8563 = vsub.f32 %v465, %v8555
  %v8564 = vsub.f32 %v471, %v8555
  %v8565 = vsub.f32 %v475, %v8555
  %v8566 = vsub.f32 %v481, %v8555
  %v8567 = vsub.f32 %v485, %v8555
  %v8568 = vsub.f32 %v491, %v8555
  %v8569 = vsub.f32 %v495, %v8555
  %v8570 = vsub.f32 %v501, %v8555
  %v8571 = vsub.f32 %v505, %v8555
  %v8572 = vsub.f32 %v511, %v8555
  %v8573 = vsub.f32 %v515, %v8555
  %v8574 = vsub.f32 %v521, %v8555
  %v8575 = vsub.f32 %v525, %v8555
  %v8576 = vsub.f32 %v531, %v8555
  %v8577 = vsub.f32 %v535, %v8555
  %v8578 = vsub.f32 %v541, %v8555
  %v8579 = vsub.f32 %v545, %v8555
  %v8580 = vsub.f32 %v551, %v8555
  %v8581 = vsub.f32 %v555, %v8555
  %v8582 = vsub.f32 %v561, %v8555
  %v8583 = vsub.f32 %v565, %v8555
  %v8584 = vsub.f32 %v571, %v8555
  %v8585 = vsub.f32 %v575, %v8555
  %v8586 = vsub.f32 %v581, %v8555
  %v8587 = vsub.f32 %v585, %v8555
  %v8588 = vsub.f32 %v591, %v8555
  %v8589 = vsub.f32 %v595, %v8555
  %v8590 = vsub.f32 %v601, %v8555
  %v8591 = vsub.f32 %v605, %v8555
  %v8592 = vsub.f32 %v611, %v8555
  %v8593 = vsub.f32 %v615, %v8555
  %v8594 = vsub.f32 %v621, %v8555
  %v8595 = vsub.f32 %v625, %v8555
  %v8596 = vsub.f32 %v631, %v8555
  %v8597 = vsub.f32 %v635, %v8555
  %v8598 = vsub.f32 %v641, %v8555
  %v8599 = vsub.f32 %v645, %v8555
  %v8600 = vsub.f32 %v651, %v8555
  %v8601 = vsub.f32 %v655, %v8555
  %v8602 = vsub.f32 %v661, %v8555
  %v8603 = vsub.f32 %v665, %v8555
  %v8604 = vsub.f32 %v671, %v8555
  %v8605 = vsub.f32 %v675, %v8555
  %v8606 = vsub.f32 %v681, %v8555
  %v8607 = vsub.f32 %v685, %v8555
  %v8608 = vsub.f32 %v691, %v8555
  %v8609 = vsub.f32 %v695, %v8555
  %v8610 = vsub.f32 %v701, %v8555
  %v8611 = vsub.f32 %v705, %v8555
  %v8612 = vsub.f32 %v711, %v8555
  %v8613 = vsub.f32 %v715, %v8555
  %v8614 = vsub.f32 %v721, %v8555
  %v8615 = vsub.f32 %v725, %v8555
  %v8616 = vsub.f32 %v731, %v8555
  %v8617 = vsub.f32 %v735, %v8555
  %v8618 = vsub.f32 %v741, %v8555
  %v8619 = vsub.f32 %v745, %v8555
  %v8620 = vadd.f32 %v8556, %v8557
  %v8621 = vadd.f32 %v8620, %v8558
  %v8622 = vadd.f32 %v8621, %v8559
  %v8623 = vadd.f32 %v8622, %v8560
  %v8624 = vadd.f32 %v8623, %v8561
  %v8625 = vadd.f32 %v8624, %v8562
  %v8626 = vadd.f32 %v8625, %v8563
  %v8627 = vadd.f32 %v8626, %v8564
  %v8628 = vadd.f32 %v8627, %v8565
  %v8629 = vadd.f32 %v8628, %v8566
  %v8630 = vadd.f32 %v8629, %v8567
  %v8631 = vadd.f32 %v8630, %v8568
  %v8632 = vadd.f32 %v8631, %v8569
  %v8633 = vadd.f32 %v8632, %v8570
  %v8634 = vadd.f32 %v8633, %v8571
  %v8635 = vadd.f32 %v8634, %v8572
  %v8636 = vadd.f32 %v8635, %v8573
  %v8637 = vadd.f32 %v8636, %v8574
  %v8638 = vadd.f32 %v8637, %v8575
  %v8639 = vadd.f32 %v8638, %v8576
  %v8640 = vadd.f32 %v8639, %v8577
  %v8641 = vadd.f32 %v8640, %v8578
  %v8642 = vadd.f32 %v8641, %v8579
  %v8643 = vadd.f32 %v8642, %v8580
  %v8644 = vadd.f32 %v8643, %v8581
  %v8645 = vadd.f32 %v8644, %v8582
  %v8646 = vadd.f32 %v8645, %v8583
  %v8647 = vadd.f32 %v8646, %v8584
  %v8648 = vadd.f32 %v8647, %v8585
  %v8649 = vadd.f32 %v8648, %v8586
  %v8650 = vadd.f32 %v8649, %v8587
  %v8651 = vadd.f32 %v8650, %v8588
  %v8652 = vadd.f32 %v8651, %v8589
  %v8653 = vadd.f32 %v8652, %v8590
  %v8654 = vadd.f32 %v8653, %v8591
  %v8655 = vadd.f32 %v8654, %v8592
  %v8656 = vadd.f32 %v8655, %v8593
  %v8657 = vadd.f32 %v8656, %v8594
  %v8658 = vadd.f32 %v8657, %v8595
  %v8659 = vadd.f32 %v8658, %v8596
  %v8660 = vadd.f32 %v8659, %v8597
  %v8661 = vadd.f32 %v8660, %v8598
  %v8662 = vadd.f32 %v8661, %v8599
  %v8663 = vadd.f32 %v8662, %v8600
  %v8664 = vadd.f32 %v8663, %v8601
  %v8665 = vadd.f32 %v8664, %v8602
  %v8666 = vadd.f32 %v8665, %v8603
  %v8667 = vadd.f32 %v8666, %v8604
  %v8668 = vadd.f32 %v8667, %v8605
  %v8669 = vadd.f32 %v8668, %v8606
  %v8670 = vadd.f32 %v8669, %v8607
  %v8671 = vadd.f32 %v8670, %v8608
  %v8672 = vadd.f32 %v8671, %v8609
  %v8673 = vadd.f32 %v8672, %v8610
  %v8674 = vadd.f32 %v8673, %v8611
  %v8675 = vadd.f32 %v8674, %v8612
  %v8676 = vadd.f32 %v8675, %v8613
  %v8677 = vadd.f32 %v8676, %v8614
  %v8678 = vadd.f32 %v8677, %v8615
  %v8679 = vadd.f32 %v8678, %v8616
  %v8680 = vadd.f32 %v8679, %v8617
  %v8681 = vadd.f32 %v8680, %v8618
  %v8682 = vadd.f32 %v8681, %v8619
  %v8683 = vrot.slane %v8682, 4
  %v8684 = vadd.f32 %v8682, %v8683
  %v8685 = vrot.slane %v8684, 2
  %v8686 = vadd.f32 %v8684, %v8685
  %v8687 = vrot.slane %v8686, 1
  %v8688 = vadd.f32 %v8686, %v8687
  %v8689 = vmul.f32 %v8556, %v8556
  %v8690 = vmul.f32 %v8557, %v8557
  %v8691 = vmul.f32 %v8558, %v8558
  %v8692 = vmul.f32 %v8559, %v8559
  %v8693 = vmul.f32 %v8560, %v8560
  %v8694 = vmul.f32 %v8561, %v8561
  %v8695 = vmul.f32 %v8562, %v8562
  %v8696 = vmul.f32 %v8563, %v8563
  %v8697 = vmul.f32 %v8564, %v8564
  %v8698 = vmul.f32 %v8565, %v8565
  %v8699 = vmul.f32 %v8566, %v8566
  %v8700 = vmul.f32 %v8567, %v8567
  %v8701 = vmul.f32 %v8568, %v8568
  %v8702 = vmul.f32 %v8569, %v8569
  %v8703 = vmul.f32 %v8570, %v8570
  %v8704 = vmul.f32 %v8571, %v8571
  %v8705 = vmul.f32 %v8572, %v8572
  %v8706 = vmul.f32 %v8573, %v8573
  %v8707 = vmul.f32 %v8574, %v8574
  %v8708 = vmul.f32 %v8575, %v8575
  %v8709 = vmul.f32 %v8576, %v8576
  %v8710 = vmul.f32 %v8577, %v8577
  %v8711 = vmul.f32 %v8578, %v8578
  %v8712 = vmul.f32 %v8579, %v8579
  %v8713 = vmul.f32 %v8580, %v8580
  %v8714 = vmul.f32 %v8581, %v8581
  %v8715 = vmul.f32 %v8582, %v8582
  %v8716 = vmul.f32 %v8583, %v8583
  %v8717 = vmul.f32 %v8584, %v8584
  %v8718 = vmul.f32 %v8585, %v8585
  %v8719 = vmul.f32 %v8586, %v8586
  %v8720 = vmul.f32 %v8587, %v8587
  %v8721 = vmul.f32 %v8588, %v8588
  %v8722 = vmul.f32 %v8589, %v8589
  %v8723 = vmul.f32 %v8590, %v8590
  %v8724 = vmul.f32 %v8591, %v8591
  %v8725 = vmul.f32 %v8592, %v8592
  %v8726 = vmul.f32 %v8593, %v8593
  %v8727 = vmul.f32 %v8594, %v8594
  %v8728 = vmul.f32 %v8595, %v8595
  %v8729 = vmul.f32 %v8596, %v8596
  %v8730 = vmul.f32 %v8597, %v8597
  %v8731 = vmul.f32 %v8598, %v8598
  %v8732 = vmul.f32 %v8599, %v8599
  %v8733 = vmul.f32 %v8600, %v8600
  %v8734 = vmul.f32 %v8601, %v8601
  %v8735 = vmul.f32 %v8602, %v8602
  %v8736 = vmul.f32 %v8603, %v8603
  %v8737 = vmul.f32 %v8604, %v8604
  %v8738 = vmul.f32 %v8605, %v8605
  %v8739 = vmul.f32 %v8606, %v8606
  %v8740 = vmul.f32 %v8607, %v8607
  %v8741 = vmul.f32 %v8608, %v8608
  %v8742 = vmul.f32 %v8609, %v8609
  %v8743 = vmul.f32 %v8610, %v8610
  %v8744 = vmul.f32 %v8611, %v8611
  %v8745 = vmul.f32 %v8612, %v8612
  %v8746 = vmul.f32 %v8613, %v8613
  %v8747 = vmul.f32 %v8614, %v8614
  %v8748 = vmul.f32 %v8615, %v8615
  %v8749 = vmul.f32 %v8616, %v8616
  %v8750 = vmul.f32 %v8617, %v8617
  %v8751 = vmul.f32 %v8618, %v8618
  %v8752 = vmul.f32 %v8619, %v8619
  %v8753 = vadd.f32 %v8689, %v8690
  %v8754 = vadd.f32 %v8753, %v8691
  %v8755 = vadd.f32 %v8754, %v8692
  %v8756 = vadd.f32 %v8755, %v8693
  %v8757 = vadd.f32 %v8756, %v8694
  %v8758 = vadd.f32 %v8757, %v8695
  %v8759 = vadd.f32 %v8758, %v8696
  %v8760 = vadd.f32 %v8759, %v8697
  %v8761 = vadd.f32 %v8760, %v8698
  %v8762 = vadd.f32 %v8761, %v8699
  %v8763 = vadd.f32 %v8762, %v8700
  %v8764 = vadd.f32 %v8763, %v8701
  %v8765 = vadd.f32 %v8764, %v8702
  %v8766 = vadd.f32 %v8765, %v8703
  %v8767 = vadd.f32 %v8766, %v8704
  %v8768 = vadd.f32 %v8767, %v8705
  %v8769 = vadd.f32 %v8768, %v8706
  %v8770 = vadd.f32 %v8769, %v8707
  %v8771 = vadd.f32 %v8770, %v8708
  %v8772 = vadd.f32 %v8771, %v8709
  %v8773 = vadd.f32 %v8772, %v8710
  %v8774 = vadd.f32 %v8773, %v8711
  %v8775 = vadd.f32 %v8774, %v8712
  %v8776 = vadd.f32 %v8775, %v8713
  %v8777 = vadd.f32 %v8776, %v8714
  %v8778 = vadd.f32 %v8777, %v8715
  %v8779 = vadd.f32 %v8778, %v8716
  %v8780 = vadd.f32 %v8779, %v8717
  %v8781 = vadd.f32 %v8780, %v8718
  %v8782 = vadd.f32 %v8781, %v8719
  %v8783 = vadd.f32 %v8782, %v8720
  %v8784 = vadd.f32 %v8783, %v8721
  %v8785 = vadd.f32 %v8784, %v8722
  %v8786 = vadd.f32 %v8785, %v8723
  %v8787 = vadd.f32 %v8786, %v8724
  %v8788 = vadd.f32 %v8787, %v8725
  %v8789 = vadd.f32 %v8788, %v8726
  %v8790 = vadd.f32 %v8789, %v8727
  %v8791 = vadd.f32 %v8790, %v8728
  %v8792 = vadd.f32 %v8791, %v8729
  %v8793 = vadd.f32 %v8792, %v8730
  %v8794 = vadd.f32 %v8793, %v8731
  %v8795 = vadd.f32 %v8794, %v8732
  %v8796 = vadd.f32 %v8795, %v8733
  %v8797 = vadd.f32 %v8796, %v8734
  %v8798 = vadd.f32 %v8797, %v8735
  %v8799 = vadd.f32 %v8798, %v8736
  %v8800 = vadd.f32 %v8799, %v8737
  %v8801 = vadd.f32 %v8800, %v8738
  %v8802 = vadd.f32 %v8801, %v8739
  %v8803 = vadd.f32 %v8802, %v8740
  %v8804 = vadd.f32 %v8803, %v8741
  %v8805 = vadd.f32 %v8804, %v8742
  %v8806 = vadd.f32 %v8805, %v8743
  %v8807 = vadd.f32 %v8806, %v8744
  %v8808 = vadd.f32 %v8807, %v8745
  %v8809 = vadd.f32 %v8808, %v8746
  %v8810 = vadd.f32 %v8809, %v8747
  %v8811 = vadd.f32 %v8810, %v8748
  %v8812 = vadd.f32 %v8811, %v8749
  %v8813 = vadd.f32 %v8812, %v8750
  %v8814 = vadd.f32 %v8813, %v8751
  %v8815 = vadd.f32 %v8814, %v8752
  %v8816 = vrot.slane %v8815, 4
  %v8817 = vadd.f32 %v8815, %v8816
  %v8818 = vrot.slane %v8817, 2
  %v8819 = vadd.f32 %v8817, %v8818
  %v8820 = vrot.slane %v8819, 1
  %v8821 = vadd.f32 %v8819, %v8820
  %v8822 = vmul.f32 %v8688, 0.001953125
  %v8823 = vmul.f32 %v8821, 0.001953125
  %v8824 = vmul.f32 %v8822, %v8822
  %v8825 = vsub.f32 %v8823, %v8824
  %v8826 = vmax.f32 %v8825, 0.0
  %v8827 = vadd.f32 %v431, %v8822
  %v8828 = vadd.f32 %v8826, 1e-05
  %v8829 = vrsqrt.pop %v8828
  %v8830 = vmul.f32 %v8550, %v8829
  %v8831 = vmul.f32 %v8827, %v8830
  %v8832 = vsub.f32 %v8551, %v8831
  %v8834 = vlaneseq
  %v8835 = vshrl.u32 %v8834, 7
  %v8836 = vsub.s32 0, %v8835
  %v8837 = vrot.slane %v8830, %v8836
  %v8839 = vmul.f32 %v431, %v8837
  %v8840 = vmul.f32 %v435, %v8837
  %v8841 = vmul.f32 %v441, %v8837
  %v8842 = vmul.f32 %v445, %v8837
  %v8843 = vmul.f32 %v451, %v8837
  %v8844 = vmul.f32 %v455, %v8837
  %v8845 = vmul.f32 %v461, %v8837
  %v8846 = vmul.f32 %v465, %v8837
  %v8847 = vmul.f32 %v471, %v8837
  %v8848 = vmul.f32 %v475, %v8837
  %v8849 = vmul.f32 %v481, %v8837
  %v8850 = vmul.f32 %v485, %v8837
  %v8851 = vmul.f32 %v491, %v8837
  %v8852 = vmul.f32 %v495, %v8837
  %v8853 = vmul.f32 %v501, %v8837
  %v8854 = vmul.f32 %v505, %v8837
  %v8855 = vmul.f32 %v511, %v8837
  %v8856 = vmul.f32 %v515, %v8837
  %v8857 = vmul.f32 %v521, %v8837
  %v8858 = vmul.f32 %v525, %v8837
  %v8859 = vmul.f32 %v531, %v8837
  %v8860 = vmul.f32 %v535, %v8837
  %v8861 = vmul.f32 %v541, %v8837
  %v8862 = vmul.f32 %v545, %v8837
  %v8863 = vmul.f32 %v551, %v8837
  %v8864 = vmul.f32 %v555, %v8837
  %v8865 = vmul.f32 %v561, %v8837
  %v8866 = vmul.f32 %v565, %v8837
  %v8867 = vmul.f32 %v571, %v8837
  %v8868 = vmul.f32 %v575, %v8837
  %v8869 = vmul.f32 %v581, %v8837
  %v8870 = vmul.f32 %v585, %v8837
  %v8871 = vmul.f32 %v591, %v8837
  %v8872 = vmul.f32 %v595, %v8837
  %v8873 = vmul.f32 %v601, %v8837
  %v8874 = vmul.f32 %v605, %v8837
  %v8875 = vmul.f32 %v611, %v8837
  %v8876 = vmul.f32 %v615, %v8837
  %v8877 = vmul.f32 %v621, %v8837
  %v8878 = vmul.f32 %v625, %v8837
  %v8879 = vmul.f32 %v631, %v8837
  %v8880 = vmul.f32 %v635, %v8837
  %v8881 = vmul.f32 %v641, %v8837
  %v8882 = vmul.f32 %v645, %v8837
  %v8883 = vmul.f32 %v651, %v8837
  %v8884 = vmul.f32 %v655, %v8837
  %v8885 = vmul.f32 %v661, %v8837
  %v8886 = vmul.f32 %v665, %v8837
  %v8887 = vmul.f32 %v671, %v8837
  %v8888 = vmul.f32 %v675, %v8837
  %v8889 = vmul.f32 %v681, %v8837
  %v8890 = vmul.f32 %v685, %v8837
  %v8891 = vmul.f32 %v691, %v8837
  %v8892 = vmul.f32 %v695, %v8837
  %v8893 = vmul.f32 %v701, %v8837
  %v8894 = vmul.f32 %v705, %v8837
  %v8895 = vmul.f32 %v711, %v8837
  %v8896 = vmul.f32 %v715, %v8837
  %v8897 = vmul.f32 %v721, %v8837
  %v8898 = vmul.f32 %v725, %v8837
  %v8899 = vmul.f32 %v731, %v8837
  %v8900 = vmul.f32 %v735, %v8837
  %v8901 = vmul.f32 %v741, %v8837
  %v8902 = vmul.f32 %v745, %v8837
  %v8904 = vlaneseq
  %v8905 = vshrl.u32 %v8904, 7
  %v8906 = vsub.s32 0, %v8905
  %v8907 = vrot.slane %v8832, %v8906
  %v8909 = vadd.f32 %v8839, %v8907
  %v8910 = vadd.f32 %v8840, %v8907
  %v8911 = vadd.f32 %v8841, %v8907
  %v8912 = vadd.f32 %v8842, %v8907
  %v8913 = vadd.f32 %v8843, %v8907
  %v8914 = vadd.f32 %v8844, %v8907
  %v8915 = vadd.f32 %v8845, %v8907
  %v8916 = vadd.f32 %v8846, %v8907
  %v8917 = vadd.f32 %v8847, %v8907
  %v8918 = vadd.f32 %v8848, %v8907
  %v8919 = vadd.f32 %v8849, %v8907
  %v8920 = vadd.f32 %v8850, %v8907
  %v8921 = vadd.f32 %v8851, %v8907
  %v8922 = vadd.f32 %v8852, %v8907
  %v8923 = vadd.f32 %v8853, %v8907
  %v8924 = vadd.f32 %v8854, %v8907
  %v8925 = vadd.f32 %v8855, %v8907
  %v8926 = vadd.f32 %v8856, %v8907
  %v8927 = vadd.f32 %v8857, %v8907
  %v8928 = vadd.f32 %v8858, %v8907
  %v8929 = vadd.f32 %v8859, %v8907
  %v8930 = vadd.f32 %v8860, %v8907
  %v8931 = vadd.f32 %v8861, %v8907
  %v8932 = vadd.f32 %v8862, %v8907
  %v8933 = vadd.f32 %v8863, %v8907
  %v8934 = vadd.f32 %v8864, %v8907
  %v8935 = vadd.f32 %v8865, %v8907
  %v8936 = vadd.f32 %v8866, %v8907
  %v8937 = vadd.f32 %v8867, %v8907
  %v8938 = vadd.f32 %v8868, %v8907
  %v8939 = vadd.f32 %v8869, %v8907
  %v8940 = vadd.f32 %v8870, %v8907
  %v8941 = vadd.f32 %v8871, %v8907
  %v8942 = vadd.f32 %v8872, %v8907
  %v8943 = vadd.f32 %v8873, %v8907
  %v8944 = vadd.f32 %v8874, %v8907
  %v8945 = vadd.f32 %v8875, %v8907
  %v8946 = vadd.f32 %v8876, %v8907
  %v8947 = vadd.f32 %v8877, %v8907
  %v8948 = vadd.f32 %v8878, %v8907
  %v8949 = vadd.f32 %v8879, %v8907
  %v8950 = vadd.f32 %v8880, %v8907
  %v8951 = vadd.f32 %v8881, %v8907
  %v8952 = vadd.f32 %v8882, %v8907
  %v8953 = vadd.f32 %v8883, %v8907
  %v8954 = vadd.f32 %v8884, %v8907
  %v8955 = vadd.f32 %v8885, %v8907
  %v8956 = vadd.f32 %v8886, %v8907
  %v8957 = vadd.f32 %v8887, %v8907
  %v8958 = vadd.f32 %v8888, %v8907
  %v8959 = vadd.f32 %v8889, %v8907
  %v8960 = vadd.f32 %v8890, %v8907
  %v8961 = vadd.f32 %v8891, %v8907
  %v8962 = vadd.f32 %v8892, %v8907
  %v8963 = vadd.f32 %v8893, %v8907
  %v8964 = vadd.f32 %v8894, %v8907
  %v8965 = vadd.f32 %v8895, %v8907
  %v8966 = vadd.f32 %v8896, %v8907
  %v8967 = vadd.f32 %v8897, %v8907
  %v8968 = vadd.f32 %v8898, %v8907
  %v8969 = vadd.f32 %v8899, %v8907
  %v8970 = vadd.f32 %v8900, %v8907
  %v8971 = vadd.f32 %v8901, %v8907
  %v8972 = vadd.f32 %v8902, %v8907
  %v8973 = vadd.f32 %v8486, %v8909
  %v8974 = vadd.f32 %v8487, %v8910
  %v8975 = vadd.f32 %v8488, %v8911
  %v8976 = vadd.f32 %v8489, %v8912
  %v8977 = vadd.f32 %v8490, %v8913
  %v8978 = vadd.f32 %v8491, %v8914
  %v8979 = vadd.f32 %v8492, %v8915
  %v8980 = vadd.f32 %v8493, %v8916
  %v8981 = vadd.f32 %v8494, %v8917
  %v8982 = vadd.f32 %v8495, %v8918
  %v8983 = vadd.f32 %v8496, %v8919
  %v8984 = vadd.f32 %v8497, %v8920
  %v8985 = vadd.f32 %v8498, %v8921
  %v8986 = vadd.f32 %v8499, %v8922
  %v8987 = vadd.f32 %v8500, %v8923
  %v8988 = vadd.f32 %v8501, %v8924
  %v8989 = vadd.f32 %v8502, %v8925
  %v8990 = vadd.f32 %v8503, %v8926
  %v8991 = vadd.f32 %v8504, %v8927
  %v8992 = vadd.f32 %v8505, %v8928
  %v8993 = vadd.f32 %v8506, %v8929
  %v8994 = vadd.f32 %v8507, %v8930
  %v8995 = vadd.f32 %v8508, %v8931
  %v8996 = vadd.f32 %v8509, %v8932
  %v8997 = vadd.f32 %v8510, %v8933
  %v8998 = vadd.f32 %v8511, %v8934
  %v8999 = vadd.f32 %v8512, %v8935
  %v9000 = vadd.f32 %v8513, %v8936
  %v9001 = vadd.f32 %v8514, %v8937
  %v9002 = vadd.f32 %v8515, %v8938
  %v9003 = vadd.f32 %v8516, %v8939
  %v9004 = vadd.f32 %v8517, %v8940
  %v9005 = vadd.f32 %v8518, %v8941
  %v9006 = vadd.f32 %v8519, %v8942
  %v9007 = vadd.f32 %v8520, %v8943
  %v9008 = vadd.f32 %v8521, %v8944
  %v9009 = vadd.f32 %v8522, %v8945
  %v9010 = vadd.f32 %v8523, %v8946
  %v9011 = vadd.f32 %v8524, %v8947
  %v9012 = vadd.f32 %v8525, %v8948
  %v9013 = vadd.f32 %v8526, %v8949
  %v9014 = vadd.f32 %v8527, %v8950
  %v9015 = vadd.f32 %v8528, %v8951
  %v9016 = vadd.f32 %v8529, %v8952
  %v9017 = vadd.f32 %v8530, %v8953
  %v9018 = vadd.f32 %v8531, %v8954
  %v9019 = vadd.f32 %v8532, %v8955
  %v9020 = vadd.f32 %v8533, %v8956
  %v9021 = vadd.f32 %v8534, %v8957
  %v9022 = vadd.f32 %v8535, %v8958
  %v9023 = vadd.f32 %v8536, %v8959
  %v9024 = vadd.f32 %v8537, %v8960
  %v9025 = vadd.f32 %v8538, %v8961
  %v9026 = vadd.f32 %v8539, %v8962
  %v9027 = vadd.f32 %v8540, %v8963
  %v9028 = vadd.f32 %v8541, %v8964
  %v9029 = vadd.f32 %v8542, %v8965
  %v9030 = vadd.f32 %v8543, %v8966
  %v9031 = vadd.f32 %v8544, %v8967
  %v9032 = vadd.f32 %v8545, %v8968
  %v9033 = vadd.f32 %v8546, %v8969
  %v9034 = vadd.f32 %v8547, %v8970
  %v9035 = vadd.f32 %v8548, %v8971
  %v9036 = vadd.f32 %v8549, %v8972
  %v9037 = vmax.f32 %v8973, 0.0
  %v9038 = vmax.f32 %v8974, 0.0
  %v9039 = vmax.f32 %v8975, 0.0
  %v9040 = vmax.f32 %v8976, 0.0
  %v9041 = vmax.f32 %v8977, 0.0
  %v9042 = vmax.f32 %v8978, 0.0
  %v9043 = vmax.f32 %v8979, 0.0
  %v9044 = vmax.f32 %v8980, 0.0
  %v9045 = vmax.f32 %v8981, 0.0
  %v9046 = vmax.f32 %v8982, 0.0
  %v9047 = vmax.f32 %v8983, 0.0
  %v9048 = vmax.f32 %v8984, 0.0
  %v9049 = vmax.f32 %v8985, 0.0
  %v9050 = vmax.f32 %v8986, 0.0
  %v9051 = vmax.f32 %v8987, 0.0
  %v9052 = vmax.f32 %v8988, 0.0
  %v9053 = vmax.f32 %v8989, 0.0
  %v9054 = vmax.f32 %v8990, 0.0
  %v9055 = vmax.f32 %v8991, 0.0
  %v9056 = vmax.f32 %v8992, 0.0
  %v9057 = vmax.f32 %v8993, 0.0
  %v9058 = vmax.f32 %v8994, 0.0
  %v9059 = vmax.f32 %v8995, 0.0
  %v9060 = vmax.f32 %v8996, 0.0
  %v9061 = vmax.f32 %v8997, 0.0
  %v9062 = vmax.f32 %v8998, 0.0
  %v9063 = vmax.f32 %v8999, 0.0
  %v9064 = vmax.f32 %v9000, 0.0
  %v9065 = vmax.f32 %v9001, 0.0
  %v9066 = vmax.f32 %v9002, 0.0
  %v9067 = vmax.f32 %v9003, 0.0
  %v9068 = vmax.f32 %v9004, 0.0
  %v9069 = vmax.f32 %v9005, 0.0
  %v9070 = vmax.f32 %v9006, 0.0
  %v9071 = vmax.f32 %v9007, 0.0
  %v9072 = vmax.f32 %v9008, 0.0
  %v9073 = vmax.f32 %v9009, 0.0
  %v9074 = vmax.f32 %v9010, 0.0
  %v9075 = vmax.f32 %v9011, 0.0
  %v9076 = vmax.f32 %v9012, 0.0
  %v9077 = vmax.f32 %v9013, 0.0
  %v9078 = vmax.f32 %v9014, 0.0
  %v9079 = vmax.f32 %v9015, 0.0
  %v9080 = vmax.f32 %v9016, 0.0
  %v9081 = vmax.f32 %v9017, 0.0
  %v9082 = vmax.f32 %v9018, 0.0
  %v9083 = vmax.f32 %v9019, 0.0
  %v9084 = vmax.f32 %v9020, 0.0
  %v9085 = vmax.f32 %v9021, 0.0
  %v9086 = vmax.f32 %v9022, 0.0
  %v9087 = vmax.f32 %v9023, 0.0
  %v9088 = vmax.f32 %v9024, 0.0
  %v9089 = vmax.f32 %v9025, 0.0
  %v9090 = vmax.f32 %v9026, 0.0
  %v9091 = vmax.f32 %v9027, 0.0
  %v9092 = vmax.f32 %v9028, 0.0
  %v9093 = vmax.f32 %v9029, 0.0
  %v9094 = vmax.f32 %v9030, 0.0
  %v9095 = vmax.f32 %v9031, 0.0
  %v9096 = vmax.f32 %v9032, 0.0
  %v9097 = vmax.f32 %v9033, 0.0
  %v9098 = vmax.f32 %v9034, 0.0
  %v9099 = vmax.f32 %v9035, 0.0
  %v9100 = vmax.f32 %v9036, 0.0
  %9101 = vst [vmem:[%s12] sm:$0xff] %v9037
  %9102 = vst [vmem:[%s12 + $0x8] sm:$0xff] %v9038
  %9103 = vst [vmem:[%s12 + $0x10] sm:$0xff] %v9039
  %9104 = vst [vmem:[%s12 + $0x18] sm:$0xff] %v9040
  %9105 = vst [vmem:[%s12 + $0x20] sm:$0xff] %v9041
  %9106 = vst [vmem:[%s12 + $0x28] sm:$0xff] %v9042
  %9107 = vst [vmem:[%s12 + $0x30] sm:$0xff] %v9043
  %9108 = vst [vmem:[%s12 + $0x38] sm:$0xff] %v9044
  %9109 = vst [vmem:[%s12 + $0x40] sm:$0xff] %v9045
  %9110 = vst [vmem:[%s12 + $0x48] sm:$0xff] %v9046
  %9111 = vst [vmem:[%s12 + $0x50] sm:$0xff] %v9047
  %9112 = vst [vmem:[%s12 + $0x58] sm:$0xff] %v9048
  %9113 = vst [vmem:[%s12 + $0x60] sm:$0xff] %v9049
  %9114 = vst [vmem:[%s12 + $0x68] sm:$0xff] %v9050
  %9115 = vst [vmem:[%s12 + $0x70] sm:$0xff] %v9051
  %9116 = vst [vmem:[%s12 + $0x78] sm:$0xff] %v9052
  %9117 = vst [vmem:[%s12 + $0x80] sm:$0xff] %v9053
  %9118 = vst [vmem:[%s12 + $0x88] sm:$0xff] %v9054
  %9119 = vst [vmem:[%s12 + $0x90] sm:$0xff] %v9055
  %9120 = vst [vmem:[%s12 + $0x98] sm:$0xff] %v9056
  %9121 = vst [vmem:[%s12 + $0xa0] sm:$0xff] %v9057
  %9122 = vst [vmem:[%s12 + $0xa8] sm:$0xff] %v9058
  %9123 = vst [vmem:[%s12 + $0xb0] sm:$0xff] %v9059
  %9124 = vst [vmem:[%s12 + $0xb8] sm:$0xff] %v9060
  %9125 = vst [vmem:[%s12 + $0xc0] sm:$0xff] %v9061
  %9126 = vst [vmem:[%s12 + $0xc8] sm:$0xff] %v9062
  %9127 = vst [vmem:[%s12 + $0xd0] sm:$0xff] %v9063
  %9128 = vst [vmem:[%s12 + $0xd8] sm:$0xff] %v9064
  %9129 = vst [vmem:[%s12 + $0xe0] sm:$0xff] %v9065
  %9130 = vst [vmem:[%s12 + $0xe8] sm:$0xff] %v9066
  %9131 = vst [vmem:[%s12 + $0xf0] sm:$0xff] %v9067
  %9132 = vst [vmem:[%s12 + $0xf8] sm:$0xff] %v9068
  %9133 = vst [vmem:[%s12 + $0x100] sm:$0xff] %v9069
  %9134 = vst [vmem:[%s12 + $0x108] sm:$0xff] %v9070
  %9135 = vst [vmem:[%s12 + $0x110] sm:$0xff] %v9071
  %9136 = vst [vmem:[%s12 + $0x118] sm:$0xff] %v9072
  %9137 = vst [vmem:[%s12 + $0x120] sm:$0xff] %v9073
  %9138 = vst [vmem:[%s12 + $0x128] sm:$0xff] %v9074
  %9139 = vst [vmem:[%s12 + $0x130] sm:$0xff] %v9075
  %9140 = vst [vmem:[%s12 + $0x138] sm:$0xff] %v9076
  %9141 = vst [vmem:[%s12 + $0x140] sm:$0xff] %v9077
  %9142 = vst [vmem:[%s12 + $0x148] sm:$0xff] %v9078
  %9143 = vst [vmem:[%s12 + $0x150] sm:$0xff] %v9079
  %9144 = vst [vmem:[%s12 + $0x158] sm:$0xff] %v9080
  %9145 = vst [vmem:[%s12 + $0x160] sm:$0xff] %v9081
  %9146 = vst [vmem:[%s12 + $0x168] sm:$0xff] %v9082
  %9147 = vst [vmem:[%s12 + $0x170] sm:$0xff] %v9083
  %9148 = vst [vmem:[%s12 + $0x178] sm:$0xff] %v9084
  %9149 = vst [vmem:[%s12 + $0x180] sm:$0xff] %v9085
  %9150 = vst [vmem:[%s12 + $0x188] sm:$0xff] %v9086
  %9151 = vst [vmem:[%s12 + $0x190] sm:$0xff] %v9087
  %9152 = vst [vmem:[%s12 + $0x198] sm:$0xff] %v9088
  %9153 = vst [vmem:[%s12 + $0x1a0] sm:$0xff] %v9089
  %9154 = vst [vmem:[%s12 + $0x1a8] sm:$0xff] %v9090
  %9155 = vst [vmem:[%s12 + $0x1b0] sm:$0xff] %v9091
  %9156 = vst [vmem:[%s12 + $0x1b8] sm:$0xff] %v9092
  %9157 = vst [vmem:[%s12 + $0x1c0] sm:$0xff] %v9093
  %9158 = vst [vmem:[%s12 + $0x1c8] sm:$0xff] %v9094
  %9159 = vst [vmem:[%s12 + $0x1d0] sm:$0xff] %v9095
  %9160 = vst [vmem:[%s12 + $0x1d8] sm:$0xff] %v9096
  %9161 = vst [vmem:[%s12 + $0x1e0] sm:$0xff] %v9097
  %9162 = vst [vmem:[%s12 + $0x1e8] sm:$0xff] %v9098
  %9163 = vst [vmem:[%s12 + $0x1f0] sm:$0xff] %v9099
  %9164 = vst [vmem:[%s12 + $0x1f8] sm:$0xff] %v9100
  // Predicated region
  $region50: #{cnn_block_forward.1} parent=0 // pred_check
    _
  $region51: #{cnn_block_forward.1} parent=0 // pred_check_branch
    %9166 = sbr.rel (0) target = $region53
  $region52: #{cnn_block_forward.1} parent=0 // pred_region
    _
  $region53: #{cnn_block_forward.1} parent=0 // pred_fallthru
    _
  // Predicated region
  $region54: #{cnn_block_forward.1} parent=0 // pred_check
    _
  $region55: #{cnn_block_forward.1} parent=0 // pred_check_branch
    %9168 = sbr.rel (0) target = $region57
  $region56: #{cnn_block_forward.1} parent=0 // pred_region
    _
  $region57: #{cnn_block_forward.1} parent=0 // pred_fallthru
    _

</llo_original>
